<compile_context>
chip_gen: v5e
topology: v5e:2x2
jax: 0.10.0
libtpu: 0.0.40
codegen_flags: <defaults>
</compile_context>

<pallas_src>
import jax
import jax.numpy as jnp
from jax import lax
from jax.experimental import pallas as pl
from jax.experimental.pallas import tpu as pltpu

EPS = 1e-5
LANE = 128


def _round_up(x, m):
    return ((x + m - 1) // m) * m


def _vmem_limit_bytes():
    cap = 64 * 1024 * 1024
    try:
        info = pltpu.get_tpu_info()
        cap = int(getattr(info, "vmem_capacity_bytes", cap))
    except Exception:
        pass
    # leave headroom; cap well below physical (v5e/v6e: 128 MiB, v7x: 64 MiB)
    return max(16 * 1024 * 1024, min(cap * 3 // 4, 100 * 1024 * 1024))


VMEM_LIMIT = _vmem_limit_bytes()


# ----------------------------- Pallas kernels ------------------------------ #

def _affine_relu_kernel_f32_bf16(x_ref, s_ref, b_ref, o32_ref, o16_ref):
    y = jnp.maximum(x_ref[...].astype(jnp.float32) * s_ref[...] + b_ref[...], 0.0)
    o32_ref[...] = y
    o16_ref[...] = y.astype(jnp.bfloat16)


def _affine_relu_kernel_bf16(x_ref, s_ref, b_ref, o16_ref):
    y = jnp.maximum(x_ref[...].astype(jnp.float32) * s_ref[...] + b_ref[...], 0.0)
    o16_ref[...] = y.astype(jnp.bfloat16)


def _make_conv_kernel(*, stride, dilation, Ho, Wo, n_k, mode, b1_stride):
    """Whole-image tap-accumulation 3x3 conv.  mode in {"plain", "b1", "res"}.

    Grid = (image, out-ch tile j, in-ch tile k); k is the reduction axis.
    The accumulator (Ho*Wo, TN) f32 lives in VMEM scratch across k.
    """

    def kernel(*refs):
        if mode == "b1":
            x_ref, w_ref, y1_ref, w1_ref, o_ref, acc_ref = refs
        elif mode == "res":
            x_ref, w_ref, res_ref, o_ref, acc_ref = refs
        else:
            x_ref, w_ref, o_ref, acc_ref = refs

        k = pl.program_id(2)  # input-channel tile

        @pl.when(k == 0)
        def _init():
            if mode == "b1":
                # fused 1x1-conv branch1: acc <- y1[::s, ::s, :] @ w1
                y1 = y1_ref[0]                               # (Hy, Wy, Cin_p) bf16
                if b1_stride != 1:
                    y1 = y1[: b1_stride * (Ho - 1) + 1 : b1_stride,
                            : b1_stride * (Wo - 1) + 1 : b1_stride, :]
                y1 = y1.reshape(Ho * Wo, y1.shape[-1])
                acc_ref[...] = jnp.dot(y1, w1_ref[...],
                                       preferred_element_type=jnp.float32)
            elif mode == "res":
                acc_ref[...] = res_ref[0].reshape(Ho * Wo, -1).astype(jnp.float32)
            else:
                acc_ref[...] = jnp.zeros_like(acc_ref)

        # One whole padded image slab for this (n, k): the 9 taps are static
        # slices of it -> 9 matmuls of M = Ho*Wo rows (no im2col).
        xb = x_ref[0]                                        # (Hp, Wp, TK) bf16
        contrib = None
        for kh in range(3):
            for kw in range(3):
                r0 = kh * dilation
                c0 = kw * dilation
                if stride == 1:
                    xs = xb[r0:r0 + Ho, c0:c0 + Wo, :]
                else:
                    xs = xb[r0:r0 + stride * (Ho - 1) + 1:stride,
                            c0:c0 + stride * (Wo - 1) + 1:stride, :]
                xs = xs.reshape(Ho * Wo, xs.shape[-1])
                d = jnp.dot(xs, w_ref[kh * 3 + kw],
                            preferred_element_type=jnp.float32)
                contrib = d if contrib is None else contrib + d
        acc_ref[...] += contrib

        @pl.when(k == n_k - 1)
        def _write():
            o_ref[0] = acc_ref[...].reshape(Ho, Wo, -1).astype(o_ref.dtype)

    return kernel


# ----------------------------- Pallas wrappers ----------------------------- #

def affine_relu(x2d, scale, shift, *, want_f32):
    """Row-tiled fused (x*scale + shift) -> ReLU.  x2d: (M, C), C lane-dense."""
    M, C = x2d.shape
    in_b = x2d.dtype.itemsize
    out_b = 6 if want_f32 else 2
    budget = int(VMEM_LIMIT * 0.6)
    cands = [c for c in (1024, 512, 256, 128, 64, 32, 16, 8)
             if 2 * c * C * (in_b + out_b) + 4 * C * 4 <= budget]
    if not cands:
        cands = [8]
    TM = next((c for c in cands if c <= M and M % c == 0), cands[0])
    Mp = _round_up(M, TM)
    if Mp != M:
        x2d = jnp.pad(x2d, ((0, Mp - M), (0, 0)))

    grid = (Mp // TM,)
    row_spec = pl.BlockSpec((TM, C), lambda i: (i, 0))
    vec_spec = pl.BlockSpec((1, C), lambda i: (0, 0))
    cp = pltpu.CompilerParams(dimension_semantics=("parallel",),
                              vmem_limit_bytes=VMEM_LIMIT)

    if want_f32:
        o32, o16 = pl.pallas_call(
            _affine_relu_kernel_f32_bf16,
            out_shape=(jax.ShapeDtypeStruct((Mp, C), jnp.float32),
                       jax.ShapeDtypeStruct((Mp, C), jnp.bfloat16)),
            grid=grid,
            in_specs=[row_spec, vec_spec, vec_spec],
            out_specs=(row_spec, row_spec),
            compiler_params=cp,
        )(x2d, scale, shift)
        return o32[:M], o16[:M]

    o16 = pl.pallas_call(
        _affine_relu_kernel_bf16,
        out_shape=jax.ShapeDtypeStruct((Mp, C), jnp.bfloat16),
        grid=grid,
        in_specs=[row_spec, vec_spec, vec_spec],
        out_specs=row_spec,
        compiler_params=cp,
    )(x2d, scale, shift)
    return o16[:M]


def _conv_tiles(C, O, Hp, Wp, Ho, Wo, out_itemsize, extra_per_tn, extra_const):
    """Pick (TK, TN): prefer TN == O (no input re-fetch across j), then big TK."""
    budget = int(VMEM_LIMIT * 0.8)

    def footprint(tk, tn):
        return (2 * Hp * Wp * tk * 2            # input slab, bf16, double-buffered
                + 2 * 9 * tk * tn * 2           # tap weights, bf16, double-buffered
                + 2 * Ho * Wo * tn * out_itemsize
                + Ho * Wo * tn * 4              # f32 accumulator scratch
                + extra_per_tn * tn + extra_const)

    tn_cands = [t for t in (O, 2048, 1024, 512, 256, 128) if t <= O and O % t == 0]
    tk_cands = [t for t in (C, 2048, 1024, 512, 256, 128) if t <= C and C % t == 0]
    for tn in tn_cands:
        for tk in tk_cands:
            if footprint(tk, tn) <= budget:
                return tk, tn
    return 128, 128


def conv3x3(x, w_packed, *, stride, dilation, padding, out_dtype=jnp.float32,
            residual=None, b1=None):
    """3x3 dilated conv (no bias) via whole-image tap accumulation.

    x:        (N, H, W, C)  bf16, channels padded to a lane multiple.
    w_packed: (9, C, O)     bf16, tap-major (kh*3+kw), channels padded.
    residual: (N, Ho, Wo, O) f32  -> added to output (same_shape path).
    b1:       (y1_bf16 (N, Hy, Wy, Cy), w1_bf16 (Cy, O), b1_stride) -> fused 1x1.
    Returns (N, Ho, Wo, O) out_dtype.
    """
    N, H, W, C = x.shape
    taps, Cw, O = w_packed.shape
    assert taps == 9 and Cw == C
    Ho = (H + 2 * padding - 2 * dilation - 1) // stride + 1
    Wo = (W + 2 * padding - 2 * dilation - 1) // stride + 1
    Hp, Wp = H + 2 * padding, W + 2 * padding

    xp = jnp.pad(x, ((0, 0), (padding, padding), (padding, padding), (0, 0)))

    extra_per_tn, extra_const = 0, 0
    if b1 is not None:
        _, Hy, Wy, Cy = b1[0].shape
        extra_per_tn = 2 * Cy * 2                    # w1 block (double-buffered)
        extra_const = 2 * Hy * Wy * Cy * 2           # y1 image block
    elif residual is not None:
        extra_per_tn = 2 * Ho * Wo * 4               # residual block

    TK, TN = _conv_tiles(C, O, Hp, Wp, Ho, Wo, jnp.dtype(out_dtype).itemsize,
                         extra_per_tn, extra_const)
    nk, nj = C // TK, O // TN
    grid = (N, nj, nk)

    in_specs = [
        pl.BlockSpec((1, Hp, Wp, TK), lambda n, j, k: (n, 0, 0, k)),
        pl.BlockSpec((9, TK, TN), lambda n, j, k: (0, k, j)),
    ]
    args = [xp, w_packed]
    mode, b1_stride = "plain", 1

    if b1 is not None:
        y1, w1, b1_stride = b1
        _, Hy, Wy, Cy = y1.shape
        in_specs += [pl.BlockSpec((1, Hy, Wy, Cy), lambda n, j, k: (n, 0, 0, 0)),
                     pl.BlockSpec((Cy, TN), lambda n, j, k: (0, j))]
        args += [y1, w1]
        mode = "b1"
    elif residual is not None:
        in_specs.append(pl.BlockSpec((1, Ho, Wo, TN), lambda n, j, k: (n, 0, 0, j)))
        args.append(residual)
        mode = "res"

    kernel = _make_conv_kernel(stride=stride, dilation=dilation, Ho=Ho, Wo=Wo,
                               n_k=nk, mode=mode, b1_stride=b1_stride)

    out = pl.pallas_call(
        kernel,
        out_shape=jax.ShapeDtypeStruct((N, Ho, Wo, O), out_dtype),
        grid=grid,
        in_specs=in_specs,
        out_specs=pl.BlockSpec((1, Ho, Wo, TN), lambda n, j, k: (n, 0, 0, j)),
        scratch_shapes=[pltpu.VMEM((Ho * Wo, TN), jnp.float32)],
        compiler_params=pltpu.CompilerParams(
            dimension_semantics=("parallel", "parallel", "arbitrary"),
            vmem_limit_bytes=VMEM_LIMIT),
    )(*args)
    return out


# ------------------------------ JAX glue ----------------------------------- #

def bn_fold(x_real, gamma, beta, c_pad):
    """Training-mode BN (batch stats, biased var) folded to scale/shift.

    Single pass: sum and sum-of-squares together, reductions in f32."""
    xf = x_real.astype(jnp.float32)
    cnt = xf.shape[0] * xf.shape[1] * xf.shape[2]
    s1 = jnp.sum(xf, axis=(0, 1, 2))
    s2 = jnp.sum(xf * xf, axis=(0, 1, 2))
    mean = s1 / cnt
    var = jnp.maximum(s2 / cnt - mean * mean, 0.0)
    scale = gamma * lax.rsqrt(var + EPS)
    shift = beta - mean * scale
    c = gamma.shape[0]
    scale = jnp.pad(scale, (0, c_pad - c)).reshape(1, c_pad)
    shift = jnp.pad(shift, (0, c_pad - c)).reshape(1, c_pad)
    return scale, shift


def pack_conv3x3(w_oihw, c_in_pad, c_out_pad):
    """PyTorch (O,I,3,3) -> tap-major (9, I_pad, O_pad) bf16, zero padded."""
    O, I, kh, kw = w_oihw.shape
    w = jnp.transpose(w_oihw, (2, 3, 1, 0)).reshape(kh * kw, I, O)
    w = jnp.pad(w, ((0, 0), (0, c_in_pad - I), (0, c_out_pad - O)))
    return w.astype(jnp.bfloat16)


def pack_params(raw, in_ch, mid_ch, out_ch, same_shape):
    """One-time weight packing (done outside the jitted forward)."""
    cin_p, cmid_p, cout_p = (_round_up(c, LANE) for c in (in_ch, mid_ch, out_ch))
    packed = {
        "bn2a_g": raw["bn2a_g"], "bn2a_b": raw["bn2a_b"],
        "bn2b1_g": raw["bn2b1_g"], "bn2b1_b": raw["bn2b1_b"],
        "w2a": pack_conv3x3(raw["w2a"], cin_p, cmid_p),
        "w2b": pack_conv3x3(raw["w2b"], cmid_p, cout_p),
    }
    if not same_shape:
        w1 = jnp.transpose(raw["w1"][:, :, 0, 0], (1, 0))            # (I, O)
        w1 = jnp.pad(w1, ((0, cin_p - in_ch), (0, cout_p - out_ch)))
        packed["w1"] = w1.astype(jnp.bfloat16)
    dims = (in_ch, mid_ch, out_ch, cin_p, cmid_p, cout_p)
    return packed, dims


def resblock_forward(packed, x_nchw, *, dims, stride, first_dilation, dilation,
                     same_shape, get_x_bn_relu=False):
    cin, cmid, cout, cin_p, cmid_p, cout_p = dims
    x = jnp.transpose(x_nchw, (0, 2, 3, 1)).astype(jnp.float32)      # NHWC
    N, H, W, _ = x.shape

    # bn_branch2a + relu  (stats: single-pass jnp reduction; affine+ReLU: Pallas)
    scale_a, shift_a = bn_fold(x, packed["bn2a_g"], packed["bn2a_b"], cin_p)
    xpc = jnp.pad(x, ((0, 0), (0, 0), (0, 0), (0, cin_p - cin)))
    if get_x_bn_relu:
        y1_f32, y1_bf16 = affine_relu(xpc.reshape(N * H * W, cin_p),
                                      scale_a, shift_a, want_f32=True)
    else:
        y1_f32 = None
        y1_bf16 = affine_relu(xpc.reshape(N * H * W, cin_p),
                              scale_a, shift_a, want_f32=False)
    y1_bf16 = y1_bf16.reshape(N, H, W, cin_p)

    # conv_branch2a (3x3, stride, dilation=first_dilation) -> bf16 mid activation
    z = conv3x3(y1_bf16, packed["w2a"], stride=stride, dilation=first_dilation,
                padding=first_dilation, out_dtype=jnp.bfloat16)
    _, Ho, Wo, _ = z.shape

    # bn_branch2b1 + relu
    scale_b, shift_b = bn_fold(z[..., :cmid], packed["bn2b1_g"],
                               packed["bn2b1_b"], cmid_p)
    z2_bf16 = affine_relu(z.reshape(N * Ho * Wo, cmid_p), scale_b, shift_b,
                          want_f32=False).reshape(N, Ho, Wo, cmid_p)

    # conv_branch2b1 (3x3, stride 1, dilation) + fused branch1 / residual
    if same_shape:
        out_full = conv3x3(z2_bf16, packed["w2b"], stride=1, dilation=dilation,
                           padding=dilation, out_dtype=jnp.float32, residual=xpc)
    else:
        out_full = conv3x3(z2_bf16, packed["w2b"], stride=1, dilation=dilation,
                           padding=dilation, out_dtype=jnp.float32,
                           b1=(y1_bf16, packed["w1"], stride))

    out = jnp.transpose(out_full[..., :cout], (0, 3, 1, 2))
    if get_x_bn_relu:
        xbr = y1_f32.reshape(N, H, W, cin_p)[..., :cin]
        return out, jnp.transpose(xbr, (0, 3, 1, 2))
    return out


# ------------------------- pure-JAX reference ------------------------------ #

def _ref_bn_relu(x, g, b):
    mean = jnp.mean(x, axis=(0, 1, 2), keepdims=True)
    var = jnp.mean(jnp.square(x - mean), axis=(0, 1, 2), keepdims=True)
    return jnp.maximum((x - mean) * lax.rsqrt(var + EPS) * g + b, 0.0)


def _ref_conv(x, w_oihw, stride, dilation, pad):
    w_hwio = jnp.transpose(w_oihw, (2, 3, 1, 0))
    return lax.conv_general_dilated(
        x, w_hwio, (stride, stride), [(pad, pad), (pad, pad)],
        rhs_dilation=(dilation, dilation),
        dimension_numbers=("NHWC", "HWIO", "NHWC"),
        precision=lax.Precision.HIGHEST)


def ref_forward(raw, x_nchw, *, stride, first_dilation, dilation, same_shape):
    x = jnp.transpose(x_nchw, (0, 2, 3, 1)).astype(jnp.float32)
    y1 = _ref_bn_relu(x, raw["bn2a_g"], raw["bn2a_b"])
    branch1 = _ref_conv(y1, raw["w1"], stride, 1, 0) if not same_shape else x
    b2 = _ref_conv(y1, raw["w2a"], stride, first_dilation, first_dilation)
    b2 = _ref_bn_relu(b2, raw["bn2b1_g"], raw["bn2b1_b"])
    b2 = _ref_conv(b2, raw["w2b"], 1, dilation, dilation)
    out = branch1 + b2
    return jnp.transpose(out, (0, 3, 1, 2)), jnp.transpose(y1, (0, 3, 1, 2))


# --------------------------------- main ------------------------------------ #

def init_params(key, in_ch, mid_ch, out_ch, same_shape):
    ks = jax.random.split(key, 7)
    params = {
        "bn2a_g": jax.random.uniform(ks[0], (in_ch,), jnp.float32, 0.5, 1.5),
        "bn2a_b": 0.1 * jax.random.normal(ks[1], (in_ch,), jnp.float32),
        "w2a": jax.random.normal(ks[2], (mid_ch, in_ch, 3, 3), jnp.float32)
               / jnp.sqrt(in_ch * 9.0),
        "bn2b1_g": jax.random.uniform(ks[3], (mid_ch,), jnp.float32, 0.5, 1.5),
        "bn2b1_b": 0.1 * jax.random.normal(ks[4], (mid_ch,), jnp.float32),
        "w2b": jax.random.normal(ks[5], (out_ch, mid_ch, 3, 3), jnp.float32)
               / jnp.sqrt(mid_ch * 9.0),
    }
    if not same_shape:
        params["w1"] = (jax.random.normal(ks[6], (out_ch, in_ch, 1, 1), jnp.float32)
                        / jnp.sqrt(float(in_ch)))
    return params


if __name__ == "__main__":
    # ResBlock(in_channels=4, mid_channels=8, out_channels=8, stride=1)
    in_ch, mid_ch, out_ch = 4, 8, 8
    stride, dilation = 1, 1
    first_dilation = dilation                          # first_dilation=None path
    same_shape = (in_ch == out_ch) and (stride == 1)   # False -> conv_branch1 fused

    key = jax.random.PRNGKey(0)
    pkey, xkey = jax.random.split(key)
    raw = init_params(pkey, in_ch, mid_ch, out_ch, same_shape)
    packed, dims = pack_params(raw, in_ch, mid_ch, out_ch, same_shape)
    x = jax.random.normal(xkey, (2, in_ch, 16, 16), jnp.float32)    # NCHW like PyTorch

    fwd = jax.jit(resblock_forward,
                  static_argnames=("dims", "stride", "first_dilation", "dilation",
                                   "same_shape", "get_x_bn_relu"))
    out, x_bn_relu = fwd(packed, x, dims=dims, stride=stride,
                         first_dilation=first_dilation, dilation=dilation,
                         same_shape=same_shape, get_x_bn_relu=True)
    out = jax.block_until_ready(out)
    x_bn_relu = jax.block_until_ready(x_bn_relu)

    ref_out, ref_bnrelu = ref_forward(
        raw, x, stride=stride, first_dilation=first_dilation,
        dilation=dilation, same_shape=same_shape)

    assert out.shape == (2, out_ch, 16, 16), out.shape
    assert x_bn_relu.shape == (2, in_ch, 16, 16), x_bn_relu.shape
    assert jnp.allclose(out, ref_out, rtol=5e-2, atol=5e-2), \
        float(jnp.max(jnp.abs(out - ref_out)))
    assert jnp.allclose(x_bn_relu, ref_bnrelu, rtol=5e-2, atol=5e-2)
    print("KERNEL_OK")
</pallas_src>

<mosaic_0001>
module attributes {stable_mosaic.version = 11 : i64} {
  func.func @_affine_relu_kernel_f32_bf16(%arg0: i32, %arg1: memref<512x128xf32, #tpu.memory_space<vmem>>, %arg2: memref<1x128xf32, #tpu.memory_space<vmem>>, %arg3: memref<1x128xf32, #tpu.memory_space<vmem>>, %arg4: memref<512x128xf32, #tpu.memory_space<vmem>>, %arg5: memref<512x128xbf16, #tpu.memory_space<vmem>>) attributes {dimension_semantics = [#tpu.dimension_semantics<parallel>], iteration_bounds = array<i64: 1>, scalar_prefetch = 0 : i64, scratch_operands = 0 : i64, tpu.core_type = #tpu.core_type<tc>, window_params = [{transform_indices = @transform_0, window_bounds = array<i64: 512, 128>}, {pipeline_mode = #tpu.pipeline_mode<synchronous>, transform_indices = @transform_1, window_bounds = array<i64: 1, 128>}, {pipeline_mode = #tpu.pipeline_mode<synchronous>, transform_indices = @transform_2, window_bounds = array<i64: 1, 128>}, {transform_indices = @transform_3, window_bounds = array<i64: 512, 128>}, {transform_indices = @transform_4, window_bounds = array<i64: 512, 128>}]} {
    %c0 = arith.constant 0 : index
    %c0_0 = arith.constant 0 : index
    %0 = vector.load %arg1[%c0, %c0_0] : memref<512x128xf32, #tpu.memory_space<vmem>>, vector<512x128xf32>
    %c0_1 = arith.constant 0 : index
    %c0_2 = arith.constant 0 : index
    %1 = vector.load %arg2[%c0_1, %c0_2] : memref<1x128xf32, #tpu.memory_space<vmem>>, vector<1x128xf32>
    %2 = vector.broadcast %1 : vector<1x128xf32> to vector<512x128xf32>
    %3 = arith.mulf %0, %2 : vector<512x128xf32>
    %c0_3 = arith.constant 0 : index
    %c0_4 = arith.constant 0 : index
    %4 = vector.load %arg3[%c0_3, %c0_4] : memref<1x128xf32, #tpu.memory_space<vmem>>, vector<1x128xf32>
    %5 = vector.broadcast %4 : vector<1x128xf32> to vector<512x128xf32>
    %6 = arith.addf %3, %5 : vector<512x128xf32>
    %cst = arith.constant 0.000000e+00 : f32
    %7 = vector.broadcast %cst : f32 to vector<512x128xf32>
    %8 = arith.maximumf %6, %7 : vector<512x128xf32>
    %c0_5 = arith.constant 0 : index
    %c0_6 = arith.constant 0 : index
    %9 = vector.load %arg4[%c0_5, %c0_6] : memref<512x128xf32, #tpu.memory_space<vmem>>, vector<512x128xf32>
    tpu.vector_store %arg4[%c0_5, %c0_6], %8 {strides = array<i32>} : memref<512x128xf32, #tpu.memory_space<vmem>>, vector<512x128xf32>,
    %10 = arith.truncf %8 : vector<512x128xf32> to vector<512x128xbf16>
    %c0_7 = arith.constant 0 : index
    %c0_8 = arith.constant 0 : index
    %11 = vector.load %arg5[%c0_7, %c0_8] : memref<512x128xbf16, #tpu.memory_space<vmem>>, vector<512x128xbf16>
    tpu.vector_store %arg5[%c0_7, %c0_8], %10 {strides = array<i32>} : memref<512x128xbf16, #tpu.memory_space<vmem>>, vector<512x128xbf16>,
    return
  }
  func.func @transform_0(%arg0: i32) -> (i32, i32) {
    %c0_i32 = arith.constant 0 : i32
    %c0_i32_0 = arith.constant 0 : i32
    return %arg0, %c0_i32 : i32, i32
  }
  func.func @transform_1(%arg0: i32) -> (i32, i32) {
    %c0_i32 = arith.constant 0 : i32
    %c0_i32_0 = arith.constant 0 : i32
    %c0_i32_1 = arith.constant 0 : i32
    return %c0_i32, %c0_i32_0 : i32, i32
  }
  func.func @transform_2(%arg0: i32) -> (i32, i32) {
    %c0_i32 = arith.constant 0 : i32
    %c0_i32_0 = arith.constant 0 : i32
    %c0_i32_1 = arith.constant 0 : i32
    return %c0_i32, %c0_i32_0 : i32, i32
  }
  func.func @transform_3(%arg0: i32) -> (i32, i32) {
    %c0_i32 = arith.constant 0 : i32
    %c0_i32_0 = arith.constant 0 : i32
    return %arg0, %c0_i32 : i32, i32
  }
  func.func @transform_4(%arg0: i32) -> (i32, i32) {
    %c0_i32 = arith.constant 0 : i32
    %c0_i32_0 = arith.constant 0 : i32
    return %arg0, %c0_i32 : i32, i32
  }
}

module attributes {stable_mosaic.version = 11 : i64} {
  func.func @kernel(%arg0: i32, %arg1: i32, %arg2: i32, %arg3: memref<1x18x18x128xbf16, #tpu.memory_space<vmem>>, %arg4: memref<9x128x128xbf16, #tpu.memory_space<vmem>>, %arg5: memref<1x16x16x128xbf16, #tpu.memory_space<vmem>>, %arg6: memref<256x128xf32, #tpu.memory_space<vmem>>) attributes {dimension_semantics = [#tpu.dimension_semantics<parallel>, #tpu.dimension_semantics<parallel>, #tpu.dimension_semantics<arbitrary>], iteration_bounds = array<i64: 2, 1, 1>, scalar_prefetch = 0 : i64, scratch_operands = 1 : i64, tpu.core_type = #tpu.core_type<tc>, window_params = [{transform_indices = @transform_0, window_bounds = array<i64: 1, 18, 18, 128>}, {transform_indices = @transform_1, window_bounds = array<i64: 9, 128, 128>}, {transform_indices = @transform_2, window_bounds = array<i64: 1, 16, 16, 128>}]} {
    %c0_i32 = arith.constant 0 : i32
    %0 = arith.cmpi eq, %arg2, %c0_i32 : i32
    %1 = arith.extui %0 : i1 to i32
    %c0_i32_0 = arith.constant 0 : i32
    %2 = arith.cmpi ne, %1, %c0_i32_0 : i32
    scf.if %2 {
      %cst_37 = arith.constant 0.000000e+00 : f32
      %64 = vector.broadcast %cst_37 : f32 to vector<256x128xf32>
      %c0_38 = arith.constant 0 : index
      %c0_39 = arith.constant 0 : index
      %65 = vector.load %arg6[%c0_38, %c0_39] : memref<256x128xf32, #tpu.memory_space<vmem>>, vector<256x128xf32>
      tpu.vector_store %arg6[%c0_38, %c0_39], %64 {strides = array<i32>} : memref<256x128xf32, #tpu.memory_space<vmem>>, vector<256x128xf32>,
    } else {
    }
    %c0 = arith.constant 0 : index
    %c0_1 = arith.constant 0 : index
    %c0_2 = arith.constant 0 : index
    %c0_3 = arith.constant 0 : index
    %3 = vector.load %arg3[%c0, %c0_1, %c0_2, %c0_3] : memref<1x18x18x128xbf16, #tpu.memory_space<vmem>>, vector<1x18x18x128xbf16>
    %4 = vector.shape_cast %3 : vector<1x18x18x128xbf16> to vector<18x18x128xbf16>
    %5 = vector.extract_strided_slice %4 {offsets = [0, 0, 0], sizes = [16, 16, 128], strides = [1, 1, 1]} : vector<18x18x128xbf16> to vector<16x16x128xbf16>
    %6 = vector.shape_cast %5 : vector<16x16x128xbf16> to vector<256x128xbf16>
    %c0_4 = arith.constant 0 : index
    %c0_5 = arith.constant 0 : index
    %c0_6 = arith.constant 0 : index
    %7 = vector.load %arg4[%c0_4, %c0_5, %c0_6] : memref<9x128x128xbf16, #tpu.memory_space<vmem>>, vector<1x128x128xbf16>
    %8 = vector.shape_cast %7 : vector<1x128x128xbf16> to vector<128x128xbf16>
    %cst = arith.constant dense<0.000000e+00> : vector<256x128xf32>
    %9 = tpu.matmul %6, %8, %cst {dimension_numbers = #tpu.dot_dimension_numbers<[1], [0], [0], [1], [0, 0, 1, 1], [], []>} : vector<256x128xbf16>, vector<128x128xbf16>, vector<256x128xf32> -> vector<256x128xf32>
    %10 = vector.extract_strided_slice %4 {offsets = [0, 1, 0], sizes = [16, 16, 128], strides = [1, 1, 1]} : vector<18x18x128xbf16> to vector<16x16x128xbf16>
    %11 = vector.shape_cast %10 : vector<16x16x128xbf16> to vector<256x128xbf16>
    %c1 = arith.constant 1 : index
    %c0_7 = arith.constant 0 : index
    %c0_8 = arith.constant 0 : index
    %12 = vector.load %arg4[%c1, %c0_7, %c0_8] : memref<9x128x128xbf16, #tpu.memory_space<vmem>>, vector<1x128x128xbf16>
    %13 = vector.shape_cast %12 : vector<1x128x128xbf16> to vector<128x128xbf16>
    %cst_9 = arith.constant dense<0.000000e+00> : vector<256x128xf32>
    %14 = tpu.matmul %11, %13, %cst_9 {dimension_numbers = #tpu.dot_dimension_numbers<[1], [0], [0], [1], [0, 0, 1, 1], [], []>} : vector<256x128xbf16>, vector<128x128xbf16>, vector<256x128xf32> -> vector<256x128xf32>
    %15 = arith.addf %9, %14 : vector<256x128xf32>
    %16 = vector.extract_strided_slice %4 {offsets = [0, 2, 0], sizes = [16, 16, 128], strides = [1, 1, 1]} : vector<18x18x128xbf16> to vector<16x16x128xbf16>
    %17 = vector.shape_cast %16 : vector<16x16x128xbf16> to vector<256x128xbf16>
    %c2 = arith.constant 2 : index
    %c0_10 = arith.constant 0 : index
    %c0_11 = arith.constant 0 : index
    %18 = vector.load %arg4[%c2, %c0_10, %c0_11] : memref<9x128x128xbf16, #tpu.memory_space<vmem>>, vector<1x128x128xbf16>
    %19 = vector.shape_cast %18 : vector<1x128x128xbf16> to vector<128x128xbf16>
    %cst_12 = arith.constant dense<0.000000e+00> : vector<256x128xf32>
    %20 = tpu.matmul %17, %19, %cst_12 {dimension_numbers = #tpu.dot_dimension_numbers<[1], [0], [0], [1], [0, 0, 1, 1], [], []>} : vector<256x128xbf16>, vector<128x128xbf16>, vector<256x128xf32> -> vector<256x128xf32>
    %21 = arith.addf %15, %20 : vector<256x128xf32>
    %22 = vector.extract_strided_slice %4 {offsets = [1, 0, 0], sizes = [16, 16, 128], strides = [1, 1, 1]} : vector<18x18x128xbf16> to vector<16x16x128xbf16>
    %23 = vector.shape_cast %22 : vector<16x16x128xbf16> to vector<256x128xbf16>
    %c3 = arith.constant 3 : index
    %c0_13 = arith.constant 0 : index
    %c0_14 = arith.constant 0 : index
    %24 = vector.load %arg4[%c3, %c0_13, %c0_14] : memref<9x128x128xbf16, #tpu.memory_space<vmem>>, vector<1x128x128xbf16>
    %25 = vector.shape_cast %24 : vector<1x128x128xbf16> to vector<128x128xbf16>
    %cst_15 = arith.constant dense<0.000000e+00> : vector<256x128xf32>
    %26 = tpu.matmul %23, %25, %cst_15 {dimension_numbers = #tpu.dot_dimension_numbers<[1], [0], [0], [1], [0, 0, 1, 1], [], []>} : vector<256x128xbf16>, vector<128x128xbf16>, vector<256x128xf32> -> vector<256x128xf32>
    %27 = arith.addf %21, %26 : vector<256x128xf32>
    %28 = vector.extract_strided_slice %4 {offsets = [1, 1, 0], sizes = [16, 16, 128], strides = [1, 1, 1]} : vector<18x18x128xbf16> to vector<16x16x128xbf16>
    %29 = vector.shape_cast %28 : vector<16x16x128xbf16> to vector<256x128xbf16>
    %c4 = arith.constant 4 : index
    %c0_16 = arith.constant 0 : index
    %c0_17 = arith.constant 0 : index
    %30 = vector.load %arg4[%c4, %c0_16, %c0_17] : memref<9x128x128xbf16, #tpu.memory_space<vmem>>, vector<1x128x128xbf16>
    %31 = vector.shape_cast %30 : vector<1x128x128xbf16> to vector<128x128xbf16>
    %cst_18 = arith.constant dense<0.000000e+00> : vector<256x128xf32>
    %32 = tpu.matmul %29, %31, %cst_18 {dimension_numbers = #tpu.dot_dimension_numbers<[1], [0], [0], [1], [0, 0, 1, 1], [], []>} : vector<256x128xbf16>, vector<128x128xbf16>, vector<256x128xf32> -> vector<256x128xf32>
    %33 = arith.addf %27, %32 : vector<256x128xf32>
    %34 = vector.extract_strided_slice %4 {offsets = [1, 2, 0], sizes = [16, 16, 128], strides = [1, 1, 1]} : vector<18x18x128xbf16> to vector<16x16x128xbf16>
    %35 = vector.shape_cast %34 : vector<16x16x128xbf16> to vector<256x128xbf16>
    %c5 = arith.constant 5 : index
    %c0_19 = arith.constant 0 : index
    %c0_20 = arith.constant 0 : index
    %36 = vector.load %arg4[%c5, %c0_19, %c0_20] : memref<9x128x128xbf16, #tpu.memory_space<vmem>>, vector<1x128x128xbf16>
    %37 = vector.shape_cast %36 : vector<1x128x128xbf16> to vector<128x128xbf16>
    %cst_21 = arith.constant dense<0.000000e+00> : vector<256x128xf32>
    %38 = tpu.matmul %35, %37, %cst_21 {dimension_numbers = #tpu.dot_dimension_numbers<[1], [0], [0], [1], [0, 0, 1, 1], [], []>} : vector<256x128xbf16>, vector<128x128xbf16>, vector<256x128xf32> -> vector<256x128xf32>
    %39 = arith.addf %33, %38 : vector<256x128xf32>
    %40 = vector.extract_strided_slice %4 {offsets = [2, 0, 0], sizes = [16, 16, 128], strides = [1, 1, 1]} : vector<18x18x128xbf16> to vector<16x16x128xbf16>
    %41 = vector.shape_cast %40 : vector<16x16x128xbf16> to vector<256x128xbf16>
    %c6 = arith.constant 6 : index
    %c0_22 = arith.constant 0 : index
    %c0_23 = arith.constant 0 : index
    %42 = vector.load %arg4[%c6, %c0_22, %c0_23] : memref<9x128x128xbf16, #tpu.memory_space<vmem>>, vector<1x128x128xbf16>
    %43 = vector.shape_cast %42 : vector<1x128x128xbf16> to vector<128x128xbf16>
    %cst_24 = arith.constant dense<0.000000e+00> : vector<256x128xf32>
    %44 = tpu.matmul %41, %43, %cst_24 {dimension_numbers = #tpu.dot_dimension_numbers<[1], [0], [0], [1], [0, 0, 1, 1], [], []>} : vector<256x128xbf16>, vector<128x128xbf16>, vector<256x128xf32> -> vector<256x128xf32>
    %45 = arith.addf %39, %44 : vector<256x128xf32>
    %46 = vector.extract_strided_slice %4 {offsets = [2, 1, 0], sizes = [16, 16, 128], strides = [1, 1, 1]} : vector<18x18x128xbf16> to vector<16x16x128xbf16>
    %47 = vector.shape_cast %46 : vector<16x16x128xbf16> to vector<256x128xbf16>
    %c7 = arith.constant 7 : index
    %c0_25 = arith.constant 0 : index
    %c0_26 = arith.constant 0 : index
    %48 = vector.load %arg4[%c7, %c0_25, %c0_26] : memref<9x128x128xbf16, #tpu.memory_space<vmem>>, vector<1x128x128xbf16>
    %49 = vector.shape_cast %48 : vector<1x128x128xbf16> to vector<128x128xbf16>
    %cst_27 = arith.constant dense<0.000000e+00> : vector<256x128xf32>
    %50 = tpu.matmul %47, %49, %cst_27 {dimension_numbers = #tpu.dot_dimension_numbers<[1], [0], [0], [1], [0, 0, 1, 1], [], []>} : vector<256x128xbf16>, vector<128x128xbf16>, vector<256x128xf32> -> vector<256x128xf32>
    %51 = arith.addf %45, %50 : vector<256x128xf32>
    %52 = vector.extract_strided_slice %4 {offsets = [2, 2, 0], sizes = [16, 16, 128], strides = [1, 1, 1]} : vector<18x18x128xbf16> to vector<16x16x128xbf16>
    %53 = vector.shape_cast %52 : vector<16x16x128xbf16> to vector<256x128xbf16>
    %c8 = arith.constant 8 : index
    %c0_28 = arith.constant 0 : index
    %c0_29 = arith.constant 0 : index
    %54 = vector.load %arg4[%c8, %c0_28, %c0_29] : memref<9x128x128xbf16, #tpu.memory_space<vmem>>, vector<1x128x128xbf16>
    %55 = vector.shape_cast %54 : vector<1x128x128xbf16> to vector<128x128xbf16>
    %cst_30 = arith.constant dense<0.000000e+00> : vector<256x128xf32>
    %56 = tpu.matmul %53, %55, %cst_30 {dimension_numbers = #tpu.dot_dimension_numbers<[1], [0], [0], [1], [0, 0, 1, 1], [], []>} : vector<256x128xbf16>, vector<128x128xbf16>, vector<256x128xf32> -> vector<256x128xf32>
    %57 = arith.addf %51, %56 : vector<256x128xf32>
    %c0_31 = arith.constant 0 : index
    %c0_32 = arith.constant 0 : index
    %58 = vector.load %arg6[%c0_31, %c0_32] : memref<256x128xf32, #tpu.memory_space<vmem>>, vector<256x128xf32>
    %59 = arith.addf %58, %57 : vector<256x128xf32>
    %c0_33 = arith.constant 0 : index
    %c0_34 = arith.constant 0 : index
    %60 = vector.load %arg6[%c0_33, %c0_34] : memref<256x128xf32, #tpu.memory_space<vmem>>, vector<256x128xf32>
    tpu.vector_store %arg6[%c0_33, %c0_34], %59 {strides = array<i32>} : memref<256x128xf32, #tpu.memory_space<vmem>>, vector<256x128xf32>,
    %c0_i32_35 = arith.constant 0 : i32
    %61 = arith.cmpi eq, %arg2, %c0_i32_35 : i32
    %62 = arith.extui %61 : i1 to i32
    %c0_i32_36 = arith.constant 0 : i32
    %63 = arith.cmpi ne, %62, %c0_i32_36 : i32
    scf.if %63 {
      %c0_37 = arith.constant 0 : index
      %c0_38 = arith.constant 0 : index
      %64 = vector.load %arg6[%c0_37, %c0_38] : memref<256x128xf32, #tpu.memory_space<vmem>>, vector<256x128xf32>
      %65 = vector.shape_cast %64 : vector<256x128xf32> to vector<16x16x128xf32>
      %66 = arith.truncf %65 : vector<16x16x128xf32> to vector<16x16x128xbf16>
      %c0_39 = arith.constant 0 : index
      %c0_40 = arith.constant 0 : index
      %c0_41 = arith.constant 0 : index
      %c0_42 = arith.constant 0 : index
      %67 = vector.load %arg5[%c0_39, %c0_40, %c0_41, %c0_42] : memref<1x16x16x128xbf16, #tpu.memory_space<vmem>>, vector<1x16x16x128xbf16>
      %68 = vector.shape_cast %67 : vector<1x16x16x128xbf16> to vector<16x16x128xbf16>
      %69 = vector.shape_cast %66 : vector<16x16x128xbf16> to vector<1x16x16x128xbf16>
      tpu.vector_store %arg5[%c0_39, %c0_40, %c0_41, %c0_42], %69 {strides = array<i32>} : memref<1x16x16x128xbf16, #tpu.memory_space<vmem>>, vector<1x16x16x128xbf16>,
    } else {
    }
    return
  }
  func.func @transform_0(%arg0: i32, %arg1: i32, %arg2: i32) -> (i32, i32, i32, i32) {
    %c0_i32 = arith.constant 0 : i32
    %c0_i32_0 = arith.constant 0 : i32
    %c0_i32_1 = arith.constant 0 : i32
    return %arg0, %c0_i32, %c0_i32_0, %arg2 : i32, i32, i32, i32
  }
  func.func @transform_1(%arg0: i32, %arg1: i32, %arg2: i32) -> (i32, i32, i32) {
    %c0_i32 = arith.constant 0 : i32
    %c0_i32_0 = arith.constant 0 : i32
    return %c0_i32, %arg2, %arg1 : i32, i32, i32
  }
  func.func @transform_2(%arg0: i32, %arg1: i32, %arg2: i32) -> (i32, i32, i32, i32) {
    %c0_i32 = arith.constant 0 : i32
    %c0_i32_0 = arith.constant 0 : i32
    %c0_i32_1 = arith.constant 0 : i32
    return %arg0, %c0_i32, %c0_i32_0, %arg1 : i32, i32, i32, i32
  }
}

module attributes {stable_mosaic.version = 11 : i64} {
  func.func @_affine_relu_kernel_bf16(%arg0: i32, %arg1: memref<512x128xbf16, #tpu.memory_space<vmem>>, %arg2: memref<1x128xf32, #tpu.memory_space<vmem>>, %arg3: memref<1x128xf32, #tpu.memory_space<vmem>>, %arg4: memref<512x128xbf16, #tpu.memory_space<vmem>>) attributes {dimension_semantics = [#tpu.dimension_semantics<parallel>], iteration_bounds = array<i64: 1>, scalar_prefetch = 0 : i64, scratch_operands = 0 : i64, tpu.core_type = #tpu.core_type<tc>, window_params = [{transform_indices = @transform_0, window_bounds = array<i64: 512, 128>}, {pipeline_mode = #tpu.pipeline_mode<synchronous>, transform_indices = @transform_1, window_bounds = array<i64: 1, 128>}, {pipeline_mode = #tpu.pipeline_mode<synchronous>, transform_indices = @transform_2, window_bounds = array<i64: 1, 128>}, {transform_indices = @transform_3, window_bounds = array<i64: 512, 128>}]} {
    %c0 = arith.constant 0 : index
    %c0_0 = arith.constant 0 : index
    %0 = vector.load %arg1[%c0, %c0_0] : memref<512x128xbf16, #tpu.memory_space<vmem>>, vector<512x128xbf16>
    %1 = arith.extf %0 : vector<512x128xbf16> to vector<512x128xf32>
    %c0_1 = arith.constant 0 : index
    %c0_2 = arith.constant 0 : index
    %2 = vector.load %arg2[%c0_1, %c0_2] : memref<1x128xf32, #tpu.memory_space<vmem>>, vector<1x128xf32>
    %3 = vector.broadcast %2 : vector<1x128xf32> to vector<512x128xf32>
    %4 = arith.mulf %1, %3 : vector<512x128xf32>
    %c0_3 = arith.constant 0 : index
    %c0_4 = arith.constant 0 : index
    %5 = vector.load %arg3[%c0_3, %c0_4] : memref<1x128xf32, #tpu.memory_space<vmem>>, vector<1x128xf32>
    %6 = vector.broadcast %5 : vector<1x128xf32> to vector<512x128xf32>
    %7 = arith.addf %4, %6 : vector<512x128xf32>
    %cst = arith.constant 0.000000e+00 : f32
    %8 = vector.broadcast %cst : f32 to vector<512x128xf32>
    %9 = arith.maximumf %7, %8 : vector<512x128xf32>
    %10 = arith.truncf %9 : vector<512x128xf32> to vector<512x128xbf16>
    %c0_5 = arith.constant 0 : index
    %c0_6 = arith.constant 0 : index
    %11 = vector.load %arg4[%c0_5, %c0_6] : memref<512x128xbf16, #tpu.memory_space<vmem>>, vector<512x128xbf16>
    tpu.vector_store %arg4[%c0_5, %c0_6], %10 {strides = array<i32>} : memref<512x128xbf16, #tpu.memory_space<vmem>>, vector<512x128xbf16>,
    return
  }
  func.func @transform_0(%arg0: i32) -> (i32, i32) {
    %c0_i32 = arith.constant 0 : i32
    %c0_i32_0 = arith.constant 0 : i32
    return %arg0, %c0_i32 : i32, i32
  }
  func.func @transform_1(%arg0: i32) -> (i32, i32) {
    %c0_i32 = arith.constant 0 : i32
    %c0_i32_0 = arith.constant 0 : i32
    %c0_i32_1 = arith.constant 0 : i32
    return %c0_i32, %c0_i32_0 : i32, i32
  }
  func.func @transform_2(%arg0: i32) -> (i32, i32) {
    %c0_i32 = arith.constant 0 : i32
    %c0_i32_0 = arith.constant 0 : i32
    %c0_i32_1 = arith.constant 0 : i32
    return %c0_i32, %c0_i32_0 : i32, i32
  }
  func.func @transform_3(%arg0: i32) -> (i32, i32) {
    %c0_i32 = arith.constant 0 : i32
    %c0_i32_0 = arith.constant 0 : i32
    return %arg0, %c0_i32 : i32, i32
  }
}

module attributes {stable_mosaic.version = 11 : i64} {
  func.func @kernel(%arg0: i32, %arg1: i32, %arg2: i32, %arg3: memref<1x18x18x128xbf16, #tpu.memory_space<vmem>>, %arg4: memref<9x128x128xbf16, #tpu.memory_space<vmem>>, %arg5: memref<1x16x16x128xbf16, #tpu.memory_space<vmem>>, %arg6: memref<128x128xbf16, #tpu.memory_space<vmem>>, %arg7: memref<1x16x16x128xf32, #tpu.memory_space<vmem>>, %arg8: memref<256x128xf32, #tpu.memory_space<vmem>>) attributes {dimension_semantics = [#tpu.dimension_semantics<parallel>, #tpu.dimension_semantics<parallel>, #tpu.dimension_semantics<arbitrary>], iteration_bounds = array<i64: 2, 1, 1>, scalar_prefetch = 0 : i64, scratch_operands = 1 : i64, tpu.core_type = #tpu.core_type<tc>, window_params = [{transform_indices = @transform_0, window_bounds = array<i64: 1, 18, 18, 128>}, {transform_indices = @transform_1, window_bounds = array<i64: 9, 128, 128>}, {transform_indices = @transform_2, window_bounds = array<i64: 1, 16, 16, 128>}, {transform_indices = @transform_3, window_bounds = array<i64: 128, 128>}, {transform_indices = @transform_4, window_bounds = array<i64: 1, 16, 16, 128>}]} {
    %c0_i32 = arith.constant 0 : i32
    %0 = arith.cmpi eq, %arg2, %c0_i32 : i32
    %1 = arith.extui %0 : i1 to i32
    %c0_i32_0 = arith.constant 0 : i32
    %2 = arith.cmpi ne, %1, %c0_i32_0 : i32
    scf.if %2 {
      %c0_37 = arith.constant 0 : index
      %c0_38 = arith.constant 0 : index
      %c0_39 = arith.constant 0 : index
      %c0_40 = arith.constant 0 : index
      %64 = vector.load %arg5[%c0_37, %c0_38, %c0_39, %c0_40] : memref<1x16x16x128xbf16, #tpu.memory_space<vmem>>, vector<1x16x16x128xbf16>
      %65 = vector.shape_cast %64 : vector<1x16x16x128xbf16> to vector<16x16x128xbf16>
      %66 = vector.shape_cast %65 : vector<16x16x128xbf16> to vector<256x128xbf16>
      %c0_41 = arith.constant 0 : index
      %c0_42 = arith.constant 0 : index
      %67 = vector.load %arg6[%c0_41, %c0_42] : memref<128x128xbf16, #tpu.memory_space<vmem>>, vector<128x128xbf16>
      %cst_43 = arith.constant dense<0.000000e+00> : vector<256x128xf32>
      %68 = tpu.matmul %66, %67, %cst_43 {dimension_numbers = #tpu.dot_dimension_numbers<[1], [0], [0], [1], [0, 0, 1, 1], [], []>} : vector<256x128xbf16>, vector<128x128xbf16>, vector<256x128xf32> -> vector<256x128xf32>
      %c0_44 = arith.constant 0 : index
      %c0_45 = arith.constant 0 : index
      %69 = vector.load %arg8[%c0_44, %c0_45] : memref<256x128xf32, #tpu.memory_space<vmem>>, vector<256x128xf32>
      tpu.vector_store %arg8[%c0_44, %c0_45], %68 {strides = array<i32>} : memref<256x128xf32, #tpu.memory_space<vmem>>, vector<256x128xf32>,
    } else {
    }
    %c0 = arith.constant 0 : index
    %c0_1 = arith.constant 0 : index
    %c0_2 = arith.constant 0 : index
    %c0_3 = arith.constant 0 : index
    %3 = vector.load %arg3[%c0, %c0_1, %c0_2, %c0_3] : memref<1x18x18x128xbf16, #tpu.memory_space<vmem>>, vector<1x18x18x128xbf16>
    %4 = vector.shape_cast %3 : vector<1x18x18x128xbf16> to vector<18x18x128xbf16>
    %5 = vector.extract_strided_slice %4 {offsets = [0, 0, 0], sizes = [16, 16, 128], strides = [1, 1, 1]} : vector<18x18x128xbf16> to vector<16x16x128xbf16>
    %6 = vector.shape_cast %5 : vector<16x16x128xbf16> to vector<256x128xbf16>
    %c0_4 = arith.constant 0 : index
    %c0_5 = arith.constant 0 : index
    %c0_6 = arith.constant 0 : index
    %7 = vector.load %arg4[%c0_4, %c0_5, %c0_6] : memref<9x128x128xbf16, #tpu.memory_space<vmem>>, vector<1x128x128xbf16>
    %8 = vector.shape_cast %7 : vector<1x128x128xbf16> to vector<128x128xbf16>
    %cst = arith.constant dense<0.000000e+00> : vector<256x128xf32>
    %9 = tpu.matmul %6, %8, %cst {dimension_numbers = #tpu.dot_dimension_numbers<[1], [0], [0], [1], [0, 0, 1, 1], [], []>} : vector<256x128xbf16>, vector<128x128xbf16>, vector<256x128xf32> -> vector<256x128xf32>
    %10 = vector.extract_strided_slice %4 {offsets = [0, 1, 0], sizes = [16, 16, 128], strides = [1, 1, 1]} : vector<18x18x128xbf16> to vector<16x16x128xbf16>
    %11 = vector.shape_cast %10 : vector<16x16x128xbf16> to vector<256x128xbf16>
    %c1 = arith.constant 1 : index
    %c0_7 = arith.constant 0 : index
    %c0_8 = arith.constant 0 : index
    %12 = vector.load %arg4[%c1, %c0_7, %c0_8] : memref<9x128x128xbf16, #tpu.memory_space<vmem>>, vector<1x128x128xbf16>
    %13 = vector.shape_cast %12 : vector<1x128x128xbf16> to vector<128x128xbf16>
    %cst_9 = arith.constant dense<0.000000e+00> : vector<256x128xf32>
    %14 = tpu.matmul %11, %13, %cst_9 {dimension_numbers = #tpu.dot_dimension_numbers<[1], [0], [0], [1], [0, 0, 1, 1], [], []>} : vector<256x128xbf16>, vector<128x128xbf16>, vector<256x128xf32> -> vector<256x128xf32>
    %15 = arith.addf %9, %14 : vector<256x128xf32>
    %16 = vector.extract_strided_slice %4 {offsets = [0, 2, 0], sizes = [16, 16, 128], strides = [1, 1, 1]} : vector<18x18x128xbf16> to vector<16x16x128xbf16>
    %17 = vector.shape_cast %16 : vector<16x16x128xbf16> to vector<256x128xbf16>
    %c2 = arith.constant 2 : index
    %c0_10 = arith.constant 0 : index
    %c0_11 = arith.constant 0 : index
    %18 = vector.load %arg4[%c2, %c0_10, %c0_11] : memref<9x128x128xbf16, #tpu.memory_space<vmem>>, vector<1x128x128xbf16>
    %19 = vector.shape_cast %18 : vector<1x128x128xbf16> to vector<128x128xbf16>
    %cst_12 = arith.constant dense<0.000000e+00> : vector<256x128xf32>
    %20 = tpu.matmul %17, %19, %cst_12 {dimension_numbers = #tpu.dot_dimension_numbers<[1], [0], [0], [1], [0, 0, 1, 1], [], []>} : vector<256x128xbf16>, vector<128x128xbf16>, vector<256x128xf32> -> vector<256x128xf32>
    %21 = arith.addf %15, %20 : vector<256x128xf32>
    %22 = vector.extract_strided_slice %4 {offsets = [1, 0, 0], sizes = [16, 16, 128], strides = [1, 1, 1]} : vector<18x18x128xbf16> to vector<16x16x128xbf16>
    %23 = vector.shape_cast %22 : vector<16x16x128xbf16> to vector<256x128xbf16>
    %c3 = arith.constant 3 : index
    %c0_13 = arith.constant 0 : index
    %c0_14 = arith.constant 0 : index
    %24 = vector.load %arg4[%c3, %c0_13, %c0_14] : memref<9x128x128xbf16, #tpu.memory_space<vmem>>, vector<1x128x128xbf16>
    %25 = vector.shape_cast %24 : vector<1x128x128xbf16> to vector<128x128xbf16>
    %cst_15 = arith.constant dense<0.000000e+00> : vector<256x128xf32>
    %26 = tpu.matmul %23, %25, %cst_15 {dimension_numbers = #tpu.dot_dimension_numbers<[1], [0], [0], [1], [0, 0, 1, 1], [], []>} : vector<256x128xbf16>, vector<128x128xbf16>, vector<256x128xf32> -> vector<256x128xf32>
    %27 = arith.addf %21, %26 : vector<256x128xf32>
    %28 = vector.extract_strided_slice %4 {offsets = [1, 1, 0], sizes = [16, 16, 128], strides = [1, 1, 1]} : vector<18x18x128xbf16> to vector<16x16x128xbf16>
    %29 = vector.shape_cast %28 : vector<16x16x128xbf16> to vector<256x128xbf16>
    %c4 = arith.constant 4 : index
    %c0_16 = arith.constant 0 : index
    %c0_17 = arith.constant 0 : index
    %30 = vector.load %arg4[%c4, %c0_16, %c0_17] : memref<9x128x128xbf16, #tpu.memory_space<vmem>>, vector<1x128x128xbf16>
    %31 = vector.shape_cast %30 : vector<1x128x128xbf16> to vector<128x128xbf16>
    %cst_18 = arith.constant dense<0.000000e+00> : vector<256x128xf32>
    %32 = tpu.matmul %29, %31, %cst_18 {dimension_numbers = #tpu.dot_dimension_numbers<[1], [0], [0], [1], [0, 0, 1, 1], [], []>} : vector<256x128xbf16>, vector<128x128xbf16>, vector<256x128xf32> -> vector<256x128xf32>
    %33 = arith.addf %27, %32 : vector<256x128xf32>
    %34 = vector.extract_strided_slice %4 {offsets = [1, 2, 0], sizes = [16, 16, 128], strides = [1, 1, 1]} : vector<18x18x128xbf16> to vector<16x16x128xbf16>
    %35 = vector.shape_cast %34 : vector<16x16x128xbf16> to vector<256x128xbf16>
    %c5 = arith.constant 5 : index
    %c0_19 = arith.constant 0 : index
    %c0_20 = arith.constant 0 : index
    %36 = vector.load %arg4[%c5, %c0_19, %c0_20] : memref<9x128x128xbf16, #tpu.memory_space<vmem>>, vector<1x128x128xbf16>
    %37 = vector.shape_cast %36 : vector<1x128x128xbf16> to vector<128x128xbf16>
    %cst_21 = arith.constant dense<0.000000e+00> : vector<256x128xf32>
    %38 = tpu.matmul %35, %37, %cst_21 {dimension_numbers = #tpu.dot_dimension_numbers<[1], [0], [0], [1], [0, 0, 1, 1], [], []>} : vector<256x128xbf16>, vector<128x128xbf16>, vector<256x128xf32> -> vector<256x128xf32>
    %39 = arith.addf %33, %38 : vector<256x128xf32>
    %40 = vector.extract_strided_slice %4 {offsets = [2, 0, 0], sizes = [16, 16, 128], strides = [1, 1, 1]} : vector<18x18x128xbf16> to vector<16x16x128xbf16>
    %41 = vector.shape_cast %40 : vector<16x16x128xbf16> to vector<256x128xbf16>
    %c6 = arith.constant 6 : index
    %c0_22 = arith.constant 0 : index
    %c0_23 = arith.constant 0 : index
    %42 = vector.load %arg4[%c6, %c0_22, %c0_23] : memref<9x128x128xbf16, #tpu.memory_space<vmem>>, vector<1x128x128xbf16>
    %43 = vector.shape_cast %42 : vector<1x128x128xbf16> to vector<128x128xbf16>
    %cst_24 = arith.constant dense<0.000000e+00> : vector<256x128xf32>
    %44 = tpu.matmul %41, %43, %cst_24 {dimension_numbers = #tpu.dot_dimension_numbers<[1], [0], [0], [1], [0, 0, 1, 1], [], []>} : vector<256x128xbf16>, vector<128x128xbf16>, vector<256x128xf32> -> vector<256x128xf32>
    %45 = arith.addf %39, %44 : vector<256x128xf32>
    %46 = vector.extract_strided_slice %4 {offsets = [2, 1, 0], sizes = [16, 16, 128], strides = [1, 1, 1]} : vector<18x18x128xbf16> to vector<16x16x128xbf16>
    %47 = vector.shape_cast %46 : vector<16x16x128xbf16> to vector<256x128xbf16>
    %c7 = arith.constant 7 : index
    %c0_25 = arith.constant 0 : index
    %c0_26 = arith.constant 0 : index
    %48 = vector.load %arg4[%c7, %c0_25, %c0_26] : memref<9x128x128xbf16, #tpu.memory_space<vmem>>, vector<1x128x128xbf16>
    %49 = vector.shape_cast %48 : vector<1x128x128xbf16> to vector<128x128xbf16>
    %cst_27 = arith.constant dense<0.000000e+00> : vector<256x128xf32>
    %50 = tpu.matmul %47, %49, %cst_27 {dimension_numbers = #tpu.dot_dimension_numbers<[1], [0], [0], [1], [0, 0, 1, 1], [], []>} : vector<256x128xbf16>, vector<128x128xbf16>, vector<256x128xf32> -> vector<256x128xf32>
    %51 = arith.addf %45, %50 : vector<256x128xf32>
    %52 = vector.extract_strided_slice %4 {offsets = [2, 2, 0], sizes = [16, 16, 128], strides = [1, 1, 1]} : vector<18x18x128xbf16> to vector<16x16x128xbf16>
    %53 = vector.shape_cast %52 : vector<16x16x128xbf16> to vector<256x128xbf16>
    %c8 = arith.constant 8 : index
    %c0_28 = arith.constant 0 : index
    %c0_29 = arith.constant 0 : index
    %54 = vector.load %arg4[%c8, %c0_28, %c0_29] : memref<9x128x128xbf16, #tpu.memory_space<vmem>>, vector<1x128x128xbf16>
    %55 = vector.shape_cast %54 : vector<1x128x128xbf16> to vector<128x128xbf16>
    %cst_30 = arith.constant dense<0.000000e+00> : vector<256x128xf32>
    %56 = tpu.matmul %53, %55, %cst_30 {dimension_numbers = #tpu.dot_dimension_numbers<[1], [0], [0], [1], [0, 0, 1, 1], [], []>} : vector<256x128xbf16>, vector<128x128xbf16>, vector<256x128xf32> -> vector<256x128xf32>
    %57 = arith.addf %51, %56 : vector<256x128xf32>
    %c0_31 = arith.constant 0 : index
    %c0_32 = arith.constant 0 : index
    %58 = vector.load %arg8[%c0_31, %c0_32] : memref<256x128xf32, #tpu.memory_space<vmem>>, vector<256x128xf32>
    %59 = arith.addf %58, %57 : vector<256x128xf32>
    %c0_33 = arith.constant 0 : index
    %c0_34 = arith.constant 0 : index
    %60 = vector.load %arg8[%c0_33, %c0_34] : memref<256x128xf32, #tpu.memory_space<vmem>>, vector<256x128xf32>
    tpu.vector_store %arg8[%c0_33, %c0_34], %59 {strides = array<i32>} : memref<256x128xf32, #tpu.memory_space<vmem>>, vector<256x128xf32>,
    %c0_i32_35 = arith.constant 0 : i32
    %61 = arith.cmpi eq, %arg2, %c0_i32_35 : i32
    %62 = arith.extui %61 : i1 to i32
    %c0_i32_36 = arith.constant 0 : i32
    %63 = arith.cmpi ne, %62, %c0_i32_36 : i32
    scf.if %63 {
      %c0_37 = arith.constant 0 : index
      %c0_38 = arith.constant 0 : index
      %64 = vector.load %arg8[%c0_37, %c0_38] : memref<256x128xf32, #tpu.memory_space<vmem>>, vector<256x128xf32>
      %65 = vector.shape_cast %64 : vector<256x128xf32> to vector<16x16x128xf32>
      %c0_39 = arith.constant 0 : index
      %c0_40 = arith.constant 0 : index
      %c0_41 = arith.constant 0 : index
      %c0_42 = arith.constant 0 : index
      %66 = vector.load %arg7[%c0_39, %c0_40, %c0_41, %c0_42] : memref<1x16x16x128xf32, #tpu.memory_space<vmem>>, vector<1x16x16x128xf32>
      %67 = vector.shape_cast %66 : vector<1x16x16x128xf32> to vector<16x16x128xf32>
      %68 = vector.shape_cast %65 : vector<16x16x128xf32> to vector<1x16x16x128xf32>
      tpu.vector_store %arg7[%c0_39, %c0_40, %c0_41, %c0_42], %68 {strides = array<i32>} : memref<1x16x16x128xf32, #tpu.memory_space<vmem>>, vector<1x16x16x128xf32>,
    } else {
    }
    return
  }
  func.func @transform_0(%arg0: i32, %arg1: i32, %arg2: i32) -> (i32, i32, i32, i32) {
    %c0_i32 = arith.constant 0 : i32
    %c0_i32_0 = arith.constant 0 : i32
    %c0_i32_1 = arith.constant 0 : i32
    return %arg0, %c0_i32, %c0_i32_0, %arg2 : i32, i32, i32, i32
  }
  func.func @transform_1(%arg0: i32, %arg1: i32, %arg2: i32) -> (i32, i32, i32) {
    %c0_i32 = arith.constant 0 : i32
    %c0_i32_0 = arith.constant 0 : i32
    return %c0_i32, %arg2, %arg1 : i32, i32, i32
  }
  func.func @transform_2(%arg0: i32, %arg1: i32, %arg2: i32) -> (i32, i32, i32, i32) {
    %c0_i32 = arith.constant 0 : i32
    %c0_i32_0 = arith.constant 0 : i32
    %c0_i32_1 = arith.constant 0 : i32
    %c0_i32_2 = arith.constant 0 : i32
    return %arg0, %c0_i32, %c0_i32_0, %c0_i32_1 : i32, i32, i32, i32
  }
  func.func @transform_3(%arg0: i32, %arg1: i32, %arg2: i32) -> (i32, i32) {
    %c0_i32 = arith.constant 0 : i32
    %c0_i32_0 = arith.constant 0 : i32
    return %c0_i32, %arg1 : i32, i32
  }
  func.func @transform_4(%arg0: i32, %arg1: i32, %arg2: i32) -> (i32, i32, i32, i32) {
    %c0_i32 = arith.constant 0 : i32
    %c0_i32_0 = arith.constant 0 : i32
    %c0_i32_1 = arith.constant 0 : i32
    return %arg0, %c0_i32, %c0_i32_0, %arg1 : i32, i32, i32, i32
  }
}

</mosaic_0001>

<llo_original>
// kernel: resblock_forward.4
$region0: #{resblock_forward.4}
  #allocation0 [shape = 'u32[]', space=smem, size = 0x4, offset = 0x4, fixed_abs, tag = 'smem constant byte address 0x4 - core index']
  #allocation1 [shape = 'u32[72,128]{1,0:T(1,128)}', space=vmem, size = 0x9000, scoped, tag = 'internal scratch']
  %s0 = inlined_call_operand.vmem [shape: f32[512,128], index: 0, kind: input, shape index: {}]
  %s1 = inlined_call_operand.vmem [shape: f32[1,128], index: 1, kind: input, shape index: {}]
  %s2 = inlined_call_operand.vmem [shape: f32[1,128], index: 2, kind: input, shape index: {}]
  %s3 = inlined_call_operand.vmem [shape: f32[512,128], index: 3, kind: output, shape index: {0}]
  %s4 = inlined_call_operand.vmem [shape: bf16[512,128], index: 4, kind: output, shape index: {1}]
  %5 = xla_tuple %s3, %s4
  %s6 = sld [smem:[#allocation0]]
  $region30: #{resblock_forward.4} parent=0
    _
  %s8 = ssub.s32 1, %s6
  %s9 = scalar_select 0, %s8, %s6
  // Predicated region
  $region2: #{resblock_forward.4} parent=0 // pred_check
    _
  $region3: #{resblock_forward.4} parent=0 // pred_check_branch
    %11 = sbr.rel (0) target = $region5
  $region4: #{resblock_forward.4} parent=0 // pred_region
    _
  $region5: #{resblock_forward.4} parent=0 // pred_fallthru
    _
  // Predicated region
  $region6: #{resblock_forward.4} parent=0 // pred_check
    _
  $region7: #{resblock_forward.4} parent=0 // pred_check_branch
    %13 = sbr.rel (0) target = $region9
  $region8: #{resblock_forward.4} parent=0 // pred_region
    _
  $region9: #{resblock_forward.4} parent=0 // pred_fallthru
    _
  // Predicated region
  $region10: #{resblock_forward.4} parent=0 // pred_check
    _
  $region11: #{resblock_forward.4} parent=0 // pred_check_branch
    %15 = sbr.rel (0) target = $region13
  $region12: #{resblock_forward.4} parent=0 // pred_region
    _
  $region13: #{resblock_forward.4} parent=0 // pred_fallthru
    _
  %v16 = vld [vmem:[%s0] sm:$0xff]
  %v17 = vld [vmem:[%s0 + $0x8] sm:$0xff]
  %v18 = vld [vmem:[%s0 + $0x10] sm:$0xff]
  %v19 = vld [vmem:[%s0 + $0x18] sm:$0xff]
  %v20 = vld [vmem:[%s0 + $0x20] sm:$0xff]
  %v21 = vld [vmem:[%s0 + $0x28] sm:$0xff]
  %v22 = vld [vmem:[%s0 + $0x30] sm:$0xff]
  %v23 = vld [vmem:[%s0 + $0x38] sm:$0xff]
  %v24 = vld [vmem:[%s0 + $0x40] sm:$0xff]
  %v25 = vld [vmem:[%s0 + $0x48] sm:$0xff]
  %v26 = vld [vmem:[%s0 + $0x50] sm:$0xff]
  %v27 = vld [vmem:[%s0 + $0x58] sm:$0xff]
  %v28 = vld [vmem:[%s0 + $0x60] sm:$0xff]
  %v29 = vld [vmem:[%s0 + $0x68] sm:$0xff]
  %v30 = vld [vmem:[%s0 + $0x70] sm:$0xff]
  %v31 = vld [vmem:[%s0 + $0x78] sm:$0xff]
  %v32 = vld [vmem:[%s0 + $0x80] sm:$0xff]
  %v33 = vld [vmem:[%s0 + $0x88] sm:$0xff]
  %v34 = vld [vmem:[%s0 + $0x90] sm:$0xff]
  %v35 = vld [vmem:[%s0 + $0x98] sm:$0xff]
  %v36 = vld [vmem:[%s0 + $0xa0] sm:$0xff]
  %v37 = vld [vmem:[%s0 + $0xa8] sm:$0xff]
  %v38 = vld [vmem:[%s0 + $0xb0] sm:$0xff]
  %v39 = vld [vmem:[%s0 + $0xb8] sm:$0xff]
  %v40 = vld [vmem:[%s0 + $0xc0] sm:$0xff]
  %v41 = vld [vmem:[%s0 + $0xc8] sm:$0xff]
  %v42 = vld [vmem:[%s0 + $0xd0] sm:$0xff]
  %v43 = vld [vmem:[%s0 + $0xd8] sm:$0xff]
  %v44 = vld [vmem:[%s0 + $0xe0] sm:$0xff]
  %v45 = vld [vmem:[%s0 + $0xe8] sm:$0xff]
  %v46 = vld [vmem:[%s0 + $0xf0] sm:$0xff]
  %v47 = vld [vmem:[%s0 + $0xf8] sm:$0xff]
  %v48 = vld [vmem:[%s0 + $0x100] sm:$0xff]
  %v49 = vld [vmem:[%s0 + $0x108] sm:$0xff]
  %v50 = vld [vmem:[%s0 + $0x110] sm:$0xff]
  %v51 = vld [vmem:[%s0 + $0x118] sm:$0xff]
  %v52 = vld [vmem:[%s0 + $0x120] sm:$0xff]
  %v53 = vld [vmem:[%s0 + $0x128] sm:$0xff]
  %v54 = vld [vmem:[%s0 + $0x130] sm:$0xff]
  %v55 = vld [vmem:[%s0 + $0x138] sm:$0xff]
  %v56 = vld [vmem:[%s0 + $0x140] sm:$0xff]
  %v57 = vld [vmem:[%s0 + $0x148] sm:$0xff]
  %v58 = vld [vmem:[%s0 + $0x150] sm:$0xff]
  %v59 = vld [vmem:[%s0 + $0x158] sm:$0xff]
  %v60 = vld [vmem:[%s0 + $0x160] sm:$0xff]
  %v61 = vld [vmem:[%s0 + $0x168] sm:$0xff]
  %v62 = vld [vmem:[%s0 + $0x170] sm:$0xff]
  %v63 = vld [vmem:[%s0 + $0x178] sm:$0xff]
  %v64 = vld [vmem:[%s0 + $0x180] sm:$0xff]
  %v65 = vld [vmem:[%s0 + $0x188] sm:$0xff]
  %v66 = vld [vmem:[%s0 + $0x190] sm:$0xff]
  %v67 = vld [vmem:[%s0 + $0x198] sm:$0xff]
  %v68 = vld [vmem:[%s0 + $0x1a0] sm:$0xff]
  %v69 = vld [vmem:[%s0 + $0x1a8] sm:$0xff]
  %v70 = vld [vmem:[%s0 + $0x1b0] sm:$0xff]
  %v71 = vld [vmem:[%s0 + $0x1b8] sm:$0xff]
  %v72 = vld [vmem:[%s0 + $0x1c0] sm:$0xff]
  %v73 = vld [vmem:[%s0 + $0x1c8] sm:$0xff]
  %v74 = vld [vmem:[%s0 + $0x1d0] sm:$0xff]
  %v75 = vld [vmem:[%s0 + $0x1d8] sm:$0xff]
  %v76 = vld [vmem:[%s0 + $0x1e0] sm:$0xff]
  %v77 = vld [vmem:[%s0 + $0x1e8] sm:$0xff]
  %v78 = vld [vmem:[%s0 + $0x1f0] sm:$0xff]
  %v79 = vld [vmem:[%s0 + $0x1f8] sm:$0xff]
  %v80 = vld [vmem:[%s1] sm:$0x1]
  %v82 = vperm.slane %v80, 0
  %v84 = vmul.f32 %v16, %v82
  %v85 = vmul.f32 %v17, %v82
  %v86 = vmul.f32 %v18, %v82
  %v87 = vmul.f32 %v19, %v82
  %v88 = vmul.f32 %v20, %v82
  %v89 = vmul.f32 %v21, %v82
  %v90 = vmul.f32 %v22, %v82
  %v91 = vmul.f32 %v23, %v82
  %v92 = vmul.f32 %v24, %v82
  %v93 = vmul.f32 %v25, %v82
  %v94 = vmul.f32 %v26, %v82
  %v95 = vmul.f32 %v27, %v82
  %v96 = vmul.f32 %v28, %v82
  %v97 = vmul.f32 %v29, %v82
  %v98 = vmul.f32 %v30, %v82
  %v99 = vmul.f32 %v31, %v82
  %v100 = vmul.f32 %v32, %v82
  %v101 = vmul.f32 %v33, %v82
  %v102 = vmul.f32 %v34, %v82
  %v103 = vmul.f32 %v35, %v82
  %v104 = vmul.f32 %v36, %v82
  %v105 = vmul.f32 %v37, %v82
  %v106 = vmul.f32 %v38, %v82
  %v107 = vmul.f32 %v39, %v82
  %v108 = vmul.f32 %v40, %v82
  %v109 = vmul.f32 %v41, %v82
  %v110 = vmul.f32 %v42, %v82
  %v111 = vmul.f32 %v43, %v82
  %v112 = vmul.f32 %v44, %v82
  %v113 = vmul.f32 %v45, %v82
  %v114 = vmul.f32 %v46, %v82
  %v115 = vmul.f32 %v47, %v82
  %v116 = vmul.f32 %v48, %v82
  %v117 = vmul.f32 %v49, %v82
  %v118 = vmul.f32 %v50, %v82
  %v119 = vmul.f32 %v51, %v82
  %v120 = vmul.f32 %v52, %v82
  %v121 = vmul.f32 %v53, %v82
  %v122 = vmul.f32 %v54, %v82
  %v123 = vmul.f32 %v55, %v82
  %v124 = vmul.f32 %v56, %v82
  %v125 = vmul.f32 %v57, %v82
  %v126 = vmul.f32 %v58, %v82
  %v127 = vmul.f32 %v59, %v82
  %v128 = vmul.f32 %v60, %v82
  %v129 = vmul.f32 %v61, %v82
  %v130 = vmul.f32 %v62, %v82
  %v131 = vmul.f32 %v63, %v82
  %v132 = vmul.f32 %v64, %v82
  %v133 = vmul.f32 %v65, %v82
  %v134 = vmul.f32 %v66, %v82
  %v135 = vmul.f32 %v67, %v82
  %v136 = vmul.f32 %v68, %v82
  %v137 = vmul.f32 %v69, %v82
  %v138 = vmul.f32 %v70, %v82
  %v139 = vmul.f32 %v71, %v82
  %v140 = vmul.f32 %v72, %v82
  %v141 = vmul.f32 %v73, %v82
  %v142 = vmul.f32 %v74, %v82
  %v143 = vmul.f32 %v75, %v82
  %v144 = vmul.f32 %v76, %v82
  %v145 = vmul.f32 %v77, %v82
  %v146 = vmul.f32 %v78, %v82
  %v147 = vmul.f32 %v79, %v82
  %v148 = vld [vmem:[%s2] sm:$0x1]
  %v150 = vperm.slane %v148, 0
  %v152 = vadd.f32 %v84, %v150
  %v153 = vadd.f32 %v85, %v150
  %v154 = vadd.f32 %v86, %v150
  %v155 = vadd.f32 %v87, %v150
  %v156 = vadd.f32 %v88, %v150
  %v157 = vadd.f32 %v89, %v150
  %v158 = vadd.f32 %v90, %v150
  %v159 = vadd.f32 %v91, %v150
  %v160 = vadd.f32 %v92, %v150
  %v161 = vadd.f32 %v93, %v150
  %v162 = vadd.f32 %v94, %v150
  %v163 = vadd.f32 %v95, %v150
  %v164 = vadd.f32 %v96, %v150
  %v165 = vadd.f32 %v97, %v150
  %v166 = vadd.f32 %v98, %v150
  %v167 = vadd.f32 %v99, %v150
  %v168 = vadd.f32 %v100, %v150
  %v169 = vadd.f32 %v101, %v150
  %v170 = vadd.f32 %v102, %v150
  %v171 = vadd.f32 %v103, %v150
  %v172 = vadd.f32 %v104, %v150
  %v173 = vadd.f32 %v105, %v150
  %v174 = vadd.f32 %v106, %v150
  %v175 = vadd.f32 %v107, %v150
  %v176 = vadd.f32 %v108, %v150
  %v177 = vadd.f32 %v109, %v150
  %v178 = vadd.f32 %v110, %v150
  %v179 = vadd.f32 %v111, %v150
  %v180 = vadd.f32 %v112, %v150
  %v181 = vadd.f32 %v113, %v150
  %v182 = vadd.f32 %v114, %v150
  %v183 = vadd.f32 %v115, %v150
  %v184 = vadd.f32 %v116, %v150
  %v185 = vadd.f32 %v117, %v150
  %v186 = vadd.f32 %v118, %v150
  %v187 = vadd.f32 %v119, %v150
  %v188 = vadd.f32 %v120, %v150
  %v189 = vadd.f32 %v121, %v150
  %v190 = vadd.f32 %v122, %v150
  %v191 = vadd.f32 %v123, %v150
  %v192 = vadd.f32 %v124, %v150
  %v193 = vadd.f32 %v125, %v150
  %v194 = vadd.f32 %v126, %v150
  %v195 = vadd.f32 %v127, %v150
  %v196 = vadd.f32 %v128, %v150
  %v197 = vadd.f32 %v129, %v150
  %v198 = vadd.f32 %v130, %v150
  %v199 = vadd.f32 %v131, %v150
  %v200 = vadd.f32 %v132, %v150
  %v201 = vadd.f32 %v133, %v150
  %v202 = vadd.f32 %v134, %v150
  %v203 = vadd.f32 %v135, %v150
  %v204 = vadd.f32 %v136, %v150
  %v205 = vadd.f32 %v137, %v150
  %v206 = vadd.f32 %v138, %v150
  %v207 = vadd.f32 %v139, %v150
  %v208 = vadd.f32 %v140, %v150
  %v209 = vadd.f32 %v141, %v150
  %v210 = vadd.f32 %v142, %v150
  %v211 = vadd.f32 %v143, %v150
  %v212 = vadd.f32 %v144, %v150
  %v213 = vadd.f32 %v145, %v150
  %v214 = vadd.f32 %v146, %v150
  %v215 = vadd.f32 %v147, %v150
  %v216 = vmax.f32 %v152, 0.0
  %v217 = vmax.f32 %v153, 0.0
  %v218 = vmax.f32 %v154, 0.0
  %v219 = vmax.f32 %v155, 0.0
  %v220 = vmax.f32 %v156, 0.0
  %v221 = vmax.f32 %v157, 0.0
  %v222 = vmax.f32 %v158, 0.0
  %v223 = vmax.f32 %v159, 0.0
  %v224 = vmax.f32 %v160, 0.0
  %v225 = vmax.f32 %v161, 0.0
  %v226 = vmax.f32 %v162, 0.0
  %v227 = vmax.f32 %v163, 0.0
  %v228 = vmax.f32 %v164, 0.0
  %v229 = vmax.f32 %v165, 0.0
  %v230 = vmax.f32 %v166, 0.0
  %v231 = vmax.f32 %v167, 0.0
  %v232 = vmax.f32 %v168, 0.0
  %v233 = vmax.f32 %v169, 0.0
  %v234 = vmax.f32 %v170, 0.0
  %v235 = vmax.f32 %v171, 0.0
  %v236 = vmax.f32 %v172, 0.0
  %v237 = vmax.f32 %v173, 0.0
  %v238 = vmax.f32 %v174, 0.0
  %v239 = vmax.f32 %v175, 0.0
  %v240 = vmax.f32 %v176, 0.0
  %v241 = vmax.f32 %v177, 0.0
  %v242 = vmax.f32 %v178, 0.0
  %v243 = vmax.f32 %v179, 0.0
  %v244 = vmax.f32 %v180, 0.0
  %v245 = vmax.f32 %v181, 0.0
  %v246 = vmax.f32 %v182, 0.0
  %v247 = vmax.f32 %v183, 0.0
  %v248 = vmax.f32 %v184, 0.0
  %v249 = vmax.f32 %v185, 0.0
  %v250 = vmax.f32 %v186, 0.0
  %v251 = vmax.f32 %v187, 0.0
  %v252 = vmax.f32 %v188, 0.0
  %v253 = vmax.f32 %v189, 0.0
  %v254 = vmax.f32 %v190, 0.0
  %v255 = vmax.f32 %v191, 0.0
  %v256 = vmax.f32 %v192, 0.0
  %v257 = vmax.f32 %v193, 0.0
  %v258 = vmax.f32 %v194, 0.0
  %v259 = vmax.f32 %v195, 0.0
  %v260 = vmax.f32 %v196, 0.0
  %v261 = vmax.f32 %v197, 0.0
  %v262 = vmax.f32 %v198, 0.0
  %v263 = vmax.f32 %v199, 0.0
  %v264 = vmax.f32 %v200, 0.0
  %v265 = vmax.f32 %v201, 0.0
  %v266 = vmax.f32 %v202, 0.0
  %v267 = vmax.f32 %v203, 0.0
  %v268 = vmax.f32 %v204, 0.0
  %v269 = vmax.f32 %v205, 0.0
  %v270 = vmax.f32 %v206, 0.0
  %v271 = vmax.f32 %v207, 0.0
  %v272 = vmax.f32 %v208, 0.0
  %v273 = vmax.f32 %v209, 0.0
  %v274 = vmax.f32 %v210, 0.0
  %v275 = vmax.f32 %v211, 0.0
  %v276 = vmax.f32 %v212, 0.0
  %v277 = vmax.f32 %v213, 0.0
  %v278 = vmax.f32 %v214, 0.0
  %v279 = vmax.f32 %v215, 0.0
  %280 = vst [vmem:[%s3] sm:$0xff] %v216
  %281 = vst [vmem:[%s3 + $0x8] sm:$0xff] %v217
  %282 = vst [vmem:[%s3 + $0x10] sm:$0xff] %v218
  %283 = vst [vmem:[%s3 + $0x18] sm:$0xff] %v219
  %284 = vst [vmem:[%s3 + $0x20] sm:$0xff] %v220
  %285 = vst [vmem:[%s3 + $0x28] sm:$0xff] %v221
  %286 = vst [vmem:[%s3 + $0x30] sm:$0xff] %v222
  %287 = vst [vmem:[%s3 + $0x38] sm:$0xff] %v223
  %288 = vst [vmem:[%s3 + $0x40] sm:$0xff] %v224
  %289 = vst [vmem:[%s3 + $0x48] sm:$0xff] %v225
  %290 = vst [vmem:[%s3 + $0x50] sm:$0xff] %v226
  %291 = vst [vmem:[%s3 + $0x58] sm:$0xff] %v227
  %292 = vst [vmem:[%s3 + $0x60] sm:$0xff] %v228
  %293 = vst [vmem:[%s3 + $0x68] sm:$0xff] %v229
  %294 = vst [vmem:[%s3 + $0x70] sm:$0xff] %v230
  %295 = vst [vmem:[%s3 + $0x78] sm:$0xff] %v231
  %296 = vst [vmem:[%s3 + $0x80] sm:$0xff] %v232
  %297 = vst [vmem:[%s3 + $0x88] sm:$0xff] %v233
  %298 = vst [vmem:[%s3 + $0x90] sm:$0xff] %v234
  %299 = vst [vmem:[%s3 + $0x98] sm:$0xff] %v235
  %300 = vst [vmem:[%s3 + $0xa0] sm:$0xff] %v236
  %301 = vst [vmem:[%s3 + $0xa8] sm:$0xff] %v237
  %302 = vst [vmem:[%s3 + $0xb0] sm:$0xff] %v238
  %303 = vst [vmem:[%s3 + $0xb8] sm:$0xff] %v239
  %304 = vst [vmem:[%s3 + $0xc0] sm:$0xff] %v240
  %305 = vst [vmem:[%s3 + $0xc8] sm:$0xff] %v241
  %306 = vst [vmem:[%s3 + $0xd0] sm:$0xff] %v242
  %307 = vst [vmem:[%s3 + $0xd8] sm:$0xff] %v243
  %308 = vst [vmem:[%s3 + $0xe0] sm:$0xff] %v244
  %309 = vst [vmem:[%s3 + $0xe8] sm:$0xff] %v245
  %310 = vst [vmem:[%s3 + $0xf0] sm:$0xff] %v246
  %311 = vst [vmem:[%s3 + $0xf8] sm:$0xff] %v247
  %312 = vst [vmem:[%s3 + $0x100] sm:$0xff] %v248
  %313 = vst [vmem:[%s3 + $0x108] sm:$0xff] %v249
  %314 = vst [vmem:[%s3 + $0x110] sm:$0xff] %v250
  %315 = vst [vmem:[%s3 + $0x118] sm:$0xff] %v251
  %316 = vst [vmem:[%s3 + $0x120] sm:$0xff] %v252
  %317 = vst [vmem:[%s3 + $0x128] sm:$0xff] %v253
  %318 = vst [vmem:[%s3 + $0x130] sm:$0xff] %v254
  %319 = vst [vmem:[%s3 + $0x138] sm:$0xff] %v255
  %320 = vst [vmem:[%s3 + $0x140] sm:$0xff] %v256
  %321 = vst [vmem:[%s3 + $0x148] sm:$0xff] %v257
  %322 = vst [vmem:[%s3 + $0x150] sm:$0xff] %v258
  %323 = vst [vmem:[%s3 + $0x158] sm:$0xff] %v259
  %324 = vst [vmem:[%s3 + $0x160] sm:$0xff] %v260
  %325 = vst [vmem:[%s3 + $0x168] sm:$0xff] %v261
  %326 = vst [vmem:[%s3 + $0x170] sm:$0xff] %v262
  %327 = vst [vmem:[%s3 + $0x178] sm:$0xff] %v263
  %328 = vst [vmem:[%s3 + $0x180] sm:$0xff] %v264
  %329 = vst [vmem:[%s3 + $0x188] sm:$0xff] %v265
  %330 = vst [vmem:[%s3 + $0x190] sm:$0xff] %v266
  %331 = vst [vmem:[%s3 + $0x198] sm:$0xff] %v267
  %332 = vst [vmem:[%s3 + $0x1a0] sm:$0xff] %v268
  %333 = vst [vmem:[%s3 + $0x1a8] sm:$0xff] %v269
  %334 = vst [vmem:[%s3 + $0x1b0] sm:$0xff] %v270
  %335 = vst [vmem:[%s3 + $0x1b8] sm:$0xff] %v271
  %336 = vst [vmem:[%s3 + $0x1c0] sm:$0xff] %v272
  %337 = vst [vmem:[%s3 + $0x1c8] sm:$0xff] %v273
  %338 = vst [vmem:[%s3 + $0x1d0] sm:$0xff] %v274
  %339 = vst [vmem:[%s3 + $0x1d8] sm:$0xff] %v275
  %340 = vst [vmem:[%s3 + $0x1e0] sm:$0xff] %v276
  %341 = vst [vmem:[%s3 + $0x1e8] sm:$0xff] %v277
  %342 = vst [vmem:[%s3 + $0x1f0] sm:$0xff] %v278
  %343 = vst [vmem:[%s3 + $0x1f8] sm:$0xff] %v279
  %v344 = vpack.c.bf16 %v216, %v216
  %v345 = vpack.c.bf16 %v217, %v217
  %v346 = vpack.c.bf16 %v218, %v218
  %v347 = vpack.c.bf16 %v219, %v219
  %v348 = vpack.c.bf16 %v220, %v220
  %v349 = vpack.c.bf16 %v221, %v221
  %v350 = vpack.c.bf16 %v222, %v222
  %v351 = vpack.c.bf16 %v223, %v223
  %v352 = vpack.c.bf16 %v224, %v224
  %v353 = vpack.c.bf16 %v225, %v225
  %v354 = vpack.c.bf16 %v226, %v226
  %v355 = vpack.c.bf16 %v227, %v227
  %v356 = vpack.c.bf16 %v228, %v228
  %v357 = vpack.c.bf16 %v229, %v229
  %v358 = vpack.c.bf16 %v230, %v230
  %v359 = vpack.c.bf16 %v231, %v231
  %v360 = vpack.c.bf16 %v232, %v232
  %v361 = vpack.c.bf16 %v233, %v233
  %v362 = vpack.c.bf16 %v234, %v234
  %v363 = vpack.c.bf16 %v235, %v235
  %v364 = vpack.c.bf16 %v236, %v236
  %v365 = vpack.c.bf16 %v237, %v237
  %v366 = vpack.c.bf16 %v238, %v238
  %v367 = vpack.c.bf16 %v239, %v239
  %v368 = vpack.c.bf16 %v240, %v240
  %v369 = vpack.c.bf16 %v241, %v241
  %v370 = vpack.c.bf16 %v242, %v242
  %v371 = vpack.c.bf16 %v243, %v243
  %v372 = vpack.c.bf16 %v244, %v244
  %v373 = vpack.c.bf16 %v245, %v245
  %v374 = vpack.c.bf16 %v246, %v246
  %v375 = vpack.c.bf16 %v247, %v247
  %v376 = vpack.c.bf16 %v248, %v248
  %v377 = vpack.c.bf16 %v249, %v249
  %v378 = vpack.c.bf16 %v250, %v250
  %v379 = vpack.c.bf16 %v251, %v251
  %v380 = vpack.c.bf16 %v252, %v252
  %v381 = vpack.c.bf16 %v253, %v253
  %v382 = vpack.c.bf16 %v254, %v254
  %v383 = vpack.c.bf16 %v255, %v255
  %v384 = vpack.c.bf16 %v256, %v256
  %v385 = vpack.c.bf16 %v257, %v257
  %v386 = vpack.c.bf16 %v258, %v258
  %v387 = vpack.c.bf16 %v259, %v259
  %v388 = vpack.c.bf16 %v260, %v260
  %v389 = vpack.c.bf16 %v261, %v261
  %v390 = vpack.c.bf16 %v262, %v262
  %v391 = vpack.c.bf16 %v263, %v263
  %v392 = vpack.c.bf16 %v264, %v264
  %v393 = vpack.c.bf16 %v265, %v265
  %v394 = vpack.c.bf16 %v266, %v266
  %v395 = vpack.c.bf16 %v267, %v267
  %v396 = vpack.c.bf16 %v268, %v268
  %v397 = vpack.c.bf16 %v269, %v269
  %v398 = vpack.c.bf16 %v270, %v270
  %v399 = vpack.c.bf16 %v271, %v271
  %v400 = vpack.c.bf16 %v272, %v272
  %v401 = vpack.c.bf16 %v273, %v273
  %v402 = vpack.c.bf16 %v274, %v274
  %v403 = vpack.c.bf16 %v275, %v275
  %v404 = vpack.c.bf16 %v276, %v276
  %v405 = vpack.c.bf16 %v277, %v277
  %v406 = vpack.c.bf16 %v278, %v278
  %v407 = vpack.c.bf16 %v279, %v279
  %408 = vst [vmem:[%s4] sm:$0xf] %v344
  %409 = vst [vmem:[%s4 + $0x4] sm:$0xf] %v345
  %410 = vst [vmem:[%s4 + $0x8] sm:$0xf] %v346
  %411 = vst [vmem:[%s4 + $0xc] sm:$0xf] %v347
  %412 = vst [vmem:[%s4 + $0x10] sm:$0xf] %v348
  %413 = vst [vmem:[%s4 + $0x14] sm:$0xf] %v349
  %414 = vst [vmem:[%s4 + $0x18] sm:$0xf] %v350
  %415 = vst [vmem:[%s4 + $0x1c] sm:$0xf] %v351
  %416 = vst [vmem:[%s4 + $0x20] sm:$0xf] %v352
  %417 = vst [vmem:[%s4 + $0x24] sm:$0xf] %v353
  %418 = vst [vmem:[%s4 + $0x28] sm:$0xf] %v354
  %419 = vst [vmem:[%s4 + $0x2c] sm:$0xf] %v355
  %420 = vst [vmem:[%s4 + $0x30] sm:$0xf] %v356
  %421 = vst [vmem:[%s4 + $0x34] sm:$0xf] %v357
  %422 = vst [vmem:[%s4 + $0x38] sm:$0xf] %v358
  %423 = vst [vmem:[%s4 + $0x3c] sm:$0xf] %v359
  %424 = vst [vmem:[%s4 + $0x40] sm:$0xf] %v360
  %425 = vst [vmem:[%s4 + $0x44] sm:$0xf] %v361
  %426 = vst [vmem:[%s4 + $0x48] sm:$0xf] %v362
  %427 = vst [vmem:[%s4 + $0x4c] sm:$0xf] %v363
  %428 = vst [vmem:[%s4 + $0x50] sm:$0xf] %v364
  %429 = vst [vmem:[%s4 + $0x54] sm:$0xf] %v365
  %430 = vst [vmem:[%s4 + $0x58] sm:$0xf] %v366
  %431 = vst [vmem:[%s4 + $0x5c] sm:$0xf] %v367
  %432 = vst [vmem:[%s4 + $0x60] sm:$0xf] %v368
  %433 = vst [vmem:[%s4 + $0x64] sm:$0xf] %v369
  %434 = vst [vmem:[%s4 + $0x68] sm:$0xf] %v370
  %435 = vst [vmem:[%s4 + $0x6c] sm:$0xf] %v371
  %436 = vst [vmem:[%s4 + $0x70] sm:$0xf] %v372
  %437 = vst [vmem:[%s4 + $0x74] sm:$0xf] %v373
  %438 = vst [vmem:[%s4 + $0x78] sm:$0xf] %v374
  %439 = vst [vmem:[%s4 + $0x7c] sm:$0xf] %v375
  %440 = vst [vmem:[%s4 + $0x80] sm:$0xf] %v376
  %441 = vst [vmem:[%s4 + $0x84] sm:$0xf] %v377
  %442 = vst [vmem:[%s4 + $0x88] sm:$0xf] %v378
  %443 = vst [vmem:[%s4 + $0x8c] sm:$0xf] %v379
  %444 = vst [vmem:[%s4 + $0x90] sm:$0xf] %v380
  %445 = vst [vmem:[%s4 + $0x94] sm:$0xf] %v381
  %446 = vst [vmem:[%s4 + $0x98] sm:$0xf] %v382
  %447 = vst [vmem:[%s4 + $0x9c] sm:$0xf] %v383
  %448 = vst [vmem:[%s4 + $0xa0] sm:$0xf] %v384
  %449 = vst [vmem:[%s4 + $0xa4] sm:$0xf] %v385
  %450 = vst [vmem:[%s4 + $0xa8] sm:$0xf] %v386
  %451 = vst [vmem:[%s4 + $0xac] sm:$0xf] %v387
  %452 = vst [vmem:[%s4 + $0xb0] sm:$0xf] %v388
  %453 = vst [vmem:[%s4 + $0xb4] sm:$0xf] %v389
  %454 = vst [vmem:[%s4 + $0xb8] sm:$0xf] %v390
  %455 = vst [vmem:[%s4 + $0xbc] sm:$0xf] %v391
  %456 = vst [vmem:[%s4 + $0xc0] sm:$0xf] %v392
  %457 = vst [vmem:[%s4 + $0xc4] sm:$0xf] %v393
  %458 = vst [vmem:[%s4 + $0xc8] sm:$0xf] %v394
  %459 = vst [vmem:[%s4 + $0xcc] sm:$0xf] %v395
  %460 = vst [vmem:[%s4 + $0xd0] sm:$0xf] %v396
  %461 = vst [vmem:[%s4 + $0xd4] sm:$0xf] %v397
  %462 = vst [vmem:[%s4 + $0xd8] sm:$0xf] %v398
  %463 = vst [vmem:[%s4 + $0xdc] sm:$0xf] %v399
  %464 = vst [vmem:[%s4 + $0xe0] sm:$0xf] %v400
  %465 = vst [vmem:[%s4 + $0xe4] sm:$0xf] %v401
  %466 = vst [vmem:[%s4 + $0xe8] sm:$0xf] %v402
  %467 = vst [vmem:[%s4 + $0xec] sm:$0xf] %v403
  %468 = vst [vmem:[%s4 + $0xf0] sm:$0xf] %v404
  %469 = vst [vmem:[%s4 + $0xf4] sm:$0xf] %v405
  %470 = vst [vmem:[%s4 + $0xf8] sm:$0xf] %v406
  %471 = vst [vmem:[%s4 + $0xfc] sm:$0xf] %v407
  // Predicated region
  $region14: #{resblock_forward.4} parent=0 // pred_check
    _
  $region15: #{resblock_forward.4} parent=0 // pred_check_branch
    %473 = sbr.rel (0) target = $region17
  $region16: #{resblock_forward.4} parent=0 // pred_region
    _
  $region17: #{resblock_forward.4} parent=0 // pred_fallthru
    _
  // Predicated region
  $region18: #{resblock_forward.4} parent=0 // pred_check
    _
  $region19: #{resblock_forward.4} parent=0 // pred_check_branch
    %475 = sbr.rel (0) target = $region21
  $region20: #{resblock_forward.4} parent=0 // pred_region
    _
  $region21: #{resblock_forward.4} parent=0 // pred_fallthru
    _
  // Predicated region
  $region22: #{resblock_forward.4} parent=0 // pred_check
    _
  $region23: #{resblock_forward.4} parent=0 // pred_check_branch
    %477 = sbr.rel (0) target = $region25
  $region24: #{resblock_forward.4} parent=0 // pred_region
    _
  $region25: #{resblock_forward.4} parent=0 // pred_fallthru
    _
  // Predicated region
  $region26: #{resblock_forward.4} parent=0 // pred_check
    _
  $region27: #{resblock_forward.4} parent=0 // pred_check_branch
    %479 = sbr.rel (0) target = $region29
  $region28: #{resblock_forward.4} parent=0 // pred_region
    _
  $region29: #{resblock_forward.4} parent=0 // pred_fallthru
    _

// kernel: resblock_forward.6
$region0: #{resblock_forward.6}
  #allocation0 [shape = 'u32[]', space=smem, size = 0x4, offset = 0x4, fixed_abs, tag = 'smem constant byte address 0x4 - core index']
  #allocation1 [shape = 'u32[72,128]{1,0:T(1,128)}', space=vmem, size = 0x9000, scoped, tag = 'internal scratch']
  %s0 = inlined_call_operand.vmem [shape: bf16[512,128], index: 0, kind: input, shape index: {}]
  %s1 = inlined_call_operand.vmem [shape: f32[1,128], index: 1, kind: input, shape index: {}]
  %s2 = inlined_call_operand.vmem [shape: f32[1,128], index: 2, kind: input, shape index: {}]
  %s3 = inlined_call_operand.vmem [shape: bf16[512,128], index: 3, kind: output, shape index: {}]
  %s4 = sld [smem:[#allocation0]]
  $region22: #{resblock_forward.6} parent=0
    _
  %s6 = ssub.s32 1, %s4
  %s7 = scalar_select 0, %s6, %s4
  // Predicated region
  $region2: #{resblock_forward.6} parent=0 // pred_check
    _
  $region3: #{resblock_forward.6} parent=0 // pred_check_branch
    %9 = sbr.rel (0) target = $region5
  $region4: #{resblock_forward.6} parent=0 // pred_region
    _
  $region5: #{resblock_forward.6} parent=0 // pred_fallthru
    _
  // Predicated region
  $region6: #{resblock_forward.6} parent=0 // pred_check
    _
  $region7: #{resblock_forward.6} parent=0 // pred_check_branch
    %11 = sbr.rel (0) target = $region9
  $region8: #{resblock_forward.6} parent=0 // pred_region
    _
  $region9: #{resblock_forward.6} parent=0 // pred_fallthru
    _
  // Predicated region
  $region10: #{resblock_forward.6} parent=0 // pred_check
    _
  $region11: #{resblock_forward.6} parent=0 // pred_check_branch
    %13 = sbr.rel (0) target = $region13
  $region12: #{resblock_forward.6} parent=0 // pred_region
    _
  $region13: #{resblock_forward.6} parent=0 // pred_fallthru
    _
  %v14 = vld [vmem:[%s0] sm:$0xf]
  %v15 = vld [vmem:[%s0 + $0x4] sm:$0xf]
  %v16 = vld [vmem:[%s0 + $0x8] sm:$0xf]
  %v17 = vld [vmem:[%s0 + $0xc] sm:$0xf]
  %v18 = vld [vmem:[%s0 + $0x10] sm:$0xf]
  %v19 = vld [vmem:[%s0 + $0x14] sm:$0xf]
  %v20 = vld [vmem:[%s0 + $0x18] sm:$0xf]
  %v21 = vld [vmem:[%s0 + $0x1c] sm:$0xf]
  %v22 = vld [vmem:[%s0 + $0x20] sm:$0xf]
  %v23 = vld [vmem:[%s0 + $0x24] sm:$0xf]
  %v24 = vld [vmem:[%s0 + $0x28] sm:$0xf]
  %v25 = vld [vmem:[%s0 + $0x2c] sm:$0xf]
  %v26 = vld [vmem:[%s0 + $0x30] sm:$0xf]
  %v27 = vld [vmem:[%s0 + $0x34] sm:$0xf]
  %v28 = vld [vmem:[%s0 + $0x38] sm:$0xf]
  %v29 = vld [vmem:[%s0 + $0x3c] sm:$0xf]
  %v30 = vld [vmem:[%s0 + $0x40] sm:$0xf]
  %v31 = vld [vmem:[%s0 + $0x44] sm:$0xf]
  %v32 = vld [vmem:[%s0 + $0x48] sm:$0xf]
  %v33 = vld [vmem:[%s0 + $0x4c] sm:$0xf]
  %v34 = vld [vmem:[%s0 + $0x50] sm:$0xf]
  %v35 = vld [vmem:[%s0 + $0x54] sm:$0xf]
  %v36 = vld [vmem:[%s0 + $0x58] sm:$0xf]
  %v37 = vld [vmem:[%s0 + $0x5c] sm:$0xf]
  %v38 = vld [vmem:[%s0 + $0x60] sm:$0xf]
  %v39 = vld [vmem:[%s0 + $0x64] sm:$0xf]
  %v40 = vld [vmem:[%s0 + $0x68] sm:$0xf]
  %v41 = vld [vmem:[%s0 + $0x6c] sm:$0xf]
  %v42 = vld [vmem:[%s0 + $0x70] sm:$0xf]
  %v43 = vld [vmem:[%s0 + $0x74] sm:$0xf]
  %v44 = vld [vmem:[%s0 + $0x78] sm:$0xf]
  %v45 = vld [vmem:[%s0 + $0x7c] sm:$0xf]
  %v46 = vld [vmem:[%s0 + $0x80] sm:$0xf]
  %v47 = vld [vmem:[%s0 + $0x84] sm:$0xf]
  %v48 = vld [vmem:[%s0 + $0x88] sm:$0xf]
  %v49 = vld [vmem:[%s0 + $0x8c] sm:$0xf]
  %v50 = vld [vmem:[%s0 + $0x90] sm:$0xf]
  %v51 = vld [vmem:[%s0 + $0x94] sm:$0xf]
  %v52 = vld [vmem:[%s0 + $0x98] sm:$0xf]
  %v53 = vld [vmem:[%s0 + $0x9c] sm:$0xf]
  %v54 = vld [vmem:[%s0 + $0xa0] sm:$0xf]
  %v55 = vld [vmem:[%s0 + $0xa4] sm:$0xf]
  %v56 = vld [vmem:[%s0 + $0xa8] sm:$0xf]
  %v57 = vld [vmem:[%s0 + $0xac] sm:$0xf]
  %v58 = vld [vmem:[%s0 + $0xb0] sm:$0xf]
  %v59 = vld [vmem:[%s0 + $0xb4] sm:$0xf]
  %v60 = vld [vmem:[%s0 + $0xb8] sm:$0xf]
  %v61 = vld [vmem:[%s0 + $0xbc] sm:$0xf]
  %v62 = vld [vmem:[%s0 + $0xc0] sm:$0xf]
  %v63 = vld [vmem:[%s0 + $0xc4] sm:$0xf]
  %v64 = vld [vmem:[%s0 + $0xc8] sm:$0xf]
  %v65 = vld [vmem:[%s0 + $0xcc] sm:$0xf]
  %v66 = vld [vmem:[%s0 + $0xd0] sm:$0xf]
  %v67 = vld [vmem:[%s0 + $0xd4] sm:$0xf]
  %v68 = vld [vmem:[%s0 + $0xd8] sm:$0xf]
  %v69 = vld [vmem:[%s0 + $0xdc] sm:$0xf]
  %v70 = vld [vmem:[%s0 + $0xe0] sm:$0xf]
  %v71 = vld [vmem:[%s0 + $0xe4] sm:$0xf]
  %v72 = vld [vmem:[%s0 + $0xe8] sm:$0xf]
  %v73 = vld [vmem:[%s0 + $0xec] sm:$0xf]
  %v74 = vld [vmem:[%s0 + $0xf0] sm:$0xf]
  %v75 = vld [vmem:[%s0 + $0xf4] sm:$0xf]
  %v76 = vld [vmem:[%s0 + $0xf8] sm:$0xf]
  %v77 = vld [vmem:[%s0 + $0xfc] sm:$0xf]
  %v78 = vunpack.c.l.bf16 %v14
  %v79 = vunpack.c.l.bf16 %v15
  %v80 = vunpack.c.l.bf16 %v16
  %v81 = vunpack.c.l.bf16 %v17
  %v82 = vunpack.c.l.bf16 %v18
  %v83 = vunpack.c.l.bf16 %v19
  %v84 = vunpack.c.l.bf16 %v20
  %v85 = vunpack.c.l.bf16 %v21
  %v86 = vunpack.c.l.bf16 %v22
  %v87 = vunpack.c.l.bf16 %v23
  %v88 = vunpack.c.l.bf16 %v24
  %v89 = vunpack.c.l.bf16 %v25
  %v90 = vunpack.c.l.bf16 %v26
  %v91 = vunpack.c.l.bf16 %v27
  %v92 = vunpack.c.l.bf16 %v28
  %v93 = vunpack.c.l.bf16 %v29
  %v94 = vunpack.c.l.bf16 %v30
  %v95 = vunpack.c.l.bf16 %v31
  %v96 = vunpack.c.l.bf16 %v32
  %v97 = vunpack.c.l.bf16 %v33
  %v98 = vunpack.c.l.bf16 %v34
  %v99 = vunpack.c.l.bf16 %v35
  %v100 = vunpack.c.l.bf16 %v36
  %v101 = vunpack.c.l.bf16 %v37
  %v102 = vunpack.c.l.bf16 %v38
  %v103 = vunpack.c.l.bf16 %v39
  %v104 = vunpack.c.l.bf16 %v40
  %v105 = vunpack.c.l.bf16 %v41
  %v106 = vunpack.c.l.bf16 %v42
  %v107 = vunpack.c.l.bf16 %v43
  %v108 = vunpack.c.l.bf16 %v44
  %v109 = vunpack.c.l.bf16 %v45
  %v110 = vunpack.c.l.bf16 %v46
  %v111 = vunpack.c.l.bf16 %v47
  %v112 = vunpack.c.l.bf16 %v48
  %v113 = vunpack.c.l.bf16 %v49
  %v114 = vunpack.c.l.bf16 %v50
  %v115 = vunpack.c.l.bf16 %v51
  %v116 = vunpack.c.l.bf16 %v52
  %v117 = vunpack.c.l.bf16 %v53
  %v118 = vunpack.c.l.bf16 %v54
  %v119 = vunpack.c.l.bf16 %v55
  %v120 = vunpack.c.l.bf16 %v56
  %v121 = vunpack.c.l.bf16 %v57
  %v122 = vunpack.c.l.bf16 %v58
  %v123 = vunpack.c.l.bf16 %v59
  %v124 = vunpack.c.l.bf16 %v60
  %v125 = vunpack.c.l.bf16 %v61
  %v126 = vunpack.c.l.bf16 %v62
  %v127 = vunpack.c.l.bf16 %v63
  %v128 = vunpack.c.l.bf16 %v64
  %v129 = vunpack.c.l.bf16 %v65
  %v130 = vunpack.c.l.bf16 %v66
  %v131 = vunpack.c.l.bf16 %v67
  %v132 = vunpack.c.l.bf16 %v68
  %v133 = vunpack.c.l.bf16 %v69
  %v134 = vunpack.c.l.bf16 %v70
  %v135 = vunpack.c.l.bf16 %v71
  %v136 = vunpack.c.l.bf16 %v72
  %v137 = vunpack.c.l.bf16 %v73
  %v138 = vunpack.c.l.bf16 %v74
  %v139 = vunpack.c.l.bf16 %v75
  %v140 = vunpack.c.l.bf16 %v76
  %v141 = vunpack.c.l.bf16 %v77
  %v142 = vld [vmem:[%s1] sm:$0x1]
  %v144 = vperm.slane %v142, 0
  %v146 = vmul.f32 %v78, %v144
  %v147 = vmul.f32 %v79, %v144
  %v148 = vmul.f32 %v80, %v144
  %v149 = vmul.f32 %v81, %v144
  %v150 = vmul.f32 %v82, %v144
  %v151 = vmul.f32 %v83, %v144
  %v152 = vmul.f32 %v84, %v144
  %v153 = vmul.f32 %v85, %v144
  %v154 = vmul.f32 %v86, %v144
  %v155 = vmul.f32 %v87, %v144
  %v156 = vmul.f32 %v88, %v144
  %v157 = vmul.f32 %v89, %v144
  %v158 = vmul.f32 %v90, %v144
  %v159 = vmul.f32 %v91, %v144
  %v160 = vmul.f32 %v92, %v144
  %v161 = vmul.f32 %v93, %v144
  %v162 = vmul.f32 %v94, %v144
  %v163 = vmul.f32 %v95, %v144
  %v164 = vmul.f32 %v96, %v144
  %v165 = vmul.f32 %v97, %v144
  %v166 = vmul.f32 %v98, %v144
  %v167 = vmul.f32 %v99, %v144
  %v168 = vmul.f32 %v100, %v144
  %v169 = vmul.f32 %v101, %v144
  %v170 = vmul.f32 %v102, %v144
  %v171 = vmul.f32 %v103, %v144
  %v172 = vmul.f32 %v104, %v144
  %v173 = vmul.f32 %v105, %v144
  %v174 = vmul.f32 %v106, %v144
  %v175 = vmul.f32 %v107, %v144
  %v176 = vmul.f32 %v108, %v144
  %v177 = vmul.f32 %v109, %v144
  %v178 = vmul.f32 %v110, %v144
  %v179 = vmul.f32 %v111, %v144
  %v180 = vmul.f32 %v112, %v144
  %v181 = vmul.f32 %v113, %v144
  %v182 = vmul.f32 %v114, %v144
  %v183 = vmul.f32 %v115, %v144
  %v184 = vmul.f32 %v116, %v144
  %v185 = vmul.f32 %v117, %v144
  %v186 = vmul.f32 %v118, %v144
  %v187 = vmul.f32 %v119, %v144
  %v188 = vmul.f32 %v120, %v144
  %v189 = vmul.f32 %v121, %v144
  %v190 = vmul.f32 %v122, %v144
  %v191 = vmul.f32 %v123, %v144
  %v192 = vmul.f32 %v124, %v144
  %v193 = vmul.f32 %v125, %v144
  %v194 = vmul.f32 %v126, %v144
  %v195 = vmul.f32 %v127, %v144
  %v196 = vmul.f32 %v128, %v144
  %v197 = vmul.f32 %v129, %v144
  %v198 = vmul.f32 %v130, %v144
  %v199 = vmul.f32 %v131, %v144
  %v200 = vmul.f32 %v132, %v144
  %v201 = vmul.f32 %v133, %v144
  %v202 = vmul.f32 %v134, %v144
  %v203 = vmul.f32 %v135, %v144
  %v204 = vmul.f32 %v136, %v144
  %v205 = vmul.f32 %v137, %v144
  %v206 = vmul.f32 %v138, %v144
  %v207 = vmul.f32 %v139, %v144
  %v208 = vmul.f32 %v140, %v144
  %v209 = vmul.f32 %v141, %v144
  %v210 = vld [vmem:[%s2] sm:$0x1]
  %v212 = vperm.slane %v210, 0
  %v214 = vadd.f32 %v146, %v212
  %v215 = vadd.f32 %v147, %v212
  %v216 = vadd.f32 %v148, %v212
  %v217 = vadd.f32 %v149, %v212
  %v218 = vadd.f32 %v150, %v212
  %v219 = vadd.f32 %v151, %v212
  %v220 = vadd.f32 %v152, %v212
  %v221 = vadd.f32 %v153, %v212
  %v222 = vadd.f32 %v154, %v212
  %v223 = vadd.f32 %v155, %v212
  %v224 = vadd.f32 %v156, %v212
  %v225 = vadd.f32 %v157, %v212
  %v226 = vadd.f32 %v158, %v212
  %v227 = vadd.f32 %v159, %v212
  %v228 = vadd.f32 %v160, %v212
  %v229 = vadd.f32 %v161, %v212
  %v230 = vadd.f32 %v162, %v212
  %v231 = vadd.f32 %v163, %v212
  %v232 = vadd.f32 %v164, %v212
  %v233 = vadd.f32 %v165, %v212
  %v234 = vadd.f32 %v166, %v212
  %v235 = vadd.f32 %v167, %v212
  %v236 = vadd.f32 %v168, %v212
  %v237 = vadd.f32 %v169, %v212
  %v238 = vadd.f32 %v170, %v212
  %v239 = vadd.f32 %v171, %v212
  %v240 = vadd.f32 %v172, %v212
  %v241 = vadd.f32 %v173, %v212
  %v242 = vadd.f32 %v174, %v212
  %v243 = vadd.f32 %v175, %v212
  %v244 = vadd.f32 %v176, %v212
  %v245 = vadd.f32 %v177, %v212
  %v246 = vadd.f32 %v178, %v212
  %v247 = vadd.f32 %v179, %v212
  %v248 = vadd.f32 %v180, %v212
  %v249 = vadd.f32 %v181, %v212
  %v250 = vadd.f32 %v182, %v212
  %v251 = vadd.f32 %v183, %v212
  %v252 = vadd.f32 %v184, %v212
  %v253 = vadd.f32 %v185, %v212
  %v254 = vadd.f32 %v186, %v212
  %v255 = vadd.f32 %v187, %v212
  %v256 = vadd.f32 %v188, %v212
  %v257 = vadd.f32 %v189, %v212
  %v258 = vadd.f32 %v190, %v212
  %v259 = vadd.f32 %v191, %v212
  %v260 = vadd.f32 %v192, %v212
  %v261 = vadd.f32 %v193, %v212
  %v262 = vadd.f32 %v194, %v212
  %v263 = vadd.f32 %v195, %v212
  %v264 = vadd.f32 %v196, %v212
  %v265 = vadd.f32 %v197, %v212
  %v266 = vadd.f32 %v198, %v212
  %v267 = vadd.f32 %v199, %v212
  %v268 = vadd.f32 %v200, %v212
  %v269 = vadd.f32 %v201, %v212
  %v270 = vadd.f32 %v202, %v212
  %v271 = vadd.f32 %v203, %v212
  %v272 = vadd.f32 %v204, %v212
  %v273 = vadd.f32 %v205, %v212
  %v274 = vadd.f32 %v206, %v212
  %v275 = vadd.f32 %v207, %v212
  %v276 = vadd.f32 %v208, %v212
  %v277 = vadd.f32 %v209, %v212
  %v278 = vmax.f32 %v214, 0.0
  %v279 = vmax.f32 %v215, 0.0
  %v280 = vmax.f32 %v216, 0.0
  %v281 = vmax.f32 %v217, 0.0
  %v282 = vmax.f32 %v218, 0.0
  %v283 = vmax.f32 %v219, 0.0
  %v284 = vmax.f32 %v220, 0.0
  %v285 = vmax.f32 %v221, 0.0
  %v286 = vmax.f32 %v222, 0.0
  %v287 = vmax.f32 %v223, 0.0
  %v288 = vmax.f32 %v224, 0.0
  %v289 = vmax.f32 %v225, 0.0
  %v290 = vmax.f32 %v226, 0.0
  %v291 = vmax.f32 %v227, 0.0
  %v292 = vmax.f32 %v228, 0.0
  %v293 = vmax.f32 %v229, 0.0
  %v294 = vmax.f32 %v230, 0.0
  %v295 = vmax.f32 %v231, 0.0
  %v296 = vmax.f32 %v232, 0.0
  %v297 = vmax.f32 %v233, 0.0
  %v298 = vmax.f32 %v234, 0.0
  %v299 = vmax.f32 %v235, 0.0
  %v300 = vmax.f32 %v236, 0.0
  %v301 = vmax.f32 %v237, 0.0
  %v302 = vmax.f32 %v238, 0.0
  %v303 = vmax.f32 %v239, 0.0
  %v304 = vmax.f32 %v240, 0.0
  %v305 = vmax.f32 %v241, 0.0
  %v306 = vmax.f32 %v242, 0.0
  %v307 = vmax.f32 %v243, 0.0
  %v308 = vmax.f32 %v244, 0.0
  %v309 = vmax.f32 %v245, 0.0
  %v310 = vmax.f32 %v246, 0.0
  %v311 = vmax.f32 %v247, 0.0
  %v312 = vmax.f32 %v248, 0.0
  %v313 = vmax.f32 %v249, 0.0
  %v314 = vmax.f32 %v250, 0.0
  %v315 = vmax.f32 %v251, 0.0
  %v316 = vmax.f32 %v252, 0.0
  %v317 = vmax.f32 %v253, 0.0
  %v318 = vmax.f32 %v254, 0.0
  %v319 = vmax.f32 %v255, 0.0
  %v320 = vmax.f32 %v256, 0.0
  %v321 = vmax.f32 %v257, 0.0
  %v322 = vmax.f32 %v258, 0.0
  %v323 = vmax.f32 %v259, 0.0
  %v324 = vmax.f32 %v260, 0.0
  %v325 = vmax.f32 %v261, 0.0
  %v326 = vmax.f32 %v262, 0.0
  %v327 = vmax.f32 %v263, 0.0
  %v328 = vmax.f32 %v264, 0.0
  %v329 = vmax.f32 %v265, 0.0
  %v330 = vmax.f32 %v266, 0.0
  %v331 = vmax.f32 %v267, 0.0
  %v332 = vmax.f32 %v268, 0.0
  %v333 = vmax.f32 %v269, 0.0
  %v334 = vmax.f32 %v270, 0.0
  %v335 = vmax.f32 %v271, 0.0
  %v336 = vmax.f32 %v272, 0.0
  %v337 = vmax.f32 %v273, 0.0
  %v338 = vmax.f32 %v274, 0.0
  %v339 = vmax.f32 %v275, 0.0
  %v340 = vmax.f32 %v276, 0.0
  %v341 = vmax.f32 %v277, 0.0
  %v342 = vpack.c.bf16 %v278, %v278
  %v343 = vpack.c.bf16 %v279, %v279
  %v344 = vpack.c.bf16 %v280, %v280
  %v345 = vpack.c.bf16 %v281, %v281
  %v346 = vpack.c.bf16 %v282, %v282
  %v347 = vpack.c.bf16 %v283, %v283
  %v348 = vpack.c.bf16 %v284, %v284
  %v349 = vpack.c.bf16 %v285, %v285
  %v350 = vpack.c.bf16 %v286, %v286
  %v351 = vpack.c.bf16 %v287, %v287
  %v352 = vpack.c.bf16 %v288, %v288
  %v353 = vpack.c.bf16 %v289, %v289
  %v354 = vpack.c.bf16 %v290, %v290
  %v355 = vpack.c.bf16 %v291, %v291
  %v356 = vpack.c.bf16 %v292, %v292
  %v357 = vpack.c.bf16 %v293, %v293
  %v358 = vpack.c.bf16 %v294, %v294
  %v359 = vpack.c.bf16 %v295, %v295
  %v360 = vpack.c.bf16 %v296, %v296
  %v361 = vpack.c.bf16 %v297, %v297
  %v362 = vpack.c.bf16 %v298, %v298
  %v363 = vpack.c.bf16 %v299, %v299
  %v364 = vpack.c.bf16 %v300, %v300
  %v365 = vpack.c.bf16 %v301, %v301
  %v366 = vpack.c.bf16 %v302, %v302
  %v367 = vpack.c.bf16 %v303, %v303
  %v368 = vpack.c.bf16 %v304, %v304
  %v369 = vpack.c.bf16 %v305, %v305
  %v370 = vpack.c.bf16 %v306, %v306
  %v371 = vpack.c.bf16 %v307, %v307
  %v372 = vpack.c.bf16 %v308, %v308
  %v373 = vpack.c.bf16 %v309, %v309
  %v374 = vpack.c.bf16 %v310, %v310
  %v375 = vpack.c.bf16 %v311, %v311
  %v376 = vpack.c.bf16 %v312, %v312
  %v377 = vpack.c.bf16 %v313, %v313
  %v378 = vpack.c.bf16 %v314, %v314
  %v379 = vpack.c.bf16 %v315, %v315
  %v380 = vpack.c.bf16 %v316, %v316
  %v381 = vpack.c.bf16 %v317, %v317
  %v382 = vpack.c.bf16 %v318, %v318
  %v383 = vpack.c.bf16 %v319, %v319
  %v384 = vpack.c.bf16 %v320, %v320
  %v385 = vpack.c.bf16 %v321, %v321
  %v386 = vpack.c.bf16 %v322, %v322
  %v387 = vpack.c.bf16 %v323, %v323
  %v388 = vpack.c.bf16 %v324, %v324
  %v389 = vpack.c.bf16 %v325, %v325
  %v390 = vpack.c.bf16 %v326, %v326
  %v391 = vpack.c.bf16 %v327, %v327
  %v392 = vpack.c.bf16 %v328, %v328
  %v393 = vpack.c.bf16 %v329, %v329
  %v394 = vpack.c.bf16 %v330, %v330
  %v395 = vpack.c.bf16 %v331, %v331
  %v396 = vpack.c.bf16 %v332, %v332
  %v397 = vpack.c.bf16 %v333, %v333
  %v398 = vpack.c.bf16 %v334, %v334
  %v399 = vpack.c.bf16 %v335, %v335
  %v400 = vpack.c.bf16 %v336, %v336
  %v401 = vpack.c.bf16 %v337, %v337
  %v402 = vpack.c.bf16 %v338, %v338
  %v403 = vpack.c.bf16 %v339, %v339
  %v404 = vpack.c.bf16 %v340, %v340
  %v405 = vpack.c.bf16 %v341, %v341
  %406 = vst [vmem:[%s3] sm:$0xf] %v342
  %407 = vst [vmem:[%s3 + $0x4] sm:$0xf] %v343
  %408 = vst [vmem:[%s3 + $0x8] sm:$0xf] %v344
  %409 = vst [vmem:[%s3 + $0xc] sm:$0xf] %v345
  %410 = vst [vmem:[%s3 + $0x10] sm:$0xf] %v346
  %411 = vst [vmem:[%s3 + $0x14] sm:$0xf] %v347
  %412 = vst [vmem:[%s3 + $0x18] sm:$0xf] %v348
  %413 = vst [vmem:[%s3 + $0x1c] sm:$0xf] %v349
  %414 = vst [vmem:[%s3 + $0x20] sm:$0xf] %v350
  %415 = vst [vmem:[%s3 + $0x24] sm:$0xf] %v351
  %416 = vst [vmem:[%s3 + $0x28] sm:$0xf] %v352
  %417 = vst [vmem:[%s3 + $0x2c] sm:$0xf] %v353
  %418 = vst [vmem:[%s3 + $0x30] sm:$0xf] %v354
  %419 = vst [vmem:[%s3 + $0x34] sm:$0xf] %v355
  %420 = vst [vmem:[%s3 + $0x38] sm:$0xf] %v356
  %421 = vst [vmem:[%s3 + $0x3c] sm:$0xf] %v357
  %422 = vst [vmem:[%s3 + $0x40] sm:$0xf] %v358
  %423 = vst [vmem:[%s3 + $0x44] sm:$0xf] %v359
  %424 = vst [vmem:[%s3 + $0x48] sm:$0xf] %v360
  %425 = vst [vmem:[%s3 + $0x4c] sm:$0xf] %v361
  %426 = vst [vmem:[%s3 + $0x50] sm:$0xf] %v362
  %427 = vst [vmem:[%s3 + $0x54] sm:$0xf] %v363
  %428 = vst [vmem:[%s3 + $0x58] sm:$0xf] %v364
  %429 = vst [vmem:[%s3 + $0x5c] sm:$0xf] %v365
  %430 = vst [vmem:[%s3 + $0x60] sm:$0xf] %v366
  %431 = vst [vmem:[%s3 + $0x64] sm:$0xf] %v367
  %432 = vst [vmem:[%s3 + $0x68] sm:$0xf] %v368
  %433 = vst [vmem:[%s3 + $0x6c] sm:$0xf] %v369
  %434 = vst [vmem:[%s3 + $0x70] sm:$0xf] %v370
  %435 = vst [vmem:[%s3 + $0x74] sm:$0xf] %v371
  %436 = vst [vmem:[%s3 + $0x78] sm:$0xf] %v372
  %437 = vst [vmem:[%s3 + $0x7c] sm:$0xf] %v373
  %438 = vst [vmem:[%s3 + $0x80] sm:$0xf] %v374
  %439 = vst [vmem:[%s3 + $0x84] sm:$0xf] %v375
  %440 = vst [vmem:[%s3 + $0x88] sm:$0xf] %v376
  %441 = vst [vmem:[%s3 + $0x8c] sm:$0xf] %v377
  %442 = vst [vmem:[%s3 + $0x90] sm:$0xf] %v378
  %443 = vst [vmem:[%s3 + $0x94] sm:$0xf] %v379
  %444 = vst [vmem:[%s3 + $0x98] sm:$0xf] %v380
  %445 = vst [vmem:[%s3 + $0x9c] sm:$0xf] %v381
  %446 = vst [vmem:[%s3 + $0xa0] sm:$0xf] %v382
  %447 = vst [vmem:[%s3 + $0xa4] sm:$0xf] %v383
  %448 = vst [vmem:[%s3 + $0xa8] sm:$0xf] %v384
  %449 = vst [vmem:[%s3 + $0xac] sm:$0xf] %v385
  %450 = vst [vmem:[%s3 + $0xb0] sm:$0xf] %v386
  %451 = vst [vmem:[%s3 + $0xb4] sm:$0xf] %v387
  %452 = vst [vmem:[%s3 + $0xb8] sm:$0xf] %v388
  %453 = vst [vmem:[%s3 + $0xbc] sm:$0xf] %v389
  %454 = vst [vmem:[%s3 + $0xc0] sm:$0xf] %v390
  %455 = vst [vmem:[%s3 + $0xc4] sm:$0xf] %v391
  %456 = vst [vmem:[%s3 + $0xc8] sm:$0xf] %v392
  %457 = vst [vmem:[%s3 + $0xcc] sm:$0xf] %v393
  %458 = vst [vmem:[%s3 + $0xd0] sm:$0xf] %v394
  %459 = vst [vmem:[%s3 + $0xd4] sm:$0xf] %v395
  %460 = vst [vmem:[%s3 + $0xd8] sm:$0xf] %v396
  %461 = vst [vmem:[%s3 + $0xdc] sm:$0xf] %v397
  %462 = vst [vmem:[%s3 + $0xe0] sm:$0xf] %v398
  %463 = vst [vmem:[%s3 + $0xe4] sm:$0xf] %v399
  %464 = vst [vmem:[%s3 + $0xe8] sm:$0xf] %v400
  %465 = vst [vmem:[%s3 + $0xec] sm:$0xf] %v401
  %466 = vst [vmem:[%s3 + $0xf0] sm:$0xf] %v402
  %467 = vst [vmem:[%s3 + $0xf4] sm:$0xf] %v403
  %468 = vst [vmem:[%s3 + $0xf8] sm:$0xf] %v404
  %469 = vst [vmem:[%s3 + $0xfc] sm:$0xf] %v405
  // Predicated region
  $region14: #{resblock_forward.6} parent=0 // pred_check
    _
  $region15: #{resblock_forward.6} parent=0 // pred_check_branch
    %471 = sbr.rel (0) target = $region17
  $region16: #{resblock_forward.6} parent=0 // pred_region
    _
  $region17: #{resblock_forward.6} parent=0 // pred_fallthru
    _
  // Predicated region
  $region18: #{resblock_forward.6} parent=0 // pred_check
    _
  $region19: #{resblock_forward.6} parent=0 // pred_check_branch
    %473 = sbr.rel (0) target = $region21
  $region20: #{resblock_forward.6} parent=0 // pred_region
    _
  $region21: #{resblock_forward.6} parent=0 // pred_fallthru
    _

// kernel: resblock_forward.5
$region0: #{resblock_forward.5}
  #allocation0 [shape = 'u32[]', space=smem, size = 0x4, offset = 0x4, fixed_abs, tag = 'smem constant byte address 0x4 - core index']
  #allocation1 [shape = 'u32[72,128]{1,0:T(1,128)}', space=vmem, size = 0x9000, scoped, tag = 'internal scratch']
  #allocation2 [shape = 'f32[256,128]{1,0:T(8,128)}', space=vmem, size = 0x20000, scoped, tag = 'scratch operand']
  %s0 = inlined_call_operand.vmem [shape: bf16[2,18,18,128], index: 0, kind: input, shape index: {}]
  %s1 = inlined_call_operand.vmem [shape: bf16[9,128,128], index: 1, kind: input, shape index: {}]
  %s2 = inlined_call_operand.vmem [shape: bf16[2,16,16,128], index: 2, kind: output, shape index: {}]
  %s3 = sld [smem:[#allocation0]]
  $region49: #{resblock_forward.5} parent=0
    _
  %s5 = ssub.s32 1, %s3
  %s6 = scalar_select 0, %s5, %s3
  loop: start=0, step=1, limit=4
  $region2: #{resblock_forward.5} parent=0 // loop_pre_header
    _
  $region3: #{resblock_forward.5} parent=0 // loop_header
    %s8 = sphi 0, %s12
    %p9 = scmp.ge.s32.totalorder %s8, 4
    %s15 = sphi 0, %s34
    %s16 = sphi 0, %s30
    %s17 = sphi 0, %s26
    %s18 = sphi 0, %s15
    %s19 = sphi 0, %s16
    %s20 = sphi 0, %s17
    %s21 = sphi 0, %s18
    %s22 = sphi 0, %s19
    %s23 = sphi 0, %s20
    %s39 = sphi 0, %s41
    %s42 = sphi 0, %s39
    %s43 = sphi 0, %s42
    %s59 = sphi 0, %s43
    %s67 = sphi 0, %s69
    %s70 = sphi 0, %s67
    %s71 = sphi 0, %s70
    %s87 = sphi 0, %s71
    %s95 = sphi 0, %s97
    %s98 = sphi 0, %s95
    %s99 = sphi 0, %s98
    %s115 = sphi 0, %s99
  $region4: #{resblock_forward.5} parent=0 // loop_header_branch
    %11 = sbr.rel (%p9) target = $region8
  $region5: #{resblock_forward.5} parent=0 // loop_body
    %s13 = ssub.s32 %s8, 1
    %s14 = ssub.s32 %s8, 2
    %s24 = sadd.s32 1, %s17
    %p25 = scmp.ge.s32.totalorder %s24, 1
    %s26 = scalar_select %p25, 0, %s24
    %s27 = sadd.s32 1, %s16
    %s28 = scalar_select %p25, %s27, %s16
    %p29 = scmp.ge.s32.totalorder %s28, 1
    %s30 = scalar_select %p29, 0, %s28
    %s31 = sadd.s32 1, %s15
    %s32 = scalar_select %p29, %s31, %s15
    %p33 = scmp.ge.s32.totalorder %s32, 2
    %s34 = scalar_select %p33, 0, %s32
    %s35 = ssub.s32 %s15, %s34
    %s36 = ssub.s32 %s17, %s26
    %s37 = sor.u32 %s35, %s36
    %p38 = scmp.eq.s32.totalorder %s37, 0
    %s40 = sadd.s32 %s39, 1
    %s41 = scalar_select %p38, %s39, %s40
    %p44 = pneg %p38
    %p45 = scmp.eq.s32.totalorder %s8, 1
    %p46 = por %p44, %p45
    %p47 = scmp.ne.s32.totalorder %s39, %s42
    %p48 = scmp.eq.s32.totalorder %s8, 0
    %p49 = por %p47, %p48
    %p50 = scmp.ne.s32.totalorder %s39, %s42
    %p51 = scmp.eq.s32.totalorder %s13, 1
    %p52 = por %p50, %p51
    %p53 = scmp.ne.s32.totalorder %s42, %s43
    %p54 = scmp.eq.s32.totalorder %s13, 0
    %p55 = por %p53, %p54
    %p56 = scmp.ne.s32.totalorder %s42, %s43
    %p57 = scmp.eq.s32.totalorder %s14, 1
    %p58 = por %p56, %p57
    %p60 = scmp.ne.s32.totalorder %s43, %s59
    %p61 = scmp.eq.s32.totalorder %s14, 0
    %p62 = por %p60, %p61
    %s63 = ssub.s32 %s17, %s26
    %s64 = ssub.s32 %s16, %s30
    %s65 = sor.u32 %s63, %s64
    %p66 = scmp.eq.s32.totalorder %s65, 0
    %s68 = sadd.s32 %s67, 1
    %s69 = scalar_select %p66, %s67, %s68
    %p72 = pneg %p66
    %p73 = scmp.eq.s32.totalorder %s8, 1
    %p74 = por %p72, %p73
    %p75 = scmp.ne.s32.totalorder %s67, %s70
    %p76 = scmp.eq.s32.totalorder %s8, 0
    %p77 = por %p75, %p76
    %p78 = scmp.ne.s32.totalorder %s67, %s70
    %p79 = scmp.eq.s32.totalorder %s13, 1
    %p80 = por %p78, %p79
    %p81 = scmp.ne.s32.totalorder %s70, %s71
    %p82 = scmp.eq.s32.totalorder %s13, 0
    %p83 = por %p81, %p82
    %p84 = scmp.ne.s32.totalorder %s70, %s71
    %p85 = scmp.eq.s32.totalorder %s14, 1
    %p86 = por %p84, %p85
    %p88 = scmp.ne.s32.totalorder %s71, %s87
    %p89 = scmp.eq.s32.totalorder %s14, 0
    %p90 = por %p88, %p89
    %s91 = ssub.s32 %s15, %s34
    %s92 = ssub.s32 %s16, %s30
    %s93 = sor.u32 %s91, %s92
    %p94 = scmp.eq.s32.totalorder %s93, 0
    %s96 = sadd.s32 %s95, 1
    %s97 = scalar_select %p94, %s95, %s96
    %p100 = pneg %p94
    %p101 = scmp.eq.s32.totalorder %s8, 1
    %p102 = por %p100, %p101
    %p103 = scmp.ne.s32.totalorder %s95, %s98
    %p104 = scmp.eq.s32.totalorder %s8, 0
    %p105 = por %p103, %p104
    %p106 = scmp.ne.s32.totalorder %s95, %s98
    %p107 = scmp.eq.s32.totalorder %s13, 1
    %p108 = por %p106, %p107
    %p109 = scmp.ne.s32.totalorder %s98, %s99
    %p110 = scmp.eq.s32.totalorder %s13, 0
    %p111 = por %p109, %p110
    %p112 = scmp.ne.s32.totalorder %s98, %s99
    %p113 = scmp.eq.s32.totalorder %s14, 1
    %p114 = por %p112, %p113
    %p116 = scmp.ne.s32.totalorder %s99, %s115
    %p117 = scmp.eq.s32.totalorder %s14, 0
    %p118 = por %p116, %p117
    %p119 = scmp.le.s32.totalorder 1, %s8
    %p120 = scmp.lt.s32.totalorder %s8, 3
    %p121 = pnand %p119, %p120
    %p122 = pneg %p121
    // Predicated region
    $region9: #{resblock_forward.5} parent=5 // pred_check
      _
    $region10: #{resblock_forward.5} parent=5 // pred_check_branch
      %124 = sbr.rel (%p121) target = $region12
    $region11: #{resblock_forward.5} parent=5 // pred_region
      %s125 = ssub.s32 %s8, 1
      // Predicated region
      $region13: #{resblock_forward.5} parent=11 // pred_check
        %p126 = pneg %p83
      $region14: #{resblock_forward.5} parent=11 // pred_check_branch
        %128 = sbr.rel (%p126) target = $region16
      $region15: #{resblock_forward.5} parent=11 // pred_region
        %s129 = smul.u32 16, %s20
        %p130 = scmp.lt.s32.totalorder %s129, 15
        %s131 = scalar_select %p130, %s129, 15
        %p132 = scmp.lt.s32.totalorder %s19, 0
        %s133 = scalar_select %p132, %s19, 0
        %s134 = sadd.s32 %s133, %s131
        %s135 = smul.addr %s134, 4
        %s136 = scalar_lea.vmem %s1, %s135
        %s137 = smul.u32 16, %s20
      $region16: #{resblock_forward.5} parent=11 // pred_fallthru
        _
    $region12: #{resblock_forward.5} parent=5 // pred_fallthru
      _
    %p138 = scmp.lt.s32.totalorder %s8, 2
    // Predicated region
    $region17: #{resblock_forward.5} parent=5 // pred_check
      %p139 = pneg %p138
    $region18: #{resblock_forward.5} parent=5 // pred_check_branch
      %141 = sbr.rel (%p139) target = $region20
    $region19: #{resblock_forward.5} parent=5 // pred_region
      // Predicated region
      $region21: #{resblock_forward.5} parent=19 // pred_check
        %p142 = pneg %p49
      $region22: #{resblock_forward.5} parent=19 // pred_check_branch
        %144 = sbr.rel (%p142) target = $region24
      $region23: #{resblock_forward.5} parent=19 // pred_region
        %p145 = scmp.lt.s32.totalorder %s15, 1
        %s146 = scalar_select %p145, %s15, 1
        %p147 = scmp.lt.s32.totalorder %s17, 0
        %s148 = scalar_select %p147, %s17, 0
        %s149 = smul.addr %s146, 54
        %s150 = sadd.s32 %s148, %s149
        %s151 = smul.addr %s150, 4
        %s152 = scalar_lea.vmem %s0, %s151
      $region24: #{resblock_forward.5} parent=19 // pred_fallthru
        _
    $region20: #{resblock_forward.5} parent=5 // pred_fallthru
      _
    %p153 = scmp.le.s32.totalorder 1, %s8
    %p154 = scmp.lt.s32.totalorder %s8, 3
    %p155 = pnand %p153, %p154
    %p156 = pneg %p155
    // Predicated region
    $region25: #{resblock_forward.5} parent=5 // pred_check
      _
    $region26: #{resblock_forward.5} parent=5 // pred_check_branch
      %158 = sbr.rel (%p155) target = $region28
    $region27: #{resblock_forward.5} parent=5 // pred_region
      %s159 = ssub.s32 %s8, 1
      %p160 = scmp.lt.s32.totalorder %s18, 1
      %s161 = scalar_select %p160, %s18, 1
      %p162 = scmp.lt.s32.totalorder %s20, 0
      %s163 = scalar_select %p162, %s20, 0
      %s164 = smul.addr %s161, 54
      %s165 = sadd.s32 %s163, %s164
      %s166 = smul.addr %s165, 4
      %s167 = scalar_lea.vmem %s0, %s166
      %p168 = pneg %p55
      %p169 = pneg %p52
      %s170 = smul.u32 16, %s20
      %p171 = scmp.lt.s32.totalorder %s170, 15
      %s172 = scalar_select %p171, %s170, 15
      %p173 = scmp.lt.s32.totalorder %s19, 0
      %s174 = scalar_select %p173, %s19, 0
      %s175 = sadd.s32 %s174, %s172
      %s176 = smul.addr %s175, 4
      %s177 = scalar_lea.vmem %s1, %s176
      %p178 = pneg %p83
      %p179 = pneg %p80
      %p180 = pneg %p111
      %p181 = pneg %p108
      %p182 = scmp.lt.s32.totalorder %s18, 1
      %s183 = scalar_select %p182, %s18, 1
      %p184 = scmp.lt.s32.totalorder %s19, 0
      %s185 = scalar_select %p184, %s19, 0
      %s186 = smul.addr %s183, 32
      %s187 = sadd.s32 %s185, %s186
      %s188 = smul.addr %s187, 4
      %s189 = scalar_lea.vmem %s2, %s188
      %p190 = scmp.lt.s32.totalorder %s18, 1
      %s191 = scalar_select %p190, %s18, 1
      %p192 = scmp.lt.s32.totalorder %s20, 0
      %s193 = scalar_select %p192, %s20, 0
      %s194 = smul.addr %s191, 54
      %s195 = sadd.s32 %s193, %s194
      %s196 = smul.addr %s195, 4
      %s197 = scalar_lea.vmem %s0, %s196
      %s198 = smul.u32 16, %s20
      %p199 = scmp.lt.s32.totalorder %s198, 15
      %s200 = scalar_select %p199, %s198, 15
      %p201 = scmp.lt.s32.totalorder %s19, 0
      %s202 = scalar_select %p201, %s19, 0
      %s203 = sadd.s32 %s202, %s200
      %s204 = smul.addr %s203, 4
      %s205 = scalar_lea.vmem %s1, %s204
      %s206 = smul.u32 16, %s20
      %p207 = scmp.lt.s32.totalorder %s18, 1
      %s208 = scalar_select %p207, %s18, 1
      %p209 = scmp.lt.s32.totalorder %s19, 0
      %s210 = scalar_select %p209, %s19, 0
      %s211 = smul.addr %s208, 32
      %s212 = sadd.s32 %s210, %s211
      %s213 = smul.addr %s212, 4
      %s214 = scalar_lea.vmem %s2, %s213
      %p215 = scmp.eq.s32.totalorder %s20, 0
      // Predicated region
      $region29: #{resblock_forward.5} parent=27 // pred_check
        %p216 = pneg %p215
      $region30: #{resblock_forward.5} parent=27 // pred_check_branch
        %218 = sbr.rel (%p216) target = $region32
      $region31: #{resblock_forward.5} parent=27 // pred_region
        %219 = vst [vmem:[#allocation2] sm:$0xff] 0.0
        %220 = vst [vmem:[#allocation2 + $0x8] sm:$0xff] 0.0
        %221 = vst [vmem:[#allocation2 + $0x10] sm:$0xff] 0.0
        %222 = vst [vmem:[#allocation2 + $0x18] sm:$0xff] 0.0
        %223 = vst [vmem:[#allocation2 + $0x20] sm:$0xff] 0.0
        %224 = vst [vmem:[#allocation2 + $0x28] sm:$0xff] 0.0
        %225 = vst [vmem:[#allocation2 + $0x30] sm:$0xff] 0.0
        %226 = vst [vmem:[#allocation2 + $0x38] sm:$0xff] 0.0
        %227 = vst [vmem:[#allocation2 + $0x40] sm:$0xff] 0.0
        %228 = vst [vmem:[#allocation2 + $0x48] sm:$0xff] 0.0
        %229 = vst [vmem:[#allocation2 + $0x50] sm:$0xff] 0.0
        %230 = vst [vmem:[#allocation2 + $0x58] sm:$0xff] 0.0
        %231 = vst [vmem:[#allocation2 + $0x60] sm:$0xff] 0.0
        %232 = vst [vmem:[#allocation2 + $0x68] sm:$0xff] 0.0
        %233 = vst [vmem:[#allocation2 + $0x70] sm:$0xff] 0.0
        %234 = vst [vmem:[#allocation2 + $0x78] sm:$0xff] 0.0
        %235 = vst [vmem:[#allocation2 + $0x80] sm:$0xff] 0.0
        %236 = vst [vmem:[#allocation2 + $0x88] sm:$0xff] 0.0
        %237 = vst [vmem:[#allocation2 + $0x90] sm:$0xff] 0.0
        %238 = vst [vmem:[#allocation2 + $0x98] sm:$0xff] 0.0
        %239 = vst [vmem:[#allocation2 + $0xa0] sm:$0xff] 0.0
        %240 = vst [vmem:[#allocation2 + $0xa8] sm:$0xff] 0.0
        %241 = vst [vmem:[#allocation2 + $0xb0] sm:$0xff] 0.0
        %242 = vst [vmem:[#allocation2 + $0xb8] sm:$0xff] 0.0
        %243 = vst [vmem:[#allocation2 + $0xc0] sm:$0xff] 0.0
        %244 = vst [vmem:[#allocation2 + $0xc8] sm:$0xff] 0.0
        %245 = vst [vmem:[#allocation2 + $0xd0] sm:$0xff] 0.0
        %246 = vst [vmem:[#allocation2 + $0xd8] sm:$0xff] 0.0
        %247 = vst [vmem:[#allocation2 + $0xe0] sm:$0xff] 0.0
        %248 = vst [vmem:[#allocation2 + $0xe8] sm:$0xff] 0.0
        %249 = vst [vmem:[#allocation2 + $0xf0] sm:$0xff] 0.0
        %250 = vst [vmem:[#allocation2 + $0xf8] sm:$0xff] 0.0
      $region32: #{resblock_forward.5} parent=27 // pred_fallthru
        _
      %v251 = vld [vmem:[%s197] sm:$0xf]
      %v252 = vld [vmem:[%s197 + $0x4] sm:$0xf]
      %v253 = vld [vmem:[%s197 + $0x8] sm:$0x1]
      %v254 = vld [vmem:[%s197 + $0xc] sm:$0xf]
      %v255 = vld [vmem:[%s197 + $0x10] sm:$0xf]
      %v256 = vld [vmem:[%s197 + $0x14] sm:$0x1]
      %v257 = vld [vmem:[%s197 + $0x18] sm:$0xf]
      %v258 = vld [vmem:[%s197 + $0x1c] sm:$0xf]
      %v259 = vld [vmem:[%s197 + $0x20] sm:$0x1]
      %v260 = vld [vmem:[%s197 + $0x24] sm:$0xf]
      %v261 = vld [vmem:[%s197 + $0x28] sm:$0xf]
      %v262 = vld [vmem:[%s197 + $0x2c] sm:$0x1]
      %v263 = vld [vmem:[%s197 + $0x30] sm:$0xf]
      %v264 = vld [vmem:[%s197 + $0x34] sm:$0xf]
      %v265 = vld [vmem:[%s197 + $0x38] sm:$0x1]
      %v266 = vld [vmem:[%s197 + $0x3c] sm:$0xf]
      %v267 = vld [vmem:[%s197 + $0x40] sm:$0xf]
      %v268 = vld [vmem:[%s197 + $0x44] sm:$0x1]
      %v269 = vld [vmem:[%s197 + $0x48] sm:$0xf]
      %v270 = vld [vmem:[%s197 + $0x4c] sm:$0xf]
      %v271 = vld [vmem:[%s197 + $0x50] sm:$0x1]
      %v272 = vld [vmem:[%s197 + $0x54] sm:$0xf]
      %v273 = vld [vmem:[%s197 + $0x58] sm:$0xf]
      %v274 = vld [vmem:[%s197 + $0x5c] sm:$0x1]
      %v275 = vld [vmem:[%s197 + $0x60] sm:$0xf]
      %v276 = vld [vmem:[%s197 + $0x64] sm:$0xf]
      %v277 = vld [vmem:[%s197 + $0x68] sm:$0x1]
      %v278 = vld [vmem:[%s197 + $0x6c] sm:$0xf]
      %v279 = vld [vmem:[%s197 + $0x70] sm:$0xf]
      %v280 = vld [vmem:[%s197 + $0x74] sm:$0x1]
      %v281 = vld [vmem:[%s197 + $0x78] sm:$0xf]
      %v282 = vld [vmem:[%s197 + $0x7c] sm:$0xf]
      %v283 = vld [vmem:[%s197 + $0x80] sm:$0x1]
      %v284 = vld [vmem:[%s197 + $0x84] sm:$0xf]
      %v285 = vld [vmem:[%s197 + $0x88] sm:$0xf]
      %v286 = vld [vmem:[%s197 + $0x8c] sm:$0x1]
      %v287 = vld [vmem:[%s197 + $0x90] sm:$0xf]
      %v288 = vld [vmem:[%s197 + $0x94] sm:$0xf]
      %v289 = vld [vmem:[%s197 + $0x98] sm:$0x1]
      %v290 = vld [vmem:[%s197 + $0x9c] sm:$0xf]
      %v291 = vld [vmem:[%s197 + $0xa0] sm:$0xf]
      %v292 = vld [vmem:[%s197 + $0xa4] sm:$0x1]
      %v293 = vld [vmem:[%s197 + $0xa8] sm:$0xf]
      %v294 = vld [vmem:[%s197 + $0xac] sm:$0xf]
      %v295 = vld [vmem:[%s197 + $0xb0] sm:$0x1]
      %v296 = vld [vmem:[%s197 + $0xb4] sm:$0xf]
      %v297 = vld [vmem:[%s197 + $0xb8] sm:$0xf]
      %v298 = vld [vmem:[%s197 + $0xbc] sm:$0x1]
      %v299 = vld [vmem:[%s197 + $0xc0] sm:$0xf]
      %v300 = vld [vmem:[%s197 + $0xc4] sm:$0xf]
      %v301 = vld [vmem:[%s197 + $0xc8] sm:$0x1]
      %v302 = vld [vmem:[%s197 + $0xcc] sm:$0xf]
      %v303 = vld [vmem:[%s197 + $0xd0] sm:$0xf]
      %v304 = vld [vmem:[%s197 + $0xd4] sm:$0x1]
      %v305 = vld [vmem:[%s205] sm:$0xf]
      %v306 = vld [vmem:[%s205 + $0x4] sm:$0xf]
      %v307 = vld [vmem:[%s205 + $0x8] sm:$0xf]
      %v308 = vld [vmem:[%s205 + $0xc] sm:$0xf]
      %v309 = vld [vmem:[%s205 + $0x10] sm:$0xf]
      %v310 = vld [vmem:[%s205 + $0x14] sm:$0xf]
      %v311 = vld [vmem:[%s205 + $0x18] sm:$0xf]
      %v312 = vld [vmem:[%s205 + $0x1c] sm:$0xf]
      %v313 = vld [vmem:[%s205 + $0x20] sm:$0xf]
      %v314 = vld [vmem:[%s205 + $0x24] sm:$0xf]
      %v315 = vld [vmem:[%s205 + $0x28] sm:$0xf]
      %v316 = vld [vmem:[%s205 + $0x2c] sm:$0xf]
      %v317 = vld [vmem:[%s205 + $0x30] sm:$0xf]
      %v318 = vld [vmem:[%s205 + $0x34] sm:$0xf]
      %v319 = vld [vmem:[%s205 + $0x38] sm:$0xf]
      %v320 = vld [vmem:[%s205 + $0x3c] sm:$0xf]
      %vm321 = vsmask.f32 3328
      %vm322 = vsmask.f32 7440
      %vm323 = vmor %vm321, %vm322
      %v325 = vshrl.u32 %v251, 16
      %v327 = vrot.slane %v325, 4
      %v328 = vshll.u32 %v251, 16
      %v330 = vrot.slane %v328, 5
      %v331 = vor.u32 %v327, %v330
      %v332 = vrot.slane %v331, 4
      %v334 = vshll.u32 %v252, 16
      %v336 = vrot.slane %v334, 5
      %v337 = vsel %vm323, %v332, %v336
      %v338 = vshrl.u32 %v252, 16
      %v340 = vrot.slane %v338, 4
      %v341 = vor.u32 %v340, %v336
      %v342 = vrot.slane %v341, 4
      %v344 = vshll.u32 %v253, 16
      %v346 = vrot.slane %v344, 5
      %v347 = vsel %vm323, %v342, %v346
      %v349 = vshrl.u32 %v254, 16
      %v351 = vrot.slane %v349, 4
      %v352 = vshll.u32 %v254, 16
      %v354 = vrot.slane %v352, 5
      %v355 = vor.u32 %v351, %v354
      %v356 = vrot.slane %v355, 4
      %v358 = vshll.u32 %v255, 16
      %v360 = vrot.slane %v358, 5
      %v361 = vsel %vm323, %v356, %v360
      %v362 = vshrl.u32 %v255, 16
      %v364 = vrot.slane %v362, 4
      %v365 = vor.u32 %v364, %v360
      %v366 = vrot.slane %v365, 4
      %v368 = vshll.u32 %v256, 16
      %v370 = vrot.slane %v368, 5
      %v371 = vsel %vm323, %v366, %v370
      %v373 = vshrl.u32 %v257, 16
      %v375 = vrot.slane %v373, 4
      %v376 = vshll.u32 %v257, 16
      %v378 = vrot.slane %v376, 5
      %v379 = vor.u32 %v375, %v378
      %v380 = vrot.slane %v379, 4
      %v382 = vshll.u32 %v258, 16
      %v384 = vrot.slane %v382, 5
      %v385 = vsel %vm323, %v380, %v384
      %v386 = vshrl.u32 %v258, 16
      %v388 = vrot.slane %v386, 4
      %v389 = vor.u32 %v388, %v384
      %v390 = vrot.slane %v389, 4
      %v392 = vshll.u32 %v259, 16
      %v394 = vrot.slane %v392, 5
      %v395 = vsel %vm323, %v390, %v394
      %v397 = vshrl.u32 %v260, 16
      %v399 = vrot.slane %v397, 4
      %v400 = vshll.u32 %v260, 16
      %v402 = vrot.slane %v400, 5
      %v403 = vor.u32 %v399, %v402
      %v404 = vrot.slane %v403, 4
      %v406 = vshll.u32 %v261, 16
      %v408 = vrot.slane %v406, 5
      %v409 = vsel %vm323, %v404, %v408
      %v410 = vshrl.u32 %v261, 16
      %v412 = vrot.slane %v410, 4
      %v413 = vor.u32 %v412, %v408
      %v414 = vrot.slane %v413, 4
      %v416 = vshll.u32 %v262, 16
      %v418 = vrot.slane %v416, 5
      %v419 = vsel %vm323, %v414, %v418
      %v421 = vshrl.u32 %v263, 16
      %v423 = vrot.slane %v421, 4
      %v424 = vshll.u32 %v263, 16
      %v426 = vrot.slane %v424, 5
      %v427 = vor.u32 %v423, %v426
      %v428 = vrot.slane %v427, 4
      %v430 = vshll.u32 %v264, 16
      %v432 = vrot.slane %v430, 5
      %v433 = vsel %vm323, %v428, %v432
      %v434 = vshrl.u32 %v264, 16
      %v436 = vrot.slane %v434, 4
      %v437 = vor.u32 %v436, %v432
      %v438 = vrot.slane %v437, 4
      %v440 = vshll.u32 %v265, 16
      %v442 = vrot.slane %v440, 5
      %v443 = vsel %vm323, %v438, %v442
      %v445 = vshrl.u32 %v266, 16
      %v447 = vrot.slane %v445, 4
      %v448 = vshll.u32 %v266, 16
      %v450 = vrot.slane %v448, 5
      %v451 = vor.u32 %v447, %v450
      %v452 = vrot.slane %v451, 4
      %v454 = vshll.u32 %v267, 16
      %v456 = vrot.slane %v454, 5
      %v457 = vsel %vm323, %v452, %v456
      %v458 = vshrl.u32 %v267, 16
      %v460 = vrot.slane %v458, 4
      %v461 = vor.u32 %v460, %v456
      %v462 = vrot.slane %v461, 4
      %v464 = vshll.u32 %v268, 16
      %v466 = vrot.slane %v464, 5
      %v467 = vsel %vm323, %v462, %v466
      %v469 = vshrl.u32 %v269, 16
      %v471 = vrot.slane %v469, 4
      %v472 = vshll.u32 %v269, 16
      %v474 = vrot.slane %v472, 5
      %v475 = vor.u32 %v471, %v474
      %v476 = vrot.slane %v475, 4
      %v478 = vshll.u32 %v270, 16
      %v480 = vrot.slane %v478, 5
      %v481 = vsel %vm323, %v476, %v480
      %v482 = vshrl.u32 %v270, 16
      %v484 = vrot.slane %v482, 4
      %v485 = vor.u32 %v484, %v480
      %v486 = vrot.slane %v485, 4
      %v488 = vshll.u32 %v271, 16
      %v490 = vrot.slane %v488, 5
      %v491 = vsel %vm323, %v486, %v490
      %v493 = vshrl.u32 %v272, 16
      %v495 = vrot.slane %v493, 4
      %v496 = vshll.u32 %v272, 16
      %v498 = vrot.slane %v496, 5
      %v499 = vor.u32 %v495, %v498
      %v500 = vrot.slane %v499, 4
      %v502 = vshll.u32 %v273, 16
      %v504 = vrot.slane %v502, 5
      %v505 = vsel %vm323, %v500, %v504
      %v506 = vshrl.u32 %v273, 16
      %v508 = vrot.slane %v506, 4
      %v509 = vor.u32 %v508, %v504
      %v510 = vrot.slane %v509, 4
      %v512 = vshll.u32 %v274, 16
      %v514 = vrot.slane %v512, 5
      %v515 = vsel %vm323, %v510, %v514
      %v517 = vshrl.u32 %v275, 16
      %v519 = vrot.slane %v517, 4
      %v520 = vshll.u32 %v275, 16
      %v522 = vrot.slane %v520, 5
      %v523 = vor.u32 %v519, %v522
      %v524 = vrot.slane %v523, 4
      %v526 = vshll.u32 %v276, 16
      %v528 = vrot.slane %v526, 5
      %v529 = vsel %vm323, %v524, %v528
      %v530 = vshrl.u32 %v276, 16
      %v532 = vrot.slane %v530, 4
      %v533 = vor.u32 %v532, %v528
      %v534 = vrot.slane %v533, 4
      %v536 = vshll.u32 %v277, 16
      %v538 = vrot.slane %v536, 5
      %v539 = vsel %vm323, %v534, %v538
      %v541 = vshrl.u32 %v278, 16
      %v543 = vrot.slane %v541, 4
      %v544 = vshll.u32 %v278, 16
      %v546 = vrot.slane %v544, 5
      %v547 = vor.u32 %v543, %v546
      %v548 = vrot.slane %v547, 4
      %v550 = vshll.u32 %v279, 16
      %v552 = vrot.slane %v550, 5
      %v553 = vsel %vm323, %v548, %v552
      %v554 = vshrl.u32 %v279, 16
      %v556 = vrot.slane %v554, 4
      %v557 = vor.u32 %v556, %v552
      %v558 = vrot.slane %v557, 4
      %v560 = vshll.u32 %v280, 16
      %v562 = vrot.slane %v560, 5
      %v563 = vsel %vm323, %v558, %v562
      %v565 = vshrl.u32 %v281, 16
      %v567 = vrot.slane %v565, 4
      %v568 = vshll.u32 %v281, 16
      %v570 = vrot.slane %v568, 5
      %v571 = vor.u32 %v567, %v570
      %v572 = vrot.slane %v571, 4
      %v574 = vshll.u32 %v282, 16
      %v576 = vrot.slane %v574, 5
      %v577 = vsel %vm323, %v572, %v576
      %v578 = vshrl.u32 %v282, 16
      %v580 = vrot.slane %v578, 4
      %v581 = vor.u32 %v580, %v576
      %v582 = vrot.slane %v581, 4
      %v584 = vshll.u32 %v283, 16
      %v586 = vrot.slane %v584, 5
      %v587 = vsel %vm323, %v582, %v586
      %v589 = vshrl.u32 %v284, 16
      %v591 = vrot.slane %v589, 4
      %v592 = vshll.u32 %v284, 16
      %v594 = vrot.slane %v592, 5
      %v595 = vor.u32 %v591, %v594
      %v596 = vrot.slane %v595, 4
      %v598 = vshll.u32 %v285, 16
      %v600 = vrot.slane %v598, 5
      %v601 = vsel %vm323, %v596, %v600
      %v602 = vshrl.u32 %v285, 16
      %v604 = vrot.slane %v602, 4
      %v605 = vor.u32 %v604, %v600
      %v606 = vrot.slane %v605, 4
      %v608 = vshll.u32 %v286, 16
      %v610 = vrot.slane %v608, 5
      %v611 = vsel %vm323, %v606, %v610
      %v613 = vshrl.u32 %v287, 16
      %v615 = vrot.slane %v613, 4
      %v616 = vshll.u32 %v287, 16
      %v618 = vrot.slane %v616, 5
      %v619 = vor.u32 %v615, %v618
      %v620 = vrot.slane %v619, 4
      %v622 = vshll.u32 %v288, 16
      %v624 = vrot.slane %v622, 5
      %v625 = vsel %vm323, %v620, %v624
      %v626 = vshrl.u32 %v288, 16
      %v628 = vrot.slane %v626, 4
      %v629 = vor.u32 %v628, %v624
      %v630 = vrot.slane %v629, 4
      %v632 = vshll.u32 %v289, 16
      %v634 = vrot.slane %v632, 5
      %v635 = vsel %vm323, %v630, %v634
      %v637 = vshrl.u32 %v290, 16
      %v639 = vrot.slane %v637, 4
      %v640 = vshll.u32 %v290, 16
      %v642 = vrot.slane %v640, 5
      %v643 = vor.u32 %v639, %v642
      %v644 = vrot.slane %v643, 4
      %v646 = vshll.u32 %v291, 16
      %v648 = vrot.slane %v646, 5
      %v649 = vsel %vm323, %v644, %v648
      %v650 = vshrl.u32 %v291, 16
      %v652 = vrot.slane %v650, 4
      %v653 = vor.u32 %v652, %v648
      %v654 = vrot.slane %v653, 4
      %v656 = vshll.u32 %v292, 16
      %v658 = vrot.slane %v656, 5
      %v659 = vsel %vm323, %v654, %v658
      %v661 = vshrl.u32 %v293, 16
      %v663 = vrot.slane %v661, 4
      %v664 = vshll.u32 %v293, 16
      %v666 = vrot.slane %v664, 5
      %v667 = vor.u32 %v663, %v666
      %v668 = vrot.slane %v667, 4
      %v670 = vshll.u32 %v294, 16
      %v672 = vrot.slane %v670, 5
      %v673 = vsel %vm323, %v668, %v672
      %v674 = vshrl.u32 %v294, 16
      %v676 = vrot.slane %v674, 4
      %v677 = vor.u32 %v676, %v672
      %v678 = vrot.slane %v677, 4
      %v680 = vshll.u32 %v295, 16
      %v682 = vrot.slane %v680, 5
      %v683 = vsel %vm323, %v678, %v682
      %v685 = vshrl.u32 %v296, 16
      %v687 = vrot.slane %v685, 4
      %v688 = vshll.u32 %v296, 16
      %v690 = vrot.slane %v688, 5
      %v691 = vor.u32 %v687, %v690
      %v692 = vrot.slane %v691, 4
      %v694 = vshll.u32 %v297, 16
      %v696 = vrot.slane %v694, 5
      %v697 = vsel %vm323, %v692, %v696
      %v698 = vshrl.u32 %v297, 16
      %v700 = vrot.slane %v698, 4
      %v701 = vor.u32 %v700, %v696
      %v702 = vrot.slane %v701, 4
      %v704 = vshll.u32 %v298, 16
      %v706 = vrot.slane %v704, 5
      %v707 = vsel %vm323, %v702, %v706
      %s708 = scalar_lea.vmem %s205, 64
      %v709 = vld [vmem:[%s708] sm:$0xf]
      %v710 = vld [vmem:[%s708 + $0x4] sm:$0xf]
      %v711 = vld [vmem:[%s708 + $0x8] sm:$0xf]
      %v712 = vld [vmem:[%s708 + $0xc] sm:$0xf]
      %v713 = vld [vmem:[%s708 + $0x10] sm:$0xf]
      %v714 = vld [vmem:[%s708 + $0x14] sm:$0xf]
      %v715 = vld [vmem:[%s708 + $0x18] sm:$0xf]
      %v716 = vld [vmem:[%s708 + $0x1c] sm:$0xf]
      %v717 = vld [vmem:[%s708 + $0x20] sm:$0xf]
      %v718 = vld [vmem:[%s708 + $0x24] sm:$0xf]
      %v719 = vld [vmem:[%s708 + $0x28] sm:$0xf]
      %v720 = vld [vmem:[%s708 + $0x2c] sm:$0xf]
      %v721 = vld [vmem:[%s708 + $0x30] sm:$0xf]
      %v722 = vld [vmem:[%s708 + $0x34] sm:$0xf]
      %v723 = vld [vmem:[%s708 + $0x38] sm:$0xf]
      %v724 = vld [vmem:[%s708 + $0x3c] sm:$0xf]
      %v725 = vunpack.c.l.b16 %v337
      %v726 = vunpack.c.l.b16 %v347
      %v727 = vunpack.c.l.b16 %v361
      %v728 = vunpack.c.l.b16 %v371
      %v729 = vunpack.c.l.b16 %v385
      %v730 = vunpack.c.l.b16 %v395
      %v731 = vunpack.c.l.b16 %v409
      %v732 = vunpack.c.l.b16 %v419
      %v733 = vunpack.c.l.b16 %v433
      %v734 = vunpack.c.l.b16 %v443
      %v735 = vunpack.c.l.b16 %v457
      %v736 = vunpack.c.l.b16 %v467
      %v737 = vunpack.c.l.b16 %v481
      %v738 = vunpack.c.l.b16 %v491
      %v739 = vunpack.c.l.b16 %v505
      %v740 = vunpack.c.l.b16 %v515
      %v741 = vunpack.c.l.b16 %v529
      %v742 = vunpack.c.l.b16 %v539
      %v743 = vunpack.c.l.b16 %v553
      %v744 = vunpack.c.l.b16 %v563
      %v745 = vunpack.c.l.b16 %v577
      %v746 = vunpack.c.l.b16 %v587
      %v747 = vunpack.c.l.b16 %v601
      %v748 = vunpack.c.l.b16 %v611
      %v749 = vunpack.c.l.b16 %v625
      %v750 = vunpack.c.l.b16 %v635
      %v751 = vunpack.c.l.b16 %v649
      %v752 = vunpack.c.l.b16 %v659
      %v753 = vunpack.c.l.b16 %v673
      %v754 = vunpack.c.l.b16 %v683
      %v755 = vunpack.c.l.b16 %v697
      %v756 = vunpack.c.l.b16 %v707
      %v757 = vpack.c.b16 %v726, %v725
      %v758 = vpack.c.b16 %v728, %v727
      %v759 = vpack.c.b16 %v730, %v729
      %v760 = vpack.c.b16 %v732, %v731
      %v761 = vpack.c.b16 %v734, %v733
      %v762 = vpack.c.b16 %v736, %v735
      %v763 = vpack.c.b16 %v738, %v737
      %v764 = vpack.c.b16 %v740, %v739
      %v765 = vpack.c.b16 %v742, %v741
      %v766 = vpack.c.b16 %v744, %v743
      %v767 = vpack.c.b16 %v746, %v745
      %v768 = vpack.c.b16 %v748, %v747
      %v769 = vpack.c.b16 %v750, %v749
      %v770 = vpack.c.b16 %v752, %v751
      %v771 = vpack.c.b16 %v754, %v753
      %v772 = vpack.c.b16 %v756, %v755
      %v805 = vunpack.c.l.b16 %v709
      %v806 = vunpack.c.l.b16 %v710
      %v807 = vunpack.c.l.b16 %v711
      %v808 = vunpack.c.l.b16 %v712
      %v809 = vunpack.c.l.b16 %v713
      %v810 = vunpack.c.l.b16 %v714
      %v811 = vunpack.c.l.b16 %v715
      %v812 = vunpack.c.l.b16 %v716
      %v813 = vunpack.c.l.b16 %v717
      %v814 = vunpack.c.l.b16 %v718
      %v815 = vunpack.c.l.b16 %v719
      %v816 = vunpack.c.l.b16 %v720
      %v817 = vunpack.c.l.b16 %v721
      %v818 = vunpack.c.l.b16 %v722
      %v819 = vunpack.c.l.b16 %v723
      %v820 = vunpack.c.l.b16 %v724
      %v821 = vpack.c.b16 %v806, %v805
      %v822 = vpack.c.b16 %v808, %v807
      %v823 = vpack.c.b16 %v810, %v809
      %v824 = vpack.c.b16 %v812, %v811
      %v825 = vpack.c.b16 %v814, %v813
      %v826 = vpack.c.b16 %v816, %v815
      %v827 = vpack.c.b16 %v818, %v817
      %v828 = vpack.c.b16 %v820, %v819
      %837 = vmatpush.bf16.msra.mxu0 %v828
      %838 = vmatpush.bf16.msra.mxu0 %v827
      %839 = vmatpush.bf16.msra.mxu0 %v826
      %840 = vmatpush.bf16.msra.mxu0 %v825
      %841 = vmatpush.bf16.msra.mxu0 %v824
      %842 = vmatpush.bf16.msra.mxu0 %v823
      %843 = vmatpush.bf16.msra.mxu0 %v822
      %844 = vmatpush.bf16.msra.mxu0 %v821
      %845 = vmatmul.bf16.gmra.mxu0 %v757
      %v846 = vpop.f32.mrf.mxu0
      %v847 = vadd.f32 0.0, %v846
      %v848 = vpop.f32.mrf.mxu0
      %v849 = vadd.f32 0.0, %v848
      %850 = vmatmul.bf16.gmra.mxu0 %v758
      %v851 = vpop.f32.mrf.mxu0
      %v852 = vadd.f32 0.0, %v851
      %v853 = vpop.f32.mrf.mxu0
      %v854 = vadd.f32 0.0, %v853
      %855 = vmatmul.bf16.gmra.mxu0 %v759
      %v856 = vpop.f32.mrf.mxu0
      %v857 = vadd.f32 0.0, %v856
      %v858 = vpop.f32.mrf.mxu0
      %v859 = vadd.f32 0.0, %v858
      %860 = vmatmul.bf16.gmra.mxu0 %v760
      %v861 = vpop.f32.mrf.mxu0
      %v862 = vadd.f32 0.0, %v861
      %v863 = vpop.f32.mrf.mxu0
      %v864 = vadd.f32 0.0, %v863
      %865 = vmatmul.bf16.gmra.mxu0 %v761
      %v866 = vpop.f32.mrf.mxu0
      %v867 = vadd.f32 0.0, %v866
      %v868 = vpop.f32.mrf.mxu0
      %v869 = vadd.f32 0.0, %v868
      %870 = vmatmul.bf16.gmra.mxu0 %v762
      %v871 = vpop.f32.mrf.mxu0
      %v872 = vadd.f32 0.0, %v871
      %v873 = vpop.f32.mrf.mxu0
      %v874 = vadd.f32 0.0, %v873
      %875 = vmatmul.bf16.gmra.mxu0 %v763
      %v876 = vpop.f32.mrf.mxu0
      %v877 = vadd.f32 0.0, %v876
      %v878 = vpop.f32.mrf.mxu0
      %v879 = vadd.f32 0.0, %v878
      %880 = vmatmul.bf16.gmra.mxu0 %v764
      %v881 = vpop.f32.mrf.mxu0
      %v882 = vadd.f32 0.0, %v881
      %v883 = vpop.f32.mrf.mxu0
      %v884 = vadd.f32 0.0, %v883
      %885 = vmatmul.bf16.gmra.mxu0 %v765
      %v886 = vpop.f32.mrf.mxu0
      %v887 = vadd.f32 0.0, %v886
      %v888 = vpop.f32.mrf.mxu0
      %v889 = vadd.f32 0.0, %v888
      %890 = vmatmul.bf16.gmra.mxu0 %v766
      %v891 = vpop.f32.mrf.mxu0
      %v892 = vadd.f32 0.0, %v891
      %v893 = vpop.f32.mrf.mxu0
      %v894 = vadd.f32 0.0, %v893
      %895 = vmatmul.bf16.gmra.mxu0 %v767
      %v896 = vpop.f32.mrf.mxu0
      %v897 = vadd.f32 0.0, %v896
      %v898 = vpop.f32.mrf.mxu0
      %v899 = vadd.f32 0.0, %v898
      %900 = vmatmul.bf16.gmra.mxu0 %v768
      %v901 = vpop.f32.mrf.mxu0
      %v902 = vadd.f32 0.0, %v901
      %v903 = vpop.f32.mrf.mxu0
      %v904 = vadd.f32 0.0, %v903
      %905 = vmatmul.bf16.gmra.mxu0 %v769
      %v906 = vpop.f32.mrf.mxu0
      %v907 = vadd.f32 0.0, %v906
      %v908 = vpop.f32.mrf.mxu0
      %v909 = vadd.f32 0.0, %v908
      %910 = vmatmul.bf16.gmra.mxu0 %v770
      %v911 = vpop.f32.mrf.mxu0
      %v912 = vadd.f32 0.0, %v911
      %v913 = vpop.f32.mrf.mxu0
      %v914 = vadd.f32 0.0, %v913
      %915 = vmatmul.bf16.gmra.mxu0 %v771
      %v916 = vpop.f32.mrf.mxu0
      %v917 = vadd.f32 0.0, %v916
      %v918 = vpop.f32.mrf.mxu0
      %v919 = vadd.f32 0.0, %v918
      %920 = vmatmul.bf16.gmra.mxu0 %v772
      %v921 = vpop.f32.mrf.mxu0
      %v922 = vadd.f32 0.0, %v921
      %v923 = vpop.f32.mrf.mxu0
      %v924 = vadd.f32 0.0, %v923
      %925 = vdwg.mxu0
      %v958 = vunpack.c.l.b16 %v251
      %v959 = vunpack.c.l.b16 %v252
      %v960 = vunpack.c.l.b16 %v254
      %v961 = vunpack.c.l.b16 %v255
      %v962 = vunpack.c.l.b16 %v257
      %v963 = vunpack.c.l.b16 %v258
      %v964 = vunpack.c.l.b16 %v260
      %v965 = vunpack.c.l.b16 %v261
      %v966 = vunpack.c.l.b16 %v263
      %v967 = vunpack.c.l.b16 %v264
      %v968 = vunpack.c.l.b16 %v266
      %v969 = vunpack.c.l.b16 %v267
      %v970 = vunpack.c.l.b16 %v269
      %v971 = vunpack.c.l.b16 %v270
      %v972 = vunpack.c.l.b16 %v272
      %v973 = vunpack.c.l.b16 %v273
      %v974 = vunpack.c.l.b16 %v275
      %v975 = vunpack.c.l.b16 %v276
      %v976 = vunpack.c.l.b16 %v278
      %v977 = vunpack.c.l.b16 %v279
      %v978 = vunpack.c.l.b16 %v281
      %v979 = vunpack.c.l.b16 %v282
      %v980 = vunpack.c.l.b16 %v284
      %v981 = vunpack.c.l.b16 %v285
      %v982 = vunpack.c.l.b16 %v287
      %v983 = vunpack.c.l.b16 %v288
      %v984 = vunpack.c.l.b16 %v290
      %v985 = vunpack.c.l.b16 %v291
      %v986 = vunpack.c.l.b16 %v293
      %v987 = vunpack.c.l.b16 %v294
      %v988 = vunpack.c.l.b16 %v296
      %v989 = vunpack.c.l.b16 %v297
      %v990 = vpack.c.b16 %v959, %v958
      %v991 = vpack.c.b16 %v961, %v960
      %v992 = vpack.c.b16 %v963, %v962
      %v993 = vpack.c.b16 %v965, %v964
      %v994 = vpack.c.b16 %v967, %v966
      %v995 = vpack.c.b16 %v969, %v968
      %v996 = vpack.c.b16 %v971, %v970
      %v997 = vpack.c.b16 %v973, %v972
      %v998 = vpack.c.b16 %v975, %v974
      %v999 = vpack.c.b16 %v977, %v976
      %v1000 = vpack.c.b16 %v979, %v978
      %v1001 = vpack.c.b16 %v981, %v980
      %v1002 = vpack.c.b16 %v983, %v982
      %v1003 = vpack.c.b16 %v985, %v984
      %v1004 = vpack.c.b16 %v987, %v986
      %v1005 = vpack.c.b16 %v989, %v988
      %v1038 = vunpack.c.l.b16 %v305
      %v1039 = vunpack.c.l.b16 %v306
      %v1040 = vunpack.c.l.b16 %v307
      %v1041 = vunpack.c.l.b16 %v308
      %v1042 = vunpack.c.l.b16 %v309
      %v1043 = vunpack.c.l.b16 %v310
      %v1044 = vunpack.c.l.b16 %v311
      %v1045 = vunpack.c.l.b16 %v312
      %v1046 = vunpack.c.l.b16 %v313
      %v1047 = vunpack.c.l.b16 %v314
      %v1048 = vunpack.c.l.b16 %v315
      %v1049 = vunpack.c.l.b16 %v316
      %v1050 = vunpack.c.l.b16 %v317
      %v1051 = vunpack.c.l.b16 %v318
      %v1052 = vunpack.c.l.b16 %v319
      %v1053 = vunpack.c.l.b16 %v320
      %v1054 = vpack.c.b16 %v1039, %v1038
      %v1055 = vpack.c.b16 %v1041, %v1040
      %v1056 = vpack.c.b16 %v1043, %v1042
      %v1057 = vpack.c.b16 %v1045, %v1044
      %v1058 = vpack.c.b16 %v1047, %v1046
      %v1059 = vpack.c.b16 %v1049, %v1048
      %v1060 = vpack.c.b16 %v1051, %v1050
      %v1061 = vpack.c.b16 %v1053, %v1052
      %1070 = vmatpush.bf16.msra.mxu0 %v1061
      %1071 = vmatpush.bf16.msra.mxu0 %v1060
      %1072 = vmatpush.bf16.msra.mxu0 %v1059
      %1073 = vmatpush.bf16.msra.mxu0 %v1058
      %1074 = vmatpush.bf16.msra.mxu0 %v1057
      %1075 = vmatpush.bf16.msra.mxu0 %v1056
      %1076 = vmatpush.bf16.msra.mxu0 %v1055
      %1077 = vmatpush.bf16.msra.mxu0 %v1054
      %1078 = vmatmul.bf16.gmra.mxu0 %v990
      %v1079 = vpop.f32.mrf.mxu0
      %v1080 = vadd.f32 %v847, %v1079
      %v1081 = vpop.f32.mrf.mxu0
      %v1082 = vadd.f32 %v849, %v1081
      %1083 = vmatmul.bf16.gmra.mxu0 %v991
      %v1084 = vpop.f32.mrf.mxu0
      %v1085 = vadd.f32 %v852, %v1084
      %v1086 = vpop.f32.mrf.mxu0
      %v1087 = vadd.f32 %v854, %v1086
      %1088 = vmatmul.bf16.gmra.mxu0 %v992
      %v1089 = vpop.f32.mrf.mxu0
      %v1090 = vadd.f32 %v857, %v1089
      %v1091 = vpop.f32.mrf.mxu0
      %v1092 = vadd.f32 %v859, %v1091
      %1093 = vmatmul.bf16.gmra.mxu0 %v993
      %v1094 = vpop.f32.mrf.mxu0
      %v1095 = vadd.f32 %v862, %v1094
      %v1096 = vpop.f32.mrf.mxu0
      %v1097 = vadd.f32 %v864, %v1096
      %1098 = vmatmul.bf16.gmra.mxu0 %v994
      %v1099 = vpop.f32.mrf.mxu0
      %v1100 = vadd.f32 %v867, %v1099
      %v1101 = vpop.f32.mrf.mxu0
      %v1102 = vadd.f32 %v869, %v1101
      %1103 = vmatmul.bf16.gmra.mxu0 %v995
      %v1104 = vpop.f32.mrf.mxu0
      %v1105 = vadd.f32 %v872, %v1104
      %v1106 = vpop.f32.mrf.mxu0
      %v1107 = vadd.f32 %v874, %v1106
      %1108 = vmatmul.bf16.gmra.mxu0 %v996
      %v1109 = vpop.f32.mrf.mxu0
      %v1110 = vadd.f32 %v877, %v1109
      %v1111 = vpop.f32.mrf.mxu0
      %v1112 = vadd.f32 %v879, %v1111
      %1113 = vmatmul.bf16.gmra.mxu0 %v997
      %v1114 = vpop.f32.mrf.mxu0
      %v1115 = vadd.f32 %v882, %v1114
      %v1116 = vpop.f32.mrf.mxu0
      %v1117 = vadd.f32 %v884, %v1116
      %1118 = vmatmul.bf16.gmra.mxu0 %v998
      %v1119 = vpop.f32.mrf.mxu0
      %v1120 = vadd.f32 %v887, %v1119
      %v1121 = vpop.f32.mrf.mxu0
      %v1122 = vadd.f32 %v889, %v1121
      %1123 = vmatmul.bf16.gmra.mxu0 %v999
      %v1124 = vpop.f32.mrf.mxu0
      %v1125 = vadd.f32 %v892, %v1124
      %v1126 = vpop.f32.mrf.mxu0
      %v1127 = vadd.f32 %v894, %v1126
      %1128 = vmatmul.bf16.gmra.mxu0 %v1000
      %v1129 = vpop.f32.mrf.mxu0
      %v1130 = vadd.f32 %v897, %v1129
      %v1131 = vpop.f32.mrf.mxu0
      %v1132 = vadd.f32 %v899, %v1131
      %1133 = vmatmul.bf16.gmra.mxu0 %v1001
      %v1134 = vpop.f32.mrf.mxu0
      %v1135 = vadd.f32 %v902, %v1134
      %v1136 = vpop.f32.mrf.mxu0
      %v1137 = vadd.f32 %v904, %v1136
      %1138 = vmatmul.bf16.gmra.mxu0 %v1002
      %v1139 = vpop.f32.mrf.mxu0
      %v1140 = vadd.f32 %v907, %v1139
      %v1141 = vpop.f32.mrf.mxu0
      %v1142 = vadd.f32 %v909, %v1141
      %1143 = vmatmul.bf16.gmra.mxu0 %v1003
      %v1144 = vpop.f32.mrf.mxu0
      %v1145 = vadd.f32 %v912, %v1144
      %v1146 = vpop.f32.mrf.mxu0
      %v1147 = vadd.f32 %v914, %v1146
      %1148 = vmatmul.bf16.gmra.mxu0 %v1004
      %v1149 = vpop.f32.mrf.mxu0
      %v1150 = vadd.f32 %v917, %v1149
      %v1151 = vpop.f32.mrf.mxu0
      %v1152 = vadd.f32 %v919, %v1151
      %1153 = vmatmul.bf16.gmra.mxu0 %v1005
      %v1154 = vpop.f32.mrf.mxu0
      %v1155 = vadd.f32 %v922, %v1154
      %v1156 = vpop.f32.mrf.mxu0
      %v1157 = vadd.f32 %v924, %v1156
      %1158 = vdwg.mxu0
      %vm1175 = vcmask 1042432
      %vm1176 = vcmask 1046532
      %vm1177 = vmor %vm1175, %vm1176
      %v1178 = vrot.slane %v251, 5
      %v1179 = vrot.slane %v1178, 4
      %v1180 = vrot.slane %v252, 5
      %v1181 = vsel %vm1177, %v1179, %v1180
      %v1182 = vrot.slane %v1180, 4
      %v1183 = vrot.slane %v253, 5
      %v1184 = vsel %vm1177, %v1182, %v1183
      %v1185 = vrot.slane %v254, 5
      %v1186 = vrot.slane %v1185, 4
      %v1187 = vrot.slane %v255, 5
      %v1188 = vsel %vm1177, %v1186, %v1187
      %v1189 = vrot.slane %v1187, 4
      %v1190 = vrot.slane %v256, 5
      %v1191 = vsel %vm1177, %v1189, %v1190
      %v1192 = vrot.slane %v257, 5
      %v1193 = vrot.slane %v1192, 4
      %v1194 = vrot.slane %v258, 5
      %v1195 = vsel %vm1177, %v1193, %v1194
      %v1196 = vrot.slane %v1194, 4
      %v1197 = vrot.slane %v259, 5
      %v1198 = vsel %vm1177, %v1196, %v1197
      %v1199 = vrot.slane %v260, 5
      %v1200 = vrot.slane %v1199, 4
      %v1201 = vrot.slane %v261, 5
      %v1202 = vsel %vm1177, %v1200, %v1201
      %v1203 = vrot.slane %v1201, 4
      %v1204 = vrot.slane %v262, 5
      %v1205 = vsel %vm1177, %v1203, %v1204
      %v1206 = vrot.slane %v263, 5
      %v1207 = vrot.slane %v1206, 4
      %v1208 = vrot.slane %v264, 5
      %v1209 = vsel %vm1177, %v1207, %v1208
      %v1210 = vrot.slane %v1208, 4
      %v1211 = vrot.slane %v265, 5
      %v1212 = vsel %vm1177, %v1210, %v1211
      %v1213 = vrot.slane %v266, 5
      %v1214 = vrot.slane %v1213, 4
      %v1215 = vrot.slane %v267, 5
      %v1216 = vsel %vm1177, %v1214, %v1215
      %v1217 = vrot.slane %v1215, 4
      %v1218 = vrot.slane %v268, 5
      %v1219 = vsel %vm1177, %v1217, %v1218
      %v1220 = vrot.slane %v269, 5
      %v1221 = vrot.slane %v1220, 4
      %v1222 = vrot.slane %v270, 5
      %v1223 = vsel %vm1177, %v1221, %v1222
      %v1224 = vrot.slane %v1222, 4
      %v1225 = vrot.slane %v271, 5
      %v1226 = vsel %vm1177, %v1224, %v1225
      %v1227 = vrot.slane %v272, 5
      %v1228 = vrot.slane %v1227, 4
      %v1229 = vrot.slane %v273, 5
      %v1230 = vsel %vm1177, %v1228, %v1229
      %v1231 = vrot.slane %v1229, 4
      %v1232 = vrot.slane %v274, 5
      %v1233 = vsel %vm1177, %v1231, %v1232
      %v1234 = vrot.slane %v275, 5
      %v1235 = vrot.slane %v1234, 4
      %v1236 = vrot.slane %v276, 5
      %v1237 = vsel %vm1177, %v1235, %v1236
      %v1238 = vrot.slane %v1236, 4
      %v1239 = vrot.slane %v277, 5
      %v1240 = vsel %vm1177, %v1238, %v1239
      %v1241 = vrot.slane %v278, 5
      %v1242 = vrot.slane %v1241, 4
      %v1243 = vrot.slane %v279, 5
      %v1244 = vsel %vm1177, %v1242, %v1243
      %v1245 = vrot.slane %v1243, 4
      %v1246 = vrot.slane %v280, 5
      %v1247 = vsel %vm1177, %v1245, %v1246
      %v1248 = vrot.slane %v281, 5
      %v1249 = vrot.slane %v1248, 4
      %v1250 = vrot.slane %v282, 5
      %v1251 = vsel %vm1177, %v1249, %v1250
      %v1252 = vrot.slane %v1250, 4
      %v1253 = vrot.slane %v283, 5
      %v1254 = vsel %vm1177, %v1252, %v1253
      %v1255 = vrot.slane %v284, 5
      %v1256 = vrot.slane %v1255, 4
      %v1257 = vrot.slane %v285, 5
      %v1258 = vsel %vm1177, %v1256, %v1257
      %v1259 = vrot.slane %v1257, 4
      %v1260 = vrot.slane %v286, 5
      %v1261 = vsel %vm1177, %v1259, %v1260
      %v1262 = vrot.slane %v287, 5
      %v1263 = vrot.slane %v1262, 4
      %v1264 = vrot.slane %v288, 5
      %v1265 = vsel %vm1177, %v1263, %v1264
      %v1266 = vrot.slane %v1264, 4
      %v1267 = vrot.slane %v289, 5
      %v1268 = vsel %vm1177, %v1266, %v1267
      %v1269 = vrot.slane %v290, 5
      %v1270 = vrot.slane %v1269, 4
      %v1271 = vrot.slane %v291, 5
      %v1272 = vsel %vm1177, %v1270, %v1271
      %v1273 = vrot.slane %v1271, 4
      %v1274 = vrot.slane %v292, 5
      %v1275 = vsel %vm1177, %v1273, %v1274
      %v1276 = vrot.slane %v293, 5
      %v1277 = vrot.slane %v1276, 4
      %v1278 = vrot.slane %v294, 5
      %v1279 = vsel %vm1177, %v1277, %v1278
      %v1280 = vrot.slane %v1278, 4
      %v1281 = vrot.slane %v295, 5
      %v1282 = vsel %vm1177, %v1280, %v1281
      %v1283 = vrot.slane %v296, 5
      %v1284 = vrot.slane %v1283, 4
      %v1285 = vrot.slane %v297, 5
      %v1286 = vsel %vm1177, %v1284, %v1285
      %v1287 = vrot.slane %v1285, 4
      %v1288 = vrot.slane %v298, 5
      %v1289 = vsel %vm1177, %v1287, %v1288
      %s1290 = scalar_lea.vmem %s205, 128
      %v1291 = vld [vmem:[%s1290] sm:$0xf]
      %v1292 = vld [vmem:[%s1290 + $0x4] sm:$0xf]
      %v1293 = vld [vmem:[%s1290 + $0x8] sm:$0xf]
      %v1294 = vld [vmem:[%s1290 + $0xc] sm:$0xf]
      %v1295 = vld [vmem:[%s1290 + $0x10] sm:$0xf]
      %v1296 = vld [vmem:[%s1290 + $0x14] sm:$0xf]
      %v1297 = vld [vmem:[%s1290 + $0x18] sm:$0xf]
      %v1298 = vld [vmem:[%s1290 + $0x1c] sm:$0xf]
      %v1299 = vld [vmem:[%s1290 + $0x20] sm:$0xf]
      %v1300 = vld [vmem:[%s1290 + $0x24] sm:$0xf]
      %v1301 = vld [vmem:[%s1290 + $0x28] sm:$0xf]
      %v1302 = vld [vmem:[%s1290 + $0x2c] sm:$0xf]
      %v1303 = vld [vmem:[%s1290 + $0x30] sm:$0xf]
      %v1304 = vld [vmem:[%s1290 + $0x34] sm:$0xf]
      %v1305 = vld [vmem:[%s1290 + $0x38] sm:$0xf]
      %v1306 = vld [vmem:[%s1290 + $0x3c] sm:$0xf]
      %v1307 = vunpack.c.l.b16 %v1181
      %v1308 = vunpack.c.l.b16 %v1184
      %v1309 = vunpack.c.l.b16 %v1188
      %v1310 = vunpack.c.l.b16 %v1191
      %v1311 = vunpack.c.l.b16 %v1195
      %v1312 = vunpack.c.l.b16 %v1198
      %v1313 = vunpack.c.l.b16 %v1202
      %v1314 = vunpack.c.l.b16 %v1205
      %v1315 = vunpack.c.l.b16 %v1209
      %v1316 = vunpack.c.l.b16 %v1212
      %v1317 = vunpack.c.l.b16 %v1216
      %v1318 = vunpack.c.l.b16 %v1219
      %v1319 = vunpack.c.l.b16 %v1223
      %v1320 = vunpack.c.l.b16 %v1226
      %v1321 = vunpack.c.l.b16 %v1230
      %v1322 = vunpack.c.l.b16 %v1233
      %v1323 = vunpack.c.l.b16 %v1237
      %v1324 = vunpack.c.l.b16 %v1240
      %v1325 = vunpack.c.l.b16 %v1244
      %v1326 = vunpack.c.l.b16 %v1247
      %v1327 = vunpack.c.l.b16 %v1251
      %v1328 = vunpack.c.l.b16 %v1254
      %v1329 = vunpack.c.l.b16 %v1258
      %v1330 = vunpack.c.l.b16 %v1261
      %v1331 = vunpack.c.l.b16 %v1265
      %v1332 = vunpack.c.l.b16 %v1268
      %v1333 = vunpack.c.l.b16 %v1272
      %v1334 = vunpack.c.l.b16 %v1275
      %v1335 = vunpack.c.l.b16 %v1279
      %v1336 = vunpack.c.l.b16 %v1282
      %v1337 = vunpack.c.l.b16 %v1286
      %v1338 = vunpack.c.l.b16 %v1289
      %v1339 = vpack.c.b16 %v1308, %v1307
      %v1340 = vpack.c.b16 %v1310, %v1309
      %v1341 = vpack.c.b16 %v1312, %v1311
      %v1342 = vpack.c.b16 %v1314, %v1313
      %v1343 = vpack.c.b16 %v1316, %v1315
      %v1344 = vpack.c.b16 %v1318, %v1317
      %v1345 = vpack.c.b16 %v1320, %v1319
      %v1346 = vpack.c.b16 %v1322, %v1321
      %v1347 = vpack.c.b16 %v1324, %v1323
      %v1348 = vpack.c.b16 %v1326, %v1325
      %v1349 = vpack.c.b16 %v1328, %v1327
      %v1350 = vpack.c.b16 %v1330, %v1329
      %v1351 = vpack.c.b16 %v1332, %v1331
      %v1352 = vpack.c.b16 %v1334, %v1333
      %v1353 = vpack.c.b16 %v1336, %v1335
      %v1354 = vpack.c.b16 %v1338, %v1337
      %v1387 = vunpack.c.l.b16 %v1291
      %v1388 = vunpack.c.l.b16 %v1292
      %v1389 = vunpack.c.l.b16 %v1293
      %v1390 = vunpack.c.l.b16 %v1294
      %v1391 = vunpack.c.l.b16 %v1295
      %v1392 = vunpack.c.l.b16 %v1296
      %v1393 = vunpack.c.l.b16 %v1297
      %v1394 = vunpack.c.l.b16 %v1298
      %v1395 = vunpack.c.l.b16 %v1299
      %v1396 = vunpack.c.l.b16 %v1300
      %v1397 = vunpack.c.l.b16 %v1301
      %v1398 = vunpack.c.l.b16 %v1302
      %v1399 = vunpack.c.l.b16 %v1303
      %v1400 = vunpack.c.l.b16 %v1304
      %v1401 = vunpack.c.l.b16 %v1305
      %v1402 = vunpack.c.l.b16 %v1306
      %v1403 = vpack.c.b16 %v1388, %v1387
      %v1404 = vpack.c.b16 %v1390, %v1389
      %v1405 = vpack.c.b16 %v1392, %v1391
      %v1406 = vpack.c.b16 %v1394, %v1393
      %v1407 = vpack.c.b16 %v1396, %v1395
      %v1408 = vpack.c.b16 %v1398, %v1397
      %v1409 = vpack.c.b16 %v1400, %v1399
      %v1410 = vpack.c.b16 %v1402, %v1401
      %1419 = vmatpush.bf16.msra.mxu0 %v1410
      %1420 = vmatpush.bf16.msra.mxu0 %v1409
      %1421 = vmatpush.bf16.msra.mxu0 %v1408
      %1422 = vmatpush.bf16.msra.mxu0 %v1407
      %1423 = vmatpush.bf16.msra.mxu0 %v1406
      %1424 = vmatpush.bf16.msra.mxu0 %v1405
      %1425 = vmatpush.bf16.msra.mxu0 %v1404
      %1426 = vmatpush.bf16.msra.mxu0 %v1403
      %1427 = vmatmul.bf16.gmra.mxu0 %v1339
      %v1428 = vpop.f32.mrf.mxu0
      %v1429 = vadd.f32 0.0, %v1428
      %v1430 = vpop.f32.mrf.mxu0
      %v1431 = vadd.f32 0.0, %v1430
      %1432 = vmatmul.bf16.gmra.mxu0 %v1340
      %v1433 = vpop.f32.mrf.mxu0
      %v1434 = vadd.f32 0.0, %v1433
      %v1435 = vpop.f32.mrf.mxu0
      %v1436 = vadd.f32 0.0, %v1435
      %1437 = vmatmul.bf16.gmra.mxu0 %v1341
      %v1438 = vpop.f32.mrf.mxu0
      %v1439 = vadd.f32 0.0, %v1438
      %v1440 = vpop.f32.mrf.mxu0
      %v1441 = vadd.f32 0.0, %v1440
      %1442 = vmatmul.bf16.gmra.mxu0 %v1342
      %v1443 = vpop.f32.mrf.mxu0
      %v1444 = vadd.f32 0.0, %v1443
      %v1445 = vpop.f32.mrf.mxu0
      %v1446 = vadd.f32 0.0, %v1445
      %1447 = vmatmul.bf16.gmra.mxu0 %v1343
      %v1448 = vpop.f32.mrf.mxu0
      %v1449 = vadd.f32 0.0, %v1448
      %v1450 = vpop.f32.mrf.mxu0
      %v1451 = vadd.f32 0.0, %v1450
      %1452 = vmatmul.bf16.gmra.mxu0 %v1344
      %v1453 = vpop.f32.mrf.mxu0
      %v1454 = vadd.f32 0.0, %v1453
      %v1455 = vpop.f32.mrf.mxu0
      %v1456 = vadd.f32 0.0, %v1455
      %1457 = vmatmul.bf16.gmra.mxu0 %v1345
      %v1458 = vpop.f32.mrf.mxu0
      %v1459 = vadd.f32 0.0, %v1458
      %v1460 = vpop.f32.mrf.mxu0
      %v1461 = vadd.f32 0.0, %v1460
      %1462 = vmatmul.bf16.gmra.mxu0 %v1346
      %v1463 = vpop.f32.mrf.mxu0
      %v1464 = vadd.f32 0.0, %v1463
      %v1465 = vpop.f32.mrf.mxu0
      %v1466 = vadd.f32 0.0, %v1465
      %1467 = vmatmul.bf16.gmra.mxu0 %v1347
      %v1468 = vpop.f32.mrf.mxu0
      %v1469 = vadd.f32 0.0, %v1468
      %v1470 = vpop.f32.mrf.mxu0
      %v1471 = vadd.f32 0.0, %v1470
      %1472 = vmatmul.bf16.gmra.mxu0 %v1348
      %v1473 = vpop.f32.mrf.mxu0
      %v1474 = vadd.f32 0.0, %v1473
      %v1475 = vpop.f32.mrf.mxu0
      %v1476 = vadd.f32 0.0, %v1475
      %1477 = vmatmul.bf16.gmra.mxu0 %v1349
      %v1478 = vpop.f32.mrf.mxu0
      %v1479 = vadd.f32 0.0, %v1478
      %v1480 = vpop.f32.mrf.mxu0
      %v1481 = vadd.f32 0.0, %v1480
      %1482 = vmatmul.bf16.gmra.mxu0 %v1350
      %v1483 = vpop.f32.mrf.mxu0
      %v1484 = vadd.f32 0.0, %v1483
      %v1485 = vpop.f32.mrf.mxu0
      %v1486 = vadd.f32 0.0, %v1485
      %1487 = vmatmul.bf16.gmra.mxu0 %v1351
      %v1488 = vpop.f32.mrf.mxu0
      %v1489 = vadd.f32 0.0, %v1488
      %v1490 = vpop.f32.mrf.mxu0
      %v1491 = vadd.f32 0.0, %v1490
      %1492 = vmatmul.bf16.gmra.mxu0 %v1352
      %v1493 = vpop.f32.mrf.mxu0
      %v1494 = vadd.f32 0.0, %v1493
      %v1495 = vpop.f32.mrf.mxu0
      %v1496 = vadd.f32 0.0, %v1495
      %1497 = vmatmul.bf16.gmra.mxu0 %v1353
      %v1498 = vpop.f32.mrf.mxu0
      %v1499 = vadd.f32 0.0, %v1498
      %v1500 = vpop.f32.mrf.mxu0
      %v1501 = vadd.f32 0.0, %v1500
      %1502 = vmatmul.bf16.gmra.mxu0 %v1354
      %v1503 = vpop.f32.mrf.mxu0
      %v1504 = vadd.f32 0.0, %v1503
      %v1505 = vpop.f32.mrf.mxu0
      %v1506 = vadd.f32 0.0, %v1505
      %1507 = vdwg.mxu0
      %v1508 = vadd.f32 %v1080, %v1429
      %v1509 = vadd.f32 %v1082, %v1431
      %v1510 = vadd.f32 %v1085, %v1434
      %v1511 = vadd.f32 %v1087, %v1436
      %v1512 = vadd.f32 %v1090, %v1439
      %v1513 = vadd.f32 %v1092, %v1441
      %v1514 = vadd.f32 %v1095, %v1444
      %v1515 = vadd.f32 %v1097, %v1446
      %v1516 = vadd.f32 %v1100, %v1449
      %v1517 = vadd.f32 %v1102, %v1451
      %v1518 = vadd.f32 %v1105, %v1454
      %v1519 = vadd.f32 %v1107, %v1456
      %v1520 = vadd.f32 %v1110, %v1459
      %v1521 = vadd.f32 %v1112, %v1461
      %v1522 = vadd.f32 %v1115, %v1464
      %v1523 = vadd.f32 %v1117, %v1466
      %v1524 = vadd.f32 %v1120, %v1469
      %v1525 = vadd.f32 %v1122, %v1471
      %v1526 = vadd.f32 %v1125, %v1474
      %v1527 = vadd.f32 %v1127, %v1476
      %v1528 = vadd.f32 %v1130, %v1479
      %v1529 = vadd.f32 %v1132, %v1481
      %v1530 = vadd.f32 %v1135, %v1484
      %v1531 = vadd.f32 %v1137, %v1486
      %v1532 = vadd.f32 %v1140, %v1489
      %v1533 = vadd.f32 %v1142, %v1491
      %v1534 = vadd.f32 %v1145, %v1494
      %v1535 = vadd.f32 %v1147, %v1496
      %v1536 = vadd.f32 %v1150, %v1499
      %v1537 = vadd.f32 %v1152, %v1501
      %v1538 = vadd.f32 %v1155, %v1504
      %v1539 = vadd.f32 %v1157, %v1506
      %s1540 = scalar_lea.vmem %s205, 192
      %v1541 = vld [vmem:[%s1540] sm:$0xf]
      %v1542 = vld [vmem:[%s1540 + $0x4] sm:$0xf]
      %v1543 = vld [vmem:[%s1540 + $0x8] sm:$0xf]
      %v1544 = vld [vmem:[%s1540 + $0xc] sm:$0xf]
      %v1545 = vld [vmem:[%s1540 + $0x10] sm:$0xf]
      %v1546 = vld [vmem:[%s1540 + $0x14] sm:$0xf]
      %v1547 = vld [vmem:[%s1540 + $0x18] sm:$0xf]
      %v1548 = vld [vmem:[%s1540 + $0x1c] sm:$0xf]
      %v1549 = vld [vmem:[%s1540 + $0x20] sm:$0xf]
      %v1550 = vld [vmem:[%s1540 + $0x24] sm:$0xf]
      %v1551 = vld [vmem:[%s1540 + $0x28] sm:$0xf]
      %v1552 = vld [vmem:[%s1540 + $0x2c] sm:$0xf]
      %v1553 = vld [vmem:[%s1540 + $0x30] sm:$0xf]
      %v1554 = vld [vmem:[%s1540 + $0x34] sm:$0xf]
      %v1555 = vld [vmem:[%s1540 + $0x38] sm:$0xf]
      %v1556 = vld [vmem:[%s1540 + $0x3c] sm:$0xf]
      %v1559 = vunpack.c.l.b16 %v299
      %v1560 = vunpack.c.l.b16 %v300
      %v1561 = vpack.c.b16 %v1560, %v1559
      %v1579 = vunpack.c.l.b16 %v1541
      %v1580 = vunpack.c.l.b16 %v1542
      %v1581 = vunpack.c.l.b16 %v1543
      %v1582 = vunpack.c.l.b16 %v1544
      %v1583 = vunpack.c.l.b16 %v1545
      %v1584 = vunpack.c.l.b16 %v1546
      %v1585 = vunpack.c.l.b16 %v1547
      %v1586 = vunpack.c.l.b16 %v1548
      %v1587 = vunpack.c.l.b16 %v1549
      %v1588 = vunpack.c.l.b16 %v1550
      %v1589 = vunpack.c.l.b16 %v1551
      %v1590 = vunpack.c.l.b16 %v1552
      %v1591 = vunpack.c.l.b16 %v1553
      %v1592 = vunpack.c.l.b16 %v1554
      %v1593 = vunpack.c.l.b16 %v1555
      %v1594 = vunpack.c.l.b16 %v1556
      %v1595 = vpack.c.b16 %v1580, %v1579
      %v1596 = vpack.c.b16 %v1582, %v1581
      %v1597 = vpack.c.b16 %v1584, %v1583
      %v1598 = vpack.c.b16 %v1586, %v1585
      %v1599 = vpack.c.b16 %v1588, %v1587
      %v1600 = vpack.c.b16 %v1590, %v1589
      %v1601 = vpack.c.b16 %v1592, %v1591
      %v1602 = vpack.c.b16 %v1594, %v1593
      %1611 = vmatpush.bf16.msra.mxu0 %v1602
      %1612 = vmatpush.bf16.msra.mxu0 %v1601
      %1613 = vmatpush.bf16.msra.mxu0 %v1600
      %1614 = vmatpush.bf16.msra.mxu0 %v1599
      %1615 = vmatpush.bf16.msra.mxu0 %v1598
      %1616 = vmatpush.bf16.msra.mxu0 %v1597
      %1617 = vmatpush.bf16.msra.mxu0 %v1596
      %1618 = vmatpush.bf16.msra.mxu0 %v1595
      %1619 = vmatmul.bf16.gmra.mxu0 %v991
      %v1620 = vpop.f32.mrf.mxu0
      %v1621 = vadd.f32 0.0, %v1620
      %v1622 = vpop.f32.mrf.mxu0
      %v1623 = vadd.f32 0.0, %v1622
      %1624 = vmatmul.bf16.gmra.mxu0 %v992
      %v1625 = vpop.f32.mrf.mxu0
      %v1626 = vadd.f32 0.0, %v1625
      %v1627 = vpop.f32.mrf.mxu0
      %v1628 = vadd.f32 0.0, %v1627
      %1629 = vmatmul.bf16.gmra.mxu0 %v993
      %v1630 = vpop.f32.mrf.mxu0
      %v1631 = vadd.f32 0.0, %v1630
      %v1632 = vpop.f32.mrf.mxu0
      %v1633 = vadd.f32 0.0, %v1632
      %1634 = vmatmul.bf16.gmra.mxu0 %v994
      %v1635 = vpop.f32.mrf.mxu0
      %v1636 = vadd.f32 0.0, %v1635
      %v1637 = vpop.f32.mrf.mxu0
      %v1638 = vadd.f32 0.0, %v1637
      %1639 = vmatmul.bf16.gmra.mxu0 %v995
      %v1640 = vpop.f32.mrf.mxu0
      %v1641 = vadd.f32 0.0, %v1640
      %v1642 = vpop.f32.mrf.mxu0
      %v1643 = vadd.f32 0.0, %v1642
      %1644 = vmatmul.bf16.gmra.mxu0 %v996
      %v1645 = vpop.f32.mrf.mxu0
      %v1646 = vadd.f32 0.0, %v1645
      %v1647 = vpop.f32.mrf.mxu0
      %v1648 = vadd.f32 0.0, %v1647
      %1649 = vmatmul.bf16.gmra.mxu0 %v997
      %v1650 = vpop.f32.mrf.mxu0
      %v1651 = vadd.f32 0.0, %v1650
      %v1652 = vpop.f32.mrf.mxu0
      %v1653 = vadd.f32 0.0, %v1652
      %1654 = vmatmul.bf16.gmra.mxu0 %v998
      %v1655 = vpop.f32.mrf.mxu0
      %v1656 = vadd.f32 0.0, %v1655
      %v1657 = vpop.f32.mrf.mxu0
      %v1658 = vadd.f32 0.0, %v1657
      %1659 = vmatmul.bf16.gmra.mxu0 %v999
      %v1660 = vpop.f32.mrf.mxu0
      %v1661 = vadd.f32 0.0, %v1660
      %v1662 = vpop.f32.mrf.mxu0
      %v1663 = vadd.f32 0.0, %v1662
      %1664 = vmatmul.bf16.gmra.mxu0 %v1000
      %v1665 = vpop.f32.mrf.mxu0
      %v1666 = vadd.f32 0.0, %v1665
      %v1667 = vpop.f32.mrf.mxu0
      %v1668 = vadd.f32 0.0, %v1667
      %1669 = vmatmul.bf16.gmra.mxu0 %v1001
      %v1670 = vpop.f32.mrf.mxu0
      %v1671 = vadd.f32 0.0, %v1670
      %v1672 = vpop.f32.mrf.mxu0
      %v1673 = vadd.f32 0.0, %v1672
      %1674 = vmatmul.bf16.gmra.mxu0 %v1002
      %v1675 = vpop.f32.mrf.mxu0
      %v1676 = vadd.f32 0.0, %v1675
      %v1677 = vpop.f32.mrf.mxu0
      %v1678 = vadd.f32 0.0, %v1677
      %1679 = vmatmul.bf16.gmra.mxu0 %v1003
      %v1680 = vpop.f32.mrf.mxu0
      %v1681 = vadd.f32 0.0, %v1680
      %v1682 = vpop.f32.mrf.mxu0
      %v1683 = vadd.f32 0.0, %v1682
      %1684 = vmatmul.bf16.gmra.mxu0 %v1004
      %v1685 = vpop.f32.mrf.mxu0
      %v1686 = vadd.f32 0.0, %v1685
      %v1687 = vpop.f32.mrf.mxu0
      %v1688 = vadd.f32 0.0, %v1687
      %1689 = vmatmul.bf16.gmra.mxu0 %v1005
      %v1690 = vpop.f32.mrf.mxu0
      %v1691 = vadd.f32 0.0, %v1690
      %v1692 = vpop.f32.mrf.mxu0
      %v1693 = vadd.f32 0.0, %v1692
      %1694 = vmatmul.bf16.gmra.mxu0 %v1561
      %v1695 = vpop.f32.mrf.mxu0
      %v1696 = vadd.f32 0.0, %v1695
      %v1697 = vpop.f32.mrf.mxu0
      %v1698 = vadd.f32 0.0, %v1697
      %1699 = vdwg.mxu0
      %v1700 = vadd.f32 %v1508, %v1621
      %v1701 = vadd.f32 %v1509, %v1623
      %v1702 = vadd.f32 %v1510, %v1626
      %v1703 = vadd.f32 %v1511, %v1628
      %v1704 = vadd.f32 %v1512, %v1631
      %v1705 = vadd.f32 %v1513, %v1633
      %v1706 = vadd.f32 %v1514, %v1636
      %v1707 = vadd.f32 %v1515, %v1638
      %v1708 = vadd.f32 %v1516, %v1641
      %v1709 = vadd.f32 %v1517, %v1643
      %v1710 = vadd.f32 %v1518, %v1646
      %v1711 = vadd.f32 %v1519, %v1648
      %v1712 = vadd.f32 %v1520, %v1651
      %v1713 = vadd.f32 %v1521, %v1653
      %v1714 = vadd.f32 %v1522, %v1656
      %v1715 = vadd.f32 %v1523, %v1658
      %v1716 = vadd.f32 %v1524, %v1661
      %v1717 = vadd.f32 %v1525, %v1663
      %v1718 = vadd.f32 %v1526, %v1666
      %v1719 = vadd.f32 %v1527, %v1668
      %v1720 = vadd.f32 %v1528, %v1671
      %v1721 = vadd.f32 %v1529, %v1673
      %v1722 = vadd.f32 %v1530, %v1676
      %v1723 = vadd.f32 %v1531, %v1678
      %v1724 = vadd.f32 %v1532, %v1681
      %v1725 = vadd.f32 %v1533, %v1683
      %v1726 = vadd.f32 %v1534, %v1686
      %v1727 = vadd.f32 %v1535, %v1688
      %v1728 = vadd.f32 %v1536, %v1691
      %v1729 = vadd.f32 %v1537, %v1693
      %v1730 = vadd.f32 %v1538, %v1696
      %v1731 = vadd.f32 %v1539, %v1698
      %v1733 = vshrl.u32 %v299, 16
      %v1735 = vrot.slane %v1733, 4
      %v1736 = vshll.u32 %v299, 16
      %v1738 = vrot.slane %v1736, 5
      %v1739 = vor.u32 %v1735, %v1738
      %v1740 = vrot.slane %v1739, 4
      %v1742 = vshll.u32 %v300, 16
      %v1744 = vrot.slane %v1742, 5
      %v1745 = vsel %vm323, %v1740, %v1744
      %v1746 = vshrl.u32 %v300, 16
      %v1748 = vrot.slane %v1746, 4
      %v1749 = vor.u32 %v1748, %v1744
      %v1750 = vrot.slane %v1749, 4
      %v1752 = vshll.u32 %v301, 16
      %v1754 = vrot.slane %v1752, 5
      %v1755 = vsel %vm323, %v1750, %v1754
      %s1756 = scalar_lea.vmem %s205, 256
      %v1757 = vld [vmem:[%s1756] sm:$0xf]
      %v1758 = vld [vmem:[%s1756 + $0x4] sm:$0xf]
      %v1759 = vld [vmem:[%s1756 + $0x8] sm:$0xf]
      %v1760 = vld [vmem:[%s1756 + $0xc] sm:$0xf]
      %v1761 = vld [vmem:[%s1756 + $0x10] sm:$0xf]
      %v1762 = vld [vmem:[%s1756 + $0x14] sm:$0xf]
      %v1763 = vld [vmem:[%s1756 + $0x18] sm:$0xf]
      %v1764 = vld [vmem:[%s1756 + $0x1c] sm:$0xf]
      %v1765 = vld [vmem:[%s1756 + $0x20] sm:$0xf]
      %v1766 = vld [vmem:[%s1756 + $0x24] sm:$0xf]
      %v1767 = vld [vmem:[%s1756 + $0x28] sm:$0xf]
      %v1768 = vld [vmem:[%s1756 + $0x2c] sm:$0xf]
      %v1769 = vld [vmem:[%s1756 + $0x30] sm:$0xf]
      %v1770 = vld [vmem:[%s1756 + $0x34] sm:$0xf]
      %v1771 = vld [vmem:[%s1756 + $0x38] sm:$0xf]
      %v1772 = vld [vmem:[%s1756 + $0x3c] sm:$0xf]
      %v1773 = vunpack.c.l.b16 %v1745
      %v1774 = vunpack.c.l.b16 %v1755
      %v1775 = vpack.c.b16 %v1774, %v1773
      %v1793 = vunpack.c.l.b16 %v1757
      %v1794 = vunpack.c.l.b16 %v1758
      %v1795 = vunpack.c.l.b16 %v1759
      %v1796 = vunpack.c.l.b16 %v1760
      %v1797 = vunpack.c.l.b16 %v1761
      %v1798 = vunpack.c.l.b16 %v1762
      %v1799 = vunpack.c.l.b16 %v1763
      %v1800 = vunpack.c.l.b16 %v1764
      %v1801 = vunpack.c.l.b16 %v1765
      %v1802 = vunpack.c.l.b16 %v1766
      %v1803 = vunpack.c.l.b16 %v1767
      %v1804 = vunpack.c.l.b16 %v1768
      %v1805 = vunpack.c.l.b16 %v1769
      %v1806 = vunpack.c.l.b16 %v1770
      %v1807 = vunpack.c.l.b16 %v1771
      %v1808 = vunpack.c.l.b16 %v1772
      %v1809 = vpack.c.b16 %v1794, %v1793
      %v1810 = vpack.c.b16 %v1796, %v1795
      %v1811 = vpack.c.b16 %v1798, %v1797
      %v1812 = vpack.c.b16 %v1800, %v1799
      %v1813 = vpack.c.b16 %v1802, %v1801
      %v1814 = vpack.c.b16 %v1804, %v1803
      %v1815 = vpack.c.b16 %v1806, %v1805
      %v1816 = vpack.c.b16 %v1808, %v1807
      %1825 = vmatpush.bf16.msra.mxu0 %v1816
      %1826 = vmatpush.bf16.msra.mxu0 %v1815
      %1827 = vmatpush.bf16.msra.mxu0 %v1814
      %1828 = vmatpush.bf16.msra.mxu0 %v1813
      %1829 = vmatpush.bf16.msra.mxu0 %v1812
      %1830 = vmatpush.bf16.msra.mxu0 %v1811
      %1831 = vmatpush.bf16.msra.mxu0 %v1810
      %1832 = vmatpush.bf16.msra.mxu0 %v1809
      %1833 = vmatmul.bf16.gmra.mxu0 %v758
      %v1834 = vpop.f32.mrf.mxu0
      %v1835 = vadd.f32 0.0, %v1834
      %v1836 = vpop.f32.mrf.mxu0
      %v1837 = vadd.f32 0.0, %v1836
      %1838 = vmatmul.bf16.gmra.mxu0 %v759
      %v1839 = vpop.f32.mrf.mxu0
      %v1840 = vadd.f32 0.0, %v1839
      %v1841 = vpop.f32.mrf.mxu0
      %v1842 = vadd.f32 0.0, %v1841
      %1843 = vmatmul.bf16.gmra.mxu0 %v760
      %v1844 = vpop.f32.mrf.mxu0
      %v1845 = vadd.f32 0.0, %v1844
      %v1846 = vpop.f32.mrf.mxu0
      %v1847 = vadd.f32 0.0, %v1846
      %1848 = vmatmul.bf16.gmra.mxu0 %v761
      %v1849 = vpop.f32.mrf.mxu0
      %v1850 = vadd.f32 0.0, %v1849
      %v1851 = vpop.f32.mrf.mxu0
      %v1852 = vadd.f32 0.0, %v1851
      %1853 = vmatmul.bf16.gmra.mxu0 %v762
      %v1854 = vpop.f32.mrf.mxu0
      %v1855 = vadd.f32 0.0, %v1854
      %v1856 = vpop.f32.mrf.mxu0
      %v1857 = vadd.f32 0.0, %v1856
      %1858 = vmatmul.bf16.gmra.mxu0 %v763
      %v1859 = vpop.f32.mrf.mxu0
      %v1860 = vadd.f32 0.0, %v1859
      %v1861 = vpop.f32.mrf.mxu0
      %v1862 = vadd.f32 0.0, %v1861
      %1863 = vmatmul.bf16.gmra.mxu0 %v764
      %v1864 = vpop.f32.mrf.mxu0
      %v1865 = vadd.f32 0.0, %v1864
      %v1866 = vpop.f32.mrf.mxu0
      %v1867 = vadd.f32 0.0, %v1866
      %1868 = vmatmul.bf16.gmra.mxu0 %v765
      %v1869 = vpop.f32.mrf.mxu0
      %v1870 = vadd.f32 0.0, %v1869
      %v1871 = vpop.f32.mrf.mxu0
      %v1872 = vadd.f32 0.0, %v1871
      %1873 = vmatmul.bf16.gmra.mxu0 %v766
      %v1874 = vpop.f32.mrf.mxu0
      %v1875 = vadd.f32 0.0, %v1874
      %v1876 = vpop.f32.mrf.mxu0
      %v1877 = vadd.f32 0.0, %v1876
      %1878 = vmatmul.bf16.gmra.mxu0 %v767
      %v1879 = vpop.f32.mrf.mxu0
      %v1880 = vadd.f32 0.0, %v1879
      %v1881 = vpop.f32.mrf.mxu0
      %v1882 = vadd.f32 0.0, %v1881
      %1883 = vmatmul.bf16.gmra.mxu0 %v768
      %v1884 = vpop.f32.mrf.mxu0
      %v1885 = vadd.f32 0.0, %v1884
      %v1886 = vpop.f32.mrf.mxu0
      %v1887 = vadd.f32 0.0, %v1886
      %1888 = vmatmul.bf16.gmra.mxu0 %v769
      %v1889 = vpop.f32.mrf.mxu0
      %v1890 = vadd.f32 0.0, %v1889
      %v1891 = vpop.f32.mrf.mxu0
      %v1892 = vadd.f32 0.0, %v1891
      %1893 = vmatmul.bf16.gmra.mxu0 %v770
      %v1894 = vpop.f32.mrf.mxu0
      %v1895 = vadd.f32 0.0, %v1894
      %v1896 = vpop.f32.mrf.mxu0
      %v1897 = vadd.f32 0.0, %v1896
      %1898 = vmatmul.bf16.gmra.mxu0 %v771
      %v1899 = vpop.f32.mrf.mxu0
      %v1900 = vadd.f32 0.0, %v1899
      %v1901 = vpop.f32.mrf.mxu0
      %v1902 = vadd.f32 0.0, %v1901
      %1903 = vmatmul.bf16.gmra.mxu0 %v772
      %v1904 = vpop.f32.mrf.mxu0
      %v1905 = vadd.f32 0.0, %v1904
      %v1906 = vpop.f32.mrf.mxu0
      %v1907 = vadd.f32 0.0, %v1906
      %1908 = vmatmul.bf16.gmra.mxu0 %v1775
      %v1909 = vpop.f32.mrf.mxu0
      %v1910 = vadd.f32 0.0, %v1909
      %v1911 = vpop.f32.mrf.mxu0
      %v1912 = vadd.f32 0.0, %v1911
      %1913 = vdwg.mxu0
      %v1914 = vadd.f32 %v1700, %v1835
      %v1915 = vadd.f32 %v1701, %v1837
      %v1916 = vadd.f32 %v1702, %v1840
      %v1917 = vadd.f32 %v1703, %v1842
      %v1918 = vadd.f32 %v1704, %v1845
      %v1919 = vadd.f32 %v1705, %v1847
      %v1920 = vadd.f32 %v1706, %v1850
      %v1921 = vadd.f32 %v1707, %v1852
      %v1922 = vadd.f32 %v1708, %v1855
      %v1923 = vadd.f32 %v1709, %v1857
      %v1924 = vadd.f32 %v1710, %v1860
      %v1925 = vadd.f32 %v1711, %v1862
      %v1926 = vadd.f32 %v1712, %v1865
      %v1927 = vadd.f32 %v1713, %v1867
      %v1928 = vadd.f32 %v1714, %v1870
      %v1929 = vadd.f32 %v1715, %v1872
      %v1930 = vadd.f32 %v1716, %v1875
      %v1931 = vadd.f32 %v1717, %v1877
      %v1932 = vadd.f32 %v1718, %v1880
      %v1933 = vadd.f32 %v1719, %v1882
      %v1934 = vadd.f32 %v1720, %v1885
      %v1935 = vadd.f32 %v1721, %v1887
      %v1936 = vadd.f32 %v1722, %v1890
      %v1937 = vadd.f32 %v1723, %v1892
      %v1938 = vadd.f32 %v1724, %v1895
      %v1939 = vadd.f32 %v1725, %v1897
      %v1940 = vadd.f32 %v1726, %v1900
      %v1941 = vadd.f32 %v1727, %v1902
      %v1942 = vadd.f32 %v1728, %v1905
      %v1943 = vadd.f32 %v1729, %v1907
      %v1944 = vadd.f32 %v1730, %v1910
      %v1945 = vadd.f32 %v1731, %v1912
      %v1947 = vrot.slane %v299, 5
      %v1948 = vrot.slane %v1947, 4
      %v1949 = vrot.slane %v300, 5
      %v1950 = vsel %vm1177, %v1948, %v1949
      %v1951 = vrot.slane %v1949, 4
      %v1952 = vrot.slane %v301, 5
      %v1953 = vsel %vm1177, %v1951, %v1952
      %s1954 = scalar_lea.vmem %s205, 320
      %v1955 = vld [vmem:[%s1954] sm:$0xf]
      %v1956 = vld [vmem:[%s1954 + $0x4] sm:$0xf]
      %v1957 = vld [vmem:[%s1954 + $0x8] sm:$0xf]
      %v1958 = vld [vmem:[%s1954 + $0xc] sm:$0xf]
      %v1959 = vld [vmem:[%s1954 + $0x10] sm:$0xf]
      %v1960 = vld [vmem:[%s1954 + $0x14] sm:$0xf]
      %v1961 = vld [vmem:[%s1954 + $0x18] sm:$0xf]
      %v1962 = vld [vmem:[%s1954 + $0x1c] sm:$0xf]
      %v1963 = vld [vmem:[%s1954 + $0x20] sm:$0xf]
      %v1964 = vld [vmem:[%s1954 + $0x24] sm:$0xf]
      %v1965 = vld [vmem:[%s1954 + $0x28] sm:$0xf]
      %v1966 = vld [vmem:[%s1954 + $0x2c] sm:$0xf]
      %v1967 = vld [vmem:[%s1954 + $0x30] sm:$0xf]
      %v1968 = vld [vmem:[%s1954 + $0x34] sm:$0xf]
      %v1969 = vld [vmem:[%s1954 + $0x38] sm:$0xf]
      %v1970 = vld [vmem:[%s1954 + $0x3c] sm:$0xf]
      %v1971 = vunpack.c.l.b16 %v1950
      %v1972 = vunpack.c.l.b16 %v1953
      %v1973 = vpack.c.b16 %v1972, %v1971
      %v1991 = vunpack.c.l.b16 %v1955
      %v1992 = vunpack.c.l.b16 %v1956
      %v1993 = vunpack.c.l.b16 %v1957
      %v1994 = vunpack.c.l.b16 %v1958
      %v1995 = vunpack.c.l.b16 %v1959
      %v1996 = vunpack.c.l.b16 %v1960
      %v1997 = vunpack.c.l.b16 %v1961
      %v1998 = vunpack.c.l.b16 %v1962
      %v1999 = vunpack.c.l.b16 %v1963
      %v2000 = vunpack.c.l.b16 %v1964
      %v2001 = vunpack.c.l.b16 %v1965
      %v2002 = vunpack.c.l.b16 %v1966
      %v2003 = vunpack.c.l.b16 %v1967
      %v2004 = vunpack.c.l.b16 %v1968
      %v2005 = vunpack.c.l.b16 %v1969
      %v2006 = vunpack.c.l.b16 %v1970
      %v2007 = vpack.c.b16 %v1992, %v1991
      %v2008 = vpack.c.b16 %v1994, %v1993
      %v2009 = vpack.c.b16 %v1996, %v1995
      %v2010 = vpack.c.b16 %v1998, %v1997
      %v2011 = vpack.c.b16 %v2000, %v1999
      %v2012 = vpack.c.b16 %v2002, %v2001
      %v2013 = vpack.c.b16 %v2004, %v2003
      %v2014 = vpack.c.b16 %v2006, %v2005
      %2023 = vmatpush.bf16.msra.mxu0 %v2014
      %2024 = vmatpush.bf16.msra.mxu0 %v2013
      %2025 = vmatpush.bf16.msra.mxu0 %v2012
      %2026 = vmatpush.bf16.msra.mxu0 %v2011
      %2027 = vmatpush.bf16.msra.mxu0 %v2010
      %2028 = vmatpush.bf16.msra.mxu0 %v2009
      %2029 = vmatpush.bf16.msra.mxu0 %v2008
      %2030 = vmatpush.bf16.msra.mxu0 %v2007
      %2031 = vmatmul.bf16.gmra.mxu0 %v1340
      %v2032 = vpop.f32.mrf.mxu0
      %v2033 = vadd.f32 0.0, %v2032
      %v2034 = vpop.f32.mrf.mxu0
      %v2035 = vadd.f32 0.0, %v2034
      %2036 = vmatmul.bf16.gmra.mxu0 %v1341
      %v2037 = vpop.f32.mrf.mxu0
      %v2038 = vadd.f32 0.0, %v2037
      %v2039 = vpop.f32.mrf.mxu0
      %v2040 = vadd.f32 0.0, %v2039
      %2041 = vmatmul.bf16.gmra.mxu0 %v1342
      %v2042 = vpop.f32.mrf.mxu0
      %v2043 = vadd.f32 0.0, %v2042
      %v2044 = vpop.f32.mrf.mxu0
      %v2045 = vadd.f32 0.0, %v2044
      %2046 = vmatmul.bf16.gmra.mxu0 %v1343
      %v2047 = vpop.f32.mrf.mxu0
      %v2048 = vadd.f32 0.0, %v2047
      %v2049 = vpop.f32.mrf.mxu0
      %v2050 = vadd.f32 0.0, %v2049
      %2051 = vmatmul.bf16.gmra.mxu0 %v1344
      %v2052 = vpop.f32.mrf.mxu0
      %v2053 = vadd.f32 0.0, %v2052
      %v2054 = vpop.f32.mrf.mxu0
      %v2055 = vadd.f32 0.0, %v2054
      %2056 = vmatmul.bf16.gmra.mxu0 %v1345
      %v2057 = vpop.f32.mrf.mxu0
      %v2058 = vadd.f32 0.0, %v2057
      %v2059 = vpop.f32.mrf.mxu0
      %v2060 = vadd.f32 0.0, %v2059
      %2061 = vmatmul.bf16.gmra.mxu0 %v1346
      %v2062 = vpop.f32.mrf.mxu0
      %v2063 = vadd.f32 0.0, %v2062
      %v2064 = vpop.f32.mrf.mxu0
      %v2065 = vadd.f32 0.0, %v2064
      %2066 = vmatmul.bf16.gmra.mxu0 %v1347
      %v2067 = vpop.f32.mrf.mxu0
      %v2068 = vadd.f32 0.0, %v2067
      %v2069 = vpop.f32.mrf.mxu0
      %v2070 = vadd.f32 0.0, %v2069
      %2071 = vmatmul.bf16.gmra.mxu0 %v1348
      %v2072 = vpop.f32.mrf.mxu0
      %v2073 = vadd.f32 0.0, %v2072
      %v2074 = vpop.f32.mrf.mxu0
      %v2075 = vadd.f32 0.0, %v2074
      %2076 = vmatmul.bf16.gmra.mxu0 %v1349
      %v2077 = vpop.f32.mrf.mxu0
      %v2078 = vadd.f32 0.0, %v2077
      %v2079 = vpop.f32.mrf.mxu0
      %v2080 = vadd.f32 0.0, %v2079
      %2081 = vmatmul.bf16.gmra.mxu0 %v1350
      %v2082 = vpop.f32.mrf.mxu0
      %v2083 = vadd.f32 0.0, %v2082
      %v2084 = vpop.f32.mrf.mxu0
      %v2085 = vadd.f32 0.0, %v2084
      %2086 = vmatmul.bf16.gmra.mxu0 %v1351
      %v2087 = vpop.f32.mrf.mxu0
      %v2088 = vadd.f32 0.0, %v2087
      %v2089 = vpop.f32.mrf.mxu0
      %v2090 = vadd.f32 0.0, %v2089
      %2091 = vmatmul.bf16.gmra.mxu0 %v1352
      %v2092 = vpop.f32.mrf.mxu0
      %v2093 = vadd.f32 0.0, %v2092
      %v2094 = vpop.f32.mrf.mxu0
      %v2095 = vadd.f32 0.0, %v2094
      %2096 = vmatmul.bf16.gmra.mxu0 %v1353
      %v2097 = vpop.f32.mrf.mxu0
      %v2098 = vadd.f32 0.0, %v2097
      %v2099 = vpop.f32.mrf.mxu0
      %v2100 = vadd.f32 0.0, %v2099
      %2101 = vmatmul.bf16.gmra.mxu0 %v1354
      %v2102 = vpop.f32.mrf.mxu0
      %v2103 = vadd.f32 0.0, %v2102
      %v2104 = vpop.f32.mrf.mxu0
      %v2105 = vadd.f32 0.0, %v2104
      %2106 = vmatmul.bf16.gmra.mxu0 %v1973
      %v2107 = vpop.f32.mrf.mxu0
      %v2108 = vadd.f32 0.0, %v2107
      %v2109 = vpop.f32.mrf.mxu0
      %v2110 = vadd.f32 0.0, %v2109
      %2111 = vdwg.mxu0
      %v2112 = vadd.f32 %v1914, %v2033
      %v2113 = vadd.f32 %v1915, %v2035
      %v2114 = vadd.f32 %v1916, %v2038
      %v2115 = vadd.f32 %v1917, %v2040
      %v2116 = vadd.f32 %v1918, %v2043
      %v2117 = vadd.f32 %v1919, %v2045
      %v2118 = vadd.f32 %v1920, %v2048
      %v2119 = vadd.f32 %v1921, %v2050
      %v2120 = vadd.f32 %v1922, %v2053
      %v2121 = vadd.f32 %v1923, %v2055
      %v2122 = vadd.f32 %v1924, %v2058
      %v2123 = vadd.f32 %v1925, %v2060
      %v2124 = vadd.f32 %v1926, %v2063
      %v2125 = vadd.f32 %v1927, %v2065
      %v2126 = vadd.f32 %v1928, %v2068
      %v2127 = vadd.f32 %v1929, %v2070
      %v2128 = vadd.f32 %v1930, %v2073
      %v2129 = vadd.f32 %v1931, %v2075
      %v2130 = vadd.f32 %v1932, %v2078
      %v2131 = vadd.f32 %v1933, %v2080
      %v2132 = vadd.f32 %v1934, %v2083
      %v2133 = vadd.f32 %v1935, %v2085
      %v2134 = vadd.f32 %v1936, %v2088
      %v2135 = vadd.f32 %v1937, %v2090
      %v2136 = vadd.f32 %v1938, %v2093
      %v2137 = vadd.f32 %v1939, %v2095
      %v2138 = vadd.f32 %v1940, %v2098
      %v2139 = vadd.f32 %v1941, %v2100
      %v2140 = vadd.f32 %v1942, %v2103
      %v2141 = vadd.f32 %v1943, %v2105
      %v2142 = vadd.f32 %v1944, %v2108
      %v2143 = vadd.f32 %v1945, %v2110
      %s2144 = scalar_lea.vmem %s205, 384
      %v2145 = vld [vmem:[%s2144] sm:$0xf]
      %v2146 = vld [vmem:[%s2144 + $0x4] sm:$0xf]
      %v2147 = vld [vmem:[%s2144 + $0x8] sm:$0xf]
      %v2148 = vld [vmem:[%s2144 + $0xc] sm:$0xf]
      %v2149 = vld [vmem:[%s2144 + $0x10] sm:$0xf]
      %v2150 = vld [vmem:[%s2144 + $0x14] sm:$0xf]
      %v2151 = vld [vmem:[%s2144 + $0x18] sm:$0xf]
      %v2152 = vld [vmem:[%s2144 + $0x1c] sm:$0xf]
      %v2153 = vld [vmem:[%s2144 + $0x20] sm:$0xf]
      %v2154 = vld [vmem:[%s2144 + $0x24] sm:$0xf]
      %v2155 = vld [vmem:[%s2144 + $0x28] sm:$0xf]
      %v2156 = vld [vmem:[%s2144 + $0x2c] sm:$0xf]
      %v2157 = vld [vmem:[%s2144 + $0x30] sm:$0xf]
      %v2158 = vld [vmem:[%s2144 + $0x34] sm:$0xf]
      %v2159 = vld [vmem:[%s2144 + $0x38] sm:$0xf]
      %v2160 = vld [vmem:[%s2144 + $0x3c] sm:$0xf]
      %v2163 = vunpack.c.l.b16 %v302
      %v2164 = vunpack.c.l.b16 %v303
      %v2165 = vpack.c.b16 %v2164, %v2163
      %v2183 = vunpack.c.l.b16 %v2145
      %v2184 = vunpack.c.l.b16 %v2146
      %v2185 = vunpack.c.l.b16 %v2147
      %v2186 = vunpack.c.l.b16 %v2148
      %v2187 = vunpack.c.l.b16 %v2149
      %v2188 = vunpack.c.l.b16 %v2150
      %v2189 = vunpack.c.l.b16 %v2151
      %v2190 = vunpack.c.l.b16 %v2152
      %v2191 = vunpack.c.l.b16 %v2153
      %v2192 = vunpack.c.l.b16 %v2154
      %v2193 = vunpack.c.l.b16 %v2155
      %v2194 = vunpack.c.l.b16 %v2156
      %v2195 = vunpack.c.l.b16 %v2157
      %v2196 = vunpack.c.l.b16 %v2158
      %v2197 = vunpack.c.l.b16 %v2159
      %v2198 = vunpack.c.l.b16 %v2160
      %v2199 = vpack.c.b16 %v2184, %v2183
      %v2200 = vpack.c.b16 %v2186, %v2185
      %v2201 = vpack.c.b16 %v2188, %v2187
      %v2202 = vpack.c.b16 %v2190, %v2189
      %v2203 = vpack.c.b16 %v2192, %v2191
      %v2204 = vpack.c.b16 %v2194, %v2193
      %v2205 = vpack.c.b16 %v2196, %v2195
      %v2206 = vpack.c.b16 %v2198, %v2197
      %2215 = vmatpush.bf16.msra.mxu0 %v2206
      %2216 = vmatpush.bf16.msra.mxu0 %v2205
      %2217 = vmatpush.bf16.msra.mxu0 %v2204
      %2218 = vmatpush.bf16.msra.mxu0 %v2203
      %2219 = vmatpush.bf16.msra.mxu0 %v2202
      %2220 = vmatpush.bf16.msra.mxu0 %v2201
      %2221 = vmatpush.bf16.msra.mxu0 %v2200
      %2222 = vmatpush.bf16.msra.mxu0 %v2199
      %2223 = vmatmul.bf16.gmra.mxu0 %v992
      %v2224 = vpop.f32.mrf.mxu0
      %v2225 = vadd.f32 0.0, %v2224
      %v2226 = vpop.f32.mrf.mxu0
      %v2227 = vadd.f32 0.0, %v2226
      %2228 = vmatmul.bf16.gmra.mxu0 %v993
      %v2229 = vpop.f32.mrf.mxu0
      %v2230 = vadd.f32 0.0, %v2229
      %v2231 = vpop.f32.mrf.mxu0
      %v2232 = vadd.f32 0.0, %v2231
      %2233 = vmatmul.bf16.gmra.mxu0 %v994
      %v2234 = vpop.f32.mrf.mxu0
      %v2235 = vadd.f32 0.0, %v2234
      %v2236 = vpop.f32.mrf.mxu0
      %v2237 = vadd.f32 0.0, %v2236
      %2238 = vmatmul.bf16.gmra.mxu0 %v995
      %v2239 = vpop.f32.mrf.mxu0
      %v2240 = vadd.f32 0.0, %v2239
      %v2241 = vpop.f32.mrf.mxu0
      %v2242 = vadd.f32 0.0, %v2241
      %2243 = vmatmul.bf16.gmra.mxu0 %v996
      %v2244 = vpop.f32.mrf.mxu0
      %v2245 = vadd.f32 0.0, %v2244
      %v2246 = vpop.f32.mrf.mxu0
      %v2247 = vadd.f32 0.0, %v2246
      %2248 = vmatmul.bf16.gmra.mxu0 %v997
      %v2249 = vpop.f32.mrf.mxu0
      %v2250 = vadd.f32 0.0, %v2249
      %v2251 = vpop.f32.mrf.mxu0
      %v2252 = vadd.f32 0.0, %v2251
      %2253 = vmatmul.bf16.gmra.mxu0 %v998
      %v2254 = vpop.f32.mrf.mxu0
      %v2255 = vadd.f32 0.0, %v2254
      %v2256 = vpop.f32.mrf.mxu0
      %v2257 = vadd.f32 0.0, %v2256
      %2258 = vmatmul.bf16.gmra.mxu0 %v999
      %v2259 = vpop.f32.mrf.mxu0
      %v2260 = vadd.f32 0.0, %v2259
      %v2261 = vpop.f32.mrf.mxu0
      %v2262 = vadd.f32 0.0, %v2261
      %2263 = vmatmul.bf16.gmra.mxu0 %v1000
      %v2264 = vpop.f32.mrf.mxu0
      %v2265 = vadd.f32 0.0, %v2264
      %v2266 = vpop.f32.mrf.mxu0
      %v2267 = vadd.f32 0.0, %v2266
      %2268 = vmatmul.bf16.gmra.mxu0 %v1001
      %v2269 = vpop.f32.mrf.mxu0
      %v2270 = vadd.f32 0.0, %v2269
      %v2271 = vpop.f32.mrf.mxu0
      %v2272 = vadd.f32 0.0, %v2271
      %2273 = vmatmul.bf16.gmra.mxu0 %v1002
      %v2274 = vpop.f32.mrf.mxu0
      %v2275 = vadd.f32 0.0, %v2274
      %v2276 = vpop.f32.mrf.mxu0
      %v2277 = vadd.f32 0.0, %v2276
      %2278 = vmatmul.bf16.gmra.mxu0 %v1003
      %v2279 = vpop.f32.mrf.mxu0
      %v2280 = vadd.f32 0.0, %v2279
      %v2281 = vpop.f32.mrf.mxu0
      %v2282 = vadd.f32 0.0, %v2281
      %2283 = vmatmul.bf16.gmra.mxu0 %v1004
      %v2284 = vpop.f32.mrf.mxu0
      %v2285 = vadd.f32 0.0, %v2284
      %v2286 = vpop.f32.mrf.mxu0
      %v2287 = vadd.f32 0.0, %v2286
      %2288 = vmatmul.bf16.gmra.mxu0 %v1005
      %v2289 = vpop.f32.mrf.mxu0
      %v2290 = vadd.f32 0.0, %v2289
      %v2291 = vpop.f32.mrf.mxu0
      %v2292 = vadd.f32 0.0, %v2291
      %2293 = vmatmul.bf16.gmra.mxu0 %v1561
      %v2294 = vpop.f32.mrf.mxu0
      %v2295 = vadd.f32 0.0, %v2294
      %v2296 = vpop.f32.mrf.mxu0
      %v2297 = vadd.f32 0.0, %v2296
      %2298 = vmatmul.bf16.gmra.mxu0 %v2165
      %v2299 = vpop.f32.mrf.mxu0
      %v2300 = vadd.f32 0.0, %v2299
      %v2301 = vpop.f32.mrf.mxu0
      %v2302 = vadd.f32 0.0, %v2301
      %2303 = vdwg.mxu0
      %v2304 = vadd.f32 %v2112, %v2225
      %v2305 = vadd.f32 %v2113, %v2227
      %v2306 = vadd.f32 %v2114, %v2230
      %v2307 = vadd.f32 %v2115, %v2232
      %v2308 = vadd.f32 %v2116, %v2235
      %v2309 = vadd.f32 %v2117, %v2237
      %v2310 = vadd.f32 %v2118, %v2240
      %v2311 = vadd.f32 %v2119, %v2242
      %v2312 = vadd.f32 %v2120, %v2245
      %v2313 = vadd.f32 %v2121, %v2247
      %v2314 = vadd.f32 %v2122, %v2250
      %v2315 = vadd.f32 %v2123, %v2252
      %v2316 = vadd.f32 %v2124, %v2255
      %v2317 = vadd.f32 %v2125, %v2257
      %v2318 = vadd.f32 %v2126, %v2260
      %v2319 = vadd.f32 %v2127, %v2262
      %v2320 = vadd.f32 %v2128, %v2265
      %v2321 = vadd.f32 %v2129, %v2267
      %v2322 = vadd.f32 %v2130, %v2270
      %v2323 = vadd.f32 %v2131, %v2272
      %v2324 = vadd.f32 %v2132, %v2275
      %v2325 = vadd.f32 %v2133, %v2277
      %v2326 = vadd.f32 %v2134, %v2280
      %v2327 = vadd.f32 %v2135, %v2282
      %v2328 = vadd.f32 %v2136, %v2285
      %v2329 = vadd.f32 %v2137, %v2287
      %v2330 = vadd.f32 %v2138, %v2290
      %v2331 = vadd.f32 %v2139, %v2292
      %v2332 = vadd.f32 %v2140, %v2295
      %v2333 = vadd.f32 %v2141, %v2297
      %v2334 = vadd.f32 %v2142, %v2300
      %v2335 = vadd.f32 %v2143, %v2302
      %v2337 = vshrl.u32 %v302, 16
      %v2339 = vrot.slane %v2337, 4
      %v2340 = vshll.u32 %v302, 16
      %v2342 = vrot.slane %v2340, 5
      %v2343 = vor.u32 %v2339, %v2342
      %v2344 = vrot.slane %v2343, 4
      %v2346 = vshll.u32 %v303, 16
      %v2348 = vrot.slane %v2346, 5
      %v2349 = vsel %vm323, %v2344, %v2348
      %v2350 = vshrl.u32 %v303, 16
      %v2352 = vrot.slane %v2350, 4
      %v2353 = vor.u32 %v2352, %v2348
      %v2354 = vrot.slane %v2353, 4
      %v2356 = vshll.u32 %v304, 16
      %v2358 = vrot.slane %v2356, 5
      %v2359 = vsel %vm323, %v2354, %v2358
      %s2360 = scalar_lea.vmem %s205, 448
      %v2361 = vld [vmem:[%s2360] sm:$0xf]
      %v2362 = vld [vmem:[%s2360 + $0x4] sm:$0xf]
      %v2363 = vld [vmem:[%s2360 + $0x8] sm:$0xf]
      %v2364 = vld [vmem:[%s2360 + $0xc] sm:$0xf]
      %v2365 = vld [vmem:[%s2360 + $0x10] sm:$0xf]
      %v2366 = vld [vmem:[%s2360 + $0x14] sm:$0xf]
      %v2367 = vld [vmem:[%s2360 + $0x18] sm:$0xf]
      %v2368 = vld [vmem:[%s2360 + $0x1c] sm:$0xf]
      %v2369 = vld [vmem:[%s2360 + $0x20] sm:$0xf]
      %v2370 = vld [vmem:[%s2360 + $0x24] sm:$0xf]
      %v2371 = vld [vmem:[%s2360 + $0x28] sm:$0xf]
      %v2372 = vld [vmem:[%s2360 + $0x2c] sm:$0xf]
      %v2373 = vld [vmem:[%s2360 + $0x30] sm:$0xf]
      %v2374 = vld [vmem:[%s2360 + $0x34] sm:$0xf]
      %v2375 = vld [vmem:[%s2360 + $0x38] sm:$0xf]
      %v2376 = vld [vmem:[%s2360 + $0x3c] sm:$0xf]
      %v2377 = vunpack.c.l.b16 %v2349
      %v2378 = vunpack.c.l.b16 %v2359
      %v2379 = vpack.c.b16 %v2378, %v2377
      %v2397 = vunpack.c.l.b16 %v2361
      %v2398 = vunpack.c.l.b16 %v2362
      %v2399 = vunpack.c.l.b16 %v2363
      %v2400 = vunpack.c.l.b16 %v2364
      %v2401 = vunpack.c.l.b16 %v2365
      %v2402 = vunpack.c.l.b16 %v2366
      %v2403 = vunpack.c.l.b16 %v2367
      %v2404 = vunpack.c.l.b16 %v2368
      %v2405 = vunpack.c.l.b16 %v2369
      %v2406 = vunpack.c.l.b16 %v2370
      %v2407 = vunpack.c.l.b16 %v2371
      %v2408 = vunpack.c.l.b16 %v2372
      %v2409 = vunpack.c.l.b16 %v2373
      %v2410 = vunpack.c.l.b16 %v2374
      %v2411 = vunpack.c.l.b16 %v2375
      %v2412 = vunpack.c.l.b16 %v2376
      %v2413 = vpack.c.b16 %v2398, %v2397
      %v2414 = vpack.c.b16 %v2400, %v2399
      %v2415 = vpack.c.b16 %v2402, %v2401
      %v2416 = vpack.c.b16 %v2404, %v2403
      %v2417 = vpack.c.b16 %v2406, %v2405
      %v2418 = vpack.c.b16 %v2408, %v2407
      %v2419 = vpack.c.b16 %v2410, %v2409
      %v2420 = vpack.c.b16 %v2412, %v2411
      %2429 = vmatpush.bf16.msra.mxu0 %v2420
      %2430 = vmatpush.bf16.msra.mxu0 %v2419
      %2431 = vmatpush.bf16.msra.mxu0 %v2418
      %2432 = vmatpush.bf16.msra.mxu0 %v2417
      %2433 = vmatpush.bf16.msra.mxu0 %v2416
      %2434 = vmatpush.bf16.msra.mxu0 %v2415
      %2435 = vmatpush.bf16.msra.mxu0 %v2414
      %2436 = vmatpush.bf16.msra.mxu0 %v2413
      %2437 = vmatmul.bf16.gmra.mxu0 %v759
      %v2438 = vpop.f32.mrf.mxu0
      %v2439 = vadd.f32 0.0, %v2438
      %v2440 = vpop.f32.mrf.mxu0
      %v2441 = vadd.f32 0.0, %v2440
      %2442 = vmatmul.bf16.gmra.mxu0 %v760
      %v2443 = vpop.f32.mrf.mxu0
      %v2444 = vadd.f32 0.0, %v2443
      %v2445 = vpop.f32.mrf.mxu0
      %v2446 = vadd.f32 0.0, %v2445
      %2447 = vmatmul.bf16.gmra.mxu0 %v761
      %v2448 = vpop.f32.mrf.mxu0
      %v2449 = vadd.f32 0.0, %v2448
      %v2450 = vpop.f32.mrf.mxu0
      %v2451 = vadd.f32 0.0, %v2450
      %2452 = vmatmul.bf16.gmra.mxu0 %v762
      %v2453 = vpop.f32.mrf.mxu0
      %v2454 = vadd.f32 0.0, %v2453
      %v2455 = vpop.f32.mrf.mxu0
      %v2456 = vadd.f32 0.0, %v2455
      %2457 = vmatmul.bf16.gmra.mxu0 %v763
      %v2458 = vpop.f32.mrf.mxu0
      %v2459 = vadd.f32 0.0, %v2458
      %v2460 = vpop.f32.mrf.mxu0
      %v2461 = vadd.f32 0.0, %v2460
      %2462 = vmatmul.bf16.gmra.mxu0 %v764
      %v2463 = vpop.f32.mrf.mxu0
      %v2464 = vadd.f32 0.0, %v2463
      %v2465 = vpop.f32.mrf.mxu0
      %v2466 = vadd.f32 0.0, %v2465
      %2467 = vmatmul.bf16.gmra.mxu0 %v765
      %v2468 = vpop.f32.mrf.mxu0
      %v2469 = vadd.f32 0.0, %v2468
      %v2470 = vpop.f32.mrf.mxu0
      %v2471 = vadd.f32 0.0, %v2470
      %2472 = vmatmul.bf16.gmra.mxu0 %v766
      %v2473 = vpop.f32.mrf.mxu0
      %v2474 = vadd.f32 0.0, %v2473
      %v2475 = vpop.f32.mrf.mxu0
      %v2476 = vadd.f32 0.0, %v2475
      %2477 = vmatmul.bf16.gmra.mxu0 %v767
      %v2478 = vpop.f32.mrf.mxu0
      %v2479 = vadd.f32 0.0, %v2478
      %v2480 = vpop.f32.mrf.mxu0
      %v2481 = vadd.f32 0.0, %v2480
      %2482 = vmatmul.bf16.gmra.mxu0 %v768
      %v2483 = vpop.f32.mrf.mxu0
      %v2484 = vadd.f32 0.0, %v2483
      %v2485 = vpop.f32.mrf.mxu0
      %v2486 = vadd.f32 0.0, %v2485
      %2487 = vmatmul.bf16.gmra.mxu0 %v769
      %v2488 = vpop.f32.mrf.mxu0
      %v2489 = vadd.f32 0.0, %v2488
      %v2490 = vpop.f32.mrf.mxu0
      %v2491 = vadd.f32 0.0, %v2490
      %2492 = vmatmul.bf16.gmra.mxu0 %v770
      %v2493 = vpop.f32.mrf.mxu0
      %v2494 = vadd.f32 0.0, %v2493
      %v2495 = vpop.f32.mrf.mxu0
      %v2496 = vadd.f32 0.0, %v2495
      %2497 = vmatmul.bf16.gmra.mxu0 %v771
      %v2498 = vpop.f32.mrf.mxu0
      %v2499 = vadd.f32 0.0, %v2498
      %v2500 = vpop.f32.mrf.mxu0
      %v2501 = vadd.f32 0.0, %v2500
      %2502 = vmatmul.bf16.gmra.mxu0 %v772
      %v2503 = vpop.f32.mrf.mxu0
      %v2504 = vadd.f32 0.0, %v2503
      %v2505 = vpop.f32.mrf.mxu0
      %v2506 = vadd.f32 0.0, %v2505
      %2507 = vmatmul.bf16.gmra.mxu0 %v1775
      %v2508 = vpop.f32.mrf.mxu0
      %v2509 = vadd.f32 0.0, %v2508
      %v2510 = vpop.f32.mrf.mxu0
      %v2511 = vadd.f32 0.0, %v2510
      %2512 = vmatmul.bf16.gmra.mxu0 %v2379
      %v2513 = vpop.f32.mrf.mxu0
      %v2514 = vadd.f32 0.0, %v2513
      %v2515 = vpop.f32.mrf.mxu0
      %v2516 = vadd.f32 0.0, %v2515
      %2517 = vdwg.mxu0
      %v2518 = vadd.f32 %v2304, %v2439
      %v2519 = vadd.f32 %v2305, %v2441
      %v2520 = vadd.f32 %v2306, %v2444
      %v2521 = vadd.f32 %v2307, %v2446
      %v2522 = vadd.f32 %v2308, %v2449
      %v2523 = vadd.f32 %v2309, %v2451
      %v2524 = vadd.f32 %v2310, %v2454
      %v2525 = vadd.f32 %v2311, %v2456
      %v2526 = vadd.f32 %v2312, %v2459
      %v2527 = vadd.f32 %v2313, %v2461
      %v2528 = vadd.f32 %v2314, %v2464
      %v2529 = vadd.f32 %v2315, %v2466
      %v2530 = vadd.f32 %v2316, %v2469
      %v2531 = vadd.f32 %v2317, %v2471
      %v2532 = vadd.f32 %v2318, %v2474
      %v2533 = vadd.f32 %v2319, %v2476
      %v2534 = vadd.f32 %v2320, %v2479
      %v2535 = vadd.f32 %v2321, %v2481
      %v2536 = vadd.f32 %v2322, %v2484
      %v2537 = vadd.f32 %v2323, %v2486
      %v2538 = vadd.f32 %v2324, %v2489
      %v2539 = vadd.f32 %v2325, %v2491
      %v2540 = vadd.f32 %v2326, %v2494
      %v2541 = vadd.f32 %v2327, %v2496
      %v2542 = vadd.f32 %v2328, %v2499
      %v2543 = vadd.f32 %v2329, %v2501
      %v2544 = vadd.f32 %v2330, %v2504
      %v2545 = vadd.f32 %v2331, %v2506
      %v2546 = vadd.f32 %v2332, %v2509
      %v2547 = vadd.f32 %v2333, %v2511
      %v2548 = vadd.f32 %v2334, %v2514
      %v2549 = vadd.f32 %v2335, %v2516
      %v2551 = vrot.slane %v302, 5
      %v2552 = vrot.slane %v2551, 4
      %v2553 = vrot.slane %v303, 5
      %v2554 = vsel %vm1177, %v2552, %v2553
      %v2555 = vrot.slane %v2553, 4
      %v2556 = vrot.slane %v304, 5
      %v2557 = vsel %vm1177, %v2555, %v2556
      %s2558 = scalar_lea.vmem %s205, 512
      %v2559 = vld [vmem:[%s2558] sm:$0xf]
      %v2560 = vld [vmem:[%s2558 + $0x4] sm:$0xf]
      %v2561 = vld [vmem:[%s2558 + $0x8] sm:$0xf]
      %v2562 = vld [vmem:[%s2558 + $0xc] sm:$0xf]
      %v2563 = vld [vmem:[%s2558 + $0x10] sm:$0xf]
      %v2564 = vld [vmem:[%s2558 + $0x14] sm:$0xf]
      %v2565 = vld [vmem:[%s2558 + $0x18] sm:$0xf]
      %v2566 = vld [vmem:[%s2558 + $0x1c] sm:$0xf]
      %v2567 = vld [vmem:[%s2558 + $0x20] sm:$0xf]
      %v2568 = vld [vmem:[%s2558 + $0x24] sm:$0xf]
      %v2569 = vld [vmem:[%s2558 + $0x28] sm:$0xf]
      %v2570 = vld [vmem:[%s2558 + $0x2c] sm:$0xf]
      %v2571 = vld [vmem:[%s2558 + $0x30] sm:$0xf]
      %v2572 = vld [vmem:[%s2558 + $0x34] sm:$0xf]
      %v2573 = vld [vmem:[%s2558 + $0x38] sm:$0xf]
      %v2574 = vld [vmem:[%s2558 + $0x3c] sm:$0xf]
      %v2575 = vunpack.c.l.b16 %v2554
      %v2576 = vunpack.c.l.b16 %v2557
      %v2577 = vpack.c.b16 %v2576, %v2575
      %v2595 = vunpack.c.l.b16 %v2559
      %v2596 = vunpack.c.l.b16 %v2560
      %v2597 = vunpack.c.l.b16 %v2561
      %v2598 = vunpack.c.l.b16 %v2562
      %v2599 = vunpack.c.l.b16 %v2563
      %v2600 = vunpack.c.l.b16 %v2564
      %v2601 = vunpack.c.l.b16 %v2565
      %v2602 = vunpack.c.l.b16 %v2566
      %v2603 = vunpack.c.l.b16 %v2567
      %v2604 = vunpack.c.l.b16 %v2568
      %v2605 = vunpack.c.l.b16 %v2569
      %v2606 = vunpack.c.l.b16 %v2570
      %v2607 = vunpack.c.l.b16 %v2571
      %v2608 = vunpack.c.l.b16 %v2572
      %v2609 = vunpack.c.l.b16 %v2573
      %v2610 = vunpack.c.l.b16 %v2574
      %v2611 = vpack.c.b16 %v2596, %v2595
      %v2612 = vpack.c.b16 %v2598, %v2597
      %v2613 = vpack.c.b16 %v2600, %v2599
      %v2614 = vpack.c.b16 %v2602, %v2601
      %v2615 = vpack.c.b16 %v2604, %v2603
      %v2616 = vpack.c.b16 %v2606, %v2605
      %v2617 = vpack.c.b16 %v2608, %v2607
      %v2618 = vpack.c.b16 %v2610, %v2609
      %2627 = vmatpush.bf16.msra.mxu0 %v2618
      %2628 = vmatpush.bf16.msra.mxu0 %v2617
      %2629 = vmatpush.bf16.msra.mxu0 %v2616
      %2630 = vmatpush.bf16.msra.mxu0 %v2615
      %2631 = vmatpush.bf16.msra.mxu0 %v2614
      %2632 = vmatpush.bf16.msra.mxu0 %v2613
      %2633 = vmatpush.bf16.msra.mxu0 %v2612
      %2634 = vmatpush.bf16.msra.mxu0 %v2611
      %2635 = vmatmul.bf16.gmra.mxu0 %v1341
      %v2636 = vpop.f32.mrf.mxu0
      %v2637 = vadd.f32 0.0, %v2636
      %v2638 = vpop.f32.mrf.mxu0
      %v2639 = vadd.f32 0.0, %v2638
      %2640 = vmatmul.bf16.gmra.mxu0 %v1342
      %v2641 = vpop.f32.mrf.mxu0
      %v2642 = vadd.f32 0.0, %v2641
      %v2643 = vpop.f32.mrf.mxu0
      %v2644 = vadd.f32 0.0, %v2643
      %2645 = vmatmul.bf16.gmra.mxu0 %v1343
      %v2646 = vpop.f32.mrf.mxu0
      %v2647 = vadd.f32 0.0, %v2646
      %v2648 = vpop.f32.mrf.mxu0
      %v2649 = vadd.f32 0.0, %v2648
      %2650 = vmatmul.bf16.gmra.mxu0 %v1344
      %v2651 = vpop.f32.mrf.mxu0
      %v2652 = vadd.f32 0.0, %v2651
      %v2653 = vpop.f32.mrf.mxu0
      %v2654 = vadd.f32 0.0, %v2653
      %2655 = vmatmul.bf16.gmra.mxu0 %v1345
      %v2656 = vpop.f32.mrf.mxu0
      %v2657 = vadd.f32 0.0, %v2656
      %v2658 = vpop.f32.mrf.mxu0
      %v2659 = vadd.f32 0.0, %v2658
      %2660 = vmatmul.bf16.gmra.mxu0 %v1346
      %v2661 = vpop.f32.mrf.mxu0
      %v2662 = vadd.f32 0.0, %v2661
      %v2663 = vpop.f32.mrf.mxu0
      %v2664 = vadd.f32 0.0, %v2663
      %2665 = vmatmul.bf16.gmra.mxu0 %v1347
      %v2666 = vpop.f32.mrf.mxu0
      %v2667 = vadd.f32 0.0, %v2666
      %v2668 = vpop.f32.mrf.mxu0
      %v2669 = vadd.f32 0.0, %v2668
      %2670 = vmatmul.bf16.gmra.mxu0 %v1348
      %v2671 = vpop.f32.mrf.mxu0
      %v2672 = vadd.f32 0.0, %v2671
      %v2673 = vpop.f32.mrf.mxu0
      %v2674 = vadd.f32 0.0, %v2673
      %2675 = vmatmul.bf16.gmra.mxu0 %v1349
      %v2676 = vpop.f32.mrf.mxu0
      %v2677 = vadd.f32 0.0, %v2676
      %v2678 = vpop.f32.mrf.mxu0
      %v2679 = vadd.f32 0.0, %v2678
      %2680 = vmatmul.bf16.gmra.mxu0 %v1350
      %v2681 = vpop.f32.mrf.mxu0
      %v2682 = vadd.f32 0.0, %v2681
      %v2683 = vpop.f32.mrf.mxu0
      %v2684 = vadd.f32 0.0, %v2683
      %2685 = vmatmul.bf16.gmra.mxu0 %v1351
      %v2686 = vpop.f32.mrf.mxu0
      %v2687 = vadd.f32 0.0, %v2686
      %v2688 = vpop.f32.mrf.mxu0
      %v2689 = vadd.f32 0.0, %v2688
      %2690 = vmatmul.bf16.gmra.mxu0 %v1352
      %v2691 = vpop.f32.mrf.mxu0
      %v2692 = vadd.f32 0.0, %v2691
      %v2693 = vpop.f32.mrf.mxu0
      %v2694 = vadd.f32 0.0, %v2693
      %2695 = vmatmul.bf16.gmra.mxu0 %v1353
      %v2696 = vpop.f32.mrf.mxu0
      %v2697 = vadd.f32 0.0, %v2696
      %v2698 = vpop.f32.mrf.mxu0
      %v2699 = vadd.f32 0.0, %v2698
      %2700 = vmatmul.bf16.gmra.mxu0 %v1354
      %v2701 = vpop.f32.mrf.mxu0
      %v2702 = vadd.f32 0.0, %v2701
      %v2703 = vpop.f32.mrf.mxu0
      %v2704 = vadd.f32 0.0, %v2703
      %2705 = vmatmul.bf16.gmra.mxu0 %v1973
      %v2706 = vpop.f32.mrf.mxu0
      %v2707 = vadd.f32 0.0, %v2706
      %v2708 = vpop.f32.mrf.mxu0
      %v2709 = vadd.f32 0.0, %v2708
      %2710 = vmatmul.bf16.gmra.mxu0 %v2577
      %v2711 = vpop.f32.mrf.mxu0
      %v2712 = vadd.f32 0.0, %v2711
      %v2713 = vpop.f32.mrf.mxu0
      %v2714 = vadd.f32 0.0, %v2713
      %2715 = vdwg.mxu0
      %v2716 = vadd.f32 %v2518, %v2637
      %v2717 = vadd.f32 %v2519, %v2639
      %v2718 = vadd.f32 %v2520, %v2642
      %v2719 = vadd.f32 %v2521, %v2644
      %v2720 = vadd.f32 %v2522, %v2647
      %v2721 = vadd.f32 %v2523, %v2649
      %v2722 = vadd.f32 %v2524, %v2652
      %v2723 = vadd.f32 %v2525, %v2654
      %v2724 = vadd.f32 %v2526, %v2657
      %v2725 = vadd.f32 %v2527, %v2659
      %v2726 = vadd.f32 %v2528, %v2662
      %v2727 = vadd.f32 %v2529, %v2664
      %v2728 = vadd.f32 %v2530, %v2667
      %v2729 = vadd.f32 %v2531, %v2669
      %v2730 = vadd.f32 %v2532, %v2672
      %v2731 = vadd.f32 %v2533, %v2674
      %v2732 = vadd.f32 %v2534, %v2677
      %v2733 = vadd.f32 %v2535, %v2679
      %v2734 = vadd.f32 %v2536, %v2682
      %v2735 = vadd.f32 %v2537, %v2684
      %v2736 = vadd.f32 %v2538, %v2687
      %v2737 = vadd.f32 %v2539, %v2689
      %v2738 = vadd.f32 %v2540, %v2692
      %v2739 = vadd.f32 %v2541, %v2694
      %v2740 = vadd.f32 %v2542, %v2697
      %v2741 = vadd.f32 %v2543, %v2699
      %v2742 = vadd.f32 %v2544, %v2702
      %v2743 = vadd.f32 %v2545, %v2704
      %v2744 = vadd.f32 %v2546, %v2707
      %v2745 = vadd.f32 %v2547, %v2709
      %v2746 = vadd.f32 %v2548, %v2712
      %v2747 = vadd.f32 %v2549, %v2714
      %v2748 = vld [vmem:[#allocation2] sm:$0xff]
      %v2749 = vld [vmem:[#allocation2 + $0x8] sm:$0xff]
      %v2750 = vld [vmem:[#allocation2 + $0x10] sm:$0xff]
      %v2751 = vld [vmem:[#allocation2 + $0x18] sm:$0xff]
      %v2752 = vld [vmem:[#allocation2 + $0x20] sm:$0xff]
      %v2753 = vld [vmem:[#allocation2 + $0x28] sm:$0xff]
      %v2754 = vld [vmem:[#allocation2 + $0x30] sm:$0xff]
      %v2755 = vld [vmem:[#allocation2 + $0x38] sm:$0xff]
      %v2756 = vld [vmem:[#allocation2 + $0x40] sm:$0xff]
      %v2757 = vld [vmem:[#allocation2 + $0x48] sm:$0xff]
      %v2758 = vld [vmem:[#allocation2 + $0x50] sm:$0xff]
      %v2759 = vld [vmem:[#allocation2 + $0x58] sm:$0xff]
      %v2760 = vld [vmem:[#allocation2 + $0x60] sm:$0xff]
      %v2761 = vld [vmem:[#allocation2 + $0x68] sm:$0xff]
      %v2762 = vld [vmem:[#allocation2 + $0x70] sm:$0xff]
      %v2763 = vld [vmem:[#allocation2 + $0x78] sm:$0xff]
      %v2764 = vld [vmem:[#allocation2 + $0x80] sm:$0xff]
      %v2765 = vld [vmem:[#allocation2 + $0x88] sm:$0xff]
      %v2766 = vld [vmem:[#allocation2 + $0x90] sm:$0xff]
      %v2767 = vld [vmem:[#allocation2 + $0x98] sm:$0xff]
      %v2768 = vld [vmem:[#allocation2 + $0xa0] sm:$0xff]
      %v2769 = vld [vmem:[#allocation2 + $0xa8] sm:$0xff]
      %v2770 = vld [vmem:[#allocation2 + $0xb0] sm:$0xff]
      %v2771 = vld [vmem:[#allocation2 + $0xb8] sm:$0xff]
      %v2772 = vld [vmem:[#allocation2 + $0xc0] sm:$0xff]
      %v2773 = vld [vmem:[#allocation2 + $0xc8] sm:$0xff]
      %v2774 = vld [vmem:[#allocation2 + $0xd0] sm:$0xff]
      %v2775 = vld [vmem:[#allocation2 + $0xd8] sm:$0xff]
      %v2776 = vld [vmem:[#allocation2 + $0xe0] sm:$0xff]
      %v2777 = vld [vmem:[#allocation2 + $0xe8] sm:$0xff]
      %v2778 = vld [vmem:[#allocation2 + $0xf0] sm:$0xff]
      %v2779 = vld [vmem:[#allocation2 + $0xf8] sm:$0xff]
      %v2780 = vadd.f32 %v2748, %v2716
      %v2781 = vadd.f32 %v2749, %v2717
      %v2782 = vadd.f32 %v2750, %v2718
      %v2783 = vadd.f32 %v2751, %v2719
      %v2784 = vadd.f32 %v2752, %v2720
      %v2785 = vadd.f32 %v2753, %v2721
      %v2786 = vadd.f32 %v2754, %v2722
      %v2787 = vadd.f32 %v2755, %v2723
      %v2788 = vadd.f32 %v2756, %v2724
      %v2789 = vadd.f32 %v2757, %v2725
      %v2790 = vadd.f32 %v2758, %v2726
      %v2791 = vadd.f32 %v2759, %v2727
      %v2792 = vadd.f32 %v2760, %v2728
      %v2793 = vadd.f32 %v2761, %v2729
      %v2794 = vadd.f32 %v2762, %v2730
      %v2795 = vadd.f32 %v2763, %v2731
      %v2796 = vadd.f32 %v2764, %v2732
      %v2797 = vadd.f32 %v2765, %v2733
      %v2798 = vadd.f32 %v2766, %v2734
      %v2799 = vadd.f32 %v2767, %v2735
      %v2800 = vadd.f32 %v2768, %v2736
      %v2801 = vadd.f32 %v2769, %v2737
      %v2802 = vadd.f32 %v2770, %v2738
      %v2803 = vadd.f32 %v2771, %v2739
      %v2804 = vadd.f32 %v2772, %v2740
      %v2805 = vadd.f32 %v2773, %v2741
      %v2806 = vadd.f32 %v2774, %v2742
      %v2807 = vadd.f32 %v2775, %v2743
      %v2808 = vadd.f32 %v2776, %v2744
      %v2809 = vadd.f32 %v2777, %v2745
      %v2810 = vadd.f32 %v2778, %v2746
      %v2811 = vadd.f32 %v2779, %v2747
      %2812 = vst [vmem:[#allocation2] sm:$0xff] %v2780
      %2813 = vst [vmem:[#allocation2 + $0x8] sm:$0xff] %v2781
      %2814 = vst [vmem:[#allocation2 + $0x10] sm:$0xff] %v2782
      %2815 = vst [vmem:[#allocation2 + $0x18] sm:$0xff] %v2783
      %2816 = vst [vmem:[#allocation2 + $0x20] sm:$0xff] %v2784
      %2817 = vst [vmem:[#allocation2 + $0x28] sm:$0xff] %v2785
      %2818 = vst [vmem:[#allocation2 + $0x30] sm:$0xff] %v2786
      %2819 = vst [vmem:[#allocation2 + $0x38] sm:$0xff] %v2787
      %2820 = vst [vmem:[#allocation2 + $0x40] sm:$0xff] %v2788
      %2821 = vst [vmem:[#allocation2 + $0x48] sm:$0xff] %v2789
      %2822 = vst [vmem:[#allocation2 + $0x50] sm:$0xff] %v2790
      %2823 = vst [vmem:[#allocation2 + $0x58] sm:$0xff] %v2791
      %2824 = vst [vmem:[#allocation2 + $0x60] sm:$0xff] %v2792
      %2825 = vst [vmem:[#allocation2 + $0x68] sm:$0xff] %v2793
      %2826 = vst [vmem:[#allocation2 + $0x70] sm:$0xff] %v2794
      %2827 = vst [vmem:[#allocation2 + $0x78] sm:$0xff] %v2795
      %2828 = vst [vmem:[#allocation2 + $0x80] sm:$0xff] %v2796
      %2829 = vst [vmem:[#allocation2 + $0x88] sm:$0xff] %v2797
      %2830 = vst [vmem:[#allocation2 + $0x90] sm:$0xff] %v2798
      %2831 = vst [vmem:[#allocation2 + $0x98] sm:$0xff] %v2799
      %2832 = vst [vmem:[#allocation2 + $0xa0] sm:$0xff] %v2800
      %2833 = vst [vmem:[#allocation2 + $0xa8] sm:$0xff] %v2801
      %2834 = vst [vmem:[#allocation2 + $0xb0] sm:$0xff] %v2802
      %2835 = vst [vmem:[#allocation2 + $0xb8] sm:$0xff] %v2803
      %2836 = vst [vmem:[#allocation2 + $0xc0] sm:$0xff] %v2804
      %2837 = vst [vmem:[#allocation2 + $0xc8] sm:$0xff] %v2805
      %2838 = vst [vmem:[#allocation2 + $0xd0] sm:$0xff] %v2806
      %2839 = vst [vmem:[#allocation2 + $0xd8] sm:$0xff] %v2807
      %2840 = vst [vmem:[#allocation2 + $0xe0] sm:$0xff] %v2808
      %2841 = vst [vmem:[#allocation2 + $0xe8] sm:$0xff] %v2809
      %2842 = vst [vmem:[#allocation2 + $0xf0] sm:$0xff] %v2810
      %2843 = vst [vmem:[#allocation2 + $0xf8] sm:$0xff] %v2811
      // Predicated region
      $region33: #{resblock_forward.5} parent=27 // pred_check
        %p2844 = pneg %p215
      $region34: #{resblock_forward.5} parent=27 // pred_check_branch
        %2846 = sbr.rel (%p2844) target = $region36
      $region35: #{resblock_forward.5} parent=27 // pred_region
        %v2847 = vld [vmem:[#allocation2] sm:$0xff]
        %v2848 = vld [vmem:[#allocation2 + $0x8] sm:$0xff]
        %v2849 = vld [vmem:[#allocation2 + $0x10] sm:$0xff]
        %v2850 = vld [vmem:[#allocation2 + $0x18] sm:$0xff]
        %v2851 = vld [vmem:[#allocation2 + $0x20] sm:$0xff]
        %v2852 = vld [vmem:[#allocation2 + $0x28] sm:$0xff]
        %v2853 = vld [vmem:[#allocation2 + $0x30] sm:$0xff]
        %v2854 = vld [vmem:[#allocation2 + $0x38] sm:$0xff]
        %v2855 = vld [vmem:[#allocation2 + $0x40] sm:$0xff]
        %v2856 = vld [vmem:[#allocation2 + $0x48] sm:$0xff]
        %v2857 = vld [vmem:[#allocation2 + $0x50] sm:$0xff]
        %v2858 = vld [vmem:[#allocation2 + $0x58] sm:$0xff]
        %v2859 = vld [vmem:[#allocation2 + $0x60] sm:$0xff]
        %v2860 = vld [vmem:[#allocation2 + $0x68] sm:$0xff]
        %v2861 = vld [vmem:[#allocation2 + $0x70] sm:$0xff]
        %v2862 = vld [vmem:[#allocation2 + $0x78] sm:$0xff]
        %v2863 = vld [vmem:[#allocation2 + $0x80] sm:$0xff]
        %v2864 = vld [vmem:[#allocation2 + $0x88] sm:$0xff]
        %v2865 = vld [vmem:[#allocation2 + $0x90] sm:$0xff]
        %v2866 = vld [vmem:[#allocation2 + $0x98] sm:$0xff]
        %v2867 = vld [vmem:[#allocation2 + $0xa0] sm:$0xff]
        %v2868 = vld [vmem:[#allocation2 + $0xa8] sm:$0xff]
        %v2869 = vld [vmem:[#allocation2 + $0xb0] sm:$0xff]
        %v2870 = vld [vmem:[#allocation2 + $0xb8] sm:$0xff]
        %v2871 = vld [vmem:[#allocation2 + $0xc0] sm:$0xff]
        %v2872 = vld [vmem:[#allocation2 + $0xc8] sm:$0xff]
        %v2873 = vld [vmem:[#allocation2 + $0xd0] sm:$0xff]
        %v2874 = vld [vmem:[#allocation2 + $0xd8] sm:$0xff]
        %v2875 = vld [vmem:[#allocation2 + $0xe0] sm:$0xff]
        %v2876 = vld [vmem:[#allocation2 + $0xe8] sm:$0xff]
        %v2877 = vld [vmem:[#allocation2 + $0xf0] sm:$0xff]
        %v2878 = vld [vmem:[#allocation2 + $0xf8] sm:$0xff]
        %v2879 = vpack.c.bf16 %v2847, %v2847
        %v2880 = vpack.c.bf16 %v2848, %v2848
        %v2881 = vpack.c.bf16 %v2849, %v2849
        %v2882 = vpack.c.bf16 %v2850, %v2850
        %v2883 = vpack.c.bf16 %v2851, %v2851
        %v2884 = vpack.c.bf16 %v2852, %v2852
        %v2885 = vpack.c.bf16 %v2853, %v2853
        %v2886 = vpack.c.bf16 %v2854, %v2854
        %v2887 = vpack.c.bf16 %v2855, %v2855
        %v2888 = vpack.c.bf16 %v2856, %v2856
        %v2889 = vpack.c.bf16 %v2857, %v2857
        %v2890 = vpack.c.bf16 %v2858, %v2858
        %v2891 = vpack.c.bf16 %v2859, %v2859
        %v2892 = vpack.c.bf16 %v2860, %v2860
        %v2893 = vpack.c.bf16 %v2861, %v2861
        %v2894 = vpack.c.bf16 %v2862, %v2862
        %v2895 = vpack.c.bf16 %v2863, %v2863
        %v2896 = vpack.c.bf16 %v2864, %v2864
        %v2897 = vpack.c.bf16 %v2865, %v2865
        %v2898 = vpack.c.bf16 %v2866, %v2866
        %v2899 = vpack.c.bf16 %v2867, %v2867
        %v2900 = vpack.c.bf16 %v2868, %v2868
        %v2901 = vpack.c.bf16 %v2869, %v2869
        %v2902 = vpack.c.bf16 %v2870, %v2870
        %v2903 = vpack.c.bf16 %v2871, %v2871
        %v2904 = vpack.c.bf16 %v2872, %v2872
        %v2905 = vpack.c.bf16 %v2873, %v2873
        %v2906 = vpack.c.bf16 %v2874, %v2874
        %v2907 = vpack.c.bf16 %v2875, %v2875
        %v2908 = vpack.c.bf16 %v2876, %v2876
        %v2909 = vpack.c.bf16 %v2877, %v2877
        %v2910 = vpack.c.bf16 %v2878, %v2878
        %2911 = vst [vmem:[%s214] sm:$0xf] %v2879
        %2912 = vst [vmem:[%s214 + $0x4] sm:$0xf] %v2880
        %2913 = vst [vmem:[%s214 + $0x8] sm:$0xf] %v2881
        %2914 = vst [vmem:[%s214 + $0xc] sm:$0xf] %v2882
        %2915 = vst [vmem:[%s214 + $0x10] sm:$0xf] %v2883
        %2916 = vst [vmem:[%s214 + $0x14] sm:$0xf] %v2884
        %2917 = vst [vmem:[%s214 + $0x18] sm:$0xf] %v2885
        %2918 = vst [vmem:[%s214 + $0x1c] sm:$0xf] %v2886
        %2919 = vst [vmem:[%s214 + $0x20] sm:$0xf] %v2887
        %2920 = vst [vmem:[%s214 + $0x24] sm:$0xf] %v2888
        %2921 = vst [vmem:[%s214 + $0x28] sm:$0xf] %v2889
        %2922 = vst [vmem:[%s214 + $0x2c] sm:$0xf] %v2890
        %2923 = vst [vmem:[%s214 + $0x30] sm:$0xf] %v2891
        %2924 = vst [vmem:[%s214 + $0x34] sm:$0xf] %v2892
        %2925 = vst [vmem:[%s214 + $0x38] sm:$0xf] %v2893
        %2926 = vst [vmem:[%s214 + $0x3c] sm:$0xf] %v2894
        %2927 = vst [vmem:[%s214 + $0x40] sm:$0xf] %v2895
        %2928 = vst [vmem:[%s214 + $0x44] sm:$0xf] %v2896
        %2929 = vst [vmem:[%s214 + $0x48] sm:$0xf] %v2897
        %2930 = vst [vmem:[%s214 + $0x4c] sm:$0xf] %v2898
        %2931 = vst [vmem:[%s214 + $0x50] sm:$0xf] %v2899
        %2932 = vst [vmem:[%s214 + $0x54] sm:$0xf] %v2900
        %2933 = vst [vmem:[%s214 + $0x58] sm:$0xf] %v2901
        %2934 = vst [vmem:[%s214 + $0x5c] sm:$0xf] %v2902
        %2935 = vst [vmem:[%s214 + $0x60] sm:$0xf] %v2903
        %2936 = vst [vmem:[%s214 + $0x64] sm:$0xf] %v2904
        %2937 = vst [vmem:[%s214 + $0x68] sm:$0xf] %v2905
        %2938 = vst [vmem:[%s214 + $0x6c] sm:$0xf] %v2906
        %2939 = vst [vmem:[%s214 + $0x70] sm:$0xf] %v2907
        %2940 = vst [vmem:[%s214 + $0x74] sm:$0xf] %v2908
        %2941 = vst [vmem:[%s214 + $0x78] sm:$0xf] %v2909
        %2942 = vst [vmem:[%s214 + $0x7c] sm:$0xf] %v2910
      $region36: #{resblock_forward.5} parent=27 // pred_fallthru
        _
      %p2943 = scmp.lt.s32.totalorder %s18, 1
      %s2944 = scalar_select %p2943, %s18, 1
      %p2945 = scmp.lt.s32.totalorder %s19, 0
      %s2946 = scalar_select %p2945, %s19, 0
      %s2947 = smul.addr %s2944, 32
      %s2948 = sadd.s32 %s2946, %s2947
      %s2949 = smul.addr %s2948, 4
      %s2950 = scalar_lea.vmem %s2, %s2949
      // Predicated region
      $region37: #{resblock_forward.5} parent=27 // pred_check
        %p2951 = pneg %p108
      $region38: #{resblock_forward.5} parent=27 // pred_check_branch
        %2953 = sbr.rel (%p2951) target = $region40
      $region39: #{resblock_forward.5} parent=27 // pred_region
        _
      $region40: #{resblock_forward.5} parent=27 // pred_fallthru
        _
    $region28: #{resblock_forward.5} parent=5 // pred_fallthru
      _
    %p2954 = scmp.le.s32.totalorder 2, %s8
    // Predicated region
    $region41: #{resblock_forward.5} parent=5 // pred_check
      %p2955 = pneg %p2954
    $region42: #{resblock_forward.5} parent=5 // pred_check_branch
      %2957 = sbr.rel (%p2955) target = $region44
    $region43: #{resblock_forward.5} parent=5 // pred_region
      %s2958 = ssub.s32 %s8, 2
      // Predicated region
      $region45: #{resblock_forward.5} parent=43 // pred_check
        %p2959 = pneg %p114
      $region46: #{resblock_forward.5} parent=43 // pred_check_branch
        %2961 = sbr.rel (%p2959) target = $region48
      $region47: #{resblock_forward.5} parent=43 // pred_region
        %p2962 = scmp.lt.s32.totalorder %s21, 1
        %s2963 = scalar_select %p2962, %s21, 1
        %p2964 = scmp.lt.s32.totalorder %s22, 0
        %s2965 = scalar_select %p2964, %s22, 0
        %s2966 = smul.addr %s2963, 32
        %s2967 = sadd.s32 %s2965, %s2966
        %s2968 = smul.addr %s2967, 4
        %s2969 = scalar_lea.vmem %s2, %s2968
      $region48: #{resblock_forward.5} parent=43 // pred_fallthru
        _
    $region44: #{resblock_forward.5} parent=5 // pred_fallthru
      _
  $region6: #{resblock_forward.5} parent=0 // loop_footer
    %s12 = sadd.s32 1, %s8
  $region7: #{resblock_forward.5} parent=0 // loop_footer_branch
    %7 = sbr.rel target = $region3
  $region8: #{resblock_forward.5} parent=0 // loop_exit
    _

// kernel: resblock_forward.7
$region0: #{resblock_forward.7}
  #allocation0 [shape = 'u32[]', space=smem, size = 0x4, offset = 0x4, fixed_abs, tag = 'smem constant byte address 0x4 - core index']
  #allocation1 [shape = 'u32[72,128]{1,0:T(1,128)}', space=vmem, size = 0x9000, scoped, tag = 'internal scratch']
  #allocation2 [shape = 'f32[256,128]{1,0:T(8,128)}', space=vmem, size = 0x20000, scoped, tag = 'scratch operand']
  %s0 = inlined_call_operand.vmem [shape: bf16[2,18,18,128], index: 0, kind: input, shape index: {}]
  %s1 = inlined_call_operand.vmem [shape: bf16[9,128,128], index: 1, kind: input, shape index: {}]
  %s2 = inlined_call_operand.vmem [shape: bf16[2,16,16,128], index: 2, kind: input, shape index: {}]
  %s3 = inlined_call_operand.vmem [shape: bf16[128,128], index: 3, kind: input, shape index: {}]
  %s4 = inlined_call_operand.vmem [shape: f32[2,16,16,128], index: 4, kind: output, shape index: {}]
  %s5 = sld [smem:[#allocation0]]
  $region57: #{resblock_forward.7} parent=0
    _
  %s7 = ssub.s32 1, %s5
  %s8 = scalar_select 0, %s7, %s5
  loop: start=0, step=1, limit=4
  $region2: #{resblock_forward.7} parent=0 // loop_pre_header
    _
  $region3: #{resblock_forward.7} parent=0 // loop_header
    %s10 = sphi 0, %s14
    %p11 = scmp.ge.s32.totalorder %s10, 4
    %s17 = sphi 0, %s36
    %s18 = sphi 0, %s32
    %s19 = sphi 0, %s28
    %s20 = sphi 0, %s17
    %s21 = sphi 0, %s18
    %s22 = sphi 0, %s19
    %s23 = sphi 0, %s20
    %s24 = sphi 0, %s21
    %s25 = sphi 0, %s22
    %s41 = sphi 0, %s43
    %s44 = sphi 0, %s41
    %s45 = sphi 0, %s44
    %s61 = sphi 0, %s45
    %s69 = sphi 0, %s71
    %s72 = sphi 0, %s69
    %s73 = sphi 0, %s72
    %s89 = sphi 0, %s73
    %s95 = sphi 0, %s97
    %s98 = sphi 0, %s95
    %s99 = sphi 0, %s98
    %s115 = sphi 0, %s99
    %s121 = sphi 0, %s123
    %s124 = sphi 0, %s121
    %s125 = sphi 0, %s124
    %s141 = sphi 0, %s125
    %s149 = sphi 0, %s151
    %s152 = sphi 0, %s149
    %s153 = sphi 0, %s152
    %s169 = sphi 0, %s153
  $region4: #{resblock_forward.7} parent=0 // loop_header_branch
    %13 = sbr.rel (%p11) target = $region8
  $region5: #{resblock_forward.7} parent=0 // loop_body
    %s15 = ssub.s32 %s10, 1
    %s16 = ssub.s32 %s10, 2
    %s26 = sadd.s32 1, %s19
    %p27 = scmp.ge.s32.totalorder %s26, 1
    %s28 = scalar_select %p27, 0, %s26
    %s29 = sadd.s32 1, %s18
    %s30 = scalar_select %p27, %s29, %s18
    %p31 = scmp.ge.s32.totalorder %s30, 1
    %s32 = scalar_select %p31, 0, %s30
    %s33 = sadd.s32 1, %s17
    %s34 = scalar_select %p31, %s33, %s17
    %p35 = scmp.ge.s32.totalorder %s34, 2
    %s36 = scalar_select %p35, 0, %s34
    %s37 = ssub.s32 %s17, %s36
    %s38 = ssub.s32 %s19, %s28
    %s39 = sor.u32 %s37, %s38
    %p40 = scmp.eq.s32.totalorder %s39, 0
    %s42 = sadd.s32 %s41, 1
    %s43 = scalar_select %p40, %s41, %s42
    %p46 = pneg %p40
    %p47 = scmp.eq.s32.totalorder %s10, 1
    %p48 = por %p46, %p47
    %p49 = scmp.ne.s32.totalorder %s41, %s44
    %p50 = scmp.eq.s32.totalorder %s10, 0
    %p51 = por %p49, %p50
    %p52 = scmp.ne.s32.totalorder %s41, %s44
    %p53 = scmp.eq.s32.totalorder %s15, 1
    %p54 = por %p52, %p53
    %p55 = scmp.ne.s32.totalorder %s44, %s45
    %p56 = scmp.eq.s32.totalorder %s15, 0
    %p57 = por %p55, %p56
    %p58 = scmp.ne.s32.totalorder %s44, %s45
    %p59 = scmp.eq.s32.totalorder %s16, 1
    %p60 = por %p58, %p59
    %p62 = scmp.ne.s32.totalorder %s45, %s61
    %p63 = scmp.eq.s32.totalorder %s16, 0
    %p64 = por %p62, %p63
    %s65 = ssub.s32 %s19, %s28
    %s66 = ssub.s32 %s18, %s32
    %s67 = sor.u32 %s65, %s66
    %p68 = scmp.eq.s32.totalorder %s67, 0
    %s70 = sadd.s32 %s69, 1
    %s71 = scalar_select %p68, %s69, %s70
    %p74 = pneg %p68
    %p75 = scmp.eq.s32.totalorder %s10, 1
    %p76 = por %p74, %p75
    %p77 = scmp.ne.s32.totalorder %s69, %s72
    %p78 = scmp.eq.s32.totalorder %s10, 0
    %p79 = por %p77, %p78
    %p80 = scmp.ne.s32.totalorder %s69, %s72
    %p81 = scmp.eq.s32.totalorder %s15, 1
    %p82 = por %p80, %p81
    %p83 = scmp.ne.s32.totalorder %s72, %s73
    %p84 = scmp.eq.s32.totalorder %s15, 0
    %p85 = por %p83, %p84
    %p86 = scmp.ne.s32.totalorder %s72, %s73
    %p87 = scmp.eq.s32.totalorder %s16, 1
    %p88 = por %p86, %p87
    %p90 = scmp.ne.s32.totalorder %s73, %s89
    %p91 = scmp.eq.s32.totalorder %s16, 0
    %p92 = por %p90, %p91
    %s93 = ssub.s32 %s17, %s36
    %p94 = scmp.eq.s32.totalorder %s93, 0
    %s96 = sadd.s32 %s95, 1
    %s97 = scalar_select %p94, %s95, %s96
    %p100 = pneg %p94
    %p101 = scmp.eq.s32.totalorder %s10, 1
    %p102 = por %p100, %p101
    %p103 = scmp.ne.s32.totalorder %s95, %s98
    %p104 = scmp.eq.s32.totalorder %s10, 0
    %p105 = por %p103, %p104
    %p106 = scmp.ne.s32.totalorder %s95, %s98
    %p107 = scmp.eq.s32.totalorder %s15, 1
    %p108 = por %p106, %p107
    %p109 = scmp.ne.s32.totalorder %s98, %s99
    %p110 = scmp.eq.s32.totalorder %s15, 0
    %p111 = por %p109, %p110
    %p112 = scmp.ne.s32.totalorder %s98, %s99
    %p113 = scmp.eq.s32.totalorder %s16, 1
    %p114 = por %p112, %p113
    %p116 = scmp.ne.s32.totalorder %s99, %s115
    %p117 = scmp.eq.s32.totalorder %s16, 0
    %p118 = por %p116, %p117
    %s119 = ssub.s32 %s18, %s32
    %p120 = scmp.eq.s32.totalorder %s119, 0
    %s122 = sadd.s32 %s121, 1
    %s123 = scalar_select %p120, %s121, %s122
    %p126 = pneg %p120
    %p127 = scmp.eq.s32.totalorder %s10, 1
    %p128 = por %p126, %p127
    %p129 = scmp.ne.s32.totalorder %s121, %s124
    %p130 = scmp.eq.s32.totalorder %s10, 0
    %p131 = por %p129, %p130
    %p132 = scmp.ne.s32.totalorder %s121, %s124
    %p133 = scmp.eq.s32.totalorder %s15, 1
    %p134 = por %p132, %p133
    %p135 = scmp.ne.s32.totalorder %s124, %s125
    %p136 = scmp.eq.s32.totalorder %s15, 0
    %p137 = por %p135, %p136
    %p138 = scmp.ne.s32.totalorder %s124, %s125
    %p139 = scmp.eq.s32.totalorder %s16, 1
    %p140 = por %p138, %p139
    %p142 = scmp.ne.s32.totalorder %s125, %s141
    %p143 = scmp.eq.s32.totalorder %s16, 0
    %p144 = por %p142, %p143
    %s145 = ssub.s32 %s17, %s36
    %s146 = ssub.s32 %s18, %s32
    %s147 = sor.u32 %s145, %s146
    %p148 = scmp.eq.s32.totalorder %s147, 0
    %s150 = sadd.s32 %s149, 1
    %s151 = scalar_select %p148, %s149, %s150
    %p154 = pneg %p148
    %p155 = scmp.eq.s32.totalorder %s10, 1
    %p156 = por %p154, %p155
    %p157 = scmp.ne.s32.totalorder %s149, %s152
    %p158 = scmp.eq.s32.totalorder %s10, 0
    %p159 = por %p157, %p158
    %p160 = scmp.ne.s32.totalorder %s149, %s152
    %p161 = scmp.eq.s32.totalorder %s15, 1
    %p162 = por %p160, %p161
    %p163 = scmp.ne.s32.totalorder %s152, %s153
    %p164 = scmp.eq.s32.totalorder %s15, 0
    %p165 = por %p163, %p164
    %p166 = scmp.ne.s32.totalorder %s152, %s153
    %p167 = scmp.eq.s32.totalorder %s16, 1
    %p168 = por %p166, %p167
    %p170 = scmp.ne.s32.totalorder %s153, %s169
    %p171 = scmp.eq.s32.totalorder %s16, 0
    %p172 = por %p170, %p171
    %p173 = scmp.le.s32.totalorder 1, %s10
    %p174 = scmp.lt.s32.totalorder %s10, 3
    %p175 = pnand %p173, %p174
    %p176 = pneg %p175
    // Predicated region
    $region9: #{resblock_forward.7} parent=5 // pred_check
      _
    $region10: #{resblock_forward.7} parent=5 // pred_check_branch
      %178 = sbr.rel (%p175) target = $region12
    $region11: #{resblock_forward.7} parent=5 // pred_region
      %s179 = ssub.s32 %s10, 1
      // Predicated region
      $region13: #{resblock_forward.7} parent=11 // pred_check
        %p180 = pneg %p85
      $region14: #{resblock_forward.7} parent=11 // pred_check_branch
        %182 = sbr.rel (%p180) target = $region16
      $region15: #{resblock_forward.7} parent=11 // pred_region
        %s183 = smul.u32 16, %s22
        %p184 = scmp.lt.s32.totalorder %s183, 15
        %s185 = scalar_select %p184, %s183, 15
        %p186 = scmp.lt.s32.totalorder %s21, 0
        %s187 = scalar_select %p186, %s21, 0
        %s188 = sadd.s32 %s187, %s185
        %s189 = smul.addr %s188, 4
        %s190 = scalar_lea.vmem %s1, %s189
        %s191 = smul.u32 16, %s22
      $region16: #{resblock_forward.7} parent=11 // pred_fallthru
        _
      // Predicated region
      $region17: #{resblock_forward.7} parent=11 // pred_check
        %p192 = pneg %p137
      $region18: #{resblock_forward.7} parent=11 // pred_check_branch
        %194 = sbr.rel (%p192) target = $region20
      $region19: #{resblock_forward.7} parent=11 // pred_region
        %p195 = scmp.lt.s32.totalorder %s21, 0
        %s196 = scalar_select %p195, %s21, 0
        %s197 = smul.addr %s196, 4
        %s198 = scalar_lea.vmem %s3, %s197
      $region20: #{resblock_forward.7} parent=11 // pred_fallthru
        _
    $region12: #{resblock_forward.7} parent=5 // pred_fallthru
      _
    %p199 = scmp.lt.s32.totalorder %s10, 2
    // Predicated region
    $region21: #{resblock_forward.7} parent=5 // pred_check
      %p200 = pneg %p199
    $region22: #{resblock_forward.7} parent=5 // pred_check_branch
      %202 = sbr.rel (%p200) target = $region24
    $region23: #{resblock_forward.7} parent=5 // pred_region
      // Predicated region
      $region25: #{resblock_forward.7} parent=23 // pred_check
        %p203 = pneg %p51
      $region26: #{resblock_forward.7} parent=23 // pred_check_branch
        %205 = sbr.rel (%p203) target = $region28
      $region27: #{resblock_forward.7} parent=23 // pred_region
        %p206 = scmp.lt.s32.totalorder %s17, 1
        %s207 = scalar_select %p206, %s17, 1
        %p208 = scmp.lt.s32.totalorder %s19, 0
        %s209 = scalar_select %p208, %s19, 0
        %s210 = smul.addr %s207, 54
        %s211 = sadd.s32 %s209, %s210
        %s212 = smul.addr %s211, 4
        %s213 = scalar_lea.vmem %s0, %s212
      $region28: #{resblock_forward.7} parent=23 // pred_fallthru
        _
      // Predicated region
      $region29: #{resblock_forward.7} parent=23 // pred_check
        %p214 = pneg %p105
      $region30: #{resblock_forward.7} parent=23 // pred_check_branch
        %216 = sbr.rel (%p214) target = $region32
      $region31: #{resblock_forward.7} parent=23 // pred_region
        %p217 = scmp.lt.s32.totalorder %s17, 1
        %s218 = scalar_select %p217, %s17, 1
        %s219 = smul.addr %s218, 32
        %s220 = smul.addr %s219, 4
        %s221 = scalar_lea.vmem %s2, %s220
      $region32: #{resblock_forward.7} parent=23 // pred_fallthru
        _
    $region24: #{resblock_forward.7} parent=5 // pred_fallthru
      _
    %p222 = scmp.le.s32.totalorder 1, %s10
    %p223 = scmp.lt.s32.totalorder %s10, 3
    %p224 = pnand %p222, %p223
    %p225 = pneg %p224
    // Predicated region
    $region33: #{resblock_forward.7} parent=5 // pred_check
      _
    $region34: #{resblock_forward.7} parent=5 // pred_check_branch
      %227 = sbr.rel (%p224) target = $region36
    $region35: #{resblock_forward.7} parent=5 // pred_region
      %s228 = ssub.s32 %s10, 1
      %p229 = scmp.lt.s32.totalorder %s20, 1
      %s230 = scalar_select %p229, %s20, 1
      %p231 = scmp.lt.s32.totalorder %s22, 0
      %s232 = scalar_select %p231, %s22, 0
      %s233 = smul.addr %s230, 54
      %s234 = sadd.s32 %s232, %s233
      %s235 = smul.addr %s234, 4
      %s236 = scalar_lea.vmem %s0, %s235
      %p237 = pneg %p57
      %p238 = pneg %p54
      %s239 = smul.u32 16, %s22
      %p240 = scmp.lt.s32.totalorder %s239, 15
      %s241 = scalar_select %p240, %s239, 15
      %p242 = scmp.lt.s32.totalorder %s21, 0
      %s243 = scalar_select %p242, %s21, 0
      %s244 = sadd.s32 %s243, %s241
      %s245 = smul.addr %s244, 4
      %s246 = scalar_lea.vmem %s1, %s245
      %p247 = pneg %p85
      %p248 = pneg %p82
      %p249 = scmp.lt.s32.totalorder %s20, 1
      %s250 = scalar_select %p249, %s20, 1
      %s251 = smul.addr %s250, 32
      %s252 = smul.addr %s251, 4
      %s253 = scalar_lea.vmem %s2, %s252
      %p254 = pneg %p111
      %p255 = pneg %p108
      %p256 = scmp.lt.s32.totalorder %s21, 0
      %s257 = scalar_select %p256, %s21, 0
      %s258 = smul.addr %s257, 4
      %s259 = scalar_lea.vmem %s3, %s258
      %p260 = pneg %p137
      %p261 = pneg %p134
      %p262 = pneg %p165
      %p263 = pneg %p162
      %p264 = scmp.lt.s32.totalorder %s20, 1
      %s265 = scalar_select %p264, %s20, 1
      %p266 = scmp.lt.s32.totalorder %s21, 0
      %s267 = scalar_select %p266, %s21, 0
      %s268 = smul.addr %s265, 32
      %s269 = sadd.s32 %s267, %s268
      %s270 = smul.addr %s269, 8
      %s271 = scalar_lea.vmem %s4, %s270
      %p272 = scmp.lt.s32.totalorder %s20, 1
      %s273 = scalar_select %p272, %s20, 1
      %p274 = scmp.lt.s32.totalorder %s22, 0
      %s275 = scalar_select %p274, %s22, 0
      %s276 = smul.addr %s273, 54
      %s277 = sadd.s32 %s275, %s276
      %s278 = smul.addr %s277, 4
      %s279 = scalar_lea.vmem %s0, %s278
      %s280 = smul.u32 16, %s22
      %p281 = scmp.lt.s32.totalorder %s280, 15
      %s282 = scalar_select %p281, %s280, 15
      %p283 = scmp.lt.s32.totalorder %s21, 0
      %s284 = scalar_select %p283, %s21, 0
      %s285 = sadd.s32 %s284, %s282
      %s286 = smul.addr %s285, 4
      %s287 = scalar_lea.vmem %s1, %s286
      %s288 = smul.u32 16, %s22
      %p289 = scmp.lt.s32.totalorder %s20, 1
      %s290 = scalar_select %p289, %s20, 1
      %s291 = smul.addr %s290, 32
      %s292 = smul.addr %s291, 4
      %s293 = scalar_lea.vmem %s2, %s292
      %p294 = scmp.lt.s32.totalorder %s21, 0
      %s295 = scalar_select %p294, %s21, 0
      %s296 = smul.addr %s295, 4
      %s297 = scalar_lea.vmem %s3, %s296
      %p298 = scmp.lt.s32.totalorder %s20, 1
      %s299 = scalar_select %p298, %s20, 1
      %p300 = scmp.lt.s32.totalorder %s21, 0
      %s301 = scalar_select %p300, %s21, 0
      %s302 = smul.addr %s299, 32
      %s303 = sadd.s32 %s301, %s302
      %s304 = smul.addr %s303, 8
      %s305 = scalar_lea.vmem %s4, %s304
      %p306 = scmp.eq.s32.totalorder %s22, 0
      // Predicated region
      $region37: #{resblock_forward.7} parent=35 // pred_check
        %p307 = pneg %p306
      $region38: #{resblock_forward.7} parent=35 // pred_check_branch
        %309 = sbr.rel (%p307) target = $region40
      $region39: #{resblock_forward.7} parent=35 // pred_region
        %v310 = vld [vmem:[%s293] sm:$0xf]
        %v311 = vld [vmem:[%s293 + $0x4] sm:$0xf]
        %v312 = vld [vmem:[%s293 + $0x8] sm:$0xf]
        %v313 = vld [vmem:[%s293 + $0xc] sm:$0xf]
        %v314 = vld [vmem:[%s293 + $0x10] sm:$0xf]
        %v315 = vld [vmem:[%s293 + $0x14] sm:$0xf]
        %v316 = vld [vmem:[%s293 + $0x18] sm:$0xf]
        %v317 = vld [vmem:[%s293 + $0x1c] sm:$0xf]
        %v318 = vld [vmem:[%s293 + $0x20] sm:$0xf]
        %v319 = vld [vmem:[%s293 + $0x24] sm:$0xf]
        %v320 = vld [vmem:[%s293 + $0x28] sm:$0xf]
        %v321 = vld [vmem:[%s293 + $0x2c] sm:$0xf]
        %v322 = vld [vmem:[%s293 + $0x30] sm:$0xf]
        %v323 = vld [vmem:[%s293 + $0x34] sm:$0xf]
        %v324 = vld [vmem:[%s293 + $0x38] sm:$0xf]
        %v325 = vld [vmem:[%s293 + $0x3c] sm:$0xf]
        %v326 = vld [vmem:[%s293 + $0x40] sm:$0xf]
        %v327 = vld [vmem:[%s293 + $0x44] sm:$0xf]
        %v328 = vld [vmem:[%s293 + $0x48] sm:$0xf]
        %v329 = vld [vmem:[%s293 + $0x4c] sm:$0xf]
        %v330 = vld [vmem:[%s293 + $0x50] sm:$0xf]
        %v331 = vld [vmem:[%s293 + $0x54] sm:$0xf]
        %v332 = vld [vmem:[%s293 + $0x58] sm:$0xf]
        %v333 = vld [vmem:[%s293 + $0x5c] sm:$0xf]
        %v334 = vld [vmem:[%s293 + $0x60] sm:$0xf]
        %v335 = vld [vmem:[%s293 + $0x64] sm:$0xf]
        %v336 = vld [vmem:[%s293 + $0x68] sm:$0xf]
        %v337 = vld [vmem:[%s293 + $0x6c] sm:$0xf]
        %v338 = vld [vmem:[%s293 + $0x70] sm:$0xf]
        %v339 = vld [vmem:[%s293 + $0x74] sm:$0xf]
        %v340 = vld [vmem:[%s293 + $0x78] sm:$0xf]
        %v341 = vld [vmem:[%s293 + $0x7c] sm:$0xf]
        %v342 = vld [vmem:[%s297] sm:$0xf]
        %v343 = vld [vmem:[%s297 + $0x4] sm:$0xf]
        %v344 = vld [vmem:[%s297 + $0x8] sm:$0xf]
        %v345 = vld [vmem:[%s297 + $0xc] sm:$0xf]
        %v346 = vld [vmem:[%s297 + $0x10] sm:$0xf]
        %v347 = vld [vmem:[%s297 + $0x14] sm:$0xf]
        %v348 = vld [vmem:[%s297 + $0x18] sm:$0xf]
        %v349 = vld [vmem:[%s297 + $0x1c] sm:$0xf]
        %v350 = vld [vmem:[%s297 + $0x20] sm:$0xf]
        %v351 = vld [vmem:[%s297 + $0x24] sm:$0xf]
        %v352 = vld [vmem:[%s297 + $0x28] sm:$0xf]
        %v353 = vld [vmem:[%s297 + $0x2c] sm:$0xf]
        %v354 = vld [vmem:[%s297 + $0x30] sm:$0xf]
        %v355 = vld [vmem:[%s297 + $0x34] sm:$0xf]
        %v356 = vld [vmem:[%s297 + $0x38] sm:$0xf]
        %v357 = vld [vmem:[%s297 + $0x3c] sm:$0xf]
        %v390 = vunpack.c.l.b16 %v310
        %v391 = vunpack.c.l.b16 %v311
        %v392 = vunpack.c.l.b16 %v312
        %v393 = vunpack.c.l.b16 %v313
        %v394 = vunpack.c.l.b16 %v314
        %v395 = vunpack.c.l.b16 %v315
        %v396 = vunpack.c.l.b16 %v316
        %v397 = vunpack.c.l.b16 %v317
        %v398 = vunpack.c.l.b16 %v318
        %v399 = vunpack.c.l.b16 %v319
        %v400 = vunpack.c.l.b16 %v320
        %v401 = vunpack.c.l.b16 %v321
        %v402 = vunpack.c.l.b16 %v322
        %v403 = vunpack.c.l.b16 %v323
        %v404 = vunpack.c.l.b16 %v324
        %v405 = vunpack.c.l.b16 %v325
        %v406 = vunpack.c.l.b16 %v326
        %v407 = vunpack.c.l.b16 %v327
        %v408 = vunpack.c.l.b16 %v328
        %v409 = vunpack.c.l.b16 %v329
        %v410 = vunpack.c.l.b16 %v330
        %v411 = vunpack.c.l.b16 %v331
        %v412 = vunpack.c.l.b16 %v332
        %v413 = vunpack.c.l.b16 %v333
        %v414 = vunpack.c.l.b16 %v334
        %v415 = vunpack.c.l.b16 %v335
        %v416 = vunpack.c.l.b16 %v336
        %v417 = vunpack.c.l.b16 %v337
        %v418 = vunpack.c.l.b16 %v338
        %v419 = vunpack.c.l.b16 %v339
        %v420 = vunpack.c.l.b16 %v340
        %v421 = vunpack.c.l.b16 %v341
        %v422 = vpack.c.b16 %v391, %v390
        %v423 = vpack.c.b16 %v393, %v392
        %v424 = vpack.c.b16 %v395, %v394
        %v425 = vpack.c.b16 %v397, %v396
        %v426 = vpack.c.b16 %v399, %v398
        %v427 = vpack.c.b16 %v401, %v400
        %v428 = vpack.c.b16 %v403, %v402
        %v429 = vpack.c.b16 %v405, %v404
        %v430 = vpack.c.b16 %v407, %v406
        %v431 = vpack.c.b16 %v409, %v408
        %v432 = vpack.c.b16 %v411, %v410
        %v433 = vpack.c.b16 %v413, %v412
        %v434 = vpack.c.b16 %v415, %v414
        %v435 = vpack.c.b16 %v417, %v416
        %v436 = vpack.c.b16 %v419, %v418
        %v437 = vpack.c.b16 %v421, %v420
        %v470 = vunpack.c.l.b16 %v342
        %v471 = vunpack.c.l.b16 %v343
        %v472 = vunpack.c.l.b16 %v344
        %v473 = vunpack.c.l.b16 %v345
        %v474 = vunpack.c.l.b16 %v346
        %v475 = vunpack.c.l.b16 %v347
        %v476 = vunpack.c.l.b16 %v348
        %v477 = vunpack.c.l.b16 %v349
        %v478 = vunpack.c.l.b16 %v350
        %v479 = vunpack.c.l.b16 %v351
        %v480 = vunpack.c.l.b16 %v352
        %v481 = vunpack.c.l.b16 %v353
        %v482 = vunpack.c.l.b16 %v354
        %v483 = vunpack.c.l.b16 %v355
        %v484 = vunpack.c.l.b16 %v356
        %v485 = vunpack.c.l.b16 %v357
        %v486 = vpack.c.b16 %v471, %v470
        %v487 = vpack.c.b16 %v473, %v472
        %v488 = vpack.c.b16 %v475, %v474
        %v489 = vpack.c.b16 %v477, %v476
        %v490 = vpack.c.b16 %v479, %v478
        %v491 = vpack.c.b16 %v481, %v480
        %v492 = vpack.c.b16 %v483, %v482
        %v493 = vpack.c.b16 %v485, %v484
        %502 = vmatpush.bf16.msra.mxu0 %v493
        %503 = vmatpush.bf16.msra.mxu0 %v492
        %504 = vmatpush.bf16.msra.mxu0 %v491
        %505 = vmatpush.bf16.msra.mxu0 %v490
        %506 = vmatpush.bf16.msra.mxu0 %v489
        %507 = vmatpush.bf16.msra.mxu0 %v488
        %508 = vmatpush.bf16.msra.mxu0 %v487
        %509 = vmatpush.bf16.msra.mxu0 %v486
        %510 = vmatmul.bf16.gmra.mxu0 %v422
        %v511 = vpop.f32.mrf.mxu0
        %v512 = vadd.f32 0.0, %v511
        %v513 = vpop.f32.mrf.mxu0
        %v514 = vadd.f32 0.0, %v513
        %515 = vmatmul.bf16.gmra.mxu0 %v423
        %v516 = vpop.f32.mrf.mxu0
        %v517 = vadd.f32 0.0, %v516
        %v518 = vpop.f32.mrf.mxu0
        %v519 = vadd.f32 0.0, %v518
        %520 = vmatmul.bf16.gmra.mxu0 %v424
        %v521 = vpop.f32.mrf.mxu0
        %v522 = vadd.f32 0.0, %v521
        %v523 = vpop.f32.mrf.mxu0
        %v524 = vadd.f32 0.0, %v523
        %525 = vmatmul.bf16.gmra.mxu0 %v425
        %v526 = vpop.f32.mrf.mxu0
        %v527 = vadd.f32 0.0, %v526
        %v528 = vpop.f32.mrf.mxu0
        %v529 = vadd.f32 0.0, %v528
        %530 = vmatmul.bf16.gmra.mxu0 %v426
        %v531 = vpop.f32.mrf.mxu0
        %v532 = vadd.f32 0.0, %v531
        %v533 = vpop.f32.mrf.mxu0
        %v534 = vadd.f32 0.0, %v533
        %535 = vmatmul.bf16.gmra.mxu0 %v427
        %v536 = vpop.f32.mrf.mxu0
        %v537 = vadd.f32 0.0, %v536
        %v538 = vpop.f32.mrf.mxu0
        %v539 = vadd.f32 0.0, %v538
        %540 = vmatmul.bf16.gmra.mxu0 %v428
        %v541 = vpop.f32.mrf.mxu0
        %v542 = vadd.f32 0.0, %v541
        %v543 = vpop.f32.mrf.mxu0
        %v544 = vadd.f32 0.0, %v543
        %545 = vmatmul.bf16.gmra.mxu0 %v429
        %v546 = vpop.f32.mrf.mxu0
        %v547 = vadd.f32 0.0, %v546
        %v548 = vpop.f32.mrf.mxu0
        %v549 = vadd.f32 0.0, %v548
        %550 = vmatmul.bf16.gmra.mxu0 %v430
        %v551 = vpop.f32.mrf.mxu0
        %v552 = vadd.f32 0.0, %v551
        %v553 = vpop.f32.mrf.mxu0
        %v554 = vadd.f32 0.0, %v553
        %555 = vmatmul.bf16.gmra.mxu0 %v431
        %v556 = vpop.f32.mrf.mxu0
        %v557 = vadd.f32 0.0, %v556
        %v558 = vpop.f32.mrf.mxu0
        %v559 = vadd.f32 0.0, %v558
        %560 = vmatmul.bf16.gmra.mxu0 %v432
        %v561 = vpop.f32.mrf.mxu0
        %v562 = vadd.f32 0.0, %v561
        %v563 = vpop.f32.mrf.mxu0
        %v564 = vadd.f32 0.0, %v563
        %565 = vmatmul.bf16.gmra.mxu0 %v433
        %v566 = vpop.f32.mrf.mxu0
        %v567 = vadd.f32 0.0, %v566
        %v568 = vpop.f32.mrf.mxu0
        %v569 = vadd.f32 0.0, %v568
        %570 = vmatmul.bf16.gmra.mxu0 %v434
        %v571 = vpop.f32.mrf.mxu0
        %v572 = vadd.f32 0.0, %v571
        %v573 = vpop.f32.mrf.mxu0
        %v574 = vadd.f32 0.0, %v573
        %575 = vmatmul.bf16.gmra.mxu0 %v435
        %v576 = vpop.f32.mrf.mxu0
        %v577 = vadd.f32 0.0, %v576
        %v578 = vpop.f32.mrf.mxu0
        %v579 = vadd.f32 0.0, %v578
        %580 = vmatmul.bf16.gmra.mxu0 %v436
        %v581 = vpop.f32.mrf.mxu0
        %v582 = vadd.f32 0.0, %v581
        %v583 = vpop.f32.mrf.mxu0
        %v584 = vadd.f32 0.0, %v583
        %585 = vmatmul.bf16.gmra.mxu0 %v437
        %v586 = vpop.f32.mrf.mxu0
        %v587 = vadd.f32 0.0, %v586
        %v588 = vpop.f32.mrf.mxu0
        %v589 = vadd.f32 0.0, %v588
        %590 = vdwg.mxu0
        %591 = vst [vmem:[#allocation2] sm:$0xff] %v512
        %592 = vst [vmem:[#allocation2 + $0x8] sm:$0xff] %v514
        %593 = vst [vmem:[#allocation2 + $0x10] sm:$0xff] %v517
        %594 = vst [vmem:[#allocation2 + $0x18] sm:$0xff] %v519
        %595 = vst [vmem:[#allocation2 + $0x20] sm:$0xff] %v522
        %596 = vst [vmem:[#allocation2 + $0x28] sm:$0xff] %v524
        %597 = vst [vmem:[#allocation2 + $0x30] sm:$0xff] %v527
        %598 = vst [vmem:[#allocation2 + $0x38] sm:$0xff] %v529
        %599 = vst [vmem:[#allocation2 + $0x40] sm:$0xff] %v532
        %600 = vst [vmem:[#allocation2 + $0x48] sm:$0xff] %v534
        %601 = vst [vmem:[#allocation2 + $0x50] sm:$0xff] %v537
        %602 = vst [vmem:[#allocation2 + $0x58] sm:$0xff] %v539
        %603 = vst [vmem:[#allocation2 + $0x60] sm:$0xff] %v542
        %604 = vst [vmem:[#allocation2 + $0x68] sm:$0xff] %v544
        %605 = vst [vmem:[#allocation2 + $0x70] sm:$0xff] %v547
        %606 = vst [vmem:[#allocation2 + $0x78] sm:$0xff] %v549
        %607 = vst [vmem:[#allocation2 + $0x80] sm:$0xff] %v552
        %608 = vst [vmem:[#allocation2 + $0x88] sm:$0xff] %v554
        %609 = vst [vmem:[#allocation2 + $0x90] sm:$0xff] %v557
        %610 = vst [vmem:[#allocation2 + $0x98] sm:$0xff] %v559
        %611 = vst [vmem:[#allocation2 + $0xa0] sm:$0xff] %v562
        %612 = vst [vmem:[#allocation2 + $0xa8] sm:$0xff] %v564
        %613 = vst [vmem:[#allocation2 + $0xb0] sm:$0xff] %v567
        %614 = vst [vmem:[#allocation2 + $0xb8] sm:$0xff] %v569
        %615 = vst [vmem:[#allocation2 + $0xc0] sm:$0xff] %v572
        %616 = vst [vmem:[#allocation2 + $0xc8] sm:$0xff] %v574
        %617 = vst [vmem:[#allocation2 + $0xd0] sm:$0xff] %v577
        %618 = vst [vmem:[#allocation2 + $0xd8] sm:$0xff] %v579
        %619 = vst [vmem:[#allocation2 + $0xe0] sm:$0xff] %v582
        %620 = vst [vmem:[#allocation2 + $0xe8] sm:$0xff] %v584
        %621 = vst [vmem:[#allocation2 + $0xf0] sm:$0xff] %v587
        %622 = vst [vmem:[#allocation2 + $0xf8] sm:$0xff] %v589
      $region40: #{resblock_forward.7} parent=35 // pred_fallthru
        _
      %v623 = vld [vmem:[%s279] sm:$0xf]
      %v624 = vld [vmem:[%s279 + $0x4] sm:$0xf]
      %v625 = vld [vmem:[%s279 + $0x8] sm:$0x1]
      %v626 = vld [vmem:[%s279 + $0xc] sm:$0xf]
      %v627 = vld [vmem:[%s279 + $0x10] sm:$0xf]
      %v628 = vld [vmem:[%s279 + $0x14] sm:$0x1]
      %v629 = vld [vmem:[%s279 + $0x18] sm:$0xf]
      %v630 = vld [vmem:[%s279 + $0x1c] sm:$0xf]
      %v631 = vld [vmem:[%s279 + $0x20] sm:$0x1]
      %v632 = vld [vmem:[%s279 + $0x24] sm:$0xf]
      %v633 = vld [vmem:[%s279 + $0x28] sm:$0xf]
      %v634 = vld [vmem:[%s279 + $0x2c] sm:$0x1]
      %v635 = vld [vmem:[%s279 + $0x30] sm:$0xf]
      %v636 = vld [vmem:[%s279 + $0x34] sm:$0xf]
      %v637 = vld [vmem:[%s279 + $0x38] sm:$0x1]
      %v638 = vld [vmem:[%s279 + $0x3c] sm:$0xf]
      %v639 = vld [vmem:[%s279 + $0x40] sm:$0xf]
      %v640 = vld [vmem:[%s279 + $0x44] sm:$0x1]
      %v641 = vld [vmem:[%s279 + $0x48] sm:$0xf]
      %v642 = vld [vmem:[%s279 + $0x4c] sm:$0xf]
      %v643 = vld [vmem:[%s279 + $0x50] sm:$0x1]
      %v644 = vld [vmem:[%s279 + $0x54] sm:$0xf]
      %v645 = vld [vmem:[%s279 + $0x58] sm:$0xf]
      %v646 = vld [vmem:[%s279 + $0x5c] sm:$0x1]
      %v647 = vld [vmem:[%s279 + $0x60] sm:$0xf]
      %v648 = vld [vmem:[%s279 + $0x64] sm:$0xf]
      %v649 = vld [vmem:[%s279 + $0x68] sm:$0x1]
      %v650 = vld [vmem:[%s279 + $0x6c] sm:$0xf]
      %v651 = vld [vmem:[%s279 + $0x70] sm:$0xf]
      %v652 = vld [vmem:[%s279 + $0x74] sm:$0x1]
      %v653 = vld [vmem:[%s279 + $0x78] sm:$0xf]
      %v654 = vld [vmem:[%s279 + $0x7c] sm:$0xf]
      %v655 = vld [vmem:[%s279 + $0x80] sm:$0x1]
      %v656 = vld [vmem:[%s279 + $0x84] sm:$0xf]
      %v657 = vld [vmem:[%s279 + $0x88] sm:$0xf]
      %v658 = vld [vmem:[%s279 + $0x8c] sm:$0x1]
      %v659 = vld [vmem:[%s279 + $0x90] sm:$0xf]
      %v660 = vld [vmem:[%s279 + $0x94] sm:$0xf]
      %v661 = vld [vmem:[%s279 + $0x98] sm:$0x1]
      %v662 = vld [vmem:[%s279 + $0x9c] sm:$0xf]
      %v663 = vld [vmem:[%s279 + $0xa0] sm:$0xf]
      %v664 = vld [vmem:[%s279 + $0xa4] sm:$0x1]
      %v665 = vld [vmem:[%s279 + $0xa8] sm:$0xf]
      %v666 = vld [vmem:[%s279 + $0xac] sm:$0xf]
      %v667 = vld [vmem:[%s279 + $0xb0] sm:$0x1]
      %v668 = vld [vmem:[%s279 + $0xb4] sm:$0xf]
      %v669 = vld [vmem:[%s279 + $0xb8] sm:$0xf]
      %v670 = vld [vmem:[%s279 + $0xbc] sm:$0x1]
      %v671 = vld [vmem:[%s279 + $0xc0] sm:$0xf]
      %v672 = vld [vmem:[%s279 + $0xc4] sm:$0xf]
      %v673 = vld [vmem:[%s279 + $0xc8] sm:$0x1]
      %v674 = vld [vmem:[%s279 + $0xcc] sm:$0xf]
      %v675 = vld [vmem:[%s279 + $0xd0] sm:$0xf]
      %v676 = vld [vmem:[%s279 + $0xd4] sm:$0x1]
      %v677 = vld [vmem:[%s287] sm:$0xf]
      %v678 = vld [vmem:[%s287 + $0x4] sm:$0xf]
      %v679 = vld [vmem:[%s287 + $0x8] sm:$0xf]
      %v680 = vld [vmem:[%s287 + $0xc] sm:$0xf]
      %v681 = vld [vmem:[%s287 + $0x10] sm:$0xf]
      %v682 = vld [vmem:[%s287 + $0x14] sm:$0xf]
      %v683 = vld [vmem:[%s287 + $0x18] sm:$0xf]
      %v684 = vld [vmem:[%s287 + $0x1c] sm:$0xf]
      %v685 = vld [vmem:[%s287 + $0x20] sm:$0xf]
      %v686 = vld [vmem:[%s287 + $0x24] sm:$0xf]
      %v687 = vld [vmem:[%s287 + $0x28] sm:$0xf]
      %v688 = vld [vmem:[%s287 + $0x2c] sm:$0xf]
      %v689 = vld [vmem:[%s287 + $0x30] sm:$0xf]
      %v690 = vld [vmem:[%s287 + $0x34] sm:$0xf]
      %v691 = vld [vmem:[%s287 + $0x38] sm:$0xf]
      %v692 = vld [vmem:[%s287 + $0x3c] sm:$0xf]
      %vm693 = vsmask.f32 3328
      %vm694 = vsmask.f32 7440
      %vm695 = vmor %vm693, %vm694
      %v697 = vshrl.u32 %v623, 16
      %v699 = vrot.slane %v697, 4
      %v700 = vshll.u32 %v623, 16
      %v702 = vrot.slane %v700, 5
      %v703 = vor.u32 %v699, %v702
      %v704 = vrot.slane %v703, 4
      %v706 = vshll.u32 %v624, 16
      %v708 = vrot.slane %v706, 5
      %v709 = vsel %vm695, %v704, %v708
      %v710 = vshrl.u32 %v624, 16
      %v712 = vrot.slane %v710, 4
      %v713 = vor.u32 %v712, %v708
      %v714 = vrot.slane %v713, 4
      %v716 = vshll.u32 %v625, 16
      %v718 = vrot.slane %v716, 5
      %v719 = vsel %vm695, %v714, %v718
      %v721 = vshrl.u32 %v626, 16
      %v723 = vrot.slane %v721, 4
      %v724 = vshll.u32 %v626, 16
      %v726 = vrot.slane %v724, 5
      %v727 = vor.u32 %v723, %v726
      %v728 = vrot.slane %v727, 4
      %v730 = vshll.u32 %v627, 16
      %v732 = vrot.slane %v730, 5
      %v733 = vsel %vm695, %v728, %v732
      %v734 = vshrl.u32 %v627, 16
      %v736 = vrot.slane %v734, 4
      %v737 = vor.u32 %v736, %v732
      %v738 = vrot.slane %v737, 4
      %v740 = vshll.u32 %v628, 16
      %v742 = vrot.slane %v740, 5
      %v743 = vsel %vm695, %v738, %v742
      %v745 = vshrl.u32 %v629, 16
      %v747 = vrot.slane %v745, 4
      %v748 = vshll.u32 %v629, 16
      %v750 = vrot.slane %v748, 5
      %v751 = vor.u32 %v747, %v750
      %v752 = vrot.slane %v751, 4
      %v754 = vshll.u32 %v630, 16
      %v756 = vrot.slane %v754, 5
      %v757 = vsel %vm695, %v752, %v756
      %v758 = vshrl.u32 %v630, 16
      %v760 = vrot.slane %v758, 4
      %v761 = vor.u32 %v760, %v756
      %v762 = vrot.slane %v761, 4
      %v764 = vshll.u32 %v631, 16
      %v766 = vrot.slane %v764, 5
      %v767 = vsel %vm695, %v762, %v766
      %v769 = vshrl.u32 %v632, 16
      %v771 = vrot.slane %v769, 4
      %v772 = vshll.u32 %v632, 16
      %v774 = vrot.slane %v772, 5
      %v775 = vor.u32 %v771, %v774
      %v776 = vrot.slane %v775, 4
      %v778 = vshll.u32 %v633, 16
      %v780 = vrot.slane %v778, 5
      %v781 = vsel %vm695, %v776, %v780
      %v782 = vshrl.u32 %v633, 16
      %v784 = vrot.slane %v782, 4
      %v785 = vor.u32 %v784, %v780
      %v786 = vrot.slane %v785, 4
      %v788 = vshll.u32 %v634, 16
      %v790 = vrot.slane %v788, 5
      %v791 = vsel %vm695, %v786, %v790
      %v793 = vshrl.u32 %v635, 16
      %v795 = vrot.slane %v793, 4
      %v796 = vshll.u32 %v635, 16
      %v798 = vrot.slane %v796, 5
      %v799 = vor.u32 %v795, %v798
      %v800 = vrot.slane %v799, 4
      %v802 = vshll.u32 %v636, 16
      %v804 = vrot.slane %v802, 5
      %v805 = vsel %vm695, %v800, %v804
      %v806 = vshrl.u32 %v636, 16
      %v808 = vrot.slane %v806, 4
      %v809 = vor.u32 %v808, %v804
      %v810 = vrot.slane %v809, 4
      %v812 = vshll.u32 %v637, 16
      %v814 = vrot.slane %v812, 5
      %v815 = vsel %vm695, %v810, %v814
      %v817 = vshrl.u32 %v638, 16
      %v819 = vrot.slane %v817, 4
      %v820 = vshll.u32 %v638, 16
      %v822 = vrot.slane %v820, 5
      %v823 = vor.u32 %v819, %v822
      %v824 = vrot.slane %v823, 4
      %v826 = vshll.u32 %v639, 16
      %v828 = vrot.slane %v826, 5
      %v829 = vsel %vm695, %v824, %v828
      %v830 = vshrl.u32 %v639, 16
      %v832 = vrot.slane %v830, 4
      %v833 = vor.u32 %v832, %v828
      %v834 = vrot.slane %v833, 4
      %v836 = vshll.u32 %v640, 16
      %v838 = vrot.slane %v836, 5
      %v839 = vsel %vm695, %v834, %v838
      %v841 = vshrl.u32 %v641, 16
      %v843 = vrot.slane %v841, 4
      %v844 = vshll.u32 %v641, 16
      %v846 = vrot.slane %v844, 5
      %v847 = vor.u32 %v843, %v846
      %v848 = vrot.slane %v847, 4
      %v850 = vshll.u32 %v642, 16
      %v852 = vrot.slane %v850, 5
      %v853 = vsel %vm695, %v848, %v852
      %v854 = vshrl.u32 %v642, 16
      %v856 = vrot.slane %v854, 4
      %v857 = vor.u32 %v856, %v852
      %v858 = vrot.slane %v857, 4
      %v860 = vshll.u32 %v643, 16
      %v862 = vrot.slane %v860, 5
      %v863 = vsel %vm695, %v858, %v862
      %v865 = vshrl.u32 %v644, 16
      %v867 = vrot.slane %v865, 4
      %v868 = vshll.u32 %v644, 16
      %v870 = vrot.slane %v868, 5
      %v871 = vor.u32 %v867, %v870
      %v872 = vrot.slane %v871, 4
      %v874 = vshll.u32 %v645, 16
      %v876 = vrot.slane %v874, 5
      %v877 = vsel %vm695, %v872, %v876
      %v878 = vshrl.u32 %v645, 16
      %v880 = vrot.slane %v878, 4
      %v881 = vor.u32 %v880, %v876
      %v882 = vrot.slane %v881, 4
      %v884 = vshll.u32 %v646, 16
      %v886 = vrot.slane %v884, 5
      %v887 = vsel %vm695, %v882, %v886
      %v889 = vshrl.u32 %v647, 16
      %v891 = vrot.slane %v889, 4
      %v892 = vshll.u32 %v647, 16
      %v894 = vrot.slane %v892, 5
      %v895 = vor.u32 %v891, %v894
      %v896 = vrot.slane %v895, 4
      %v898 = vshll.u32 %v648, 16
      %v900 = vrot.slane %v898, 5
      %v901 = vsel %vm695, %v896, %v900
      %v902 = vshrl.u32 %v648, 16
      %v904 = vrot.slane %v902, 4
      %v905 = vor.u32 %v904, %v900
      %v906 = vrot.slane %v905, 4
      %v908 = vshll.u32 %v649, 16
      %v910 = vrot.slane %v908, 5
      %v911 = vsel %vm695, %v906, %v910
      %v913 = vshrl.u32 %v650, 16
      %v915 = vrot.slane %v913, 4
      %v916 = vshll.u32 %v650, 16
      %v918 = vrot.slane %v916, 5
      %v919 = vor.u32 %v915, %v918
      %v920 = vrot.slane %v919, 4
      %v922 = vshll.u32 %v651, 16
      %v924 = vrot.slane %v922, 5
      %v925 = vsel %vm695, %v920, %v924
      %v926 = vshrl.u32 %v651, 16
      %v928 = vrot.slane %v926, 4
      %v929 = vor.u32 %v928, %v924
      %v930 = vrot.slane %v929, 4
      %v932 = vshll.u32 %v652, 16
      %v934 = vrot.slane %v932, 5
      %v935 = vsel %vm695, %v930, %v934
      %v937 = vshrl.u32 %v653, 16
      %v939 = vrot.slane %v937, 4
      %v940 = vshll.u32 %v653, 16
      %v942 = vrot.slane %v940, 5
      %v943 = vor.u32 %v939, %v942
      %v944 = vrot.slane %v943, 4
      %v946 = vshll.u32 %v654, 16
      %v948 = vrot.slane %v946, 5
      %v949 = vsel %vm695, %v944, %v948
      %v950 = vshrl.u32 %v654, 16
      %v952 = vrot.slane %v950, 4
      %v953 = vor.u32 %v952, %v948
      %v954 = vrot.slane %v953, 4
      %v956 = vshll.u32 %v655, 16
      %v958 = vrot.slane %v956, 5
      %v959 = vsel %vm695, %v954, %v958
      %v961 = vshrl.u32 %v656, 16
      %v963 = vrot.slane %v961, 4
      %v964 = vshll.u32 %v656, 16
      %v966 = vrot.slane %v964, 5
      %v967 = vor.u32 %v963, %v966
      %v968 = vrot.slane %v967, 4
      %v970 = vshll.u32 %v657, 16
      %v972 = vrot.slane %v970, 5
      %v973 = vsel %vm695, %v968, %v972
      %v974 = vshrl.u32 %v657, 16
      %v976 = vrot.slane %v974, 4
      %v977 = vor.u32 %v976, %v972
      %v978 = vrot.slane %v977, 4
      %v980 = vshll.u32 %v658, 16
      %v982 = vrot.slane %v980, 5
      %v983 = vsel %vm695, %v978, %v982
      %v985 = vshrl.u32 %v659, 16
      %v987 = vrot.slane %v985, 4
      %v988 = vshll.u32 %v659, 16
      %v990 = vrot.slane %v988, 5
      %v991 = vor.u32 %v987, %v990
      %v992 = vrot.slane %v991, 4
      %v994 = vshll.u32 %v660, 16
      %v996 = vrot.slane %v994, 5
      %v997 = vsel %vm695, %v992, %v996
      %v998 = vshrl.u32 %v660, 16
      %v1000 = vrot.slane %v998, 4
      %v1001 = vor.u32 %v1000, %v996
      %v1002 = vrot.slane %v1001, 4
      %v1004 = vshll.u32 %v661, 16
      %v1006 = vrot.slane %v1004, 5
      %v1007 = vsel %vm695, %v1002, %v1006
      %v1009 = vshrl.u32 %v662, 16
      %v1011 = vrot.slane %v1009, 4
      %v1012 = vshll.u32 %v662, 16
      %v1014 = vrot.slane %v1012, 5
      %v1015 = vor.u32 %v1011, %v1014
      %v1016 = vrot.slane %v1015, 4
      %v1018 = vshll.u32 %v663, 16
      %v1020 = vrot.slane %v1018, 5
      %v1021 = vsel %vm695, %v1016, %v1020
      %v1022 = vshrl.u32 %v663, 16
      %v1024 = vrot.slane %v1022, 4
      %v1025 = vor.u32 %v1024, %v1020
      %v1026 = vrot.slane %v1025, 4
      %v1028 = vshll.u32 %v664, 16
      %v1030 = vrot.slane %v1028, 5
      %v1031 = vsel %vm695, %v1026, %v1030
      %v1033 = vshrl.u32 %v665, 16
      %v1035 = vrot.slane %v1033, 4
      %v1036 = vshll.u32 %v665, 16
      %v1038 = vrot.slane %v1036, 5
      %v1039 = vor.u32 %v1035, %v1038
      %v1040 = vrot.slane %v1039, 4
      %v1042 = vshll.u32 %v666, 16
      %v1044 = vrot.slane %v1042, 5
      %v1045 = vsel %vm695, %v1040, %v1044
      %v1046 = vshrl.u32 %v666, 16
      %v1048 = vrot.slane %v1046, 4
      %v1049 = vor.u32 %v1048, %v1044
      %v1050 = vrot.slane %v1049, 4
      %v1052 = vshll.u32 %v667, 16
      %v1054 = vrot.slane %v1052, 5
      %v1055 = vsel %vm695, %v1050, %v1054
      %v1057 = vshrl.u32 %v668, 16
      %v1059 = vrot.slane %v1057, 4
      %v1060 = vshll.u32 %v668, 16
      %v1062 = vrot.slane %v1060, 5
      %v1063 = vor.u32 %v1059, %v1062
      %v1064 = vrot.slane %v1063, 4
      %v1066 = vshll.u32 %v669, 16
      %v1068 = vrot.slane %v1066, 5
      %v1069 = vsel %vm695, %v1064, %v1068
      %v1070 = vshrl.u32 %v669, 16
      %v1072 = vrot.slane %v1070, 4
      %v1073 = vor.u32 %v1072, %v1068
      %v1074 = vrot.slane %v1073, 4
      %v1076 = vshll.u32 %v670, 16
      %v1078 = vrot.slane %v1076, 5
      %v1079 = vsel %vm695, %v1074, %v1078
      %s1080 = scalar_lea.vmem %s287, 64
      %v1081 = vld [vmem:[%s1080] sm:$0xf]
      %v1082 = vld [vmem:[%s1080 + $0x4] sm:$0xf]
      %v1083 = vld [vmem:[%s1080 + $0x8] sm:$0xf]
      %v1084 = vld [vmem:[%s1080 + $0xc] sm:$0xf]
      %v1085 = vld [vmem:[%s1080 + $0x10] sm:$0xf]
      %v1086 = vld [vmem:[%s1080 + $0x14] sm:$0xf]
      %v1087 = vld [vmem:[%s1080 + $0x18] sm:$0xf]
      %v1088 = vld [vmem:[%s1080 + $0x1c] sm:$0xf]
      %v1089 = vld [vmem:[%s1080 + $0x20] sm:$0xf]
      %v1090 = vld [vmem:[%s1080 + $0x24] sm:$0xf]
      %v1091 = vld [vmem:[%s1080 + $0x28] sm:$0xf]
      %v1092 = vld [vmem:[%s1080 + $0x2c] sm:$0xf]
      %v1093 = vld [vmem:[%s1080 + $0x30] sm:$0xf]
      %v1094 = vld [vmem:[%s1080 + $0x34] sm:$0xf]
      %v1095 = vld [vmem:[%s1080 + $0x38] sm:$0xf]
      %v1096 = vld [vmem:[%s1080 + $0x3c] sm:$0xf]
      %v1097 = vunpack.c.l.b16 %v709
      %v1098 = vunpack.c.l.b16 %v719
      %v1099 = vunpack.c.l.b16 %v733
      %v1100 = vunpack.c.l.b16 %v743
      %v1101 = vunpack.c.l.b16 %v757
      %v1102 = vunpack.c.l.b16 %v767
      %v1103 = vunpack.c.l.b16 %v781
      %v1104 = vunpack.c.l.b16 %v791
      %v1105 = vunpack.c.l.b16 %v805
      %v1106 = vunpack.c.l.b16 %v815
      %v1107 = vunpack.c.l.b16 %v829
      %v1108 = vunpack.c.l.b16 %v839
      %v1109 = vunpack.c.l.b16 %v853
      %v1110 = vunpack.c.l.b16 %v863
      %v1111 = vunpack.c.l.b16 %v877
      %v1112 = vunpack.c.l.b16 %v887
      %v1113 = vunpack.c.l.b16 %v901
      %v1114 = vunpack.c.l.b16 %v911
      %v1115 = vunpack.c.l.b16 %v925
      %v1116 = vunpack.c.l.b16 %v935
      %v1117 = vunpack.c.l.b16 %v949
      %v1118 = vunpack.c.l.b16 %v959
      %v1119 = vunpack.c.l.b16 %v973
      %v1120 = vunpack.c.l.b16 %v983
      %v1121 = vunpack.c.l.b16 %v997
      %v1122 = vunpack.c.l.b16 %v1007
      %v1123 = vunpack.c.l.b16 %v1021
      %v1124 = vunpack.c.l.b16 %v1031
      %v1125 = vunpack.c.l.b16 %v1045
      %v1126 = vunpack.c.l.b16 %v1055
      %v1127 = vunpack.c.l.b16 %v1069
      %v1128 = vunpack.c.l.b16 %v1079
      %v1129 = vpack.c.b16 %v1098, %v1097
      %v1130 = vpack.c.b16 %v1100, %v1099
      %v1131 = vpack.c.b16 %v1102, %v1101
      %v1132 = vpack.c.b16 %v1104, %v1103
      %v1133 = vpack.c.b16 %v1106, %v1105
      %v1134 = vpack.c.b16 %v1108, %v1107
      %v1135 = vpack.c.b16 %v1110, %v1109
      %v1136 = vpack.c.b16 %v1112, %v1111
      %v1137 = vpack.c.b16 %v1114, %v1113
      %v1138 = vpack.c.b16 %v1116, %v1115
      %v1139 = vpack.c.b16 %v1118, %v1117
      %v1140 = vpack.c.b16 %v1120, %v1119
      %v1141 = vpack.c.b16 %v1122, %v1121
      %v1142 = vpack.c.b16 %v1124, %v1123
      %v1143 = vpack.c.b16 %v1126, %v1125
      %v1144 = vpack.c.b16 %v1128, %v1127
      %v1177 = vunpack.c.l.b16 %v1081
      %v1178 = vunpack.c.l.b16 %v1082
      %v1179 = vunpack.c.l.b16 %v1083
      %v1180 = vunpack.c.l.b16 %v1084
      %v1181 = vunpack.c.l.b16 %v1085
      %v1182 = vunpack.c.l.b16 %v1086
      %v1183 = vunpack.c.l.b16 %v1087
      %v1184 = vunpack.c.l.b16 %v1088
      %v1185 = vunpack.c.l.b16 %v1089
      %v1186 = vunpack.c.l.b16 %v1090
      %v1187 = vunpack.c.l.b16 %v1091
      %v1188 = vunpack.c.l.b16 %v1092
      %v1189 = vunpack.c.l.b16 %v1093
      %v1190 = vunpack.c.l.b16 %v1094
      %v1191 = vunpack.c.l.b16 %v1095
      %v1192 = vunpack.c.l.b16 %v1096
      %v1193 = vpack.c.b16 %v1178, %v1177
      %v1194 = vpack.c.b16 %v1180, %v1179
      %v1195 = vpack.c.b16 %v1182, %v1181
      %v1196 = vpack.c.b16 %v1184, %v1183
      %v1197 = vpack.c.b16 %v1186, %v1185
      %v1198 = vpack.c.b16 %v1188, %v1187
      %v1199 = vpack.c.b16 %v1190, %v1189
      %v1200 = vpack.c.b16 %v1192, %v1191
      %1209 = vmatpush.bf16.msra.mxu0 %v1200
      %1210 = vmatpush.bf16.msra.mxu0 %v1199
      %1211 = vmatpush.bf16.msra.mxu0 %v1198
      %1212 = vmatpush.bf16.msra.mxu0 %v1197
      %1213 = vmatpush.bf16.msra.mxu0 %v1196
      %1214 = vmatpush.bf16.msra.mxu0 %v1195
      %1215 = vmatpush.bf16.msra.mxu0 %v1194
      %1216 = vmatpush.bf16.msra.mxu0 %v1193
      %1217 = vmatmul.bf16.gmra.mxu0 %v1129
      %v1218 = vpop.f32.mrf.mxu0
      %v1219 = vadd.f32 0.0, %v1218
      %v1220 = vpop.f32.mrf.mxu0
      %v1221 = vadd.f32 0.0, %v1220
      %1222 = vmatmul.bf16.gmra.mxu0 %v1130
      %v1223 = vpop.f32.mrf.mxu0
      %v1224 = vadd.f32 0.0, %v1223
      %v1225 = vpop.f32.mrf.mxu0
      %v1226 = vadd.f32 0.0, %v1225
      %1227 = vmatmul.bf16.gmra.mxu0 %v1131
      %v1228 = vpop.f32.mrf.mxu0
      %v1229 = vadd.f32 0.0, %v1228
      %v1230 = vpop.f32.mrf.mxu0
      %v1231 = vadd.f32 0.0, %v1230
      %1232 = vmatmul.bf16.gmra.mxu0 %v1132
      %v1233 = vpop.f32.mrf.mxu0
      %v1234 = vadd.f32 0.0, %v1233
      %v1235 = vpop.f32.mrf.mxu0
      %v1236 = vadd.f32 0.0, %v1235
      %1237 = vmatmul.bf16.gmra.mxu0 %v1133
      %v1238 = vpop.f32.mrf.mxu0
      %v1239 = vadd.f32 0.0, %v1238
      %v1240 = vpop.f32.mrf.mxu0
      %v1241 = vadd.f32 0.0, %v1240
      %1242 = vmatmul.bf16.gmra.mxu0 %v1134
      %v1243 = vpop.f32.mrf.mxu0
      %v1244 = vadd.f32 0.0, %v1243
      %v1245 = vpop.f32.mrf.mxu0
      %v1246 = vadd.f32 0.0, %v1245
      %1247 = vmatmul.bf16.gmra.mxu0 %v1135
      %v1248 = vpop.f32.mrf.mxu0
      %v1249 = vadd.f32 0.0, %v1248
      %v1250 = vpop.f32.mrf.mxu0
      %v1251 = vadd.f32 0.0, %v1250
      %1252 = vmatmul.bf16.gmra.mxu0 %v1136
      %v1253 = vpop.f32.mrf.mxu0
      %v1254 = vadd.f32 0.0, %v1253
      %v1255 = vpop.f32.mrf.mxu0
      %v1256 = vadd.f32 0.0, %v1255
      %1257 = vmatmul.bf16.gmra.mxu0 %v1137
      %v1258 = vpop.f32.mrf.mxu0
      %v1259 = vadd.f32 0.0, %v1258
      %v1260 = vpop.f32.mrf.mxu0
      %v1261 = vadd.f32 0.0, %v1260
      %1262 = vmatmul.bf16.gmra.mxu0 %v1138
      %v1263 = vpop.f32.mrf.mxu0
      %v1264 = vadd.f32 0.0, %v1263
      %v1265 = vpop.f32.mrf.mxu0
      %v1266 = vadd.f32 0.0, %v1265
      %1267 = vmatmul.bf16.gmra.mxu0 %v1139
      %v1268 = vpop.f32.mrf.mxu0
      %v1269 = vadd.f32 0.0, %v1268
      %v1270 = vpop.f32.mrf.mxu0
      %v1271 = vadd.f32 0.0, %v1270
      %1272 = vmatmul.bf16.gmra.mxu0 %v1140
      %v1273 = vpop.f32.mrf.mxu0
      %v1274 = vadd.f32 0.0, %v1273
      %v1275 = vpop.f32.mrf.mxu0
      %v1276 = vadd.f32 0.0, %v1275
      %1277 = vmatmul.bf16.gmra.mxu0 %v1141
      %v1278 = vpop.f32.mrf.mxu0
      %v1279 = vadd.f32 0.0, %v1278
      %v1280 = vpop.f32.mrf.mxu0
      %v1281 = vadd.f32 0.0, %v1280
      %1282 = vmatmul.bf16.gmra.mxu0 %v1142
      %v1283 = vpop.f32.mrf.mxu0
      %v1284 = vadd.f32 0.0, %v1283
      %v1285 = vpop.f32.mrf.mxu0
      %v1286 = vadd.f32 0.0, %v1285
      %1287 = vmatmul.bf16.gmra.mxu0 %v1143
      %v1288 = vpop.f32.mrf.mxu0
      %v1289 = vadd.f32 0.0, %v1288
      %v1290 = vpop.f32.mrf.mxu0
      %v1291 = vadd.f32 0.0, %v1290
      %1292 = vmatmul.bf16.gmra.mxu0 %v1144
      %v1293 = vpop.f32.mrf.mxu0
      %v1294 = vadd.f32 0.0, %v1293
      %v1295 = vpop.f32.mrf.mxu0
      %v1296 = vadd.f32 0.0, %v1295
      %1297 = vdwg.mxu0
      %v1330 = vunpack.c.l.b16 %v623
      %v1331 = vunpack.c.l.b16 %v624
      %v1332 = vunpack.c.l.b16 %v626
      %v1333 = vunpack.c.l.b16 %v627
      %v1334 = vunpack.c.l.b16 %v629
      %v1335 = vunpack.c.l.b16 %v630
      %v1336 = vunpack.c.l.b16 %v632
      %v1337 = vunpack.c.l.b16 %v633
      %v1338 = vunpack.c.l.b16 %v635
      %v1339 = vunpack.c.l.b16 %v636
      %v1340 = vunpack.c.l.b16 %v638
      %v1341 = vunpack.c.l.b16 %v639
      %v1342 = vunpack.c.l.b16 %v641
      %v1343 = vunpack.c.l.b16 %v642
      %v1344 = vunpack.c.l.b16 %v644
      %v1345 = vunpack.c.l.b16 %v645
      %v1346 = vunpack.c.l.b16 %v647
      %v1347 = vunpack.c.l.b16 %v648
      %v1348 = vunpack.c.l.b16 %v650
      %v1349 = vunpack.c.l.b16 %v651
      %v1350 = vunpack.c.l.b16 %v653
      %v1351 = vunpack.c.l.b16 %v654
      %v1352 = vunpack.c.l.b16 %v656
      %v1353 = vunpack.c.l.b16 %v657
      %v1354 = vunpack.c.l.b16 %v659
      %v1355 = vunpack.c.l.b16 %v660
      %v1356 = vunpack.c.l.b16 %v662
      %v1357 = vunpack.c.l.b16 %v663
      %v1358 = vunpack.c.l.b16 %v665
      %v1359 = vunpack.c.l.b16 %v666
      %v1360 = vunpack.c.l.b16 %v668
      %v1361 = vunpack.c.l.b16 %v669
      %v1362 = vpack.c.b16 %v1331, %v1330
      %v1363 = vpack.c.b16 %v1333, %v1332
      %v1364 = vpack.c.b16 %v1335, %v1334
      %v1365 = vpack.c.b16 %v1337, %v1336
      %v1366 = vpack.c.b16 %v1339, %v1338
      %v1367 = vpack.c.b16 %v1341, %v1340
      %v1368 = vpack.c.b16 %v1343, %v1342
      %v1369 = vpack.c.b16 %v1345, %v1344
      %v1370 = vpack.c.b16 %v1347, %v1346
      %v1371 = vpack.c.b16 %v1349, %v1348
      %v1372 = vpack.c.b16 %v1351, %v1350
      %v1373 = vpack.c.b16 %v1353, %v1352
      %v1374 = vpack.c.b16 %v1355, %v1354
      %v1375 = vpack.c.b16 %v1357, %v1356
      %v1376 = vpack.c.b16 %v1359, %v1358
      %v1377 = vpack.c.b16 %v1361, %v1360
      %v1410 = vunpack.c.l.b16 %v677
      %v1411 = vunpack.c.l.b16 %v678
      %v1412 = vunpack.c.l.b16 %v679
      %v1413 = vunpack.c.l.b16 %v680
      %v1414 = vunpack.c.l.b16 %v681
      %v1415 = vunpack.c.l.b16 %v682
      %v1416 = vunpack.c.l.b16 %v683
      %v1417 = vunpack.c.l.b16 %v684
      %v1418 = vunpack.c.l.b16 %v685
      %v1419 = vunpack.c.l.b16 %v686
      %v1420 = vunpack.c.l.b16 %v687
      %v1421 = vunpack.c.l.b16 %v688
      %v1422 = vunpack.c.l.b16 %v689
      %v1423 = vunpack.c.l.b16 %v690
      %v1424 = vunpack.c.l.b16 %v691
      %v1425 = vunpack.c.l.b16 %v692
      %v1426 = vpack.c.b16 %v1411, %v1410
      %v1427 = vpack.c.b16 %v1413, %v1412
      %v1428 = vpack.c.b16 %v1415, %v1414
      %v1429 = vpack.c.b16 %v1417, %v1416
      %v1430 = vpack.c.b16 %v1419, %v1418
      %v1431 = vpack.c.b16 %v1421, %v1420
      %v1432 = vpack.c.b16 %v1423, %v1422
      %v1433 = vpack.c.b16 %v1425, %v1424
      %1442 = vmatpush.bf16.msra.mxu0 %v1433
      %1443 = vmatpush.bf16.msra.mxu0 %v1432
      %1444 = vmatpush.bf16.msra.mxu0 %v1431
      %1445 = vmatpush.bf16.msra.mxu0 %v1430
      %1446 = vmatpush.bf16.msra.mxu0 %v1429
      %1447 = vmatpush.bf16.msra.mxu0 %v1428
      %1448 = vmatpush.bf16.msra.mxu0 %v1427
      %1449 = vmatpush.bf16.msra.mxu0 %v1426
      %1450 = vmatmul.bf16.gmra.mxu0 %v1362
      %v1451 = vpop.f32.mrf.mxu0
      %v1452 = vadd.f32 %v1219, %v1451
      %v1453 = vpop.f32.mrf.mxu0
      %v1454 = vadd.f32 %v1221, %v1453
      %1455 = vmatmul.bf16.gmra.mxu0 %v1363
      %v1456 = vpop.f32.mrf.mxu0
      %v1457 = vadd.f32 %v1224, %v1456
      %v1458 = vpop.f32.mrf.mxu0
      %v1459 = vadd.f32 %v1226, %v1458
      %1460 = vmatmul.bf16.gmra.mxu0 %v1364
      %v1461 = vpop.f32.mrf.mxu0
      %v1462 = vadd.f32 %v1229, %v1461
      %v1463 = vpop.f32.mrf.mxu0
      %v1464 = vadd.f32 %v1231, %v1463
      %1465 = vmatmul.bf16.gmra.mxu0 %v1365
      %v1466 = vpop.f32.mrf.mxu0
      %v1467 = vadd.f32 %v1234, %v1466
      %v1468 = vpop.f32.mrf.mxu0
      %v1469 = vadd.f32 %v1236, %v1468
      %1470 = vmatmul.bf16.gmra.mxu0 %v1366
      %v1471 = vpop.f32.mrf.mxu0
      %v1472 = vadd.f32 %v1239, %v1471
      %v1473 = vpop.f32.mrf.mxu0
      %v1474 = vadd.f32 %v1241, %v1473
      %1475 = vmatmul.bf16.gmra.mxu0 %v1367
      %v1476 = vpop.f32.mrf.mxu0
      %v1477 = vadd.f32 %v1244, %v1476
      %v1478 = vpop.f32.mrf.mxu0
      %v1479 = vadd.f32 %v1246, %v1478
      %1480 = vmatmul.bf16.gmra.mxu0 %v1368
      %v1481 = vpop.f32.mrf.mxu0
      %v1482 = vadd.f32 %v1249, %v1481
      %v1483 = vpop.f32.mrf.mxu0
      %v1484 = vadd.f32 %v1251, %v1483
      %1485 = vmatmul.bf16.gmra.mxu0 %v1369
      %v1486 = vpop.f32.mrf.mxu0
      %v1487 = vadd.f32 %v1254, %v1486
      %v1488 = vpop.f32.mrf.mxu0
      %v1489 = vadd.f32 %v1256, %v1488
      %1490 = vmatmul.bf16.gmra.mxu0 %v1370
      %v1491 = vpop.f32.mrf.mxu0
      %v1492 = vadd.f32 %v1259, %v1491
      %v1493 = vpop.f32.mrf.mxu0
      %v1494 = vadd.f32 %v1261, %v1493
      %1495 = vmatmul.bf16.gmra.mxu0 %v1371
      %v1496 = vpop.f32.mrf.mxu0
      %v1497 = vadd.f32 %v1264, %v1496
      %v1498 = vpop.f32.mrf.mxu0
      %v1499 = vadd.f32 %v1266, %v1498
      %1500 = vmatmul.bf16.gmra.mxu0 %v1372
      %v1501 = vpop.f32.mrf.mxu0
      %v1502 = vadd.f32 %v1269, %v1501
      %v1503 = vpop.f32.mrf.mxu0
      %v1504 = vadd.f32 %v1271, %v1503
      %1505 = vmatmul.bf16.gmra.mxu0 %v1373
      %v1506 = vpop.f32.mrf.mxu0
      %v1507 = vadd.f32 %v1274, %v1506
      %v1508 = vpop.f32.mrf.mxu0
      %v1509 = vadd.f32 %v1276, %v1508
      %1510 = vmatmul.bf16.gmra.mxu0 %v1374
      %v1511 = vpop.f32.mrf.mxu0
      %v1512 = vadd.f32 %v1279, %v1511
      %v1513 = vpop.f32.mrf.mxu0
      %v1514 = vadd.f32 %v1281, %v1513
      %1515 = vmatmul.bf16.gmra.mxu0 %v1375
      %v1516 = vpop.f32.mrf.mxu0
      %v1517 = vadd.f32 %v1284, %v1516
      %v1518 = vpop.f32.mrf.mxu0
      %v1519 = vadd.f32 %v1286, %v1518
      %1520 = vmatmul.bf16.gmra.mxu0 %v1376
      %v1521 = vpop.f32.mrf.mxu0
      %v1522 = vadd.f32 %v1289, %v1521
      %v1523 = vpop.f32.mrf.mxu0
      %v1524 = vadd.f32 %v1291, %v1523
      %1525 = vmatmul.bf16.gmra.mxu0 %v1377
      %v1526 = vpop.f32.mrf.mxu0
      %v1527 = vadd.f32 %v1294, %v1526
      %v1528 = vpop.f32.mrf.mxu0
      %v1529 = vadd.f32 %v1296, %v1528
      %1530 = vdwg.mxu0
      %vm1547 = vcmask 1042432
      %vm1548 = vcmask 1046532
      %vm1549 = vmor %vm1547, %vm1548
      %v1550 = vrot.slane %v623, 5
      %v1551 = vrot.slane %v1550, 4
      %v1552 = vrot.slane %v624, 5
      %v1553 = vsel %vm1549, %v1551, %v1552
      %v1554 = vrot.slane %v1552, 4
      %v1555 = vrot.slane %v625, 5
      %v1556 = vsel %vm1549, %v1554, %v1555
      %v1557 = vrot.slane %v626, 5
      %v1558 = vrot.slane %v1557, 4
      %v1559 = vrot.slane %v627, 5
      %v1560 = vsel %vm1549, %v1558, %v1559
      %v1561 = vrot.slane %v1559, 4
      %v1562 = vrot.slane %v628, 5
      %v1563 = vsel %vm1549, %v1561, %v1562
      %v1564 = vrot.slane %v629, 5
      %v1565 = vrot.slane %v1564, 4
      %v1566 = vrot.slane %v630, 5
      %v1567 = vsel %vm1549, %v1565, %v1566
      %v1568 = vrot.slane %v1566, 4
      %v1569 = vrot.slane %v631, 5
      %v1570 = vsel %vm1549, %v1568, %v1569
      %v1571 = vrot.slane %v632, 5
      %v1572 = vrot.slane %v1571, 4
      %v1573 = vrot.slane %v633, 5
      %v1574 = vsel %vm1549, %v1572, %v1573
      %v1575 = vrot.slane %v1573, 4
      %v1576 = vrot.slane %v634, 5
      %v1577 = vsel %vm1549, %v1575, %v1576
      %v1578 = vrot.slane %v635, 5
      %v1579 = vrot.slane %v1578, 4
      %v1580 = vrot.slane %v636, 5
      %v1581 = vsel %vm1549, %v1579, %v1580
      %v1582 = vrot.slane %v1580, 4
      %v1583 = vrot.slane %v637, 5
      %v1584 = vsel %vm1549, %v1582, %v1583
      %v1585 = vrot.slane %v638, 5
      %v1586 = vrot.slane %v1585, 4
      %v1587 = vrot.slane %v639, 5
      %v1588 = vsel %vm1549, %v1586, %v1587
      %v1589 = vrot.slane %v1587, 4
      %v1590 = vrot.slane %v640, 5
      %v1591 = vsel %vm1549, %v1589, %v1590
      %v1592 = vrot.slane %v641, 5
      %v1593 = vrot.slane %v1592, 4
      %v1594 = vrot.slane %v642, 5
      %v1595 = vsel %vm1549, %v1593, %v1594
      %v1596 = vrot.slane %v1594, 4
      %v1597 = vrot.slane %v643, 5
      %v1598 = vsel %vm1549, %v1596, %v1597
      %v1599 = vrot.slane %v644, 5
      %v1600 = vrot.slane %v1599, 4
      %v1601 = vrot.slane %v645, 5
      %v1602 = vsel %vm1549, %v1600, %v1601
      %v1603 = vrot.slane %v1601, 4
      %v1604 = vrot.slane %v646, 5
      %v1605 = vsel %vm1549, %v1603, %v1604
      %v1606 = vrot.slane %v647, 5
      %v1607 = vrot.slane %v1606, 4
      %v1608 = vrot.slane %v648, 5
      %v1609 = vsel %vm1549, %v1607, %v1608
      %v1610 = vrot.slane %v1608, 4
      %v1611 = vrot.slane %v649, 5
      %v1612 = vsel %vm1549, %v1610, %v1611
      %v1613 = vrot.slane %v650, 5
      %v1614 = vrot.slane %v1613, 4
      %v1615 = vrot.slane %v651, 5
      %v1616 = vsel %vm1549, %v1614, %v1615
      %v1617 = vrot.slane %v1615, 4
      %v1618 = vrot.slane %v652, 5
      %v1619 = vsel %vm1549, %v1617, %v1618
      %v1620 = vrot.slane %v653, 5
      %v1621 = vrot.slane %v1620, 4
      %v1622 = vrot.slane %v654, 5
      %v1623 = vsel %vm1549, %v1621, %v1622
      %v1624 = vrot.slane %v1622, 4
      %v1625 = vrot.slane %v655, 5
      %v1626 = vsel %vm1549, %v1624, %v1625
      %v1627 = vrot.slane %v656, 5
      %v1628 = vrot.slane %v1627, 4
      %v1629 = vrot.slane %v657, 5
      %v1630 = vsel %vm1549, %v1628, %v1629
      %v1631 = vrot.slane %v1629, 4
      %v1632 = vrot.slane %v658, 5
      %v1633 = vsel %vm1549, %v1631, %v1632
      %v1634 = vrot.slane %v659, 5
      %v1635 = vrot.slane %v1634, 4
      %v1636 = vrot.slane %v660, 5
      %v1637 = vsel %vm1549, %v1635, %v1636
      %v1638 = vrot.slane %v1636, 4
      %v1639 = vrot.slane %v661, 5
      %v1640 = vsel %vm1549, %v1638, %v1639
      %v1641 = vrot.slane %v662, 5
      %v1642 = vrot.slane %v1641, 4
      %v1643 = vrot.slane %v663, 5
      %v1644 = vsel %vm1549, %v1642, %v1643
      %v1645 = vrot.slane %v1643, 4
      %v1646 = vrot.slane %v664, 5
      %v1647 = vsel %vm1549, %v1645, %v1646
      %v1648 = vrot.slane %v665, 5
      %v1649 = vrot.slane %v1648, 4
      %v1650 = vrot.slane %v666, 5
      %v1651 = vsel %vm1549, %v1649, %v1650
      %v1652 = vrot.slane %v1650, 4
      %v1653 = vrot.slane %v667, 5
      %v1654 = vsel %vm1549, %v1652, %v1653
      %v1655 = vrot.slane %v668, 5
      %v1656 = vrot.slane %v1655, 4
      %v1657 = vrot.slane %v669, 5
      %v1658 = vsel %vm1549, %v1656, %v1657
      %v1659 = vrot.slane %v1657, 4
      %v1660 = vrot.slane %v670, 5
      %v1661 = vsel %vm1549, %v1659, %v1660
      %s1662 = scalar_lea.vmem %s287, 128
      %v1663 = vld [vmem:[%s1662] sm:$0xf]
      %v1664 = vld [vmem:[%s1662 + $0x4] sm:$0xf]
      %v1665 = vld [vmem:[%s1662 + $0x8] sm:$0xf]
      %v1666 = vld [vmem:[%s1662 + $0xc] sm:$0xf]
      %v1667 = vld [vmem:[%s1662 + $0x10] sm:$0xf]
      %v1668 = vld [vmem:[%s1662 + $0x14] sm:$0xf]
      %v1669 = vld [vmem:[%s1662 + $0x18] sm:$0xf]
      %v1670 = vld [vmem:[%s1662 + $0x1c] sm:$0xf]
      %v1671 = vld [vmem:[%s1662 + $0x20] sm:$0xf]
      %v1672 = vld [vmem:[%s1662 + $0x24] sm:$0xf]
      %v1673 = vld [vmem:[%s1662 + $0x28] sm:$0xf]
      %v1674 = vld [vmem:[%s1662 + $0x2c] sm:$0xf]
      %v1675 = vld [vmem:[%s1662 + $0x30] sm:$0xf]
      %v1676 = vld [vmem:[%s1662 + $0x34] sm:$0xf]
      %v1677 = vld [vmem:[%s1662 + $0x38] sm:$0xf]
      %v1678 = vld [vmem:[%s1662 + $0x3c] sm:$0xf]
      %v1679 = vunpack.c.l.b16 %v1553
      %v1680 = vunpack.c.l.b16 %v1556
      %v1681 = vunpack.c.l.b16 %v1560
      %v1682 = vunpack.c.l.b16 %v1563
      %v1683 = vunpack.c.l.b16 %v1567
      %v1684 = vunpack.c.l.b16 %v1570
      %v1685 = vunpack.c.l.b16 %v1574
      %v1686 = vunpack.c.l.b16 %v1577
      %v1687 = vunpack.c.l.b16 %v1581
      %v1688 = vunpack.c.l.b16 %v1584
      %v1689 = vunpack.c.l.b16 %v1588
      %v1690 = vunpack.c.l.b16 %v1591
      %v1691 = vunpack.c.l.b16 %v1595
      %v1692 = vunpack.c.l.b16 %v1598
      %v1693 = vunpack.c.l.b16 %v1602
      %v1694 = vunpack.c.l.b16 %v1605
      %v1695 = vunpack.c.l.b16 %v1609
      %v1696 = vunpack.c.l.b16 %v1612
      %v1697 = vunpack.c.l.b16 %v1616
      %v1698 = vunpack.c.l.b16 %v1619
      %v1699 = vunpack.c.l.b16 %v1623
      %v1700 = vunpack.c.l.b16 %v1626
      %v1701 = vunpack.c.l.b16 %v1630
      %v1702 = vunpack.c.l.b16 %v1633
      %v1703 = vunpack.c.l.b16 %v1637
      %v1704 = vunpack.c.l.b16 %v1640
      %v1705 = vunpack.c.l.b16 %v1644
      %v1706 = vunpack.c.l.b16 %v1647
      %v1707 = vunpack.c.l.b16 %v1651
      %v1708 = vunpack.c.l.b16 %v1654
      %v1709 = vunpack.c.l.b16 %v1658
      %v1710 = vunpack.c.l.b16 %v1661
      %v1711 = vpack.c.b16 %v1680, %v1679
      %v1712 = vpack.c.b16 %v1682, %v1681
      %v1713 = vpack.c.b16 %v1684, %v1683
      %v1714 = vpack.c.b16 %v1686, %v1685
      %v1715 = vpack.c.b16 %v1688, %v1687
      %v1716 = vpack.c.b16 %v1690, %v1689
      %v1717 = vpack.c.b16 %v1692, %v1691
      %v1718 = vpack.c.b16 %v1694, %v1693
      %v1719 = vpack.c.b16 %v1696, %v1695
      %v1720 = vpack.c.b16 %v1698, %v1697
      %v1721 = vpack.c.b16 %v1700, %v1699
      %v1722 = vpack.c.b16 %v1702, %v1701
      %v1723 = vpack.c.b16 %v1704, %v1703
      %v1724 = vpack.c.b16 %v1706, %v1705
      %v1725 = vpack.c.b16 %v1708, %v1707
      %v1726 = vpack.c.b16 %v1710, %v1709
      %v1759 = vunpack.c.l.b16 %v1663
      %v1760 = vunpack.c.l.b16 %v1664
      %v1761 = vunpack.c.l.b16 %v1665
      %v1762 = vunpack.c.l.b16 %v1666
      %v1763 = vunpack.c.l.b16 %v1667
      %v1764 = vunpack.c.l.b16 %v1668
      %v1765 = vunpack.c.l.b16 %v1669
      %v1766 = vunpack.c.l.b16 %v1670
      %v1767 = vunpack.c.l.b16 %v1671
      %v1768 = vunpack.c.l.b16 %v1672
      %v1769 = vunpack.c.l.b16 %v1673
      %v1770 = vunpack.c.l.b16 %v1674
      %v1771 = vunpack.c.l.b16 %v1675
      %v1772 = vunpack.c.l.b16 %v1676
      %v1773 = vunpack.c.l.b16 %v1677
      %v1774 = vunpack.c.l.b16 %v1678
      %v1775 = vpack.c.b16 %v1760, %v1759
      %v1776 = vpack.c.b16 %v1762, %v1761
      %v1777 = vpack.c.b16 %v1764, %v1763
      %v1778 = vpack.c.b16 %v1766, %v1765
      %v1779 = vpack.c.b16 %v1768, %v1767
      %v1780 = vpack.c.b16 %v1770, %v1769
      %v1781 = vpack.c.b16 %v1772, %v1771
      %v1782 = vpack.c.b16 %v1774, %v1773
      %1791 = vmatpush.bf16.msra.mxu0 %v1782
      %1792 = vmatpush.bf16.msra.mxu0 %v1781
      %1793 = vmatpush.bf16.msra.mxu0 %v1780
      %1794 = vmatpush.bf16.msra.mxu0 %v1779
      %1795 = vmatpush.bf16.msra.mxu0 %v1778
      %1796 = vmatpush.bf16.msra.mxu0 %v1777
      %1797 = vmatpush.bf16.msra.mxu0 %v1776
      %1798 = vmatpush.bf16.msra.mxu0 %v1775
      %1799 = vmatmul.bf16.gmra.mxu0 %v1711
      %v1800 = vpop.f32.mrf.mxu0
      %v1801 = vadd.f32 0.0, %v1800
      %v1802 = vpop.f32.mrf.mxu0
      %v1803 = vadd.f32 0.0, %v1802
      %1804 = vmatmul.bf16.gmra.mxu0 %v1712
      %v1805 = vpop.f32.mrf.mxu0
      %v1806 = vadd.f32 0.0, %v1805
      %v1807 = vpop.f32.mrf.mxu0
      %v1808 = vadd.f32 0.0, %v1807
      %1809 = vmatmul.bf16.gmra.mxu0 %v1713
      %v1810 = vpop.f32.mrf.mxu0
      %v1811 = vadd.f32 0.0, %v1810
      %v1812 = vpop.f32.mrf.mxu0
      %v1813 = vadd.f32 0.0, %v1812
      %1814 = vmatmul.bf16.gmra.mxu0 %v1714
      %v1815 = vpop.f32.mrf.mxu0
      %v1816 = vadd.f32 0.0, %v1815
      %v1817 = vpop.f32.mrf.mxu0
      %v1818 = vadd.f32 0.0, %v1817
      %1819 = vmatmul.bf16.gmra.mxu0 %v1715
      %v1820 = vpop.f32.mrf.mxu0
      %v1821 = vadd.f32 0.0, %v1820
      %v1822 = vpop.f32.mrf.mxu0
      %v1823 = vadd.f32 0.0, %v1822
      %1824 = vmatmul.bf16.gmra.mxu0 %v1716
      %v1825 = vpop.f32.mrf.mxu0
      %v1826 = vadd.f32 0.0, %v1825
      %v1827 = vpop.f32.mrf.mxu0
      %v1828 = vadd.f32 0.0, %v1827
      %1829 = vmatmul.bf16.gmra.mxu0 %v1717
      %v1830 = vpop.f32.mrf.mxu0
      %v1831 = vadd.f32 0.0, %v1830
      %v1832 = vpop.f32.mrf.mxu0
      %v1833 = vadd.f32 0.0, %v1832
      %1834 = vmatmul.bf16.gmra.mxu0 %v1718
      %v1835 = vpop.f32.mrf.mxu0
      %v1836 = vadd.f32 0.0, %v1835
      %v1837 = vpop.f32.mrf.mxu0
      %v1838 = vadd.f32 0.0, %v1837
      %1839 = vmatmul.bf16.gmra.mxu0 %v1719
      %v1840 = vpop.f32.mrf.mxu0
      %v1841 = vadd.f32 0.0, %v1840
      %v1842 = vpop.f32.mrf.mxu0
      %v1843 = vadd.f32 0.0, %v1842
      %1844 = vmatmul.bf16.gmra.mxu0 %v1720
      %v1845 = vpop.f32.mrf.mxu0
      %v1846 = vadd.f32 0.0, %v1845
      %v1847 = vpop.f32.mrf.mxu0
      %v1848 = vadd.f32 0.0, %v1847
      %1849 = vmatmul.bf16.gmra.mxu0 %v1721
      %v1850 = vpop.f32.mrf.mxu0
      %v1851 = vadd.f32 0.0, %v1850
      %v1852 = vpop.f32.mrf.mxu0
      %v1853 = vadd.f32 0.0, %v1852
      %1854 = vmatmul.bf16.gmra.mxu0 %v1722
      %v1855 = vpop.f32.mrf.mxu0
      %v1856 = vadd.f32 0.0, %v1855
      %v1857 = vpop.f32.mrf.mxu0
      %v1858 = vadd.f32 0.0, %v1857
      %1859 = vmatmul.bf16.gmra.mxu0 %v1723
      %v1860 = vpop.f32.mrf.mxu0
      %v1861 = vadd.f32 0.0, %v1860
      %v1862 = vpop.f32.mrf.mxu0
      %v1863 = vadd.f32 0.0, %v1862
      %1864 = vmatmul.bf16.gmra.mxu0 %v1724
      %v1865 = vpop.f32.mrf.mxu0
      %v1866 = vadd.f32 0.0, %v1865
      %v1867 = vpop.f32.mrf.mxu0
      %v1868 = vadd.f32 0.0, %v1867
      %1869 = vmatmul.bf16.gmra.mxu0 %v1725
      %v1870 = vpop.f32.mrf.mxu0
      %v1871 = vadd.f32 0.0, %v1870
      %v1872 = vpop.f32.mrf.mxu0
      %v1873 = vadd.f32 0.0, %v1872
      %1874 = vmatmul.bf16.gmra.mxu0 %v1726
      %v1875 = vpop.f32.mrf.mxu0
      %v1876 = vadd.f32 0.0, %v1875
      %v1877 = vpop.f32.mrf.mxu0
      %v1878 = vadd.f32 0.0, %v1877
      %1879 = vdwg.mxu0
      %v1880 = vadd.f32 %v1452, %v1801
      %v1881 = vadd.f32 %v1454, %v1803
      %v1882 = vadd.f32 %v1457, %v1806
      %v1883 = vadd.f32 %v1459, %v1808
      %v1884 = vadd.f32 %v1462, %v1811
      %v1885 = vadd.f32 %v1464, %v1813
      %v1886 = vadd.f32 %v1467, %v1816
      %v1887 = vadd.f32 %v1469, %v1818
      %v1888 = vadd.f32 %v1472, %v1821
      %v1889 = vadd.f32 %v1474, %v1823
      %v1890 = vadd.f32 %v1477, %v1826
      %v1891 = vadd.f32 %v1479, %v1828
      %v1892 = vadd.f32 %v1482, %v1831
      %v1893 = vadd.f32 %v1484, %v1833
      %v1894 = vadd.f32 %v1487, %v1836
      %v1895 = vadd.f32 %v1489, %v1838
      %v1896 = vadd.f32 %v1492, %v1841
      %v1897 = vadd.f32 %v1494, %v1843
      %v1898 = vadd.f32 %v1497, %v1846
      %v1899 = vadd.f32 %v1499, %v1848
      %v1900 = vadd.f32 %v1502, %v1851
      %v1901 = vadd.f32 %v1504, %v1853
      %v1902 = vadd.f32 %v1507, %v1856
      %v1903 = vadd.f32 %v1509, %v1858
      %v1904 = vadd.f32 %v1512, %v1861
      %v1905 = vadd.f32 %v1514, %v1863
      %v1906 = vadd.f32 %v1517, %v1866
      %v1907 = vadd.f32 %v1519, %v1868
      %v1908 = vadd.f32 %v1522, %v1871
      %v1909 = vadd.f32 %v1524, %v1873
      %v1910 = vadd.f32 %v1527, %v1876
      %v1911 = vadd.f32 %v1529, %v1878
      %s1912 = scalar_lea.vmem %s287, 192
      %v1913 = vld [vmem:[%s1912] sm:$0xf]
      %v1914 = vld [vmem:[%s1912 + $0x4] sm:$0xf]
      %v1915 = vld [vmem:[%s1912 + $0x8] sm:$0xf]
      %v1916 = vld [vmem:[%s1912 + $0xc] sm:$0xf]
      %v1917 = vld [vmem:[%s1912 + $0x10] sm:$0xf]
      %v1918 = vld [vmem:[%s1912 + $0x14] sm:$0xf]
      %v1919 = vld [vmem:[%s1912 + $0x18] sm:$0xf]
      %v1920 = vld [vmem:[%s1912 + $0x1c] sm:$0xf]
      %v1921 = vld [vmem:[%s1912 + $0x20] sm:$0xf]
      %v1922 = vld [vmem:[%s1912 + $0x24] sm:$0xf]
      %v1923 = vld [vmem:[%s1912 + $0x28] sm:$0xf]
      %v1924 = vld [vmem:[%s1912 + $0x2c] sm:$0xf]
      %v1925 = vld [vmem:[%s1912 + $0x30] sm:$0xf]
      %v1926 = vld [vmem:[%s1912 + $0x34] sm:$0xf]
      %v1927 = vld [vmem:[%s1912 + $0x38] sm:$0xf]
      %v1928 = vld [vmem:[%s1912 + $0x3c] sm:$0xf]
      %v1931 = vunpack.c.l.b16 %v671
      %v1932 = vunpack.c.l.b16 %v672
      %v1933 = vpack.c.b16 %v1932, %v1931
      %v1951 = vunpack.c.l.b16 %v1913
      %v1952 = vunpack.c.l.b16 %v1914
      %v1953 = vunpack.c.l.b16 %v1915
      %v1954 = vunpack.c.l.b16 %v1916
      %v1955 = vunpack.c.l.b16 %v1917
      %v1956 = vunpack.c.l.b16 %v1918
      %v1957 = vunpack.c.l.b16 %v1919
      %v1958 = vunpack.c.l.b16 %v1920
      %v1959 = vunpack.c.l.b16 %v1921
      %v1960 = vunpack.c.l.b16 %v1922
      %v1961 = vunpack.c.l.b16 %v1923
      %v1962 = vunpack.c.l.b16 %v1924
      %v1963 = vunpack.c.l.b16 %v1925
      %v1964 = vunpack.c.l.b16 %v1926
      %v1965 = vunpack.c.l.b16 %v1927
      %v1966 = vunpack.c.l.b16 %v1928
      %v1967 = vpack.c.b16 %v1952, %v1951
      %v1968 = vpack.c.b16 %v1954, %v1953
      %v1969 = vpack.c.b16 %v1956, %v1955
      %v1970 = vpack.c.b16 %v1958, %v1957
      %v1971 = vpack.c.b16 %v1960, %v1959
      %v1972 = vpack.c.b16 %v1962, %v1961
      %v1973 = vpack.c.b16 %v1964, %v1963
      %v1974 = vpack.c.b16 %v1966, %v1965
      %1983 = vmatpush.bf16.msra.mxu0 %v1974
      %1984 = vmatpush.bf16.msra.mxu0 %v1973
      %1985 = vmatpush.bf16.msra.mxu0 %v1972
      %1986 = vmatpush.bf16.msra.mxu0 %v1971
      %1987 = vmatpush.bf16.msra.mxu0 %v1970
      %1988 = vmatpush.bf16.msra.mxu0 %v1969
      %1989 = vmatpush.bf16.msra.mxu0 %v1968
      %1990 = vmatpush.bf16.msra.mxu0 %v1967
      %1991 = vmatmul.bf16.gmra.mxu0 %v1363
      %v1992 = vpop.f32.mrf.mxu0
      %v1993 = vadd.f32 0.0, %v1992
      %v1994 = vpop.f32.mrf.mxu0
      %v1995 = vadd.f32 0.0, %v1994
      %1996 = vmatmul.bf16.gmra.mxu0 %v1364
      %v1997 = vpop.f32.mrf.mxu0
      %v1998 = vadd.f32 0.0, %v1997
      %v1999 = vpop.f32.mrf.mxu0
      %v2000 = vadd.f32 0.0, %v1999
      %2001 = vmatmul.bf16.gmra.mxu0 %v1365
      %v2002 = vpop.f32.mrf.mxu0
      %v2003 = vadd.f32 0.0, %v2002
      %v2004 = vpop.f32.mrf.mxu0
      %v2005 = vadd.f32 0.0, %v2004
      %2006 = vmatmul.bf16.gmra.mxu0 %v1366
      %v2007 = vpop.f32.mrf.mxu0
      %v2008 = vadd.f32 0.0, %v2007
      %v2009 = vpop.f32.mrf.mxu0
      %v2010 = vadd.f32 0.0, %v2009
      %2011 = vmatmul.bf16.gmra.mxu0 %v1367
      %v2012 = vpop.f32.mrf.mxu0
      %v2013 = vadd.f32 0.0, %v2012
      %v2014 = vpop.f32.mrf.mxu0
      %v2015 = vadd.f32 0.0, %v2014
      %2016 = vmatmul.bf16.gmra.mxu0 %v1368
      %v2017 = vpop.f32.mrf.mxu0
      %v2018 = vadd.f32 0.0, %v2017
      %v2019 = vpop.f32.mrf.mxu0
      %v2020 = vadd.f32 0.0, %v2019
      %2021 = vmatmul.bf16.gmra.mxu0 %v1369
      %v2022 = vpop.f32.mrf.mxu0
      %v2023 = vadd.f32 0.0, %v2022
      %v2024 = vpop.f32.mrf.mxu0
      %v2025 = vadd.f32 0.0, %v2024
      %2026 = vmatmul.bf16.gmra.mxu0 %v1370
      %v2027 = vpop.f32.mrf.mxu0
      %v2028 = vadd.f32 0.0, %v2027
      %v2029 = vpop.f32.mrf.mxu0
      %v2030 = vadd.f32 0.0, %v2029
      %2031 = vmatmul.bf16.gmra.mxu0 %v1371
      %v2032 = vpop.f32.mrf.mxu0
      %v2033 = vadd.f32 0.0, %v2032
      %v2034 = vpop.f32.mrf.mxu0
      %v2035 = vadd.f32 0.0, %v2034
      %2036 = vmatmul.bf16.gmra.mxu0 %v1372
      %v2037 = vpop.f32.mrf.mxu0
      %v2038 = vadd.f32 0.0, %v2037
      %v2039 = vpop.f32.mrf.mxu0
      %v2040 = vadd.f32 0.0, %v2039
      %2041 = vmatmul.bf16.gmra.mxu0 %v1373
      %v2042 = vpop.f32.mrf.mxu0
      %v2043 = vadd.f32 0.0, %v2042
      %v2044 = vpop.f32.mrf.mxu0
      %v2045 = vadd.f32 0.0, %v2044
      %2046 = vmatmul.bf16.gmra.mxu0 %v1374
      %v2047 = vpop.f32.mrf.mxu0
      %v2048 = vadd.f32 0.0, %v2047
      %v2049 = vpop.f32.mrf.mxu0
      %v2050 = vadd.f32 0.0, %v2049
      %2051 = vmatmul.bf16.gmra.mxu0 %v1375
      %v2052 = vpop.f32.mrf.mxu0
      %v2053 = vadd.f32 0.0, %v2052
      %v2054 = vpop.f32.mrf.mxu0
      %v2055 = vadd.f32 0.0, %v2054
      %2056 = vmatmul.bf16.gmra.mxu0 %v1376
      %v2057 = vpop.f32.mrf.mxu0
      %v2058 = vadd.f32 0.0, %v2057
      %v2059 = vpop.f32.mrf.mxu0
      %v2060 = vadd.f32 0.0, %v2059
      %2061 = vmatmul.bf16.gmra.mxu0 %v1377
      %v2062 = vpop.f32.mrf.mxu0
      %v2063 = vadd.f32 0.0, %v2062
      %v2064 = vpop.f32.mrf.mxu0
      %v2065 = vadd.f32 0.0, %v2064
      %2066 = vmatmul.bf16.gmra.mxu0 %v1933
      %v2067 = vpop.f32.mrf.mxu0
      %v2068 = vadd.f32 0.0, %v2067
      %v2069 = vpop.f32.mrf.mxu0
      %v2070 = vadd.f32 0.0, %v2069
      %2071 = vdwg.mxu0
      %v2072 = vadd.f32 %v1880, %v1993
      %v2073 = vadd.f32 %v1881, %v1995
      %v2074 = vadd.f32 %v1882, %v1998
      %v2075 = vadd.f32 %v1883, %v2000
      %v2076 = vadd.f32 %v1884, %v2003
      %v2077 = vadd.f32 %v1885, %v2005
      %v2078 = vadd.f32 %v1886, %v2008
      %v2079 = vadd.f32 %v1887, %v2010
      %v2080 = vadd.f32 %v1888, %v2013
      %v2081 = vadd.f32 %v1889, %v2015
      %v2082 = vadd.f32 %v1890, %v2018
      %v2083 = vadd.f32 %v1891, %v2020
      %v2084 = vadd.f32 %v1892, %v2023
      %v2085 = vadd.f32 %v1893, %v2025
      %v2086 = vadd.f32 %v1894, %v2028
      %v2087 = vadd.f32 %v1895, %v2030
      %v2088 = vadd.f32 %v1896, %v2033
      %v2089 = vadd.f32 %v1897, %v2035
      %v2090 = vadd.f32 %v1898, %v2038
      %v2091 = vadd.f32 %v1899, %v2040
      %v2092 = vadd.f32 %v1900, %v2043
      %v2093 = vadd.f32 %v1901, %v2045
      %v2094 = vadd.f32 %v1902, %v2048
      %v2095 = vadd.f32 %v1903, %v2050
      %v2096 = vadd.f32 %v1904, %v2053
      %v2097 = vadd.f32 %v1905, %v2055
      %v2098 = vadd.f32 %v1906, %v2058
      %v2099 = vadd.f32 %v1907, %v2060
      %v2100 = vadd.f32 %v1908, %v2063
      %v2101 = vadd.f32 %v1909, %v2065
      %v2102 = vadd.f32 %v1910, %v2068
      %v2103 = vadd.f32 %v1911, %v2070
      %v2105 = vshrl.u32 %v671, 16
      %v2107 = vrot.slane %v2105, 4
      %v2108 = vshll.u32 %v671, 16
      %v2110 = vrot.slane %v2108, 5
      %v2111 = vor.u32 %v2107, %v2110
      %v2112 = vrot.slane %v2111, 4
      %v2114 = vshll.u32 %v672, 16
      %v2116 = vrot.slane %v2114, 5
      %v2117 = vsel %vm695, %v2112, %v2116
      %v2118 = vshrl.u32 %v672, 16
      %v2120 = vrot.slane %v2118, 4
      %v2121 = vor.u32 %v2120, %v2116
      %v2122 = vrot.slane %v2121, 4
      %v2124 = vshll.u32 %v673, 16
      %v2126 = vrot.slane %v2124, 5
      %v2127 = vsel %vm695, %v2122, %v2126
      %s2128 = scalar_lea.vmem %s287, 256
      %v2129 = vld [vmem:[%s2128] sm:$0xf]
      %v2130 = vld [vmem:[%s2128 + $0x4] sm:$0xf]
      %v2131 = vld [vmem:[%s2128 + $0x8] sm:$0xf]
      %v2132 = vld [vmem:[%s2128 + $0xc] sm:$0xf]
      %v2133 = vld [vmem:[%s2128 + $0x10] sm:$0xf]
      %v2134 = vld [vmem:[%s2128 + $0x14] sm:$0xf]
      %v2135 = vld [vmem:[%s2128 + $0x18] sm:$0xf]
      %v2136 = vld [vmem:[%s2128 + $0x1c] sm:$0xf]
      %v2137 = vld [vmem:[%s2128 + $0x20] sm:$0xf]
      %v2138 = vld [vmem:[%s2128 + $0x24] sm:$0xf]
      %v2139 = vld [vmem:[%s2128 + $0x28] sm:$0xf]
      %v2140 = vld [vmem:[%s2128 + $0x2c] sm:$0xf]
      %v2141 = vld [vmem:[%s2128 + $0x30] sm:$0xf]
      %v2142 = vld [vmem:[%s2128 + $0x34] sm:$0xf]
      %v2143 = vld [vmem:[%s2128 + $0x38] sm:$0xf]
      %v2144 = vld [vmem:[%s2128 + $0x3c] sm:$0xf]
      %v2145 = vunpack.c.l.b16 %v2117
      %v2146 = vunpack.c.l.b16 %v2127
      %v2147 = vpack.c.b16 %v2146, %v2145
      %v2165 = vunpack.c.l.b16 %v2129
      %v2166 = vunpack.c.l.b16 %v2130
      %v2167 = vunpack.c.l.b16 %v2131
      %v2168 = vunpack.c.l.b16 %v2132
      %v2169 = vunpack.c.l.b16 %v2133
      %v2170 = vunpack.c.l.b16 %v2134
      %v2171 = vunpack.c.l.b16 %v2135
      %v2172 = vunpack.c.l.b16 %v2136
      %v2173 = vunpack.c.l.b16 %v2137
      %v2174 = vunpack.c.l.b16 %v2138
      %v2175 = vunpack.c.l.b16 %v2139
      %v2176 = vunpack.c.l.b16 %v2140
      %v2177 = vunpack.c.l.b16 %v2141
      %v2178 = vunpack.c.l.b16 %v2142
      %v2179 = vunpack.c.l.b16 %v2143
      %v2180 = vunpack.c.l.b16 %v2144
      %v2181 = vpack.c.b16 %v2166, %v2165
      %v2182 = vpack.c.b16 %v2168, %v2167
      %v2183 = vpack.c.b16 %v2170, %v2169
      %v2184 = vpack.c.b16 %v2172, %v2171
      %v2185 = vpack.c.b16 %v2174, %v2173
      %v2186 = vpack.c.b16 %v2176, %v2175
      %v2187 = vpack.c.b16 %v2178, %v2177
      %v2188 = vpack.c.b16 %v2180, %v2179
      %2197 = vmatpush.bf16.msra.mxu0 %v2188
      %2198 = vmatpush.bf16.msra.mxu0 %v2187
      %2199 = vmatpush.bf16.msra.mxu0 %v2186
      %2200 = vmatpush.bf16.msra.mxu0 %v2185
      %2201 = vmatpush.bf16.msra.mxu0 %v2184
      %2202 = vmatpush.bf16.msra.mxu0 %v2183
      %2203 = vmatpush.bf16.msra.mxu0 %v2182
      %2204 = vmatpush.bf16.msra.mxu0 %v2181
      %2205 = vmatmul.bf16.gmra.mxu0 %v1130
      %v2206 = vpop.f32.mrf.mxu0
      %v2207 = vadd.f32 0.0, %v2206
      %v2208 = vpop.f32.mrf.mxu0
      %v2209 = vadd.f32 0.0, %v2208
      %2210 = vmatmul.bf16.gmra.mxu0 %v1131
      %v2211 = vpop.f32.mrf.mxu0
      %v2212 = vadd.f32 0.0, %v2211
      %v2213 = vpop.f32.mrf.mxu0
      %v2214 = vadd.f32 0.0, %v2213
      %2215 = vmatmul.bf16.gmra.mxu0 %v1132
      %v2216 = vpop.f32.mrf.mxu0
      %v2217 = vadd.f32 0.0, %v2216
      %v2218 = vpop.f32.mrf.mxu0
      %v2219 = vadd.f32 0.0, %v2218
      %2220 = vmatmul.bf16.gmra.mxu0 %v1133
      %v2221 = vpop.f32.mrf.mxu0
      %v2222 = vadd.f32 0.0, %v2221
      %v2223 = vpop.f32.mrf.mxu0
      %v2224 = vadd.f32 0.0, %v2223
      %2225 = vmatmul.bf16.gmra.mxu0 %v1134
      %v2226 = vpop.f32.mrf.mxu0
      %v2227 = vadd.f32 0.0, %v2226
      %v2228 = vpop.f32.mrf.mxu0
      %v2229 = vadd.f32 0.0, %v2228
      %2230 = vmatmul.bf16.gmra.mxu0 %v1135
      %v2231 = vpop.f32.mrf.mxu0
      %v2232 = vadd.f32 0.0, %v2231
      %v2233 = vpop.f32.mrf.mxu0
      %v2234 = vadd.f32 0.0, %v2233
      %2235 = vmatmul.bf16.gmra.mxu0 %v1136
      %v2236 = vpop.f32.mrf.mxu0
      %v2237 = vadd.f32 0.0, %v2236
      %v2238 = vpop.f32.mrf.mxu0
      %v2239 = vadd.f32 0.0, %v2238
      %2240 = vmatmul.bf16.gmra.mxu0 %v1137
      %v2241 = vpop.f32.mrf.mxu0
      %v2242 = vadd.f32 0.0, %v2241
      %v2243 = vpop.f32.mrf.mxu0
      %v2244 = vadd.f32 0.0, %v2243
      %2245 = vmatmul.bf16.gmra.mxu0 %v1138
      %v2246 = vpop.f32.mrf.mxu0
      %v2247 = vadd.f32 0.0, %v2246
      %v2248 = vpop.f32.mrf.mxu0
      %v2249 = vadd.f32 0.0, %v2248
      %2250 = vmatmul.bf16.gmra.mxu0 %v1139
      %v2251 = vpop.f32.mrf.mxu0
      %v2252 = vadd.f32 0.0, %v2251
      %v2253 = vpop.f32.mrf.mxu0
      %v2254 = vadd.f32 0.0, %v2253
      %2255 = vmatmul.bf16.gmra.mxu0 %v1140
      %v2256 = vpop.f32.mrf.mxu0
      %v2257 = vadd.f32 0.0, %v2256
      %v2258 = vpop.f32.mrf.mxu0
      %v2259 = vadd.f32 0.0, %v2258
      %2260 = vmatmul.bf16.gmra.mxu0 %v1141
      %v2261 = vpop.f32.mrf.mxu0
      %v2262 = vadd.f32 0.0, %v2261
      %v2263 = vpop.f32.mrf.mxu0
      %v2264 = vadd.f32 0.0, %v2263
      %2265 = vmatmul.bf16.gmra.mxu0 %v1142
      %v2266 = vpop.f32.mrf.mxu0
      %v2267 = vadd.f32 0.0, %v2266
      %v2268 = vpop.f32.mrf.mxu0
      %v2269 = vadd.f32 0.0, %v2268
      %2270 = vmatmul.bf16.gmra.mxu0 %v1143
      %v2271 = vpop.f32.mrf.mxu0
      %v2272 = vadd.f32 0.0, %v2271
      %v2273 = vpop.f32.mrf.mxu0
      %v2274 = vadd.f32 0.0, %v2273
      %2275 = vmatmul.bf16.gmra.mxu0 %v1144
      %v2276 = vpop.f32.mrf.mxu0
      %v2277 = vadd.f32 0.0, %v2276
      %v2278 = vpop.f32.mrf.mxu0
      %v2279 = vadd.f32 0.0, %v2278
      %2280 = vmatmul.bf16.gmra.mxu0 %v2147
      %v2281 = vpop.f32.mrf.mxu0
      %v2282 = vadd.f32 0.0, %v2281
      %v2283 = vpop.f32.mrf.mxu0
      %v2284 = vadd.f32 0.0, %v2283
      %2285 = vdwg.mxu0
      %v2286 = vadd.f32 %v2072, %v2207
      %v2287 = vadd.f32 %v2073, %v2209
      %v2288 = vadd.f32 %v2074, %v2212
      %v2289 = vadd.f32 %v2075, %v2214
      %v2290 = vadd.f32 %v2076, %v2217
      %v2291 = vadd.f32 %v2077, %v2219
      %v2292 = vadd.f32 %v2078, %v2222
      %v2293 = vadd.f32 %v2079, %v2224
      %v2294 = vadd.f32 %v2080, %v2227
      %v2295 = vadd.f32 %v2081, %v2229
      %v2296 = vadd.f32 %v2082, %v2232
      %v2297 = vadd.f32 %v2083, %v2234
      %v2298 = vadd.f32 %v2084, %v2237
      %v2299 = vadd.f32 %v2085, %v2239
      %v2300 = vadd.f32 %v2086, %v2242
      %v2301 = vadd.f32 %v2087, %v2244
      %v2302 = vadd.f32 %v2088, %v2247
      %v2303 = vadd.f32 %v2089, %v2249
      %v2304 = vadd.f32 %v2090, %v2252
      %v2305 = vadd.f32 %v2091, %v2254
      %v2306 = vadd.f32 %v2092, %v2257
      %v2307 = vadd.f32 %v2093, %v2259
      %v2308 = vadd.f32 %v2094, %v2262
      %v2309 = vadd.f32 %v2095, %v2264
      %v2310 = vadd.f32 %v2096, %v2267
      %v2311 = vadd.f32 %v2097, %v2269
      %v2312 = vadd.f32 %v2098, %v2272
      %v2313 = vadd.f32 %v2099, %v2274
      %v2314 = vadd.f32 %v2100, %v2277
      %v2315 = vadd.f32 %v2101, %v2279
      %v2316 = vadd.f32 %v2102, %v2282
      %v2317 = vadd.f32 %v2103, %v2284
      %v2319 = vrot.slane %v671, 5
      %v2320 = vrot.slane %v2319, 4
      %v2321 = vrot.slane %v672, 5
      %v2322 = vsel %vm1549, %v2320, %v2321
      %v2323 = vrot.slane %v2321, 4
      %v2324 = vrot.slane %v673, 5
      %v2325 = vsel %vm1549, %v2323, %v2324
      %s2326 = scalar_lea.vmem %s287, 320
      %v2327 = vld [vmem:[%s2326] sm:$0xf]
      %v2328 = vld [vmem:[%s2326 + $0x4] sm:$0xf]
      %v2329 = vld [vmem:[%s2326 + $0x8] sm:$0xf]
      %v2330 = vld [vmem:[%s2326 + $0xc] sm:$0xf]
      %v2331 = vld [vmem:[%s2326 + $0x10] sm:$0xf]
      %v2332 = vld [vmem:[%s2326 + $0x14] sm:$0xf]
      %v2333 = vld [vmem:[%s2326 + $0x18] sm:$0xf]
      %v2334 = vld [vmem:[%s2326 + $0x1c] sm:$0xf]
      %v2335 = vld [vmem:[%s2326 + $0x20] sm:$0xf]
      %v2336 = vld [vmem:[%s2326 + $0x24] sm:$0xf]
      %v2337 = vld [vmem:[%s2326 + $0x28] sm:$0xf]
      %v2338 = vld [vmem:[%s2326 + $0x2c] sm:$0xf]
      %v2339 = vld [vmem:[%s2326 + $0x30] sm:$0xf]
      %v2340 = vld [vmem:[%s2326 + $0x34] sm:$0xf]
      %v2341 = vld [vmem:[%s2326 + $0x38] sm:$0xf]
      %v2342 = vld [vmem:[%s2326 + $0x3c] sm:$0xf]
      %v2343 = vunpack.c.l.b16 %v2322
      %v2344 = vunpack.c.l.b16 %v2325
      %v2345 = vpack.c.b16 %v2344, %v2343
      %v2363 = vunpack.c.l.b16 %v2327
      %v2364 = vunpack.c.l.b16 %v2328
      %v2365 = vunpack.c.l.b16 %v2329
      %v2366 = vunpack.c.l.b16 %v2330
      %v2367 = vunpack.c.l.b16 %v2331
      %v2368 = vunpack.c.l.b16 %v2332
      %v2369 = vunpack.c.l.b16 %v2333
      %v2370 = vunpack.c.l.b16 %v2334
      %v2371 = vunpack.c.l.b16 %v2335
      %v2372 = vunpack.c.l.b16 %v2336
      %v2373 = vunpack.c.l.b16 %v2337
      %v2374 = vunpack.c.l.b16 %v2338
      %v2375 = vunpack.c.l.b16 %v2339
      %v2376 = vunpack.c.l.b16 %v2340
      %v2377 = vunpack.c.l.b16 %v2341
      %v2378 = vunpack.c.l.b16 %v2342
      %v2379 = vpack.c.b16 %v2364, %v2363
      %v2380 = vpack.c.b16 %v2366, %v2365
      %v2381 = vpack.c.b16 %v2368, %v2367
      %v2382 = vpack.c.b16 %v2370, %v2369
      %v2383 = vpack.c.b16 %v2372, %v2371
      %v2384 = vpack.c.b16 %v2374, %v2373
      %v2385 = vpack.c.b16 %v2376, %v2375
      %v2386 = vpack.c.b16 %v2378, %v2377
      %2395 = vmatpush.bf16.msra.mxu0 %v2386
      %2396 = vmatpush.bf16.msra.mxu0 %v2385
      %2397 = vmatpush.bf16.msra.mxu0 %v2384
      %2398 = vmatpush.bf16.msra.mxu0 %v2383
      %2399 = vmatpush.bf16.msra.mxu0 %v2382
      %2400 = vmatpush.bf16.msra.mxu0 %v2381
      %2401 = vmatpush.bf16.msra.mxu0 %v2380
      %2402 = vmatpush.bf16.msra.mxu0 %v2379
      %2403 = vmatmul.bf16.gmra.mxu0 %v1712
      %v2404 = vpop.f32.mrf.mxu0
      %v2405 = vadd.f32 0.0, %v2404
      %v2406 = vpop.f32.mrf.mxu0
      %v2407 = vadd.f32 0.0, %v2406
      %2408 = vmatmul.bf16.gmra.mxu0 %v1713
      %v2409 = vpop.f32.mrf.mxu0
      %v2410 = vadd.f32 0.0, %v2409
      %v2411 = vpop.f32.mrf.mxu0
      %v2412 = vadd.f32 0.0, %v2411
      %2413 = vmatmul.bf16.gmra.mxu0 %v1714
      %v2414 = vpop.f32.mrf.mxu0
      %v2415 = vadd.f32 0.0, %v2414
      %v2416 = vpop.f32.mrf.mxu0
      %v2417 = vadd.f32 0.0, %v2416
      %2418 = vmatmul.bf16.gmra.mxu0 %v1715
      %v2419 = vpop.f32.mrf.mxu0
      %v2420 = vadd.f32 0.0, %v2419
      %v2421 = vpop.f32.mrf.mxu0
      %v2422 = vadd.f32 0.0, %v2421
      %2423 = vmatmul.bf16.gmra.mxu0 %v1716
      %v2424 = vpop.f32.mrf.mxu0
      %v2425 = vadd.f32 0.0, %v2424
      %v2426 = vpop.f32.mrf.mxu0
      %v2427 = vadd.f32 0.0, %v2426
      %2428 = vmatmul.bf16.gmra.mxu0 %v1717
      %v2429 = vpop.f32.mrf.mxu0
      %v2430 = vadd.f32 0.0, %v2429
      %v2431 = vpop.f32.mrf.mxu0
      %v2432 = vadd.f32 0.0, %v2431
      %2433 = vmatmul.bf16.gmra.mxu0 %v1718
      %v2434 = vpop.f32.mrf.mxu0
      %v2435 = vadd.f32 0.0, %v2434
      %v2436 = vpop.f32.mrf.mxu0
      %v2437 = vadd.f32 0.0, %v2436
      %2438 = vmatmul.bf16.gmra.mxu0 %v1719
      %v2439 = vpop.f32.mrf.mxu0
      %v2440 = vadd.f32 0.0, %v2439
      %v2441 = vpop.f32.mrf.mxu0
      %v2442 = vadd.f32 0.0, %v2441
      %2443 = vmatmul.bf16.gmra.mxu0 %v1720
      %v2444 = vpop.f32.mrf.mxu0
      %v2445 = vadd.f32 0.0, %v2444
      %v2446 = vpop.f32.mrf.mxu0
      %v2447 = vadd.f32 0.0, %v2446
      %2448 = vmatmul.bf16.gmra.mxu0 %v1721
      %v2449 = vpop.f32.mrf.mxu0
      %v2450 = vadd.f32 0.0, %v2449
      %v2451 = vpop.f32.mrf.mxu0
      %v2452 = vadd.f32 0.0, %v2451
      %2453 = vmatmul.bf16.gmra.mxu0 %v1722
      %v2454 = vpop.f32.mrf.mxu0
      %v2455 = vadd.f32 0.0, %v2454
      %v2456 = vpop.f32.mrf.mxu0
      %v2457 = vadd.f32 0.0, %v2456
      %2458 = vmatmul.bf16.gmra.mxu0 %v1723
      %v2459 = vpop.f32.mrf.mxu0
      %v2460 = vadd.f32 0.0, %v2459
      %v2461 = vpop.f32.mrf.mxu0
      %v2462 = vadd.f32 0.0, %v2461
      %2463 = vmatmul.bf16.gmra.mxu0 %v1724
      %v2464 = vpop.f32.mrf.mxu0
      %v2465 = vadd.f32 0.0, %v2464
      %v2466 = vpop.f32.mrf.mxu0
      %v2467 = vadd.f32 0.0, %v2466
      %2468 = vmatmul.bf16.gmra.mxu0 %v1725
      %v2469 = vpop.f32.mrf.mxu0
      %v2470 = vadd.f32 0.0, %v2469
      %v2471 = vpop.f32.mrf.mxu0
      %v2472 = vadd.f32 0.0, %v2471
      %2473 = vmatmul.bf16.gmra.mxu0 %v1726
      %v2474 = vpop.f32.mrf.mxu0
      %v2475 = vadd.f32 0.0, %v2474
      %v2476 = vpop.f32.mrf.mxu0
      %v2477 = vadd.f32 0.0, %v2476
      %2478 = vmatmul.bf16.gmra.mxu0 %v2345
      %v2479 = vpop.f32.mrf.mxu0
      %v2480 = vadd.f32 0.0, %v2479
      %v2481 = vpop.f32.mrf.mxu0
      %v2482 = vadd.f32 0.0, %v2481
      %2483 = vdwg.mxu0
      %v2484 = vadd.f32 %v2286, %v2405
      %v2485 = vadd.f32 %v2287, %v2407
      %v2486 = vadd.f32 %v2288, %v2410
      %v2487 = vadd.f32 %v2289, %v2412
      %v2488 = vadd.f32 %v2290, %v2415
      %v2489 = vadd.f32 %v2291, %v2417
      %v2490 = vadd.f32 %v2292, %v2420
      %v2491 = vadd.f32 %v2293, %v2422
      %v2492 = vadd.f32 %v2294, %v2425
      %v2493 = vadd.f32 %v2295, %v2427
      %v2494 = vadd.f32 %v2296, %v2430
      %v2495 = vadd.f32 %v2297, %v2432
      %v2496 = vadd.f32 %v2298, %v2435
      %v2497 = vadd.f32 %v2299, %v2437
      %v2498 = vadd.f32 %v2300, %v2440
      %v2499 = vadd.f32 %v2301, %v2442
      %v2500 = vadd.f32 %v2302, %v2445
      %v2501 = vadd.f32 %v2303, %v2447
      %v2502 = vadd.f32 %v2304, %v2450
      %v2503 = vadd.f32 %v2305, %v2452
      %v2504 = vadd.f32 %v2306, %v2455
      %v2505 = vadd.f32 %v2307, %v2457
      %v2506 = vadd.f32 %v2308, %v2460
      %v2507 = vadd.f32 %v2309, %v2462
      %v2508 = vadd.f32 %v2310, %v2465
      %v2509 = vadd.f32 %v2311, %v2467
      %v2510 = vadd.f32 %v2312, %v2470
      %v2511 = vadd.f32 %v2313, %v2472
      %v2512 = vadd.f32 %v2314, %v2475
      %v2513 = vadd.f32 %v2315, %v2477
      %v2514 = vadd.f32 %v2316, %v2480
      %v2515 = vadd.f32 %v2317, %v2482
      %s2516 = scalar_lea.vmem %s287, 384
      %v2517 = vld [vmem:[%s2516] sm:$0xf]
      %v2518 = vld [vmem:[%s2516 + $0x4] sm:$0xf]
      %v2519 = vld [vmem:[%s2516 + $0x8] sm:$0xf]
      %v2520 = vld [vmem:[%s2516 + $0xc] sm:$0xf]
      %v2521 = vld [vmem:[%s2516 + $0x10] sm:$0xf]
      %v2522 = vld [vmem:[%s2516 + $0x14] sm:$0xf]
      %v2523 = vld [vmem:[%s2516 + $0x18] sm:$0xf]
      %v2524 = vld [vmem:[%s2516 + $0x1c] sm:$0xf]
      %v2525 = vld [vmem:[%s2516 + $0x20] sm:$0xf]
      %v2526 = vld [vmem:[%s2516 + $0x24] sm:$0xf]
      %v2527 = vld [vmem:[%s2516 + $0x28] sm:$0xf]
      %v2528 = vld [vmem:[%s2516 + $0x2c] sm:$0xf]
      %v2529 = vld [vmem:[%s2516 + $0x30] sm:$0xf]
      %v2530 = vld [vmem:[%s2516 + $0x34] sm:$0xf]
      %v2531 = vld [vmem:[%s2516 + $0x38] sm:$0xf]
      %v2532 = vld [vmem:[%s2516 + $0x3c] sm:$0xf]
      %v2535 = vunpack.c.l.b16 %v674
      %v2536 = vunpack.c.l.b16 %v675
      %v2537 = vpack.c.b16 %v2536, %v2535
      %v2555 = vunpack.c.l.b16 %v2517
      %v2556 = vunpack.c.l.b16 %v2518
      %v2557 = vunpack.c.l.b16 %v2519
      %v2558 = vunpack.c.l.b16 %v2520
      %v2559 = vunpack.c.l.b16 %v2521
      %v2560 = vunpack.c.l.b16 %v2522
      %v2561 = vunpack.c.l.b16 %v2523
      %v2562 = vunpack.c.l.b16 %v2524
      %v2563 = vunpack.c.l.b16 %v2525
      %v2564 = vunpack.c.l.b16 %v2526
      %v2565 = vunpack.c.l.b16 %v2527
      %v2566 = vunpack.c.l.b16 %v2528
      %v2567 = vunpack.c.l.b16 %v2529
      %v2568 = vunpack.c.l.b16 %v2530
      %v2569 = vunpack.c.l.b16 %v2531
      %v2570 = vunpack.c.l.b16 %v2532
      %v2571 = vpack.c.b16 %v2556, %v2555
      %v2572 = vpack.c.b16 %v2558, %v2557
      %v2573 = vpack.c.b16 %v2560, %v2559
      %v2574 = vpack.c.b16 %v2562, %v2561
      %v2575 = vpack.c.b16 %v2564, %v2563
      %v2576 = vpack.c.b16 %v2566, %v2565
      %v2577 = vpack.c.b16 %v2568, %v2567
      %v2578 = vpack.c.b16 %v2570, %v2569
      %2587 = vmatpush.bf16.msra.mxu0 %v2578
      %2588 = vmatpush.bf16.msra.mxu0 %v2577
      %2589 = vmatpush.bf16.msra.mxu0 %v2576
      %2590 = vmatpush.bf16.msra.mxu0 %v2575
      %2591 = vmatpush.bf16.msra.mxu0 %v2574
      %2592 = vmatpush.bf16.msra.mxu0 %v2573
      %2593 = vmatpush.bf16.msra.mxu0 %v2572
      %2594 = vmatpush.bf16.msra.mxu0 %v2571
      %2595 = vmatmul.bf16.gmra.mxu0 %v1364
      %v2596 = vpop.f32.mrf.mxu0
      %v2597 = vadd.f32 0.0, %v2596
      %v2598 = vpop.f32.mrf.mxu0
      %v2599 = vadd.f32 0.0, %v2598
      %2600 = vmatmul.bf16.gmra.mxu0 %v1365
      %v2601 = vpop.f32.mrf.mxu0
      %v2602 = vadd.f32 0.0, %v2601
      %v2603 = vpop.f32.mrf.mxu0
      %v2604 = vadd.f32 0.0, %v2603
      %2605 = vmatmul.bf16.gmra.mxu0 %v1366
      %v2606 = vpop.f32.mrf.mxu0
      %v2607 = vadd.f32 0.0, %v2606
      %v2608 = vpop.f32.mrf.mxu0
      %v2609 = vadd.f32 0.0, %v2608
      %2610 = vmatmul.bf16.gmra.mxu0 %v1367
      %v2611 = vpop.f32.mrf.mxu0
      %v2612 = vadd.f32 0.0, %v2611
      %v2613 = vpop.f32.mrf.mxu0
      %v2614 = vadd.f32 0.0, %v2613
      %2615 = vmatmul.bf16.gmra.mxu0 %v1368
      %v2616 = vpop.f32.mrf.mxu0
      %v2617 = vadd.f32 0.0, %v2616
      %v2618 = vpop.f32.mrf.mxu0
      %v2619 = vadd.f32 0.0, %v2618
      %2620 = vmatmul.bf16.gmra.mxu0 %v1369
      %v2621 = vpop.f32.mrf.mxu0
      %v2622 = vadd.f32 0.0, %v2621
      %v2623 = vpop.f32.mrf.mxu0
      %v2624 = vadd.f32 0.0, %v2623
      %2625 = vmatmul.bf16.gmra.mxu0 %v1370
      %v2626 = vpop.f32.mrf.mxu0
      %v2627 = vadd.f32 0.0, %v2626
      %v2628 = vpop.f32.mrf.mxu0
      %v2629 = vadd.f32 0.0, %v2628
      %2630 = vmatmul.bf16.gmra.mxu0 %v1371
      %v2631 = vpop.f32.mrf.mxu0
      %v2632 = vadd.f32 0.0, %v2631
      %v2633 = vpop.f32.mrf.mxu0
      %v2634 = vadd.f32 0.0, %v2633
      %2635 = vmatmul.bf16.gmra.mxu0 %v1372
      %v2636 = vpop.f32.mrf.mxu0
      %v2637 = vadd.f32 0.0, %v2636
      %v2638 = vpop.f32.mrf.mxu0
      %v2639 = vadd.f32 0.0, %v2638
      %2640 = vmatmul.bf16.gmra.mxu0 %v1373
      %v2641 = vpop.f32.mrf.mxu0
      %v2642 = vadd.f32 0.0, %v2641
      %v2643 = vpop.f32.mrf.mxu0
      %v2644 = vadd.f32 0.0, %v2643
      %2645 = vmatmul.bf16.gmra.mxu0 %v1374
      %v2646 = vpop.f32.mrf.mxu0
      %v2647 = vadd.f32 0.0, %v2646
      %v2648 = vpop.f32.mrf.mxu0
      %v2649 = vadd.f32 0.0, %v2648
      %2650 = vmatmul.bf16.gmra.mxu0 %v1375
      %v2651 = vpop.f32.mrf.mxu0
      %v2652 = vadd.f32 0.0, %v2651
      %v2653 = vpop.f32.mrf.mxu0
      %v2654 = vadd.f32 0.0, %v2653
      %2655 = vmatmul.bf16.gmra.mxu0 %v1376
      %v2656 = vpop.f32.mrf.mxu0
      %v2657 = vadd.f32 0.0, %v2656
      %v2658 = vpop.f32.mrf.mxu0
      %v2659 = vadd.f32 0.0, %v2658
      %2660 = vmatmul.bf16.gmra.mxu0 %v1377
      %v2661 = vpop.f32.mrf.mxu0
      %v2662 = vadd.f32 0.0, %v2661
      %v2663 = vpop.f32.mrf.mxu0
      %v2664 = vadd.f32 0.0, %v2663
      %2665 = vmatmul.bf16.gmra.mxu0 %v1933
      %v2666 = vpop.f32.mrf.mxu0
      %v2667 = vadd.f32 0.0, %v2666
      %v2668 = vpop.f32.mrf.mxu0
      %v2669 = vadd.f32 0.0, %v2668
      %2670 = vmatmul.bf16.gmra.mxu0 %v2537
      %v2671 = vpop.f32.mrf.mxu0
      %v2672 = vadd.f32 0.0, %v2671
      %v2673 = vpop.f32.mrf.mxu0
      %v2674 = vadd.f32 0.0, %v2673
      %2675 = vdwg.mxu0
      %v2676 = vadd.f32 %v2484, %v2597
      %v2677 = vadd.f32 %v2485, %v2599
      %v2678 = vadd.f32 %v2486, %v2602
      %v2679 = vadd.f32 %v2487, %v2604
      %v2680 = vadd.f32 %v2488, %v2607
      %v2681 = vadd.f32 %v2489, %v2609
      %v2682 = vadd.f32 %v2490, %v2612
      %v2683 = vadd.f32 %v2491, %v2614
      %v2684 = vadd.f32 %v2492, %v2617
      %v2685 = vadd.f32 %v2493, %v2619
      %v2686 = vadd.f32 %v2494, %v2622
      %v2687 = vadd.f32 %v2495, %v2624
      %v2688 = vadd.f32 %v2496, %v2627
      %v2689 = vadd.f32 %v2497, %v2629
      %v2690 = vadd.f32 %v2498, %v2632
      %v2691 = vadd.f32 %v2499, %v2634
      %v2692 = vadd.f32 %v2500, %v2637
      %v2693 = vadd.f32 %v2501, %v2639
      %v2694 = vadd.f32 %v2502, %v2642
      %v2695 = vadd.f32 %v2503, %v2644
      %v2696 = vadd.f32 %v2504, %v2647
      %v2697 = vadd.f32 %v2505, %v2649
      %v2698 = vadd.f32 %v2506, %v2652
      %v2699 = vadd.f32 %v2507, %v2654
      %v2700 = vadd.f32 %v2508, %v2657
      %v2701 = vadd.f32 %v2509, %v2659
      %v2702 = vadd.f32 %v2510, %v2662
      %v2703 = vadd.f32 %v2511, %v2664
      %v2704 = vadd.f32 %v2512, %v2667
      %v2705 = vadd.f32 %v2513, %v2669
      %v2706 = vadd.f32 %v2514, %v2672
      %v2707 = vadd.f32 %v2515, %v2674
      %v2709 = vshrl.u32 %v674, 16
      %v2711 = vrot.slane %v2709, 4
      %v2712 = vshll.u32 %v674, 16
      %v2714 = vrot.slane %v2712, 5
      %v2715 = vor.u32 %v2711, %v2714
      %v2716 = vrot.slane %v2715, 4
      %v2718 = vshll.u32 %v675, 16
      %v2720 = vrot.slane %v2718, 5
      %v2721 = vsel %vm695, %v2716, %v2720
      %v2722 = vshrl.u32 %v675, 16
      %v2724 = vrot.slane %v2722, 4
      %v2725 = vor.u32 %v2724, %v2720
      %v2726 = vrot.slane %v2725, 4
      %v2728 = vshll.u32 %v676, 16
      %v2730 = vrot.slane %v2728, 5
      %v2731 = vsel %vm695, %v2726, %v2730
      %s2732 = scalar_lea.vmem %s287, 448
      %v2733 = vld [vmem:[%s2732] sm:$0xf]
      %v2734 = vld [vmem:[%s2732 + $0x4] sm:$0xf]
      %v2735 = vld [vmem:[%s2732 + $0x8] sm:$0xf]
      %v2736 = vld [vmem:[%s2732 + $0xc] sm:$0xf]
      %v2737 = vld [vmem:[%s2732 + $0x10] sm:$0xf]
      %v2738 = vld [vmem:[%s2732 + $0x14] sm:$0xf]
      %v2739 = vld [vmem:[%s2732 + $0x18] sm:$0xf]
      %v2740 = vld [vmem:[%s2732 + $0x1c] sm:$0xf]
      %v2741 = vld [vmem:[%s2732 + $0x20] sm:$0xf]
      %v2742 = vld [vmem:[%s2732 + $0x24] sm:$0xf]
      %v2743 = vld [vmem:[%s2732 + $0x28] sm:$0xf]
      %v2744 = vld [vmem:[%s2732 + $0x2c] sm:$0xf]
      %v2745 = vld [vmem:[%s2732 + $0x30] sm:$0xf]
      %v2746 = vld [vmem:[%s2732 + $0x34] sm:$0xf]
      %v2747 = vld [vmem:[%s2732 + $0x38] sm:$0xf]
      %v2748 = vld [vmem:[%s2732 + $0x3c] sm:$0xf]
      %v2749 = vunpack.c.l.b16 %v2721
      %v2750 = vunpack.c.l.b16 %v2731
      %v2751 = vpack.c.b16 %v2750, %v2749
      %v2769 = vunpack.c.l.b16 %v2733
      %v2770 = vunpack.c.l.b16 %v2734
      %v2771 = vunpack.c.l.b16 %v2735
      %v2772 = vunpack.c.l.b16 %v2736
      %v2773 = vunpack.c.l.b16 %v2737
      %v2774 = vunpack.c.l.b16 %v2738
      %v2775 = vunpack.c.l.b16 %v2739
      %v2776 = vunpack.c.l.b16 %v2740
      %v2777 = vunpack.c.l.b16 %v2741
      %v2778 = vunpack.c.l.b16 %v2742
      %v2779 = vunpack.c.l.b16 %v2743
      %v2780 = vunpack.c.l.b16 %v2744
      %v2781 = vunpack.c.l.b16 %v2745
      %v2782 = vunpack.c.l.b16 %v2746
      %v2783 = vunpack.c.l.b16 %v2747
      %v2784 = vunpack.c.l.b16 %v2748
      %v2785 = vpack.c.b16 %v2770, %v2769
      %v2786 = vpack.c.b16 %v2772, %v2771
      %v2787 = vpack.c.b16 %v2774, %v2773
      %v2788 = vpack.c.b16 %v2776, %v2775
      %v2789 = vpack.c.b16 %v2778, %v2777
      %v2790 = vpack.c.b16 %v2780, %v2779
      %v2791 = vpack.c.b16 %v2782, %v2781
      %v2792 = vpack.c.b16 %v2784, %v2783
      %2801 = vmatpush.bf16.msra.mxu0 %v2792
      %2802 = vmatpush.bf16.msra.mxu0 %v2791
      %2803 = vmatpush.bf16.msra.mxu0 %v2790
      %2804 = vmatpush.bf16.msra.mxu0 %v2789
      %2805 = vmatpush.bf16.msra.mxu0 %v2788
      %2806 = vmatpush.bf16.msra.mxu0 %v2787
      %2807 = vmatpush.bf16.msra.mxu0 %v2786
      %2808 = vmatpush.bf16.msra.mxu0 %v2785
      %2809 = vmatmul.bf16.gmra.mxu0 %v1131
      %v2810 = vpop.f32.mrf.mxu0
      %v2811 = vadd.f32 0.0, %v2810
      %v2812 = vpop.f32.mrf.mxu0
      %v2813 = vadd.f32 0.0, %v2812
      %2814 = vmatmul.bf16.gmra.mxu0 %v1132
      %v2815 = vpop.f32.mrf.mxu0
      %v2816 = vadd.f32 0.0, %v2815
      %v2817 = vpop.f32.mrf.mxu0
      %v2818 = vadd.f32 0.0, %v2817
      %2819 = vmatmul.bf16.gmra.mxu0 %v1133
      %v2820 = vpop.f32.mrf.mxu0
      %v2821 = vadd.f32 0.0, %v2820
      %v2822 = vpop.f32.mrf.mxu0
      %v2823 = vadd.f32 0.0, %v2822
      %2824 = vmatmul.bf16.gmra.mxu0 %v1134
      %v2825 = vpop.f32.mrf.mxu0
      %v2826 = vadd.f32 0.0, %v2825
      %v2827 = vpop.f32.mrf.mxu0
      %v2828 = vadd.f32 0.0, %v2827
      %2829 = vmatmul.bf16.gmra.mxu0 %v1135
      %v2830 = vpop.f32.mrf.mxu0
      %v2831 = vadd.f32 0.0, %v2830
      %v2832 = vpop.f32.mrf.mxu0
      %v2833 = vadd.f32 0.0, %v2832
      %2834 = vmatmul.bf16.gmra.mxu0 %v1136
      %v2835 = vpop.f32.mrf.mxu0
      %v2836 = vadd.f32 0.0, %v2835
      %v2837 = vpop.f32.mrf.mxu0
      %v2838 = vadd.f32 0.0, %v2837
      %2839 = vmatmul.bf16.gmra.mxu0 %v1137
      %v2840 = vpop.f32.mrf.mxu0
      %v2841 = vadd.f32 0.0, %v2840
      %v2842 = vpop.f32.mrf.mxu0
      %v2843 = vadd.f32 0.0, %v2842
      %2844 = vmatmul.bf16.gmra.mxu0 %v1138
      %v2845 = vpop.f32.mrf.mxu0
      %v2846 = vadd.f32 0.0, %v2845
      %v2847 = vpop.f32.mrf.mxu0
      %v2848 = vadd.f32 0.0, %v2847
      %2849 = vmatmul.bf16.gmra.mxu0 %v1139
      %v2850 = vpop.f32.mrf.mxu0
      %v2851 = vadd.f32 0.0, %v2850
      %v2852 = vpop.f32.mrf.mxu0
      %v2853 = vadd.f32 0.0, %v2852
      %2854 = vmatmul.bf16.gmra.mxu0 %v1140
      %v2855 = vpop.f32.mrf.mxu0
      %v2856 = vadd.f32 0.0, %v2855
      %v2857 = vpop.f32.mrf.mxu0
      %v2858 = vadd.f32 0.0, %v2857
      %2859 = vmatmul.bf16.gmra.mxu0 %v1141
      %v2860 = vpop.f32.mrf.mxu0
      %v2861 = vadd.f32 0.0, %v2860
      %v2862 = vpop.f32.mrf.mxu0
      %v2863 = vadd.f32 0.0, %v2862
      %2864 = vmatmul.bf16.gmra.mxu0 %v1142
      %v2865 = vpop.f32.mrf.mxu0
      %v2866 = vadd.f32 0.0, %v2865
      %v2867 = vpop.f32.mrf.mxu0
      %v2868 = vadd.f32 0.0, %v2867
      %2869 = vmatmul.bf16.gmra.mxu0 %v1143
      %v2870 = vpop.f32.mrf.mxu0
      %v2871 = vadd.f32 0.0, %v2870
      %v2872 = vpop.f32.mrf.mxu0
      %v2873 = vadd.f32 0.0, %v2872
      %2874 = vmatmul.bf16.gmra.mxu0 %v1144
      %v2875 = vpop.f32.mrf.mxu0
      %v2876 = vadd.f32 0.0, %v2875
      %v2877 = vpop.f32.mrf.mxu0
      %v2878 = vadd.f32 0.0, %v2877
      %2879 = vmatmul.bf16.gmra.mxu0 %v2147
      %v2880 = vpop.f32.mrf.mxu0
      %v2881 = vadd.f32 0.0, %v2880
      %v2882 = vpop.f32.mrf.mxu0
      %v2883 = vadd.f32 0.0, %v2882
      %2884 = vmatmul.bf16.gmra.mxu0 %v2751
      %v2885 = vpop.f32.mrf.mxu0
      %v2886 = vadd.f32 0.0, %v2885
      %v2887 = vpop.f32.mrf.mxu0
      %v2888 = vadd.f32 0.0, %v2887
      %2889 = vdwg.mxu0
      %v2890 = vadd.f32 %v2676, %v2811
      %v2891 = vadd.f32 %v2677, %v2813
      %v2892 = vadd.f32 %v2678, %v2816
      %v2893 = vadd.f32 %v2679, %v2818
      %v2894 = vadd.f32 %v2680, %v2821
      %v2895 = vadd.f32 %v2681, %v2823
      %v2896 = vadd.f32 %v2682, %v2826
      %v2897 = vadd.f32 %v2683, %v2828
      %v2898 = vadd.f32 %v2684, %v2831
      %v2899 = vadd.f32 %v2685, %v2833
      %v2900 = vadd.f32 %v2686, %v2836
      %v2901 = vadd.f32 %v2687, %v2838
      %v2902 = vadd.f32 %v2688, %v2841
      %v2903 = vadd.f32 %v2689, %v2843
      %v2904 = vadd.f32 %v2690, %v2846
      %v2905 = vadd.f32 %v2691, %v2848
      %v2906 = vadd.f32 %v2692, %v2851
      %v2907 = vadd.f32 %v2693, %v2853
      %v2908 = vadd.f32 %v2694, %v2856
      %v2909 = vadd.f32 %v2695, %v2858
      %v2910 = vadd.f32 %v2696, %v2861
      %v2911 = vadd.f32 %v2697, %v2863
      %v2912 = vadd.f32 %v2698, %v2866
      %v2913 = vadd.f32 %v2699, %v2868
      %v2914 = vadd.f32 %v2700, %v2871
      %v2915 = vadd.f32 %v2701, %v2873
      %v2916 = vadd.f32 %v2702, %v2876
      %v2917 = vadd.f32 %v2703, %v2878
      %v2918 = vadd.f32 %v2704, %v2881
      %v2919 = vadd.f32 %v2705, %v2883
      %v2920 = vadd.f32 %v2706, %v2886
      %v2921 = vadd.f32 %v2707, %v2888
      %v2923 = vrot.slane %v674, 5
      %v2924 = vrot.slane %v2923, 4
      %v2925 = vrot.slane %v675, 5
      %v2926 = vsel %vm1549, %v2924, %v2925
      %v2927 = vrot.slane %v2925, 4
      %v2928 = vrot.slane %v676, 5
      %v2929 = vsel %vm1549, %v2927, %v2928
      %s2930 = scalar_lea.vmem %s287, 512
      %v2931 = vld [vmem:[%s2930] sm:$0xf]
      %v2932 = vld [vmem:[%s2930 + $0x4] sm:$0xf]
      %v2933 = vld [vmem:[%s2930 + $0x8] sm:$0xf]
      %v2934 = vld [vmem:[%s2930 + $0xc] sm:$0xf]
      %v2935 = vld [vmem:[%s2930 + $0x10] sm:$0xf]
      %v2936 = vld [vmem:[%s2930 + $0x14] sm:$0xf]
      %v2937 = vld [vmem:[%s2930 + $0x18] sm:$0xf]
      %v2938 = vld [vmem:[%s2930 + $0x1c] sm:$0xf]
      %v2939 = vld [vmem:[%s2930 + $0x20] sm:$0xf]
      %v2940 = vld [vmem:[%s2930 + $0x24] sm:$0xf]
      %v2941 = vld [vmem:[%s2930 + $0x28] sm:$0xf]
      %v2942 = vld [vmem:[%s2930 + $0x2c] sm:$0xf]
      %v2943 = vld [vmem:[%s2930 + $0x30] sm:$0xf]
      %v2944 = vld [vmem:[%s2930 + $0x34] sm:$0xf]
      %v2945 = vld [vmem:[%s2930 + $0x38] sm:$0xf]
      %v2946 = vld [vmem:[%s2930 + $0x3c] sm:$0xf]
      %v2947 = vunpack.c.l.b16 %v2926
      %v2948 = vunpack.c.l.b16 %v2929
      %v2949 = vpack.c.b16 %v2948, %v2947
      %v2967 = vunpack.c.l.b16 %v2931
      %v2968 = vunpack.c.l.b16 %v2932
      %v2969 = vunpack.c.l.b16 %v2933
      %v2970 = vunpack.c.l.b16 %v2934
      %v2971 = vunpack.c.l.b16 %v2935
      %v2972 = vunpack.c.l.b16 %v2936
      %v2973 = vunpack.c.l.b16 %v2937
      %v2974 = vunpack.c.l.b16 %v2938
      %v2975 = vunpack.c.l.b16 %v2939
      %v2976 = vunpack.c.l.b16 %v2940
      %v2977 = vunpack.c.l.b16 %v2941
      %v2978 = vunpack.c.l.b16 %v2942
      %v2979 = vunpack.c.l.b16 %v2943
      %v2980 = vunpack.c.l.b16 %v2944
      %v2981 = vunpack.c.l.b16 %v2945
      %v2982 = vunpack.c.l.b16 %v2946
      %v2983 = vpack.c.b16 %v2968, %v2967
      %v2984 = vpack.c.b16 %v2970, %v2969
      %v2985 = vpack.c.b16 %v2972, %v2971
      %v2986 = vpack.c.b16 %v2974, %v2973
      %v2987 = vpack.c.b16 %v2976, %v2975
      %v2988 = vpack.c.b16 %v2978, %v2977
      %v2989 = vpack.c.b16 %v2980, %v2979
      %v2990 = vpack.c.b16 %v2982, %v2981
      %2999 = vmatpush.bf16.msra.mxu0 %v2990
      %3000 = vmatpush.bf16.msra.mxu0 %v2989
      %3001 = vmatpush.bf16.msra.mxu0 %v2988
      %3002 = vmatpush.bf16.msra.mxu0 %v2987
      %3003 = vmatpush.bf16.msra.mxu0 %v2986
      %3004 = vmatpush.bf16.msra.mxu0 %v2985
      %3005 = vmatpush.bf16.msra.mxu0 %v2984
      %3006 = vmatpush.bf16.msra.mxu0 %v2983
      %3007 = vmatmul.bf16.gmra.mxu0 %v1713
      %v3008 = vpop.f32.mrf.mxu0
      %v3009 = vadd.f32 0.0, %v3008
      %v3010 = vpop.f32.mrf.mxu0
      %v3011 = vadd.f32 0.0, %v3010
      %3012 = vmatmul.bf16.gmra.mxu0 %v1714
      %v3013 = vpop.f32.mrf.mxu0
      %v3014 = vadd.f32 0.0, %v3013
      %v3015 = vpop.f32.mrf.mxu0
      %v3016 = vadd.f32 0.0, %v3015
      %3017 = vmatmul.bf16.gmra.mxu0 %v1715
      %v3018 = vpop.f32.mrf.mxu0
      %v3019 = vadd.f32 0.0, %v3018
      %v3020 = vpop.f32.mrf.mxu0
      %v3021 = vadd.f32 0.0, %v3020
      %3022 = vmatmul.bf16.gmra.mxu0 %v1716
      %v3023 = vpop.f32.mrf.mxu0
      %v3024 = vadd.f32 0.0, %v3023
      %v3025 = vpop.f32.mrf.mxu0
      %v3026 = vadd.f32 0.0, %v3025
      %3027 = vmatmul.bf16.gmra.mxu0 %v1717
      %v3028 = vpop.f32.mrf.mxu0
      %v3029 = vadd.f32 0.0, %v3028
      %v3030 = vpop.f32.mrf.mxu0
      %v3031 = vadd.f32 0.0, %v3030
      %3032 = vmatmul.bf16.gmra.mxu0 %v1718
      %v3033 = vpop.f32.mrf.mxu0
      %v3034 = vadd.f32 0.0, %v3033
      %v3035 = vpop.f32.mrf.mxu0
      %v3036 = vadd.f32 0.0, %v3035
      %3037 = vmatmul.bf16.gmra.mxu0 %v1719
      %v3038 = vpop.f32.mrf.mxu0
      %v3039 = vadd.f32 0.0, %v3038
      %v3040 = vpop.f32.mrf.mxu0
      %v3041 = vadd.f32 0.0, %v3040
      %3042 = vmatmul.bf16.gmra.mxu0 %v1720
      %v3043 = vpop.f32.mrf.mxu0
      %v3044 = vadd.f32 0.0, %v3043
      %v3045 = vpop.f32.mrf.mxu0
      %v3046 = vadd.f32 0.0, %v3045
      %3047 = vmatmul.bf16.gmra.mxu0 %v1721
      %v3048 = vpop.f32.mrf.mxu0
      %v3049 = vadd.f32 0.0, %v3048
      %v3050 = vpop.f32.mrf.mxu0
      %v3051 = vadd.f32 0.0, %v3050
      %3052 = vmatmul.bf16.gmra.mxu0 %v1722
      %v3053 = vpop.f32.mrf.mxu0
      %v3054 = vadd.f32 0.0, %v3053
      %v3055 = vpop.f32.mrf.mxu0
      %v3056 = vadd.f32 0.0, %v3055
      %3057 = vmatmul.bf16.gmra.mxu0 %v1723
      %v3058 = vpop.f32.mrf.mxu0
      %v3059 = vadd.f32 0.0, %v3058
      %v3060 = vpop.f32.mrf.mxu0
      %v3061 = vadd.f32 0.0, %v3060
      %3062 = vmatmul.bf16.gmra.mxu0 %v1724
      %v3063 = vpop.f32.mrf.mxu0
      %v3064 = vadd.f32 0.0, %v3063
      %v3065 = vpop.f32.mrf.mxu0
      %v3066 = vadd.f32 0.0, %v3065
      %3067 = vmatmul.bf16.gmra.mxu0 %v1725
      %v3068 = vpop.f32.mrf.mxu0
      %v3069 = vadd.f32 0.0, %v3068
      %v3070 = vpop.f32.mrf.mxu0
      %v3071 = vadd.f32 0.0, %v3070
      %3072 = vmatmul.bf16.gmra.mxu0 %v1726
      %v3073 = vpop.f32.mrf.mxu0
      %v3074 = vadd.f32 0.0, %v3073
      %v3075 = vpop.f32.mrf.mxu0
      %v3076 = vadd.f32 0.0, %v3075
      %3077 = vmatmul.bf16.gmra.mxu0 %v2345
      %v3078 = vpop.f32.mrf.mxu0
      %v3079 = vadd.f32 0.0, %v3078
      %v3080 = vpop.f32.mrf.mxu0
      %v3081 = vadd.f32 0.0, %v3080
      %3082 = vmatmul.bf16.gmra.mxu0 %v2949
      %v3083 = vpop.f32.mrf.mxu0
      %v3084 = vadd.f32 0.0, %v3083
      %v3085 = vpop.f32.mrf.mxu0
      %v3086 = vadd.f32 0.0, %v3085
      %3087 = vdwg.mxu0
      %v3088 = vadd.f32 %v2890, %v3009
      %v3089 = vadd.f32 %v2891, %v3011
      %v3090 = vadd.f32 %v2892, %v3014
      %v3091 = vadd.f32 %v2893, %v3016
      %v3092 = vadd.f32 %v2894, %v3019
      %v3093 = vadd.f32 %v2895, %v3021
      %v3094 = vadd.f32 %v2896, %v3024
      %v3095 = vadd.f32 %v2897, %v3026
      %v3096 = vadd.f32 %v2898, %v3029
      %v3097 = vadd.f32 %v2899, %v3031
      %v3098 = vadd.f32 %v2900, %v3034
      %v3099 = vadd.f32 %v2901, %v3036
      %v3100 = vadd.f32 %v2902, %v3039
      %v3101 = vadd.f32 %v2903, %v3041
      %v3102 = vadd.f32 %v2904, %v3044
      %v3103 = vadd.f32 %v2905, %v3046
      %v3104 = vadd.f32 %v2906, %v3049
      %v3105 = vadd.f32 %v2907, %v3051
      %v3106 = vadd.f32 %v2908, %v3054
      %v3107 = vadd.f32 %v2909, %v3056
      %v3108 = vadd.f32 %v2910, %v3059
      %v3109 = vadd.f32 %v2911, %v3061
      %v3110 = vadd.f32 %v2912, %v3064
      %v3111 = vadd.f32 %v2913, %v3066
      %v3112 = vadd.f32 %v2914, %v3069
      %v3113 = vadd.f32 %v2915, %v3071
      %v3114 = vadd.f32 %v2916, %v3074
      %v3115 = vadd.f32 %v2917, %v3076
      %v3116 = vadd.f32 %v2918, %v3079
      %v3117 = vadd.f32 %v2919, %v3081
      %v3118 = vadd.f32 %v2920, %v3084
      %v3119 = vadd.f32 %v2921, %v3086
      %v3120 = vld [vmem:[#allocation2] sm:$0xff]
      %v3121 = vld [vmem:[#allocation2 + $0x8] sm:$0xff]
      %v3122 = vld [vmem:[#allocation2 + $0x10] sm:$0xff]
      %v3123 = vld [vmem:[#allocation2 + $0x18] sm:$0xff]
      %v3124 = vld [vmem:[#allocation2 + $0x20] sm:$0xff]
      %v3125 = vld [vmem:[#allocation2 + $0x28] sm:$0xff]
      %v3126 = vld [vmem:[#allocation2 + $0x30] sm:$0xff]
      %v3127 = vld [vmem:[#allocation2 + $0x38] sm:$0xff]
      %v3128 = vld [vmem:[#allocation2 + $0x40] sm:$0xff]
      %v3129 = vld [vmem:[#allocation2 + $0x48] sm:$0xff]
      %v3130 = vld [vmem:[#allocation2 + $0x50] sm:$0xff]
      %v3131 = vld [vmem:[#allocation2 + $0x58] sm:$0xff]
      %v3132 = vld [vmem:[#allocation2 + $0x60] sm:$0xff]
      %v3133 = vld [vmem:[#allocation2 + $0x68] sm:$0xff]
      %v3134 = vld [vmem:[#allocation2 + $0x70] sm:$0xff]
      %v3135 = vld [vmem:[#allocation2 + $0x78] sm:$0xff]
      %v3136 = vld [vmem:[#allocation2 + $0x80] sm:$0xff]
      %v3137 = vld [vmem:[#allocation2 + $0x88] sm:$0xff]
      %v3138 = vld [vmem:[#allocation2 + $0x90] sm:$0xff]
      %v3139 = vld [vmem:[#allocation2 + $0x98] sm:$0xff]
      %v3140 = vld [vmem:[#allocation2 + $0xa0] sm:$0xff]
      %v3141 = vld [vmem:[#allocation2 + $0xa8] sm:$0xff]
      %v3142 = vld [vmem:[#allocation2 + $0xb0] sm:$0xff]
      %v3143 = vld [vmem:[#allocation2 + $0xb8] sm:$0xff]
      %v3144 = vld [vmem:[#allocation2 + $0xc0] sm:$0xff]
      %v3145 = vld [vmem:[#allocation2 + $0xc8] sm:$0xff]
      %v3146 = vld [vmem:[#allocation2 + $0xd0] sm:$0xff]
      %v3147 = vld [vmem:[#allocation2 + $0xd8] sm:$0xff]
      %v3148 = vld [vmem:[#allocation2 + $0xe0] sm:$0xff]
      %v3149 = vld [vmem:[#allocation2 + $0xe8] sm:$0xff]
      %v3150 = vld [vmem:[#allocation2 + $0xf0] sm:$0xff]
      %v3151 = vld [vmem:[#allocation2 + $0xf8] sm:$0xff]
      %v3152 = vadd.f32 %v3120, %v3088
      %v3153 = vadd.f32 %v3121, %v3089
      %v3154 = vadd.f32 %v3122, %v3090
      %v3155 = vadd.f32 %v3123, %v3091
      %v3156 = vadd.f32 %v3124, %v3092
      %v3157 = vadd.f32 %v3125, %v3093
      %v3158 = vadd.f32 %v3126, %v3094
      %v3159 = vadd.f32 %v3127, %v3095
      %v3160 = vadd.f32 %v3128, %v3096
      %v3161 = vadd.f32 %v3129, %v3097
      %v3162 = vadd.f32 %v3130, %v3098
      %v3163 = vadd.f32 %v3131, %v3099
      %v3164 = vadd.f32 %v3132, %v3100
      %v3165 = vadd.f32 %v3133, %v3101
      %v3166 = vadd.f32 %v3134, %v3102
      %v3167 = vadd.f32 %v3135, %v3103
      %v3168 = vadd.f32 %v3136, %v3104
      %v3169 = vadd.f32 %v3137, %v3105
      %v3170 = vadd.f32 %v3138, %v3106
      %v3171 = vadd.f32 %v3139, %v3107
      %v3172 = vadd.f32 %v3140, %v3108
      %v3173 = vadd.f32 %v3141, %v3109
      %v3174 = vadd.f32 %v3142, %v3110
      %v3175 = vadd.f32 %v3143, %v3111
      %v3176 = vadd.f32 %v3144, %v3112
      %v3177 = vadd.f32 %v3145, %v3113
      %v3178 = vadd.f32 %v3146, %v3114
      %v3179 = vadd.f32 %v3147, %v3115
      %v3180 = vadd.f32 %v3148, %v3116
      %v3181 = vadd.f32 %v3149, %v3117
      %v3182 = vadd.f32 %v3150, %v3118
      %v3183 = vadd.f32 %v3151, %v3119
      %3184 = vst [vmem:[#allocation2] sm:$0xff] %v3152
      %3185 = vst [vmem:[#allocation2 + $0x8] sm:$0xff] %v3153
      %3186 = vst [vmem:[#allocation2 + $0x10] sm:$0xff] %v3154
      %3187 = vst [vmem:[#allocation2 + $0x18] sm:$0xff] %v3155
      %3188 = vst [vmem:[#allocation2 + $0x20] sm:$0xff] %v3156
      %3189 = vst [vmem:[#allocation2 + $0x28] sm:$0xff] %v3157
      %3190 = vst [vmem:[#allocation2 + $0x30] sm:$0xff] %v3158
      %3191 = vst [vmem:[#allocation2 + $0x38] sm:$0xff] %v3159
      %3192 = vst [vmem:[#allocation2 + $0x40] sm:$0xff] %v3160
      %3193 = vst [vmem:[#allocation2 + $0x48] sm:$0xff] %v3161
      %3194 = vst [vmem:[#allocation2 + $0x50] sm:$0xff] %v3162
      %3195 = vst [vmem:[#allocation2 + $0x58] sm:$0xff] %v3163
      %3196 = vst [vmem:[#allocation2 + $0x60] sm:$0xff] %v3164
      %3197 = vst [vmem:[#allocation2 + $0x68] sm:$0xff] %v3165
      %3198 = vst [vmem:[#allocation2 + $0x70] sm:$0xff] %v3166
      %3199 = vst [vmem:[#allocation2 + $0x78] sm:$0xff] %v3167
      %3200 = vst [vmem:[#allocation2 + $0x80] sm:$0xff] %v3168
      %3201 = vst [vmem:[#allocation2 + $0x88] sm:$0xff] %v3169
      %3202 = vst [vmem:[#allocation2 + $0x90] sm:$0xff] %v3170
      %3203 = vst [vmem:[#allocation2 + $0x98] sm:$0xff] %v3171
      %3204 = vst [vmem:[#allocation2 + $0xa0] sm:$0xff] %v3172
      %3205 = vst [vmem:[#allocation2 + $0xa8] sm:$0xff] %v3173
      %3206 = vst [vmem:[#allocation2 + $0xb0] sm:$0xff] %v3174
      %3207 = vst [vmem:[#allocation2 + $0xb8] sm:$0xff] %v3175
      %3208 = vst [vmem:[#allocation2 + $0xc0] sm:$0xff] %v3176
      %3209 = vst [vmem:[#allocation2 + $0xc8] sm:$0xff] %v3177
      %3210 = vst [vmem:[#allocation2 + $0xd0] sm:$0xff] %v3178
      %3211 = vst [vmem:[#allocation2 + $0xd8] sm:$0xff] %v3179
      %3212 = vst [vmem:[#allocation2 + $0xe0] sm:$0xff] %v3180
      %3213 = vst [vmem:[#allocation2 + $0xe8] sm:$0xff] %v3181
      %3214 = vst [vmem:[#allocation2 + $0xf0] sm:$0xff] %v3182
      %3215 = vst [vmem:[#allocation2 + $0xf8] sm:$0xff] %v3183
      // Predicated region
      $region41: #{resblock_forward.7} parent=35 // pred_check
        %p3216 = pneg %p306
      $region42: #{resblock_forward.7} parent=35 // pred_check_branch
        %3218 = sbr.rel (%p3216) target = $region44
      $region43: #{resblock_forward.7} parent=35 // pred_region
        %v3219 = vld [vmem:[#allocation2] sm:$0xff]
        %v3220 = vld [vmem:[#allocation2 + $0x8] sm:$0xff]
        %v3221 = vld [vmem:[#allocation2 + $0x10] sm:$0xff]
        %v3222 = vld [vmem:[#allocation2 + $0x18] sm:$0xff]
        %v3223 = vld [vmem:[#allocation2 + $0x20] sm:$0xff]
        %v3224 = vld [vmem:[#allocation2 + $0x28] sm:$0xff]
        %v3225 = vld [vmem:[#allocation2 + $0x30] sm:$0xff]
        %v3226 = vld [vmem:[#allocation2 + $0x38] sm:$0xff]
        %v3227 = vld [vmem:[#allocation2 + $0x40] sm:$0xff]
        %v3228 = vld [vmem:[#allocation2 + $0x48] sm:$0xff]
        %v3229 = vld [vmem:[#allocation2 + $0x50] sm:$0xff]
        %v3230 = vld [vmem:[#allocation2 + $0x58] sm:$0xff]
        %v3231 = vld [vmem:[#allocation2 + $0x60] sm:$0xff]
        %v3232 = vld [vmem:[#allocation2 + $0x68] sm:$0xff]
        %v3233 = vld [vmem:[#allocation2 + $0x70] sm:$0xff]
        %v3234 = vld [vmem:[#allocation2 + $0x78] sm:$0xff]
        %v3235 = vld [vmem:[#allocation2 + $0x80] sm:$0xff]
        %v3236 = vld [vmem:[#allocation2 + $0x88] sm:$0xff]
        %v3237 = vld [vmem:[#allocation2 + $0x90] sm:$0xff]
        %v3238 = vld [vmem:[#allocation2 + $0x98] sm:$0xff]
        %v3239 = vld [vmem:[#allocation2 + $0xa0] sm:$0xff]
        %v3240 = vld [vmem:[#allocation2 + $0xa8] sm:$0xff]
        %v3241 = vld [vmem:[#allocation2 + $0xb0] sm:$0xff]
        %v3242 = vld [vmem:[#allocation2 + $0xb8] sm:$0xff]
        %v3243 = vld [vmem:[#allocation2 + $0xc0] sm:$0xff]
        %v3244 = vld [vmem:[#allocation2 + $0xc8] sm:$0xff]
        %v3245 = vld [vmem:[#allocation2 + $0xd0] sm:$0xff]
        %v3246 = vld [vmem:[#allocation2 + $0xd8] sm:$0xff]
        %v3247 = vld [vmem:[#allocation2 + $0xe0] sm:$0xff]
        %v3248 = vld [vmem:[#allocation2 + $0xe8] sm:$0xff]
        %v3249 = vld [vmem:[#allocation2 + $0xf0] sm:$0xff]
        %v3250 = vld [vmem:[#allocation2 + $0xf8] sm:$0xff]
        %3251 = vst [vmem:[%s305] sm:$0xff] %v3219
        %3252 = vst [vmem:[%s305 + $0x8] sm:$0xff] %v3220
        %3253 = vst [vmem:[%s305 + $0x10] sm:$0xff] %v3221
        %3254 = vst [vmem:[%s305 + $0x18] sm:$0xff] %v3222
        %3255 = vst [vmem:[%s305 + $0x20] sm:$0xff] %v3223
        %3256 = vst [vmem:[%s305 + $0x28] sm:$0xff] %v3224
        %3257 = vst [vmem:[%s305 + $0x30] sm:$0xff] %v3225
        %3258 = vst [vmem:[%s305 + $0x38] sm:$0xff] %v3226
        %3259 = vst [vmem:[%s305 + $0x40] sm:$0xff] %v3227
        %3260 = vst [vmem:[%s305 + $0x48] sm:$0xff] %v3228
        %3261 = vst [vmem:[%s305 + $0x50] sm:$0xff] %v3229
        %3262 = vst [vmem:[%s305 + $0x58] sm:$0xff] %v3230
        %3263 = vst [vmem:[%s305 + $0x60] sm:$0xff] %v3231
        %3264 = vst [vmem:[%s305 + $0x68] sm:$0xff] %v3232
        %3265 = vst [vmem:[%s305 + $0x70] sm:$0xff] %v3233
        %3266 = vst [vmem:[%s305 + $0x78] sm:$0xff] %v3234
        %3267 = vst [vmem:[%s305 + $0x80] sm:$0xff] %v3235
        %3268 = vst [vmem:[%s305 + $0x88] sm:$0xff] %v3236
        %3269 = vst [vmem:[%s305 + $0x90] sm:$0xff] %v3237
        %3270 = vst [vmem:[%s305 + $0x98] sm:$0xff] %v3238
        %3271 = vst [vmem:[%s305 + $0xa0] sm:$0xff] %v3239
        %3272 = vst [vmem:[%s305 + $0xa8] sm:$0xff] %v3240
        %3273 = vst [vmem:[%s305 + $0xb0] sm:$0xff] %v3241
        %3274 = vst [vmem:[%s305 + $0xb8] sm:$0xff] %v3242
        %3275 = vst [vmem:[%s305 + $0xc0] sm:$0xff] %v3243
        %3276 = vst [vmem:[%s305 + $0xc8] sm:$0xff] %v3244
        %3277 = vst [vmem:[%s305 + $0xd0] sm:$0xff] %v3245
        %3278 = vst [vmem:[%s305 + $0xd8] sm:$0xff] %v3246
        %3279 = vst [vmem:[%s305 + $0xe0] sm:$0xff] %v3247
        %3280 = vst [vmem:[%s305 + $0xe8] sm:$0xff] %v3248
        %3281 = vst [vmem:[%s305 + $0xf0] sm:$0xff] %v3249
        %3282 = vst [vmem:[%s305 + $0xf8] sm:$0xff] %v3250
      $region44: #{resblock_forward.7} parent=35 // pred_fallthru
        _
      %p3283 = scmp.lt.s32.totalorder %s20, 1
      %s3284 = scalar_select %p3283, %s20, 1
      %p3285 = scmp.lt.s32.totalorder %s21, 0
      %s3286 = scalar_select %p3285, %s21, 0
      %s3287 = smul.addr %s3284, 32
      %s3288 = sadd.s32 %s3286, %s3287
      %s3289 = smul.addr %s3288, 8
      %s3290 = scalar_lea.vmem %s4, %s3289
      // Predicated region
      $region45: #{resblock_forward.7} parent=35 // pred_check
        %p3291 = pneg %p162
      $region46: #{resblock_forward.7} parent=35 // pred_check_branch
        %3293 = sbr.rel (%p3291) target = $region48
      $region47: #{resblock_forward.7} parent=35 // pred_region
        _
      $region48: #{resblock_forward.7} parent=35 // pred_fallthru
        _
    $region36: #{resblock_forward.7} parent=5 // pred_fallthru
      _
    %p3294 = scmp.le.s32.totalorder 2, %s10
    // Predicated region
    $region49: #{resblock_forward.7} parent=5 // pred_check
      %p3295 = pneg %p3294
    $region50: #{resblock_forward.7} parent=5 // pred_check_branch
      %3297 = sbr.rel (%p3295) target = $region52
    $region51: #{resblock_forward.7} parent=5 // pred_region
      %s3298 = ssub.s32 %s10, 2
      // Predicated region
      $region53: #{resblock_forward.7} parent=51 // pred_check
        %p3299 = pneg %p168
      $region54: #{resblock_forward.7} parent=51 // pred_check_branch
        %3301 = sbr.rel (%p3299) target = $region56
      $region55: #{resblock_forward.7} parent=51 // pred_region
        %p3302 = scmp.lt.s32.totalorder %s23, 1
        %s3303 = scalar_select %p3302, %s23, 1
        %p3304 = scmp.lt.s32.totalorder %s24, 0
        %s3305 = scalar_select %p3304, %s24, 0
        %s3306 = smul.addr %s3303, 32
        %s3307 = sadd.s32 %s3305, %s3306
        %s3308 = smul.addr %s3307, 8
        %s3309 = scalar_lea.vmem %s4, %s3308
      $region56: #{resblock_forward.7} parent=51 // pred_fallthru
        _
    $region52: #{resblock_forward.7} parent=5 // pred_fallthru
      _
  $region6: #{resblock_forward.7} parent=0 // loop_footer
    %s14 = sadd.s32 1, %s10
  $region7: #{resblock_forward.7} parent=0 // loop_footer_branch
    %9 = sbr.rel target = $region3
  $region8: #{resblock_forward.7} parent=0 // loop_exit
    _

</llo_original>
